<compile_context>
chip_gen: v6e
topology: v6e:2x2x1
jax: 0.10.0
libtpu: 0.0.40
codegen_flags: <defaults>
</compile_context>

<pallas_src>
import functools

import jax
import jax.numpy as jnp
from jax.experimental import pallas as pl
from jax.experimental.pallas import tpu as pltpu

TM = 1024                      # row (M) tile for the patch matmul
TN = 256                       # output-channel tile (multiple of 128 lanes)
TK = 1024                      # max reduction (K) tile
BN_TR = 1024                   # row tile for the batchnorm normalize pass
LANE = 128
SUB = 16                       # bf16 sublane packing
VMEM_LIMIT = 48 * 1024 * 1024  # scoped-VMEM budget, safe on v5e/v6e (128 MiB) and v7x (64 MiB)


def _round_up(x, m):
    return ((x + m - 1) // m) * m


def _pick_tk(K):
    """Largest multiple of 128 that divides K and is <= TK; K itself for irregular K
    (only the very first conv, K = 16*input_nc, and tiny 9*C up-convs hit this)."""
    if K % LANE != 0:
        return K
    best = LANE
    d = LANE
    while d <= min(TK, K):
        if K % d == 0:
            best = d
        d += LANE
    return best


# ------------------------- Pallas kernels -------------------------

def _mm_kernel(pre_act, post_act, valid_cols, want_stats, tk, num_k):
    """Tiled patch @ weight matmul: K-resident weight block sliced per K step, f32 VMEM
    accumulator, fused pre-activation on the patch tile, bias + post-activation epilogue,
    and optional per-M-tile column sum / sum-of-squares side outputs (BatchNorm input)."""

    def kernel(p_ref, w_ref, b_ref, *rest):
        if want_stats:
            o_ref, sum_ref, sumsq_ref, acc_ref = rest
        else:
            o_ref, acc_ref = rest

        k = pl.program_id(2)

        @pl.when(k == 0)
        def _():
            acc_ref[...] = jnp.zeros_like(acc_ref)

        p = p_ref[...]
        if pre_act == "lrelu":
            p = jnp.where(p > 0, p, 0.2 * p)
        elif pre_act == "relu":
            p = jnp.maximum(p, 0)

        if num_k == 1:
            w = w_ref[...]
        else:
            w = w_ref[pl.ds(pl.multiple_of(k * tk, tk), tk), :]
        acc_ref[...] += jnp.dot(p, w, preferred_element_type=jnp.float32)

        @pl.when(k == num_k - 1)
        def _():
            y = acc_ref[...] + b_ref[...]
            if valid_cols is not None:          # narrow-channel layer: store exact width
                y = y[:, :valid_cols]
            if want_stats:                      # BatchNorm sees the pre-activation y (f32)
                s1 = jnp.sum(y, axis=0, keepdims=True)
                s2 = jnp.sum(y * y, axis=0, keepdims=True)
                sum_ref[...] = jnp.broadcast_to(s1[:, None, :], sum_ref.shape)
                sumsq_ref[...] = jnp.broadcast_to(s2[:, None, :], sumsq_ref.shape)
            if post_act == "tanh":
                y = jnp.tanh(y)
            elif post_act == "relu":
                y = jnp.maximum(y, 0.0)
            elif post_act == "lrelu":
                y = jnp.where(y > 0, y, 0.2 * y)
            o_ref[...] = y.astype(o_ref.dtype)

    return kernel


def matmul_bias_act(patches, w_pad, b_pad, n_valid, pre_act="none", post_act="none",
                    want_stats=False, out_dtype=jnp.bfloat16):
    """patches: (M, K) bf16; w_pad: (K, Np) bf16 (Np multiple of 128); b_pad: (1, Np) f32.
    Returns ((M, n_valid) out_dtype, optional (col_sum, col_sumsq) f32 vectors)."""
    M, K = patches.shape
    Kw, Np = w_pad.shape
    assert Kw == K and Np % LANE == 0 and Np >= n_valid

    tm = min(TM, _round_up(max(M, 1), SUB))
    Mp = _round_up(M, tm)
    if Mp != M:
        patches = jnp.pad(patches, ((0, Mp - M), (0, 0)))

    narrow = (n_valid % LANE) != 0
    if narrow:
        tn, ob_w, valid_cols = Np, n_valid, n_valid   # single lane tile, exact-width store
    else:
        tn = TN if Np % TN == 0 else LANE
        ob_w, valid_cols = tn, None

    tk = _pick_tk(K)
    num_k = K // tk
    mt = Mp // tm
    grid = (mt, Np // tn, num_k)

    main_shape = jax.ShapeDtypeStruct((Mp, n_valid), out_dtype)
    main_spec = pl.BlockSpec((tm, ob_w), lambda i, j, k: (i, j))
    if want_stats:
        assert post_act == "none"
        stat_shape = jax.ShapeDtypeStruct((mt, 8, n_valid), jnp.float32)
        stat_spec = pl.BlockSpec((1, 8, ob_w), lambda i, j, k: (i, 0, j))
        out_shape = (main_shape, stat_shape, stat_shape)
        out_specs = (main_spec, stat_spec, stat_spec)
    else:
        out_shape, out_specs = main_shape, main_spec

    res = pl.pallas_call(
        _mm_kernel(pre_act, post_act, valid_cols, want_stats, tk, num_k),
        out_shape=out_shape,
        grid=grid,
        in_specs=[
            pl.BlockSpec((tm, tk), lambda i, j, k: (i, k)),
            pl.BlockSpec((K, tn), lambda i, j, k: (0, j)),   # K-resident weight block
            pl.BlockSpec((1, tn), lambda i, j, k: (0, j)),
        ],
        out_specs=out_specs,
        scratch_shapes=[pltpu.VMEM((tm, tn), jnp.float32)],
        compiler_params=pltpu.CompilerParams(
            dimension_semantics=("parallel", "parallel", "arbitrary"),
            vmem_limit_bytes=VMEM_LIMIT),
    )(patches, w_pad, b_pad)

    if want_stats:
        out, ssum, ssq = res
        stats = (ssum[:, 0, :].sum(axis=0), ssq[:, 0, :].sum(axis=0))
    else:
        out, stats = res, None
    if Mp != M:
        out = out[:M]
    return out, stats


def _bn_norm_kernel(x_ref, mean_ref, rstd_ref, o_ref):
    x = x_ref[...].astype(jnp.float32)
    o_ref[...] = ((x - mean_ref[...]) * rstd_ref[...]).astype(o_ref.dtype)


def bn_normalize_2d(x2d, mean, rstd):
    """Single tiled normalize pass on a (rows, C) tensor with precomputed f32 stats."""
    R, Cw = x2d.shape
    tr = min(BN_TR, _round_up(max(R, 1), SUB))
    Rp = _round_up(R, tr)
    if Rp != R:
        x2d = jnp.pad(x2d, ((0, Rp - R), (0, 0)))
    out = pl.pallas_call(
        _bn_norm_kernel,
        out_shape=jax.ShapeDtypeStruct((Rp, Cw), x2d.dtype),
        grid=(Rp // tr,),
        in_specs=[pl.BlockSpec((tr, Cw), lambda i: (i, 0)),
                  pl.BlockSpec((1, Cw), lambda i: (0, 0)),
                  pl.BlockSpec((1, Cw), lambda i: (0, 0))],
        out_specs=pl.BlockSpec((tr, Cw), lambda i: (i, 0)),
        compiler_params=pltpu.CompilerParams(
            dimension_semantics=("parallel",),
            vmem_limit_bytes=VMEM_LIMIT),
    )(x2d, mean.reshape(1, Cw), rstd.reshape(1, Cw))
    return out[:R]


def _bn_stats(ssum, ssq, count, phases=1, eps=1e-5):
    """Per-channel mean/rstd from f32 column sums.  For the sub-pixel up-conv layout the
    columns are (phase, channel); phase groups are folded into the per-channel stats."""
    C = ssum.shape[0] // phases
    s1 = ssum.reshape(phases, C).sum(axis=0)
    s2 = ssq.reshape(phases, C).sum(axis=0)
    n = count * phases
    mean = s1 / n
    var = jnp.maximum(s2 / n - mean * mean, 0.0)   # clamp: guards bf16/f32 cancellation
    rstd = jax.lax.rsqrt(var + eps)
    if phases > 1:
        mean = jnp.tile(mean, phases)
        rstd = jnp.tile(rstd, phases)
    return mean, rstd


# ------------------------- JAX glue (im2col, conv wrappers) -------------------------

def _im2col(x_nhwc, k, stride, pad):
    x = jnp.pad(x_nhwc, ((0, 0), (pad, pad), (pad, pad), (0, 0)))
    N, Hp, Wp, C = x.shape
    OH = (Hp - k) // stride + 1
    OW = (Wp - k) // stride + 1
    patches = []
    for kh in range(k):
        for kw in range(k):
            patches.append(
                x[:, kh:kh + stride * OH:stride, kw:kw + stride * OW:stride, :])
    p = jnp.stack(patches, axis=3)                       # (N, OH, OW, k*k, C)
    return p.reshape(N * OH * OW, k * k * C), (N, OH, OW)


def conv2d_s2(x, w_pad, b_pad, n_valid, pre_act="none", post_act="none",
              with_bn=False, out_dtype=jnp.bfloat16):
    """Conv2d(k=4, s=2, p=1) via im2col + tiled Pallas matmul.  pre_act is fused into
    the kernel's patch-tile load (lrelu/relu map 0->0, so spatial zero-padding commutes).
    If with_bn, BatchNorm stats come from the matmul epilogue; one normalize pass follows."""
    patches, (N, OH, OW) = _im2col(x, 4, 2, 1)
    M = N * OH * OW
    out, stats = matmul_bias_act(patches, w_pad, b_pad, n_valid, pre_act, post_act,
                                 want_stats=with_bn, out_dtype=out_dtype)
    if with_bn:
        mean, rstd = _bn_stats(*stats, count=M, phases=1)
        out = bn_normalize_2d(out, mean, rstd)
    return out.reshape(N, OH, OW, n_valid)


def conv_transpose2d_s2(x, w_pad, b_pad, n_valid4, pre_act="none", post_act="none",
                        with_bn=False, out_dtype=jnp.bfloat16):
    """ConvTranspose2d(k=4, s=2, p=1) lowered to one 3x3 stride-1 conv producing all 4
    sub-pixel output phases (no zero-dilated tensor).  BN (if any) runs on the phase-major
    2-D layout before the depth-to-space shuffle."""
    N, H, W, _ = x.shape
    Cout = n_valid4 // 4
    patches, _ = _im2col(x, 3, 1, 1)                     # (N*H*W, 9*Cin)
    M = N * H * W
    out, stats = matmul_bias_act(patches, w_pad, b_pad, n_valid4, pre_act, post_act,
                                 want_stats=with_bn, out_dtype=out_dtype)
    if with_bn:
        mean, rstd = _bn_stats(*stats, count=M, phases=4)
        out = bn_normalize_2d(out, mean, rstd)
    out = out.reshape(N, H, W, 2, 2, Cout)               # (n, h, w, py, px, co)
    # TODO(synk): fold this depth-to-space shuffle into the consumer's im2col / a
    # phase-aware out_spec to save one full HBM pass per up layer.
    out = jnp.transpose(out, (0, 1, 3, 2, 4, 5)).reshape(N, 2 * H, 2 * W, Cout)
    return out


# ------------------------- weight preparation -------------------------

def _prep_down_weight(w):
    """PyTorch Conv2d weight (Cout, Cin, 4, 4) -> (16*Cin, Np) bf16, Np=roundup(Cout,128)."""
    Cout = w.shape[0]
    w_mat = jnp.transpose(w, (2, 3, 1, 0)).reshape(-1, Cout)   # rows = (kh, kw, ci)
    Np = _round_up(Cout, LANE)
    w_mat = jnp.pad(w_mat, ((0, 0), (0, Np - Cout))).astype(jnp.bfloat16)
    return w_mat, Cout


def _prep_up_weight(w_t):
    """PyTorch ConvTranspose2d weight (Cin, Cout, 4, 4) -> combined 3x3 sub-pixel weight
    (9*Cin, Np) bf16 producing 4 output phases (py, px); Np = roundup(4*Cout, 128)."""
    Cin, Cout = w_t.shape[0], w_t.shape[1]
    W9 = jnp.zeros((3, 3, Cin, 2, 2, Cout), jnp.float32)
    for py in range(2):
        for px in range(2):
            for a in (py, py + 1):          # 3x3 patch row -> input row offset (a-1)
                for b in (px, px + 1):
                    ky = 3 - py - 2 * (a - py)
                    kx = 3 - px - 2 * (b - px)
                    W9 = W9.at[a, b, :, py, px, :].set(w_t[:, :, ky, kx])
    w_mat = W9.reshape(9 * Cin, 4 * Cout)
    Np = _round_up(4 * Cout, LANE)
    w_mat = jnp.pad(w_mat, ((0, 0), (0, Np - 4 * Cout))).astype(jnp.bfloat16)
    return w_mat, 4 * Cout


def _prep_bias(bias_or_none, n_valid):
    Np = _round_up(n_valid, LANE)
    if bias_or_none is None:
        return jnp.zeros((1, Np), jnp.float32)
    b = bias_or_none.astype(jnp.float32).reshape(1, -1)
    return jnp.pad(b, ((0, 0), (0, Np - b.shape[1])))


# ------------------------- U-Net structure -------------------------

def build_unet_params(key, input_nc, output_nc, num_downs, ngf):
    """Deterministic parameter init.  Blocks ordered outermost -> innermost.
    Matmul-ready (lane-padded, bf16) weight matrices are precomputed here."""
    specs = [dict(outer=output_nc, inner=ngf, inp=input_nc, outermost=True, innermost=False),
             dict(outer=ngf, inner=ngf * 2, inp=ngf, outermost=False, innermost=False),
             dict(outer=ngf * 2, inner=ngf * 4, inp=ngf * 2, outermost=False, innermost=False),
             dict(outer=ngf * 4, inner=ngf * 8, inp=ngf * 4, outermost=False, innermost=False)]
    for _ in range(num_downs - 5):
        specs.append(dict(outer=ngf * 8, inner=ngf * 8, inp=ngf * 8,
                          outermost=False, innermost=False))
    specs.append(dict(outer=ngf * 8, inner=ngf * 8, inp=ngf * 8,
                      outermost=False, innermost=True))

    blocks = []
    for s in specs:
        key, k1, k2, k3 = jax.random.split(key, 4)
        # Conv2d(inp, inner, 4, 2, 1, bias=False)  [BatchNorm norm layer -> use_bias=False]
        w_down = 0.05 * jax.random.normal(k1, (s["inner"], s["inp"], 4, 4), jnp.float32)
        w_down_mat, nc_down = _prep_down_weight(w_down)
        b_down = _prep_bias(None, nc_down)
        # ConvTranspose2d(inner or inner*2, outer, 4, 2, 1); bias only for outermost
        up_in = s["inner"] if s["innermost"] else s["inner"] * 2
        w_up = 0.05 * jax.random.normal(k2, (up_in, s["outer"], 4, 4), jnp.float32)
        w_up_mat, nc_up = _prep_up_weight(w_up)
        if s["outermost"]:
            b_raw = 0.05 * jax.random.normal(k3, (s["outer"],), jnp.float32)
            b_up = _prep_bias(jnp.tile(b_raw, 4), nc_up)   # bias replicated per phase
        else:
            b_up = _prep_bias(None, nc_up)
        blocks.append(dict(outermost=s["outermost"], innermost=s["innermost"],
                           w_down_mat=w_down_mat, b_down=b_down, nc_down=nc_down,
                           w_up_mat=w_up_mat, b_up=b_up, nc_up=nc_up))
    return blocks


def _apply_block(x, blocks, idx):
    cfg = blocks[idx]
    if cfg["outermost"]:
        # down = [downconv]; up = [ReLU, upconvT(+bias), Tanh]; no skip concat
        d = conv2d_s2(x, cfg["w_down_mat"], cfg["b_down"], cfg["nc_down"])
        s = _apply_block(d, blocks, idx + 1)
        return conv_transpose2d_s2(s, cfg["w_up_mat"], cfg["b_up"], cfg["nc_up"],
                                   pre_act="relu", post_act="tanh",
                                   out_dtype=jnp.float32)
    elif cfg["innermost"]:
        # down = [LeakyReLU(0.2), downconv]; up = [ReLU, upconvT, BN]; skip concat.
        # The up-ReLU is fused into the down matmul epilogue (d has a single consumer).
        d = conv2d_s2(x, cfg["w_down_mat"], cfg["b_down"], cfg["nc_down"],
                      pre_act="lrelu", post_act="relu")
        u = conv_transpose2d_s2(d, cfg["w_up_mat"], cfg["b_up"], cfg["nc_up"],
                                with_bn=True)
        # TODO(synk): split this concat into two K-ranges of the consuming up-conv.
        return jnp.concatenate([x, u], axis=-1)
    else:
        # down = [LeakyReLU(0.2), downconv, BN]; up = [ReLU, upconvT, BN]; skip concat
        d = conv2d_s2(x, cfg["w_down_mat"], cfg["b_down"], cfg["nc_down"],
                      pre_act="lrelu", with_bn=True)
        s = _apply_block(d, blocks, idx + 1)
        u = conv_transpose2d_s2(s, cfg["w_up_mat"], cfg["b_up"], cfg["nc_up"],
                                pre_act="relu", with_bn=True)
        return jnp.concatenate([x, u], axis=-1)


def unet_forward(x_nchw, blocks):
    x = jnp.transpose(x_nchw, (0, 2, 3, 1)).astype(jnp.bfloat16)  # NCHW -> NHWC bf16
    y = _apply_block(x, blocks, 0)                                # outermost returns f32
    return jnp.transpose(y, (0, 3, 1, 2))                         # NHWC -> NCHW


# ------------------------- driver -------------------------

if __name__ == "__main__":
    INPUT_NC, OUTPUT_NC, NUM_DOWNS, NGF = 3, 3, 5, 8   # small synthetic config
    N, H, W = 2, 32, 32                                # 2^num_downs spatial -> 1x1 bottleneck

    key = jax.random.PRNGKey(0)
    kp, kx = jax.random.split(key)
    blocks = build_unet_params(kp, INPUT_NC, OUTPUT_NC, NUM_DOWNS, NGF)
    x = jax.random.normal(kx, (N, INPUT_NC, H, W), jnp.float32)  # NCHW like PyTorch

    forward = jax.jit(functools.partial(unet_forward, blocks=blocks))
    y = forward(x)
    jax.block_until_ready(y)

    assert y.shape == (N, OUTPUT_NC, H, W), y.shape
    assert y.dtype == jnp.float32
    assert bool(jnp.all(jnp.isfinite(y)))
    print("KERNEL_OK")
</pallas_src>

<mosaic_0001>
module attributes {stable_mosaic.version = 11 : i64} {
  func.func @kernel(%arg0: i32, %arg1: i32, %arg2: i32, %arg3: memref<512x48xbf16, #tpu.memory_space<vmem>>, %arg4: memref<48x128xbf16, #tpu.memory_space<vmem>>, %arg5: memref<1x128xf32, #tpu.memory_space<vmem>>, %arg6: memref<512x8xbf16, #tpu.memory_space<vmem>>, %arg7: memref<512x128xf32, #tpu.memory_space<vmem>>) attributes {dimension_semantics = [#tpu.dimension_semantics<parallel>, #tpu.dimension_semantics<parallel>, #tpu.dimension_semantics<arbitrary>], iteration_bounds = array<i64: 1, 1, 1>, scalar_prefetch = 0 : i64, scratch_operands = 1 : i64, tpu.core_type = #tpu.core_type<tc>, window_params = [{transform_indices = @transform_0, window_bounds = array<i64: 512, 48>}, {transform_indices = @transform_1, window_bounds = array<i64: 48, 128>}, {transform_indices = @transform_2, window_bounds = array<i64: 1, 128>}, {transform_indices = @transform_3, window_bounds = array<i64: 512, 8>}]} {
    %c0_i32 = arith.constant 0 : i32
    %0 = arith.cmpi eq, %arg2, %c0_i32 : i32
    %1 = arith.extui %0 : i1 to i32
    %c0_i32_0 = arith.constant 0 : i32
    %2 = arith.cmpi ne, %1, %c0_i32_0 : i32
    scf.if %2 {
      %cst_10 = arith.constant 0.000000e+00 : f32
      %12 = vector.broadcast %cst_10 : f32 to vector<512x128xf32>
      %c0_11 = arith.constant 0 : index
      %c0_12 = arith.constant 0 : index
      %13 = vector.load %arg7[%c0_11, %c0_12] : memref<512x128xf32, #tpu.memory_space<vmem>>, vector<512x128xf32>
      tpu.vector_store %arg7[%c0_11, %c0_12], %12 {strides = array<i32>} : memref<512x128xf32, #tpu.memory_space<vmem>>, vector<512x128xf32>,
    } else {
    }
    %c0 = arith.constant 0 : index
    %c0_1 = arith.constant 0 : index
    %3 = vector.load %arg3[%c0, %c0_1] : memref<512x48xbf16, #tpu.memory_space<vmem>>, vector<512x48xbf16>
    %c0_2 = arith.constant 0 : index
    %c0_3 = arith.constant 0 : index
    %4 = vector.load %arg4[%c0_2, %c0_3] : memref<48x128xbf16, #tpu.memory_space<vmem>>, vector<48x128xbf16>
    %c0_4 = arith.constant 0 : index
    %c0_5 = arith.constant 0 : index
    %5 = vector.load %arg7[%c0_4, %c0_5] : memref<512x128xf32, #tpu.memory_space<vmem>>, vector<512x128xf32>
    %cst = arith.constant dense<0.000000e+00> : vector<512x128xf32>
    %6 = tpu.matmul %3, %4, %cst {dimension_numbers = #tpu.dot_dimension_numbers<[1], [0], [0], [1], [0, 0, 1, 1], [], []>} : vector<512x48xbf16>, vector<48x128xbf16>, vector<512x128xf32> -> vector<512x128xf32>
    %7 = arith.addf %5, %6 : vector<512x128xf32>
    %c0_6 = arith.constant 0 : index
    %c0_7 = arith.constant 0 : index
    %8 = vector.load %arg7[%c0_6, %c0_7] : memref<512x128xf32, #tpu.memory_space<vmem>>, vector<512x128xf32>
    tpu.vector_store %arg7[%c0_6, %c0_7], %7 {strides = array<i32>} : memref<512x128xf32, #tpu.memory_space<vmem>>, vector<512x128xf32>,
    %c0_i32_8 = arith.constant 0 : i32
    %9 = arith.cmpi eq, %arg2, %c0_i32_8 : i32
    %10 = arith.extui %9 : i1 to i32
    %c0_i32_9 = arith.constant 0 : i32
    %11 = arith.cmpi ne, %10, %c0_i32_9 : i32
    scf.if %11 {
      %c0_10 = arith.constant 0 : index
      %c0_11 = arith.constant 0 : index
      %12 = vector.load %arg7[%c0_10, %c0_11] : memref<512x128xf32, #tpu.memory_space<vmem>>, vector<512x128xf32>
      %c0_12 = arith.constant 0 : index
      %c0_13 = arith.constant 0 : index
      %13 = vector.load %arg5[%c0_12, %c0_13] : memref<1x128xf32, #tpu.memory_space<vmem>>, vector<1x128xf32>
      %14 = vector.broadcast %13 : vector<1x128xf32> to vector<512x128xf32>
      %15 = arith.addf %12, %14 : vector<512x128xf32>
      %16 = vector.extract_strided_slice %15 {offsets = [0, 0], sizes = [512, 8], strides = [1, 1]} : vector<512x128xf32> to vector<512x8xf32>
      %17 = arith.truncf %16 : vector<512x8xf32> to vector<512x8xbf16>
      %c0_14 = arith.constant 0 : index
      %c0_15 = arith.constant 0 : index
      %18 = vector.load %arg6[%c0_14, %c0_15] : memref<512x8xbf16, #tpu.memory_space<vmem>>, vector<512x8xbf16>
      tpu.vector_store %arg6[%c0_14, %c0_15], %17 {strides = array<i32>} : memref<512x8xbf16, #tpu.memory_space<vmem>>, vector<512x8xbf16>,
    } else {
    }
    return
  }
  func.func @transform_0(%arg0: i32, %arg1: i32, %arg2: i32) -> (i32, i32) {
    %c0_i32 = arith.constant 0 : i32
    return %arg0, %arg2 : i32, i32
  }
  func.func @transform_1(%arg0: i32, %arg1: i32, %arg2: i32) -> (i32, i32) {
    %c0_i32 = arith.constant 0 : i32
    %c0_i32_0 = arith.constant 0 : i32
    return %c0_i32, %arg1 : i32, i32
  }
  func.func @transform_2(%arg0: i32, %arg1: i32, %arg2: i32) -> (i32, i32) {
    %c0_i32 = arith.constant 0 : i32
    %c0_i32_0 = arith.constant 0 : i32
    return %c0_i32, %arg1 : i32, i32
  }
  func.func @transform_3(%arg0: i32, %arg1: i32, %arg2: i32) -> (i32, i32) {
    %c0_i32 = arith.constant 0 : i32
    return %arg0, %arg1 : i32, i32
  }
}

module attributes {stable_mosaic.version = 11 : i64} {
  func.func @kernel(%arg0: i32, %arg1: i32, %arg2: i32, %arg3: memref<128x128xbf16, #tpu.memory_space<vmem>>, %arg4: memref<128x128xbf16, #tpu.memory_space<vmem>>, %arg5: memref<1x128xf32, #tpu.memory_space<vmem>>, %arg6: memref<128x16xbf16, #tpu.memory_space<vmem>>, %arg7: memref<1x8x16xf32, #tpu.memory_space<vmem>>, %arg8: memref<1x8x16xf32, #tpu.memory_space<vmem>>, %arg9: memref<128x128xf32, #tpu.memory_space<vmem>>) attributes {dimension_semantics = [#tpu.dimension_semantics<parallel>, #tpu.dimension_semantics<parallel>, #tpu.dimension_semantics<arbitrary>], iteration_bounds = array<i64: 1, 1, 1>, scalar_prefetch = 0 : i64, scratch_operands = 1 : i64, tpu.core_type = #tpu.core_type<tc>, window_params = [{transform_indices = @transform_0, window_bounds = array<i64: 128, 128>}, {transform_indices = @transform_1, window_bounds = array<i64: 128, 128>}, {transform_indices = @transform_2, window_bounds = array<i64: 1, 128>}, {transform_indices = @transform_3, window_bounds = array<i64: 128, 16>}, {transform_indices = @transform_4, window_bounds = array<i64: 1, 8, 16>}, {transform_indices = @transform_5, window_bounds = array<i64: 1, 8, 16>}]} {
    %c0_i32 = arith.constant 0 : i32
    %0 = arith.cmpi eq, %arg2, %c0_i32 : i32
    %1 = arith.extui %0 : i1 to i32
    %c0_i32_0 = arith.constant 0 : i32
    %2 = arith.cmpi ne, %1, %c0_i32_0 : i32
    scf.if %2 {
      %cst_12 = arith.constant 0.000000e+00 : f32
      %17 = vector.broadcast %cst_12 : f32 to vector<128x128xf32>
      %c0_13 = arith.constant 0 : index
      %c0_14 = arith.constant 0 : index
      %18 = vector.load %arg9[%c0_13, %c0_14] : memref<128x128xf32, #tpu.memory_space<vmem>>, vector<128x128xf32>
      tpu.vector_store %arg9[%c0_13, %c0_14], %17 {strides = array<i32>} : memref<128x128xf32, #tpu.memory_space<vmem>>, vector<128x128xf32>,
    } else {
    }
    %c0 = arith.constant 0 : index
    %c0_1 = arith.constant 0 : index
    %3 = vector.load %arg3[%c0, %c0_1] : memref<128x128xbf16, #tpu.memory_space<vmem>>, vector<128x128xbf16>
    %cst = arith.constant 0.000000e+00 : bf16
    %4 = vector.broadcast %cst : bf16 to vector<128x128xbf16>
    %5 = arith.cmpf ogt, %3, %4 : vector<128x128xbf16>
    %cst_2 = arith.constant 2.001950e-01 : bf16
    %6 = vector.broadcast %cst_2 : bf16 to vector<128x128xbf16>
    %7 = arith.mulf %6, %3 : vector<128x128xbf16>
    %8 = arith.select %5, %3, %7 : vector<128x128xi1>, vector<128x128xbf16>
    %c0_3 = arith.constant 0 : index
    %c0_4 = arith.constant 0 : index
    %9 = vector.load %arg4[%c0_3, %c0_4] : memref<128x128xbf16, #tpu.memory_space<vmem>>, vector<128x128xbf16>
    %c0_5 = arith.constant 0 : index
    %c0_6 = arith.constant 0 : index
    %10 = vector.load %arg9[%c0_5, %c0_6] : memref<128x128xf32, #tpu.memory_space<vmem>>, vector<128x128xf32>
    %cst_7 = arith.constant dense<0.000000e+00> : vector<128x128xf32>
    %11 = tpu.matmul %8, %9, %cst_7 {dimension_numbers = #tpu.dot_dimension_numbers<[1], [0], [0], [1], [0, 0, 1, 1], [], []>} : vector<128x128xbf16>, vector<128x128xbf16>, vector<128x128xf32> -> vector<128x128xf32>
    %12 = arith.addf %10, %11 : vector<128x128xf32>
    %c0_8 = arith.constant 0 : index
    %c0_9 = arith.constant 0 : index
    %13 = vector.load %arg9[%c0_8, %c0_9] : memref<128x128xf32, #tpu.memory_space<vmem>>, vector<128x128xf32>
    tpu.vector_store %arg9[%c0_8, %c0_9], %12 {strides = array<i32>} : memref<128x128xf32, #tpu.memory_space<vmem>>, vector<128x128xf32>,
    %c0_i32_10 = arith.constant 0 : i32
    %14 = arith.cmpi eq, %arg2, %c0_i32_10 : i32
    %15 = arith.extui %14 : i1 to i32
    %c0_i32_11 = arith.constant 0 : i32
    %16 = arith.cmpi ne, %15, %c0_i32_11 : i32
    scf.if %16 {
      %c0_12 = arith.constant 0 : index
      %c0_13 = arith.constant 0 : index
      %17 = vector.load %arg9[%c0_12, %c0_13] : memref<128x128xf32, #tpu.memory_space<vmem>>, vector<128x128xf32>
      %c0_14 = arith.constant 0 : index
      %c0_15 = arith.constant 0 : index
      %18 = vector.load %arg5[%c0_14, %c0_15] : memref<1x128xf32, #tpu.memory_space<vmem>>, vector<1x128xf32>
      %19 = vector.broadcast %18 : vector<1x128xf32> to vector<128x128xf32>
      %20 = arith.addf %17, %19 : vector<128x128xf32>
      %21 = vector.extract_strided_slice %20 {offsets = [0, 0], sizes = [128, 16], strides = [1, 1]} : vector<128x128xf32> to vector<128x16xf32>
      %cst_16 = arith.constant dense<0.000000e+00> : vector<16xf32>
      %22 = vector.multi_reduction <add>, %21, %cst_16 [0] : vector<128x16xf32> to vector<16xf32>
      %23 = vector.shape_cast %22 : vector<16xf32> to vector<1x16xf32>
      %24 = arith.mulf %21, %21 : vector<128x16xf32>
      %cst_17 = arith.constant dense<0.000000e+00> : vector<16xf32>
      %25 = vector.multi_reduction <add>, %24, %cst_17 [0] : vector<128x16xf32> to vector<16xf32>
      %26 = vector.shape_cast %25 : vector<16xf32> to vector<1x16xf32>
      %27 = vector.shape_cast %23 : vector<1x16xf32> to vector<1x1x16xf32>
      %28 = vector.shape_cast %27 : vector<1x1x16xf32> to vector<1x1x16xf32>
      %29 = vector.broadcast %28 : vector<1x1x16xf32> to vector<1x8x16xf32>
      %c0_18 = arith.constant 0 : index
      %c0_19 = arith.constant 0 : index
      %c0_20 = arith.constant 0 : index
      %30 = vector.load %arg7[%c0_18, %c0_19, %c0_20] : memref<1x8x16xf32, #tpu.memory_space<vmem>>, vector<1x8x16xf32>
      tpu.vector_store %arg7[%c0_18, %c0_19, %c0_20], %29 {strides = array<i32>} : memref<1x8x16xf32, #tpu.memory_space<vmem>>, vector<1x8x16xf32>,
      %31 = vector.shape_cast %26 : vector<1x16xf32> to vector<1x1x16xf32>
      %32 = vector.shape_cast %31 : vector<1x1x16xf32> to vector<1x1x16xf32>
      %33 = vector.broadcast %32 : vector<1x1x16xf32> to vector<1x8x16xf32>
      %c0_21 = arith.constant 0 : index
      %c0_22 = arith.constant 0 : index
      %c0_23 = arith.constant 0 : index
      %34 = vector.load %arg8[%c0_21, %c0_22, %c0_23] : memref<1x8x16xf32, #tpu.memory_space<vmem>>, vector<1x8x16xf32>
      tpu.vector_store %arg8[%c0_21, %c0_22, %c0_23], %33 {strides = array<i32>} : memref<1x8x16xf32, #tpu.memory_space<vmem>>, vector<1x8x16xf32>,
      %35 = arith.truncf %21 : vector<128x16xf32> to vector<128x16xbf16>
      %c0_24 = arith.constant 0 : index
      %c0_25 = arith.constant 0 : index
      %36 = vector.load %arg6[%c0_24, %c0_25] : memref<128x16xbf16, #tpu.memory_space<vmem>>, vector<128x16xbf16>
      tpu.vector_store %arg6[%c0_24, %c0_25], %35 {strides = array<i32>} : memref<128x16xbf16, #tpu.memory_space<vmem>>, vector<128x16xbf16>,
    } else {
    }
    return
  }
  func.func @transform_0(%arg0: i32, %arg1: i32, %arg2: i32) -> (i32, i32) {
    %c0_i32 = arith.constant 0 : i32
    return %arg0, %arg2 : i32, i32
  }
  func.func @transform_1(%arg0: i32, %arg1: i32, %arg2: i32) -> (i32, i32) {
    %c0_i32 = arith.constant 0 : i32
    %c0_i32_0 = arith.constant 0 : i32
    return %c0_i32, %arg1 : i32, i32
  }
  func.func @transform_2(%arg0: i32, %arg1: i32, %arg2: i32) -> (i32, i32) {
    %c0_i32 = arith.constant 0 : i32
    %c0_i32_0 = arith.constant 0 : i32
    return %c0_i32, %arg1 : i32, i32
  }
  func.func @transform_3(%arg0: i32, %arg1: i32, %arg2: i32) -> (i32, i32) {
    %c0_i32 = arith.constant 0 : i32
    return %arg0, %arg1 : i32, i32
  }
  func.func @transform_4(%arg0: i32, %arg1: i32, %arg2: i32) -> (i32, i32, i32) {
    %c0_i32 = arith.constant 0 : i32
    %c0_i32_0 = arith.constant 0 : i32
    return %arg0, %c0_i32, %arg1 : i32, i32, i32
  }
  func.func @transform_5(%arg0: i32, %arg1: i32, %arg2: i32) -> (i32, i32, i32) {
    %c0_i32 = arith.constant 0 : i32
    %c0_i32_0 = arith.constant 0 : i32
    return %arg0, %c0_i32, %arg1 : i32, i32, i32
  }
}

module attributes {stable_mosaic.version = 11 : i64} {
  func.func @_bn_norm_kernel(%arg0: i32, %arg1: memref<128x16xbf16, #tpu.memory_space<vmem>>, %arg2: memref<1x16xf32, #tpu.memory_space<vmem>>, %arg3: memref<1x16xf32, #tpu.memory_space<vmem>>, %arg4: memref<128x16xbf16, #tpu.memory_space<vmem>>) attributes {dimension_semantics = [#tpu.dimension_semantics<parallel>], iteration_bounds = array<i64: 1>, scalar_prefetch = 0 : i64, scratch_operands = 0 : i64, tpu.core_type = #tpu.core_type<tc>, window_params = [{transform_indices = @transform_0, window_bounds = array<i64: 128, 16>}, {pipeline_mode = #tpu.pipeline_mode<synchronous>, transform_indices = @transform_1, window_bounds = array<i64: 1, 16>}, {pipeline_mode = #tpu.pipeline_mode<synchronous>, transform_indices = @transform_2, window_bounds = array<i64: 1, 16>}, {transform_indices = @transform_3, window_bounds = array<i64: 128, 16>}]} {
    %c0 = arith.constant 0 : index
    %c0_0 = arith.constant 0 : index
    %0 = vector.load %arg1[%c0, %c0_0] : memref<128x16xbf16, #tpu.memory_space<vmem>>, vector<128x16xbf16>
    %1 = arith.extf %0 : vector<128x16xbf16> to vector<128x16xf32>
    %c0_1 = arith.constant 0 : index
    %c0_2 = arith.constant 0 : index
    %2 = vector.load %arg2[%c0_1, %c0_2] : memref<1x16xf32, #tpu.memory_space<vmem>>, vector<1x16xf32>
    %3 = vector.broadcast %2 : vector<1x16xf32> to vector<128x16xf32>
    %4 = arith.subf %1, %3 : vector<128x16xf32>
    %c0_3 = arith.constant 0 : index
    %c0_4 = arith.constant 0 : index
    %5 = vector.load %arg3[%c0_3, %c0_4] : memref<1x16xf32, #tpu.memory_space<vmem>>, vector<1x16xf32>
    %6 = vector.broadcast %5 : vector<1x16xf32> to vector<128x16xf32>
    %7 = arith.mulf %4, %6 : vector<128x16xf32>
    %8 = arith.truncf %7 : vector<128x16xf32> to vector<128x16xbf16>
    %c0_5 = arith.constant 0 : index
    %c0_6 = arith.constant 0 : index
    %9 = vector.load %arg4[%c0_5, %c0_6] : memref<128x16xbf16, #tpu.memory_space<vmem>>, vector<128x16xbf16>
    tpu.vector_store %arg4[%c0_5, %c0_6], %8 {strides = array<i32>} : memref<128x16xbf16, #tpu.memory_space<vmem>>, vector<128x16xbf16>,
    return
  }
  func.func @transform_0(%arg0: i32) -> (i32, i32) {
    %c0_i32 = arith.constant 0 : i32
    %c0_i32_0 = arith.constant 0 : i32
    return %arg0, %c0_i32 : i32, i32
  }
  func.func @transform_1(%arg0: i32) -> (i32, i32) {
    %c0_i32 = arith.constant 0 : i32
    %c0_i32_0 = arith.constant 0 : i32
    %c0_i32_1 = arith.constant 0 : i32
    return %c0_i32, %c0_i32_0 : i32, i32
  }
  func.func @transform_2(%arg0: i32) -> (i32, i32) {
    %c0_i32 = arith.constant 0 : i32
    %c0_i32_0 = arith.constant 0 : i32
    %c0_i32_1 = arith.constant 0 : i32
    return %c0_i32, %c0_i32_0 : i32, i32
  }
  func.func @transform_3(%arg0: i32) -> (i32, i32) {
    %c0_i32 = arith.constant 0 : i32
    %c0_i32_0 = arith.constant 0 : i32
    return %arg0, %c0_i32 : i32, i32
  }
}

module attributes {stable_mosaic.version = 11 : i64} {
  func.func @kernel(%arg0: i32, %arg1: i32, %arg2: i32, %arg3: memref<32x256xbf16, #tpu.memory_space<vmem>>, %arg4: memref<256x128xbf16, #tpu.memory_space<vmem>>, %arg5: memref<1x128xf32, #tpu.memory_space<vmem>>, %arg6: memref<32x32xbf16, #tpu.memory_space<vmem>>, %arg7: memref<1x8x32xf32, #tpu.memory_space<vmem>>, %arg8: memref<1x8x32xf32, #tpu.memory_space<vmem>>, %arg9: memref<32x128xf32, #tpu.memory_space<vmem>>) attributes {dimension_semantics = [#tpu.dimension_semantics<parallel>, #tpu.dimension_semantics<parallel>, #tpu.dimension_semantics<arbitrary>], iteration_bounds = array<i64: 1, 1, 1>, scalar_prefetch = 0 : i64, scratch_operands = 1 : i64, tpu.core_type = #tpu.core_type<tc>, window_params = [{transform_indices = @transform_0, window_bounds = array<i64: 32, 256>}, {transform_indices = @transform_1, window_bounds = array<i64: 256, 128>}, {transform_indices = @transform_2, window_bounds = array<i64: 1, 128>}, {transform_indices = @transform_3, window_bounds = array<i64: 32, 32>}, {transform_indices = @transform_4, window_bounds = array<i64: 1, 8, 32>}, {transform_indices = @transform_5, window_bounds = array<i64: 1, 8, 32>}]} {
    %c0_i32 = arith.constant 0 : i32
    %0 = arith.cmpi eq, %arg2, %c0_i32 : i32
    %1 = arith.extui %0 : i1 to i32
    %c0_i32_0 = arith.constant 0 : i32
    %2 = arith.cmpi ne, %1, %c0_i32_0 : i32
    scf.if %2 {
      %cst_12 = arith.constant 0.000000e+00 : f32
      %17 = vector.broadcast %cst_12 : f32 to vector<32x128xf32>
      %c0_13 = arith.constant 0 : index
      %c0_14 = arith.constant 0 : index
      %18 = vector.load %arg9[%c0_13, %c0_14] : memref<32x128xf32, #tpu.memory_space<vmem>>, vector<32x128xf32>
      tpu.vector_store %arg9[%c0_13, %c0_14], %17 {strides = array<i32>} : memref<32x128xf32, #tpu.memory_space<vmem>>, vector<32x128xf32>,
    } else {
    }
    %c0 = arith.constant 0 : index
    %c0_1 = arith.constant 0 : index
    %3 = vector.load %arg3[%c0, %c0_1] : memref<32x256xbf16, #tpu.memory_space<vmem>>, vector<32x256xbf16>
    %cst = arith.constant 0.000000e+00 : bf16
    %4 = vector.broadcast %cst : bf16 to vector<32x256xbf16>
    %5 = arith.cmpf ogt, %3, %4 : vector<32x256xbf16>
    %cst_2 = arith.constant 2.001950e-01 : bf16
    %6 = vector.broadcast %cst_2 : bf16 to vector<32x256xbf16>
    %7 = arith.mulf %6, %3 : vector<32x256xbf16>
    %8 = arith.select %5, %3, %7 : vector<32x256xi1>, vector<32x256xbf16>
    %c0_3 = arith.constant 0 : index
    %c0_4 = arith.constant 0 : index
    %9 = vector.load %arg4[%c0_3, %c0_4] : memref<256x128xbf16, #tpu.memory_space<vmem>>, vector<256x128xbf16>
    %c0_5 = arith.constant 0 : index
    %c0_6 = arith.constant 0 : index
    %10 = vector.load %arg9[%c0_5, %c0_6] : memref<32x128xf32, #tpu.memory_space<vmem>>, vector<32x128xf32>
    %cst_7 = arith.constant dense<0.000000e+00> : vector<32x128xf32>
    %11 = tpu.matmul %8, %9, %cst_7 {dimension_numbers = #tpu.dot_dimension_numbers<[1], [0], [0], [1], [0, 0, 1, 1], [], []>} : vector<32x256xbf16>, vector<256x128xbf16>, vector<32x128xf32> -> vector<32x128xf32>
    %12 = arith.addf %10, %11 : vector<32x128xf32>
    %c0_8 = arith.constant 0 : index
    %c0_9 = arith.constant 0 : index
    %13 = vector.load %arg9[%c0_8, %c0_9] : memref<32x128xf32, #tpu.memory_space<vmem>>, vector<32x128xf32>
    tpu.vector_store %arg9[%c0_8, %c0_9], %12 {strides = array<i32>} : memref<32x128xf32, #tpu.memory_space<vmem>>, vector<32x128xf32>,
    %c0_i32_10 = arith.constant 0 : i32
    %14 = arith.cmpi eq, %arg2, %c0_i32_10 : i32
    %15 = arith.extui %14 : i1 to i32
    %c0_i32_11 = arith.constant 0 : i32
    %16 = arith.cmpi ne, %15, %c0_i32_11 : i32
    scf.if %16 {
      %c0_12 = arith.constant 0 : index
      %c0_13 = arith.constant 0 : index
      %17 = vector.load %arg9[%c0_12, %c0_13] : memref<32x128xf32, #tpu.memory_space<vmem>>, vector<32x128xf32>
      %c0_14 = arith.constant 0 : index
      %c0_15 = arith.constant 0 : index
      %18 = vector.load %arg5[%c0_14, %c0_15] : memref<1x128xf32, #tpu.memory_space<vmem>>, vector<1x128xf32>
      %19 = vector.broadcast %18 : vector<1x128xf32> to vector<32x128xf32>
      %20 = arith.addf %17, %19 : vector<32x128xf32>
      %21 = vector.extract_strided_slice %20 {offsets = [0, 0], sizes = [32, 32], strides = [1, 1]} : vector<32x128xf32> to vector<32x32xf32>
      %cst_16 = arith.constant dense<0.000000e+00> : vector<32xf32>
      %22 = vector.multi_reduction <add>, %21, %cst_16 [0] : vector<32x32xf32> to vector<32xf32>
      %23 = vector.shape_cast %22 : vector<32xf32> to vector<1x32xf32>
      %24 = arith.mulf %21, %21 : vector<32x32xf32>
      %cst_17 = arith.constant dense<0.000000e+00> : vector<32xf32>
      %25 = vector.multi_reduction <add>, %24, %cst_17 [0] : vector<32x32xf32> to vector<32xf32>
      %26 = vector.shape_cast %25 : vector<32xf32> to vector<1x32xf32>
      %27 = vector.shape_cast %23 : vector<1x32xf32> to vector<1x1x32xf32>
      %28 = vector.shape_cast %27 : vector<1x1x32xf32> to vector<1x1x32xf32>
      %29 = vector.broadcast %28 : vector<1x1x32xf32> to vector<1x8x32xf32>
      %c0_18 = arith.constant 0 : index
      %c0_19 = arith.constant 0 : index
      %c0_20 = arith.constant 0 : index
      %30 = vector.load %arg7[%c0_18, %c0_19, %c0_20] : memref<1x8x32xf32, #tpu.memory_space<vmem>>, vector<1x8x32xf32>
      tpu.vector_store %arg7[%c0_18, %c0_19, %c0_20], %29 {strides = array<i32>} : memref<1x8x32xf32, #tpu.memory_space<vmem>>, vector<1x8x32xf32>,
      %31 = vector.shape_cast %26 : vector<1x32xf32> to vector<1x1x32xf32>
      %32 = vector.shape_cast %31 : vector<1x1x32xf32> to vector<1x1x32xf32>
      %33 = vector.broadcast %32 : vector<1x1x32xf32> to vector<1x8x32xf32>
      %c0_21 = arith.constant 0 : index
      %c0_22 = arith.constant 0 : index
      %c0_23 = arith.constant 0 : index
      %34 = vector.load %arg8[%c0_21, %c0_22, %c0_23] : memref<1x8x32xf32, #tpu.memory_space<vmem>>, vector<1x8x32xf32>
      tpu.vector_store %arg8[%c0_21, %c0_22, %c0_23], %33 {strides = array<i32>} : memref<1x8x32xf32, #tpu.memory_space<vmem>>, vector<1x8x32xf32>,
      %35 = arith.truncf %21 : vector<32x32xf32> to vector<32x32xbf16>
      %c0_24 = arith.constant 0 : index
      %c0_25 = arith.constant 0 : index
      %36 = vector.load %arg6[%c0_24, %c0_25] : memref<32x32xbf16, #tpu.memory_space<vmem>>, vector<32x32xbf16>
      tpu.vector_store %arg6[%c0_24, %c0_25], %35 {strides = array<i32>} : memref<32x32xbf16, #tpu.memory_space<vmem>>, vector<32x32xbf16>,
    } else {
    }
    return
  }
  func.func @transform_0(%arg0: i32, %arg1: i32, %arg2: i32) -> (i32, i32) {
    %c0_i32 = arith.constant 0 : i32
    return %arg0, %arg2 : i32, i32
  }
  func.func @transform_1(%arg0: i32, %arg1: i32, %arg2: i32) -> (i32, i32) {
    %c0_i32 = arith.constant 0 : i32
    %c0_i32_0 = arith.constant 0 : i32
    return %c0_i32, %arg1 : i32, i32
  }
  func.func @transform_2(%arg0: i32, %arg1: i32, %arg2: i32) -> (i32, i32) {
    %c0_i32 = arith.constant 0 : i32
    %c0_i32_0 = arith.constant 0 : i32
    return %c0_i32, %arg1 : i32, i32
  }
  func.func @transform_3(%arg0: i32, %arg1: i32, %arg2: i32) -> (i32, i32) {
    %c0_i32 = arith.constant 0 : i32
    return %arg0, %arg1 : i32, i32
  }
  func.func @transform_4(%arg0: i32, %arg1: i32, %arg2: i32) -> (i32, i32, i32) {
    %c0_i32 = arith.constant 0 : i32
    %c0_i32_0 = arith.constant 0 : i32
    return %arg0, %c0_i32, %arg1 : i32, i32, i32
  }
  func.func @transform_5(%arg0: i32, %arg1: i32, %arg2: i32) -> (i32, i32, i32) {
    %c0_i32 = arith.constant 0 : i32
    %c0_i32_0 = arith.constant 0 : i32
    return %arg0, %c0_i32, %arg1 : i32, i32, i32
  }
}

module attributes {stable_mosaic.version = 11 : i64} {
  func.func @_bn_norm_kernel(%arg0: i32, %arg1: memref<32x32xbf16, #tpu.memory_space<vmem>>, %arg2: memref<1x32xf32, #tpu.memory_space<vmem>>, %arg3: memref<1x32xf32, #tpu.memory_space<vmem>>, %arg4: memref<32x32xbf16, #tpu.memory_space<vmem>>) attributes {dimension_semantics = [#tpu.dimension_semantics<parallel>], iteration_bounds = array<i64: 1>, scalar_prefetch = 0 : i64, scratch_operands = 0 : i64, tpu.core_type = #tpu.core_type<tc>, window_params = [{transform_indices = @transform_0, window_bounds = array<i64: 32, 32>}, {pipeline_mode = #tpu.pipeline_mode<synchronous>, transform_indices = @transform_1, window_bounds = array<i64: 1, 32>}, {pipeline_mode = #tpu.pipeline_mode<synchronous>, transform_indices = @transform_2, window_bounds = array<i64: 1, 32>}, {transform_indices = @transform_3, window_bounds = array<i64: 32, 32>}]} {
    %c0 = arith.constant 0 : index
    %c0_0 = arith.constant 0 : index
    %0 = vector.load %arg1[%c0, %c0_0] : memref<32x32xbf16, #tpu.memory_space<vmem>>, vector<32x32xbf16>
    %1 = arith.extf %0 : vector<32x32xbf16> to vector<32x32xf32>
    %c0_1 = arith.constant 0 : index
    %c0_2 = arith.constant 0 : index
    %2 = vector.load %arg2[%c0_1, %c0_2] : memref<1x32xf32, #tpu.memory_space<vmem>>, vector<1x32xf32>
    %3 = vector.broadcast %2 : vector<1x32xf32> to vector<32x32xf32>
    %4 = arith.subf %1, %3 : vector<32x32xf32>
    %c0_3 = arith.constant 0 : index
    %c0_4 = arith.constant 0 : index
    %5 = vector.load %arg3[%c0_3, %c0_4] : memref<1x32xf32, #tpu.memory_space<vmem>>, vector<1x32xf32>
    %6 = vector.broadcast %5 : vector<1x32xf32> to vector<32x32xf32>
    %7 = arith.mulf %4, %6 : vector<32x32xf32>
    %8 = arith.truncf %7 : vector<32x32xf32> to vector<32x32xbf16>
    %c0_5 = arith.constant 0 : index
    %c0_6 = arith.constant 0 : index
    %9 = vector.load %arg4[%c0_5, %c0_6] : memref<32x32xbf16, #tpu.memory_space<vmem>>, vector<32x32xbf16>
    tpu.vector_store %arg4[%c0_5, %c0_6], %8 {strides = array<i32>} : memref<32x32xbf16, #tpu.memory_space<vmem>>, vector<32x32xbf16>,
    return
  }
  func.func @transform_0(%arg0: i32) -> (i32, i32) {
    %c0_i32 = arith.constant 0 : i32
    %c0_i32_0 = arith.constant 0 : i32
    return %arg0, %c0_i32 : i32, i32
  }
  func.func @transform_1(%arg0: i32) -> (i32, i32) {
    %c0_i32 = arith.constant 0 : i32
    %c0_i32_0 = arith.constant 0 : i32
    %c0_i32_1 = arith.constant 0 : i32
    return %c0_i32, %c0_i32_0 : i32, i32
  }
  func.func @transform_2(%arg0: i32) -> (i32, i32) {
    %c0_i32 = arith.constant 0 : i32
    %c0_i32_0 = arith.constant 0 : i32
    %c0_i32_1 = arith.constant 0 : i32
    return %c0_i32, %c0_i32_0 : i32, i32
  }
  func.func @transform_3(%arg0: i32) -> (i32, i32) {
    %c0_i32 = arith.constant 0 : i32
    %c0_i32_0 = arith.constant 0 : i32
    return %arg0, %c0_i32 : i32, i32
  }
}

module attributes {stable_mosaic.version = 11 : i64} {
  func.func @_bn_norm_kernel(%arg0: i32, %arg1: memref<16x64xbf16, #tpu.memory_space<vmem>>, %arg2: memref<1x64xf32, #tpu.memory_space<vmem>>, %arg3: memref<1x64xf32, #tpu.memory_space<vmem>>, %arg4: memref<16x64xbf16, #tpu.memory_space<vmem>>) attributes {dimension_semantics = [#tpu.dimension_semantics<parallel>], iteration_bounds = array<i64: 1>, scalar_prefetch = 0 : i64, scratch_operands = 0 : i64, tpu.core_type = #tpu.core_type<tc>, window_params = [{transform_indices = @transform_0, window_bounds = array<i64: 16, 64>}, {pipeline_mode = #tpu.pipeline_mode<synchronous>, transform_indices = @transform_1, window_bounds = array<i64: 1, 64>}, {pipeline_mode = #tpu.pipeline_mode<synchronous>, transform_indices = @transform_2, window_bounds = array<i64: 1, 64>}, {transform_indices = @transform_3, window_bounds = array<i64: 16, 64>}]} {
    %c0 = arith.constant 0 : index
    %c0_0 = arith.constant 0 : index
    %0 = vector.load %arg1[%c0, %c0_0] : memref<16x64xbf16, #tpu.memory_space<vmem>>, vector<16x64xbf16>
    %1 = arith.extf %0 : vector<16x64xbf16> to vector<16x64xf32>
    %c0_1 = arith.constant 0 : index
    %c0_2 = arith.constant 0 : index
    %2 = vector.load %arg2[%c0_1, %c0_2] : memref<1x64xf32, #tpu.memory_space<vmem>>, vector<1x64xf32>
    %3 = vector.broadcast %2 : vector<1x64xf32> to vector<16x64xf32>
    %4 = arith.subf %1, %3 : vector<16x64xf32>
    %c0_3 = arith.constant 0 : index
    %c0_4 = arith.constant 0 : index
    %5 = vector.load %arg3[%c0_3, %c0_4] : memref<1x64xf32, #tpu.memory_space<vmem>>, vector<1x64xf32>
    %6 = vector.broadcast %5 : vector<1x64xf32> to vector<16x64xf32>
    %7 = arith.mulf %4, %6 : vector<16x64xf32>
    %8 = arith.truncf %7 : vector<16x64xf32> to vector<16x64xbf16>
    %c0_5 = arith.constant 0 : index
    %c0_6 = arith.constant 0 : index
    %9 = vector.load %arg4[%c0_5, %c0_6] : memref<16x64xbf16, #tpu.memory_space<vmem>>, vector<16x64xbf16>
    tpu.vector_store %arg4[%c0_5, %c0_6], %8 {strides = array<i32>} : memref<16x64xbf16, #tpu.memory_space<vmem>>, vector<16x64xbf16>,
    return
  }
  func.func @transform_0(%arg0: i32) -> (i32, i32) {
    %c0_i32 = arith.constant 0 : i32
    %c0_i32_0 = arith.constant 0 : i32
    return %arg0, %c0_i32 : i32, i32
  }
  func.func @transform_1(%arg0: i32) -> (i32, i32) {
    %c0_i32 = arith.constant 0 : i32
    %c0_i32_0 = arith.constant 0 : i32
    %c0_i32_1 = arith.constant 0 : i32
    return %c0_i32, %c0_i32_0 : i32, i32
  }
  func.func @transform_2(%arg0: i32) -> (i32, i32) {
    %c0_i32 = arith.constant 0 : i32
    %c0_i32_0 = arith.constant 0 : i32
    %c0_i32_1 = arith.constant 0 : i32
    return %c0_i32, %c0_i32_0 : i32, i32
  }
  func.func @transform_3(%arg0: i32) -> (i32, i32) {
    %c0_i32 = arith.constant 0 : i32
    %c0_i32_0 = arith.constant 0 : i32
    return %arg0, %c0_i32 : i32, i32
  }
}

module attributes {stable_mosaic.version = 11 : i64} {
  func.func @kernel(%arg0: i32, %arg1: i32, %arg2: i32, %arg3: memref<16x512xbf16, #tpu.memory_space<vmem>>, %arg4: memref<512x128xbf16, #tpu.memory_space<vmem>>, %arg5: memref<1x128xf32, #tpu.memory_space<vmem>>, %arg6: memref<16x64xbf16, #tpu.memory_space<vmem>>, %arg7: memref<1x8x64xf32, #tpu.memory_space<vmem>>, %arg8: memref<1x8x64xf32, #tpu.memory_space<vmem>>, %arg9: memref<16x128xf32, #tpu.memory_space<vmem>>) attributes {dimension_semantics = [#tpu.dimension_semantics<parallel>, #tpu.dimension_semantics<parallel>, #tpu.dimension_semantics<arbitrary>], iteration_bounds = array<i64: 1, 1, 1>, scalar_prefetch = 0 : i64, scratch_operands = 1 : i64, tpu.core_type = #tpu.core_type<tc>, window_params = [{transform_indices = @transform_0, window_bounds = array<i64: 16, 512>}, {transform_indices = @transform_1, window_bounds = array<i64: 512, 128>}, {transform_indices = @transform_2, window_bounds = array<i64: 1, 128>}, {transform_indices = @transform_3, window_bounds = array<i64: 16, 64>}, {transform_indices = @transform_4, window_bounds = array<i64: 1, 8, 64>}, {transform_indices = @transform_5, window_bounds = array<i64: 1, 8, 64>}]} {
    %c0_i32 = arith.constant 0 : i32
    %0 = arith.cmpi eq, %arg2, %c0_i32 : i32
    %1 = arith.extui %0 : i1 to i32
    %c0_i32_0 = arith.constant 0 : i32
    %2 = arith.cmpi ne, %1, %c0_i32_0 : i32
    scf.if %2 {
      %cst_12 = arith.constant 0.000000e+00 : f32
      %17 = vector.broadcast %cst_12 : f32 to vector<16x128xf32>
      %c0_13 = arith.constant 0 : index
      %c0_14 = arith.constant 0 : index
      %18 = vector.load %arg9[%c0_13, %c0_14] : memref<16x128xf32, #tpu.memory_space<vmem>>, vector<16x128xf32>
      tpu.vector_store %arg9[%c0_13, %c0_14], %17 {strides = array<i32>} : memref<16x128xf32, #tpu.memory_space<vmem>>, vector<16x128xf32>,
    } else {
    }
    %c0 = arith.constant 0 : index
    %c0_1 = arith.constant 0 : index
    %3 = vector.load %arg3[%c0, %c0_1] : memref<16x512xbf16, #tpu.memory_space<vmem>>, vector<16x512xbf16>
    %cst = arith.constant 0.000000e+00 : bf16
    %4 = vector.broadcast %cst : bf16 to vector<16x512xbf16>
    %5 = arith.cmpf ogt, %3, %4 : vector<16x512xbf16>
    %cst_2 = arith.constant 2.001950e-01 : bf16
    %6 = vector.broadcast %cst_2 : bf16 to vector<16x512xbf16>
    %7 = arith.mulf %6, %3 : vector<16x512xbf16>
    %8 = arith.select %5, %3, %7 : vector<16x512xi1>, vector<16x512xbf16>
    %c0_3 = arith.constant 0 : index
    %c0_4 = arith.constant 0 : index
    %9 = vector.load %arg4[%c0_3, %c0_4] : memref<512x128xbf16, #tpu.memory_space<vmem>>, vector<512x128xbf16>
    %c0_5 = arith.constant 0 : index
    %c0_6 = arith.constant 0 : index
    %10 = vector.load %arg9[%c0_5, %c0_6] : memref<16x128xf32, #tpu.memory_space<vmem>>, vector<16x128xf32>
    %cst_7 = arith.constant dense<0.000000e+00> : vector<16x128xf32>
    %11 = tpu.matmul %8, %9, %cst_7 {dimension_numbers = #tpu.dot_dimension_numbers<[1], [0], [0], [1], [0, 0, 1, 1], [], []>} : vector<16x512xbf16>, vector<512x128xbf16>, vector<16x128xf32> -> vector<16x128xf32>
    %12 = arith.addf %10, %11 : vector<16x128xf32>
    %c0_8 = arith.constant 0 : index
    %c0_9 = arith.constant 0 : index
    %13 = vector.load %arg9[%c0_8, %c0_9] : memref<16x128xf32, #tpu.memory_space<vmem>>, vector<16x128xf32>
    tpu.vector_store %arg9[%c0_8, %c0_9], %12 {strides = array<i32>} : memref<16x128xf32, #tpu.memory_space<vmem>>, vector<16x128xf32>,
    %c0_i32_10 = arith.constant 0 : i32
    %14 = arith.cmpi eq, %arg2, %c0_i32_10 : i32
    %15 = arith.extui %14 : i1 to i32
    %c0_i32_11 = arith.constant 0 : i32
    %16 = arith.cmpi ne, %15, %c0_i32_11 : i32
    scf.if %16 {
      %c0_12 = arith.constant 0 : index
      %c0_13 = arith.constant 0 : index
      %17 = vector.load %arg9[%c0_12, %c0_13] : memref<16x128xf32, #tpu.memory_space<vmem>>, vector<16x128xf32>
      %c0_14 = arith.constant 0 : index
      %c0_15 = arith.constant 0 : index
      %18 = vector.load %arg5[%c0_14, %c0_15] : memref<1x128xf32, #tpu.memory_space<vmem>>, vector<1x128xf32>
      %19 = vector.broadcast %18 : vector<1x128xf32> to vector<16x128xf32>
      %20 = arith.addf %17, %19 : vector<16x128xf32>
      %21 = vector.extract_strided_slice %20 {offsets = [0, 0], sizes = [16, 64], strides = [1, 1]} : vector<16x128xf32> to vector<16x64xf32>
      %cst_16 = arith.constant dense<0.000000e+00> : vector<64xf32>
      %22 = vector.multi_reduction <add>, %21, %cst_16 [0] : vector<16x64xf32> to vector<64xf32>
      %23 = vector.shape_cast %22 : vector<64xf32> to vector<1x64xf32>
      %24 = arith.mulf %21, %21 : vector<16x64xf32>
      %cst_17 = arith.constant dense<0.000000e+00> : vector<64xf32>
      %25 = vector.multi_reduction <add>, %24, %cst_17 [0] : vector<16x64xf32> to vector<64xf32>
      %26 = vector.shape_cast %25 : vector<64xf32> to vector<1x64xf32>
      %27 = vector.shape_cast %23 : vector<1x64xf32> to vector<1x1x64xf32>
      %28 = vector.shape_cast %27 : vector<1x1x64xf32> to vector<1x1x64xf32>
      %29 = vector.broadcast %28 : vector<1x1x64xf32> to vector<1x8x64xf32>
      %c0_18 = arith.constant 0 : index
      %c0_19 = arith.constant 0 : index
      %c0_20 = arith.constant 0 : index
      %30 = vector.load %arg7[%c0_18, %c0_19, %c0_20] : memref<1x8x64xf32, #tpu.memory_space<vmem>>, vector<1x8x64xf32>
      tpu.vector_store %arg7[%c0_18, %c0_19, %c0_20], %29 {strides = array<i32>} : memref<1x8x64xf32, #tpu.memory_space<vmem>>, vector<1x8x64xf32>,
      %31 = vector.shape_cast %26 : vector<1x64xf32> to vector<1x1x64xf32>
      %32 = vector.shape_cast %31 : vector<1x1x64xf32> to vector<1x1x64xf32>
      %33 = vector.broadcast %32 : vector<1x1x64xf32> to vector<1x8x64xf32>
      %c0_21 = arith.constant 0 : index
      %c0_22 = arith.constant 0 : index
      %c0_23 = arith.constant 0 : index
      %34 = vector.load %arg8[%c0_21, %c0_22, %c0_23] : memref<1x8x64xf32, #tpu.memory_space<vmem>>, vector<1x8x64xf32>
      tpu.vector_store %arg8[%c0_21, %c0_22, %c0_23], %33 {strides = array<i32>} : memref<1x8x64xf32, #tpu.memory_space<vmem>>, vector<1x8x64xf32>,
      %35 = arith.truncf %21 : vector<16x64xf32> to vector<16x64xbf16>
      %c0_24 = arith.constant 0 : index
      %c0_25 = arith.constant 0 : index
      %36 = vector.load %arg6[%c0_24, %c0_25] : memref<16x64xbf16, #tpu.memory_space<vmem>>, vector<16x64xbf16>
      tpu.vector_store %arg6[%c0_24, %c0_25], %35 {strides = array<i32>} : memref<16x64xbf16, #tpu.memory_space<vmem>>, vector<16x64xbf16>,
    } else {
    }
    return
  }
  func.func @transform_0(%arg0: i32, %arg1: i32, %arg2: i32) -> (i32, i32) {
    %c0_i32 = arith.constant 0 : i32
    return %arg0, %arg2 : i32, i32
  }
  func.func @transform_1(%arg0: i32, %arg1: i32, %arg2: i32) -> (i32, i32) {
    %c0_i32 = arith.constant 0 : i32
    %c0_i32_0 = arith.constant 0 : i32
    return %c0_i32, %arg1 : i32, i32
  }
  func.func @transform_2(%arg0: i32, %arg1: i32, %arg2: i32) -> (i32, i32) {
    %c0_i32 = arith.constant 0 : i32
    %c0_i32_0 = arith.constant 0 : i32
    return %c0_i32, %arg1 : i32, i32
  }
  func.func @transform_3(%arg0: i32, %arg1: i32, %arg2: i32) -> (i32, i32) {
    %c0_i32 = arith.constant 0 : i32
    return %arg0, %arg1 : i32, i32
  }
  func.func @transform_4(%arg0: i32, %arg1: i32, %arg2: i32) -> (i32, i32, i32) {
    %c0_i32 = arith.constant 0 : i32
    %c0_i32_0 = arith.constant 0 : i32
    return %arg0, %c0_i32, %arg1 : i32, i32, i32
  }
  func.func @transform_5(%arg0: i32, %arg1: i32, %arg2: i32) -> (i32, i32, i32) {
    %c0_i32 = arith.constant 0 : i32
    %c0_i32_0 = arith.constant 0 : i32
    return %arg0, %c0_i32, %arg1 : i32, i32, i32
  }
}

module attributes {stable_mosaic.version = 11 : i64} {
  func.func @kernel(%arg0: i32, %arg1: i32, %arg2: i32, %arg3: memref<16x576xbf16, #tpu.memory_space<vmem>>, %arg4: memref<576x256xbf16, #tpu.memory_space<vmem>>, %arg5: memref<1x256xf32, #tpu.memory_space<vmem>>, %arg6: memref<16x256xbf16, #tpu.memory_space<vmem>>, %arg7: memref<1x8x256xf32, #tpu.memory_space<vmem>>, %arg8: memref<1x8x256xf32, #tpu.memory_space<vmem>>, %arg9: memref<16x256xf32, #tpu.memory_space<vmem>>) attributes {dimension_semantics = [#tpu.dimension_semantics<parallel>, #tpu.dimension_semantics<parallel>, #tpu.dimension_semantics<arbitrary>], iteration_bounds = array<i64: 1, 1, 1>, scalar_prefetch = 0 : i64, scratch_operands = 1 : i64, tpu.core_type = #tpu.core_type<tc>, window_params = [{transform_indices = @transform_0, window_bounds = array<i64: 16, 576>}, {transform_indices = @transform_1, window_bounds = array<i64: 576, 256>}, {transform_indices = @transform_2, window_bounds = array<i64: 1, 256>}, {transform_indices = @transform_3, window_bounds = array<i64: 16, 256>}, {transform_indices = @transform_4, window_bounds = array<i64: 1, 8, 256>}, {transform_indices = @transform_5, window_bounds = array<i64: 1, 8, 256>}]} {
    %c0_i32 = arith.constant 0 : i32
    %0 = arith.cmpi eq, %arg2, %c0_i32 : i32
    %1 = arith.extui %0 : i1 to i32
    %c0_i32_0 = arith.constant 0 : i32
    %2 = arith.cmpi ne, %1, %c0_i32_0 : i32
    scf.if %2 {
      %cst_10 = arith.constant 0.000000e+00 : f32
      %12 = vector.broadcast %cst_10 : f32 to vector<16x256xf32>
      %c0_11 = arith.constant 0 : index
      %c0_12 = arith.constant 0 : index
      %13 = vector.load %arg9[%c0_11, %c0_12] : memref<16x256xf32, #tpu.memory_space<vmem>>, vector<16x256xf32>
      tpu.vector_store %arg9[%c0_11, %c0_12], %12 {strides = array<i32>} : memref<16x256xf32, #tpu.memory_space<vmem>>, vector<16x256xf32>,
    } else {
    }
    %c0 = arith.constant 0 : index
    %c0_1 = arith.constant 0 : index
    %3 = vector.load %arg3[%c0, %c0_1] : memref<16x576xbf16, #tpu.memory_space<vmem>>, vector<16x576xbf16>
    %c0_2 = arith.constant 0 : index
    %c0_3 = arith.constant 0 : index
    %4 = vector.load %arg4[%c0_2, %c0_3] : memref<576x256xbf16, #tpu.memory_space<vmem>>, vector<576x256xbf16>
    %c0_4 = arith.constant 0 : index
    %c0_5 = arith.constant 0 : index
    %5 = vector.load %arg9[%c0_4, %c0_5] : memref<16x256xf32, #tpu.memory_space<vmem>>, vector<16x256xf32>
    %cst = arith.constant dense<0.000000e+00> : vector<16x256xf32>
    %6 = tpu.matmul %3, %4, %cst {dimension_numbers = #tpu.dot_dimension_numbers<[1], [0], [0], [1], [0, 0, 1, 1], [], []>} : vector<16x576xbf16>, vector<576x256xbf16>, vector<16x256xf32> -> vector<16x256xf32>
    %7 = arith.addf %5, %6 : vector<16x256xf32>
    %c0_6 = arith.constant 0 : index
    %c0_7 = arith.constant 0 : index
    %8 = vector.load %arg9[%c0_6, %c0_7] : memref<16x256xf32, #tpu.memory_space<vmem>>, vector<16x256xf32>
    tpu.vector_store %arg9[%c0_6, %c0_7], %7 {strides = array<i32>} : memref<16x256xf32, #tpu.memory_space<vmem>>, vector<16x256xf32>,
    %c0_i32_8 = arith.constant 0 : i32
    %9 = arith.cmpi eq, %arg2, %c0_i32_8 : i32
    %10 = arith.extui %9 : i1 to i32
    %c0_i32_9 = arith.constant 0 : i32
    %11 = arith.cmpi ne, %10, %c0_i32_9 : i32
    scf.if %11 {
      %c0_10 = arith.constant 0 : index
      %c0_11 = arith.constant 0 : index
      %12 = vector.load %arg9[%c0_10, %c0_11] : memref<16x256xf32, #tpu.memory_space<vmem>>, vector<16x256xf32>
      %c0_12 = arith.constant 0 : index
      %c0_13 = arith.constant 0 : index
      %13 = vector.load %arg5[%c0_12, %c0_13] : memref<1x256xf32, #tpu.memory_space<vmem>>, vector<1x256xf32>
      %14 = vector.broadcast %13 : vector<1x256xf32> to vector<16x256xf32>
      %15 = arith.addf %12, %14 : vector<16x256xf32>
      %cst_14 = arith.constant dense<0.000000e+00> : vector<256xf32>
      %16 = vector.multi_reduction <add>, %15, %cst_14 [0] : vector<16x256xf32> to vector<256xf32>
      %17 = vector.shape_cast %16 : vector<256xf32> to vector<1x256xf32>
      %18 = arith.mulf %15, %15 : vector<16x256xf32>
      %cst_15 = arith.constant dense<0.000000e+00> : vector<256xf32>
      %19 = vector.multi_reduction <add>, %18, %cst_15 [0] : vector<16x256xf32> to vector<256xf32>
      %20 = vector.shape_cast %19 : vector<256xf32> to vector<1x256xf32>
      %21 = vector.shape_cast %17 : vector<1x256xf32> to vector<1x1x256xf32>
      %22 = vector.shape_cast %21 : vector<1x1x256xf32> to vector<1x1x256xf32>
      %23 = vector.broadcast %22 : vector<1x1x256xf32> to vector<1x8x256xf32>
      %c0_16 = arith.constant 0 : index
      %c0_17 = arith.constant 0 : index
      %c0_18 = arith.constant 0 : index
      %24 = vector.load %arg7[%c0_16, %c0_17, %c0_18] : memref<1x8x256xf32, #tpu.memory_space<vmem>>, vector<1x8x256xf32>
      tpu.vector_store %arg7[%c0_16, %c0_17, %c0_18], %23 {strides = array<i32>} : memref<1x8x256xf32, #tpu.memory_space<vmem>>, vector<1x8x256xf32>,
      %25 = vector.shape_cast %20 : vector<1x256xf32> to vector<1x1x256xf32>
      %26 = vector.shape_cast %25 : vector<1x1x256xf32> to vector<1x1x256xf32>
      %27 = vector.broadcast %26 : vector<1x1x256xf32> to vector<1x8x256xf32>
      %c0_19 = arith.constant 0 : index
      %c0_20 = arith.constant 0 : index
      %c0_21 = arith.constant 0 : index
      %28 = vector.load %arg8[%c0_19, %c0_20, %c0_21] : memref<1x8x256xf32, #tpu.memory_space<vmem>>, vector<1x8x256xf32>
      tpu.vector_store %arg8[%c0_19, %c0_20, %c0_21], %27 {strides = array<i32>} : memref<1x8x256xf32, #tpu.memory_space<vmem>>, vector<1x8x256xf32>,
      %29 = arith.truncf %15 : vector<16x256xf32> to vector<16x256xbf16>
      %c0_22 = arith.constant 0 : index
      %c0_23 = arith.constant 0 : index
      %30 = vector.load %arg6[%c0_22, %c0_23] : memref<16x256xbf16, #tpu.memory_space<vmem>>, vector<16x256xbf16>
      tpu.vector_store %arg6[%c0_22, %c0_23], %29 {strides = array<i32>} : memref<16x256xbf16, #tpu.memory_space<vmem>>, vector<16x256xbf16>,
    } else {
    }
    return
  }
  func.func @transform_0(%arg0: i32, %arg1: i32, %arg2: i32) -> (i32, i32) {
    %c0_i32 = arith.constant 0 : i32
    return %arg0, %arg2 : i32, i32
  }
  func.func @transform_1(%arg0: i32, %arg1: i32, %arg2: i32) -> (i32, i32) {
    %c0_i32 = arith.constant 0 : i32
    %c0_i32_0 = arith.constant 0 : i32
    return %c0_i32, %arg1 : i32, i32
  }
  func.func @transform_2(%arg0: i32, %arg1: i32, %arg2: i32) -> (i32, i32) {
    %c0_i32 = arith.constant 0 : i32
    %c0_i32_0 = arith.constant 0 : i32
    return %c0_i32, %arg1 : i32, i32
  }
  func.func @transform_3(%arg0: i32, %arg1: i32, %arg2: i32) -> (i32, i32) {
    %c0_i32 = arith.constant 0 : i32
    return %arg0, %arg1 : i32, i32
  }
  func.func @transform_4(%arg0: i32, %arg1: i32, %arg2: i32) -> (i32, i32, i32) {
    %c0_i32 = arith.constant 0 : i32
    %c0_i32_0 = arith.constant 0 : i32
    return %arg0, %c0_i32, %arg1 : i32, i32, i32
  }
  func.func @transform_5(%arg0: i32, %arg1: i32, %arg2: i32) -> (i32, i32, i32) {
    %c0_i32 = arith.constant 0 : i32
    %c0_i32_0 = arith.constant 0 : i32
    return %arg0, %c0_i32, %arg1 : i32, i32, i32
  }
}

module attributes {stable_mosaic.version = 11 : i64} {
  func.func @kernel(%arg0: i32, %arg1: i32, %arg2: i32, %arg3: memref<16x1024xbf16, #tpu.memory_space<vmem>>, %arg4: memref<1024x128xbf16, #tpu.memory_space<vmem>>, %arg5: memref<1x128xf32, #tpu.memory_space<vmem>>, %arg6: memref<16x64xbf16, #tpu.memory_space<vmem>>, %arg7: memref<16x128xf32, #tpu.memory_space<vmem>>) attributes {dimension_semantics = [#tpu.dimension_semantics<parallel>, #tpu.dimension_semantics<parallel>, #tpu.dimension_semantics<arbitrary>], iteration_bounds = array<i64: 1, 1, 1>, scalar_prefetch = 0 : i64, scratch_operands = 1 : i64, tpu.core_type = #tpu.core_type<tc>, window_params = [{transform_indices = @transform_0, window_bounds = array<i64: 16, 1024>}, {transform_indices = @transform_1, window_bounds = array<i64: 1024, 128>}, {transform_indices = @transform_2, window_bounds = array<i64: 1, 128>}, {transform_indices = @transform_3, window_bounds = array<i64: 16, 64>}]} {
    %c0_i32 = arith.constant 0 : i32
    %0 = arith.cmpi eq, %arg2, %c0_i32 : i32
    %1 = arith.extui %0 : i1 to i32
    %c0_i32_0 = arith.constant 0 : i32
    %2 = arith.cmpi ne, %1, %c0_i32_0 : i32
    scf.if %2 {
      %cst_12 = arith.constant 0.000000e+00 : f32
      %17 = vector.broadcast %cst_12 : f32 to vector<16x128xf32>
      %c0_13 = arith.constant 0 : index
      %c0_14 = arith.constant 0 : index
      %18 = vector.load %arg7[%c0_13, %c0_14] : memref<16x128xf32, #tpu.memory_space<vmem>>, vector<16x128xf32>
      tpu.vector_store %arg7[%c0_13, %c0_14], %17 {strides = array<i32>} : memref<16x128xf32, #tpu.memory_space<vmem>>, vector<16x128xf32>,
    } else {
    }
    %c0 = arith.constant 0 : index
    %c0_1 = arith.constant 0 : index
    %3 = vector.load %arg3[%c0, %c0_1] : memref<16x1024xbf16, #tpu.memory_space<vmem>>, vector<16x1024xbf16>
    %cst = arith.constant 0.000000e+00 : bf16
    %4 = vector.broadcast %cst : bf16 to vector<16x1024xbf16>
    %5 = arith.cmpf ogt, %3, %4 : vector<16x1024xbf16>
    %cst_2 = arith.constant 2.001950e-01 : bf16
    %6 = vector.broadcast %cst_2 : bf16 to vector<16x1024xbf16>
    %7 = arith.mulf %6, %3 : vector<16x1024xbf16>
    %8 = arith.select %5, %3, %7 : vector<16x1024xi1>, vector<16x1024xbf16>
    %c0_3 = arith.constant 0 : index
    %c0_4 = arith.constant 0 : index
    %9 = vector.load %arg4[%c0_3, %c0_4] : memref<1024x128xbf16, #tpu.memory_space<vmem>>, vector<1024x128xbf16>
    %c0_5 = arith.constant 0 : index
    %c0_6 = arith.constant 0 : index
    %10 = vector.load %arg7[%c0_5, %c0_6] : memref<16x128xf32, #tpu.memory_space<vmem>>, vector<16x128xf32>
    %cst_7 = arith.constant dense<0.000000e+00> : vector<16x128xf32>
    %11 = tpu.matmul %8, %9, %cst_7 {dimension_numbers = #tpu.dot_dimension_numbers<[1], [0], [0], [1], [0, 0, 1, 1], [], []>} : vector<16x1024xbf16>, vector<1024x128xbf16>, vector<16x128xf32> -> vector<16x128xf32>
    %12 = arith.addf %10, %11 : vector<16x128xf32>
    %c0_8 = arith.constant 0 : index
    %c0_9 = arith.constant 0 : index
    %13 = vector.load %arg7[%c0_8, %c0_9] : memref<16x128xf32, #tpu.memory_space<vmem>>, vector<16x128xf32>
    tpu.vector_store %arg7[%c0_8, %c0_9], %12 {strides = array<i32>} : memref<16x128xf32, #tpu.memory_space<vmem>>, vector<16x128xf32>,
    %c0_i32_10 = arith.constant 0 : i32
    %14 = arith.cmpi eq, %arg2, %c0_i32_10 : i32
    %15 = arith.extui %14 : i1 to i32
    %c0_i32_11 = arith.constant 0 : i32
    %16 = arith.cmpi ne, %15, %c0_i32_11 : i32
    scf.if %16 {
      %c0_12 = arith.constant 0 : index
      %c0_13 = arith.constant 0 : index
      %17 = vector.load %arg7[%c0_12, %c0_13] : memref<16x128xf32, #tpu.memory_space<vmem>>, vector<16x128xf32>
      %c0_14 = arith.constant 0 : index
      %c0_15 = arith.constant 0 : index
      %18 = vector.load %arg5[%c0_14, %c0_15] : memref<1x128xf32, #tpu.memory_space<vmem>>, vector<1x128xf32>
      %19 = vector.broadcast %18 : vector<1x128xf32> to vector<16x128xf32>
      %20 = arith.addf %17, %19 : vector<16x128xf32>
      %21 = vector.extract_strided_slice %20 {offsets = [0, 0], sizes = [16, 64], strides = [1, 1]} : vector<16x128xf32> to vector<16x64xf32>
      %cst_16 = arith.constant 0.000000e+00 : f32
      %22 = vector.broadcast %cst_16 : f32 to vector<16x64xf32>
      %23 = arith.maximumf %21, %22 : vector<16x64xf32>
      %24 = arith.truncf %23 : vector<16x64xf32> to vector<16x64xbf16>
      %c0_17 = arith.constant 0 : index
      %c0_18 = arith.constant 0 : index
      %25 = vector.load %arg6[%c0_17, %c0_18] : memref<16x64xbf16, #tpu.memory_space<vmem>>, vector<16x64xbf16>
      tpu.vector_store %arg6[%c0_17, %c0_18], %24 {strides = array<i32>} : memref<16x64xbf16, #tpu.memory_space<vmem>>, vector<16x64xbf16>,
    } else {
    }
    return
  }
  func.func @transform_0(%arg0: i32, %arg1: i32, %arg2: i32) -> (i32, i32) {
    %c0_i32 = arith.constant 0 : i32
    return %arg0, %arg2 : i32, i32
  }
  func.func @transform_1(%arg0: i32, %arg1: i32, %arg2: i32) -> (i32, i32) {
    %c0_i32 = arith.constant 0 : i32
    %c0_i32_0 = arith.constant 0 : i32
    return %c0_i32, %arg1 : i32, i32
  }
  func.func @transform_2(%arg0: i32, %arg1: i32, %arg2: i32) -> (i32, i32) {
    %c0_i32 = arith.constant 0 : i32
    %c0_i32_0 = arith.constant 0 : i32
    return %c0_i32, %arg1 : i32, i32
  }
  func.func @transform_3(%arg0: i32, %arg1: i32, %arg2: i32) -> (i32, i32) {
    %c0_i32 = arith.constant 0 : i32
    return %arg0, %arg1 : i32, i32
  }
}

module attributes {stable_mosaic.version = 11 : i64} {
  func.func @_bn_norm_kernel(%arg0: i32, %arg1: memref<16x256xbf16, #tpu.memory_space<vmem>>, %arg2: memref<1x256xf32, #tpu.memory_space<vmem>>, %arg3: memref<1x256xf32, #tpu.memory_space<vmem>>, %arg4: memref<16x256xbf16, #tpu.memory_space<vmem>>) attributes {dimension_semantics = [#tpu.dimension_semantics<parallel>], iteration_bounds = array<i64: 1>, scalar_prefetch = 0 : i64, scratch_operands = 0 : i64, tpu.core_type = #tpu.core_type<tc>, window_params = [{transform_indices = @transform_0, window_bounds = array<i64: 16, 256>}, {pipeline_mode = #tpu.pipeline_mode<synchronous>, transform_indices = @transform_1, window_bounds = array<i64: 1, 256>}, {pipeline_mode = #tpu.pipeline_mode<synchronous>, transform_indices = @transform_2, window_bounds = array<i64: 1, 256>}, {transform_indices = @transform_3, window_bounds = array<i64: 16, 256>}]} {
    %c0 = arith.constant 0 : index
    %c0_0 = arith.constant 0 : index
    %0 = vector.load %arg1[%c0, %c0_0] : memref<16x256xbf16, #tpu.memory_space<vmem>>, vector<16x256xbf16>
    %1 = arith.extf %0 : vector<16x256xbf16> to vector<16x256xf32>
    %c0_1 = arith.constant 0 : index
    %c0_2 = arith.constant 0 : index
    %2 = vector.load %arg2[%c0_1, %c0_2] : memref<1x256xf32, #tpu.memory_space<vmem>>, vector<1x256xf32>
    %3 = vector.broadcast %2 : vector<1x256xf32> to vector<16x256xf32>
    %4 = arith.subf %1, %3 : vector<16x256xf32>
    %c0_3 = arith.constant 0 : index
    %c0_4 = arith.constant 0 : index
    %5 = vector.load %arg3[%c0_3, %c0_4] : memref<1x256xf32, #tpu.memory_space<vmem>>, vector<1x256xf32>
    %6 = vector.broadcast %5 : vector<1x256xf32> to vector<16x256xf32>
    %7 = arith.mulf %4, %6 : vector<16x256xf32>
    %8 = arith.truncf %7 : vector<16x256xf32> to vector<16x256xbf16>
    %c0_5 = arith.constant 0 : index
    %c0_6 = arith.constant 0 : index
    %9 = vector.load %arg4[%c0_5, %c0_6] : memref<16x256xbf16, #tpu.memory_space<vmem>>, vector<16x256xbf16>
    tpu.vector_store %arg4[%c0_5, %c0_6], %8 {strides = array<i32>} : memref<16x256xbf16, #tpu.memory_space<vmem>>, vector<16x256xbf16>,
    return
  }
  func.func @transform_0(%arg0: i32) -> (i32, i32) {
    %c0_i32 = arith.constant 0 : i32
    %c0_i32_0 = arith.constant 0 : i32
    return %arg0, %c0_i32 : i32, i32
  }
  func.func @transform_1(%arg0: i32) -> (i32, i32) {
    %c0_i32 = arith.constant 0 : i32
    %c0_i32_0 = arith.constant 0 : i32
    %c0_i32_1 = arith.constant 0 : i32
    return %c0_i32, %c0_i32_0 : i32, i32
  }
  func.func @transform_2(%arg0: i32) -> (i32, i32) {
    %c0_i32 = arith.constant 0 : i32
    %c0_i32_0 = arith.constant 0 : i32
    %c0_i32_1 = arith.constant 0 : i32
    return %c0_i32, %c0_i32_0 : i32, i32
  }
  func.func @transform_3(%arg0: i32) -> (i32, i32) {
    %c0_i32 = arith.constant 0 : i32
    %c0_i32_0 = arith.constant 0 : i32
    return %arg0, %c0_i32 : i32, i32
  }
}

module attributes {stable_mosaic.version = 11 : i64} {
  func.func @kernel(%arg0: i32, %arg1: i32, %arg2: i32, %arg3: memref<16x384xbf16, #tpu.memory_space<vmem>>, %arg4: memref<1152x128xbf16, #tpu.memory_space<vmem>>, %arg5: memref<1x128xf32, #tpu.memory_space<vmem>>, %arg6: memref<16x128xbf16, #tpu.memory_space<vmem>>, %arg7: memref<1x8x128xf32, #tpu.memory_space<vmem>>, %arg8: memref<1x8x128xf32, #tpu.memory_space<vmem>>, %arg9: memref<16x128xf32, #tpu.memory_space<vmem>>) attributes {dimension_semantics = [#tpu.dimension_semantics<parallel>, #tpu.dimension_semantics<parallel>, #tpu.dimension_semantics<arbitrary>], iteration_bounds = array<i64: 1, 1, 3>, scalar_prefetch = 0 : i64, scratch_operands = 1 : i64, tpu.core_type = #tpu.core_type<tc>, window_params = [{transform_indices = @transform_0, window_bounds = array<i64: 16, 384>}, {transform_indices = @transform_1, window_bounds = array<i64: 1152, 128>}, {transform_indices = @transform_2, window_bounds = array<i64: 1, 128>}, {transform_indices = @transform_3, window_bounds = array<i64: 16, 128>}, {transform_indices = @transform_4, window_bounds = array<i64: 1, 8, 128>}, {transform_indices = @transform_5, window_bounds = array<i64: 1, 8, 128>}]} {
    %c0_i32 = arith.constant 0 : i32
    %0 = arith.cmpi eq, %arg2, %c0_i32 : i32
    %1 = arith.extui %0 : i1 to i32
    %c0_i32_0 = arith.constant 0 : i32
    %2 = arith.cmpi ne, %1, %c0_i32_0 : i32
    scf.if %2 {
      %cst_9 = arith.constant 0.000000e+00 : f32
      %17 = vector.broadcast %cst_9 : f32 to vector<16x128xf32>
      %c0_10 = arith.constant 0 : index
      %c0_11 = arith.constant 0 : index
      %18 = vector.load %arg9[%c0_10, %c0_11] : memref<16x128xf32, #tpu.memory_space<vmem>>, vector<16x128xf32>
      tpu.vector_store %arg9[%c0_10, %c0_11], %17 {strides = array<i32>} : memref<16x128xf32, #tpu.memory_space<vmem>>, vector<16x128xf32>,
    } else {
    }
    %c0 = arith.constant 0 : index
    %c0_1 = arith.constant 0 : index
    %3 = vector.load %arg3[%c0, %c0_1] : memref<16x384xbf16, #tpu.memory_space<vmem>>, vector<16x384xbf16>
    %cst = arith.constant 0.000000e+00 : bf16
    %4 = vector.broadcast %cst : bf16 to vector<16x384xbf16>
    %5 = arith.maximumf %3, %4 : vector<16x384xbf16>
    %c384_i32 = arith.constant 384 : i32
    %6 = arith.muli %arg2, %c384_i32 : i32
    %7 = tpu.assume_multiple %6, 384 : i32
    %8 = arith.index_cast %7 : i32 to index
    %c0_2 = arith.constant 0 : index
    %9 = vector.load %arg4[%8, %c0_2] : memref<1152x128xbf16, #tpu.memory_space<vmem>>, vector<384x128xbf16>
    %c0_3 = arith.constant 0 : index
    %c0_4 = arith.constant 0 : index
    %10 = vector.load %arg9[%c0_3, %c0_4] : memref<16x128xf32, #tpu.memory_space<vmem>>, vector<16x128xf32>
    %cst_5 = arith.constant dense<0.000000e+00> : vector<16x128xf32>
    %11 = tpu.matmul %5, %9, %cst_5 {dimension_numbers = #tpu.dot_dimension_numbers<[1], [0], [0], [1], [0, 0, 1, 1], [], []>} : vector<16x384xbf16>, vector<384x128xbf16>, vector<16x128xf32> -> vector<16x128xf32>
    %12 = arith.addf %10, %11 : vector<16x128xf32>
    %c0_6 = arith.constant 0 : index
    %c0_7 = arith.constant 0 : index
    %13 = vector.load %arg9[%c0_6, %c0_7] : memref<16x128xf32, #tpu.memory_space<vmem>>, vector<16x128xf32>
    tpu.vector_store %arg9[%c0_6, %c0_7], %12 {strides = array<i32>} : memref<16x128xf32, #tpu.memory_space<vmem>>, vector<16x128xf32>,
    %c2_i32 = arith.constant 2 : i32
    %14 = arith.cmpi eq, %arg2, %c2_i32 : i32
    %15 = arith.extui %14 : i1 to i32
    %c0_i32_8 = arith.constant 0 : i32
    %16 = arith.cmpi ne, %15, %c0_i32_8 : i32
    scf.if %16 {
      %c0_9 = arith.constant 0 : index
      %c0_10 = arith.constant 0 : index
      %17 = vector.load %arg9[%c0_9, %c0_10] : memref<16x128xf32, #tpu.memory_space<vmem>>, vector<16x128xf32>
      %c0_11 = arith.constant 0 : index
      %c0_12 = arith.constant 0 : index
      %18 = vector.load %arg5[%c0_11, %c0_12] : memref<1x128xf32, #tpu.memory_space<vmem>>, vector<1x128xf32>
      %19 = vector.broadcast %18 : vector<1x128xf32> to vector<16x128xf32>
      %20 = arith.addf %17, %19 : vector<16x128xf32>
      %cst_13 = arith.constant dense<0.000000e+00> : vector<128xf32>
      %21 = vector.multi_reduction <add>, %20, %cst_13 [0] : vector<16x128xf32> to vector<128xf32>
      %22 = vector.shape_cast %21 : vector<128xf32> to vector<1x128xf32>
      %23 = arith.mulf %20, %20 : vector<16x128xf32>
      %cst_14 = arith.constant dense<0.000000e+00> : vector<128xf32>
      %24 = vector.multi_reduction <add>, %23, %cst_14 [0] : vector<16x128xf32> to vector<128xf32>
      %25 = vector.shape_cast %24 : vector<128xf32> to vector<1x128xf32>
      %26 = vector.shape_cast %22 : vector<1x128xf32> to vector<1x1x128xf32>
      %27 = vector.shape_cast %26 : vector<1x1x128xf32> to vector<1x1x128xf32>
      %28 = vector.broadcast %27 : vector<1x1x128xf32> to vector<1x8x128xf32>
      %c0_15 = arith.constant 0 : index
      %c0_16 = arith.constant 0 : index
      %c0_17 = arith.constant 0 : index
      %29 = vector.load %arg7[%c0_15, %c0_16, %c0_17] : memref<1x8x128xf32, #tpu.memory_space<vmem>>, vector<1x8x128xf32>
      tpu.vector_store %arg7[%c0_15, %c0_16, %c0_17], %28 {strides = array<i32>} : memref<1x8x128xf32, #tpu.memory_space<vmem>>, vector<1x8x128xf32>,
      %30 = vector.shape_cast %25 : vector<1x128xf32> to vector<1x1x128xf32>
      %31 = vector.shape_cast %30 : vector<1x1x128xf32> to vector<1x1x128xf32>
      %32 = vector.broadcast %31 : vector<1x1x128xf32> to vector<1x8x128xf32>
      %c0_18 = arith.constant 0 : index
      %c0_19 = arith.constant 0 : index
      %c0_20 = arith.constant 0 : index
      %33 = vector.load %arg8[%c0_18, %c0_19, %c0_20] : memref<1x8x128xf32, #tpu.memory_space<vmem>>, vector<1x8x128xf32>
      tpu.vector_store %arg8[%c0_18, %c0_19, %c0_20], %32 {strides = array<i32>} : memref<1x8x128xf32, #tpu.memory_space<vmem>>, vector<1x8x128xf32>,
      %34 = arith.truncf %20 : vector<16x128xf32> to vector<16x128xbf16>
      %c0_21 = arith.constant 0 : index
      %c0_22 = arith.constant 0 : index
      %35 = vector.load %arg6[%c0_21, %c0_22] : memref<16x128xbf16, #tpu.memory_space<vmem>>, vector<16x128xbf16>
      tpu.vector_store %arg6[%c0_21, %c0_22], %34 {strides = array<i32>} : memref<16x128xbf16, #tpu.memory_space<vmem>>, vector<16x128xbf16>,
    } else {
    }
    return
  }
  func.func @transform_0(%arg0: i32, %arg1: i32, %arg2: i32) -> (i32, i32) {
    %c0_i32 = arith.constant 0 : i32
    return %arg0, %arg2 : i32, i32
  }
  func.func @transform_1(%arg0: i32, %arg1: i32, %arg2: i32) -> (i32, i32) {
    %c0_i32 = arith.constant 0 : i32
    %c0_i32_0 = arith.constant 0 : i32
    return %c0_i32, %arg1 : i32, i32
  }
  func.func @transform_2(%arg0: i32, %arg1: i32, %arg2: i32) -> (i32, i32) {
    %c0_i32 = arith.constant 0 : i32
    %c0_i32_0 = arith.constant 0 : i32
    return %c0_i32, %arg1 : i32, i32
  }
  func.func @transform_3(%arg0: i32, %arg1: i32, %arg2: i32) -> (i32, i32) {
    %c0_i32 = arith.constant 0 : i32
    return %arg0, %arg1 : i32, i32
  }
  func.func @transform_4(%arg0: i32, %arg1: i32, %arg2: i32) -> (i32, i32, i32) {
    %c0_i32 = arith.constant 0 : i32
    %c0_i32_0 = arith.constant 0 : i32
    return %arg0, %c0_i32, %arg1 : i32, i32, i32
  }
  func.func @transform_5(%arg0: i32, %arg1: i32, %arg2: i32) -> (i32, i32, i32) {
    %c0_i32 = arith.constant 0 : i32
    %c0_i32_0 = arith.constant 0 : i32
    return %arg0, %c0_i32, %arg1 : i32, i32, i32
  }
}

module attributes {stable_mosaic.version = 11 : i64} {
  func.func @_bn_norm_kernel(%arg0: i32, %arg1: memref<16x128xbf16, #tpu.memory_space<vmem>>, %arg2: memref<1x128xf32, #tpu.memory_space<vmem>>, %arg3: memref<1x128xf32, #tpu.memory_space<vmem>>, %arg4: memref<16x128xbf16, #tpu.memory_space<vmem>>) attributes {dimension_semantics = [#tpu.dimension_semantics<parallel>], iteration_bounds = array<i64: 1>, scalar_prefetch = 0 : i64, scratch_operands = 0 : i64, tpu.core_type = #tpu.core_type<tc>, window_params = [{transform_indices = @transform_0, window_bounds = array<i64: 16, 128>}, {pipeline_mode = #tpu.pipeline_mode<synchronous>, transform_indices = @transform_1, window_bounds = array<i64: 1, 128>}, {pipeline_mode = #tpu.pipeline_mode<synchronous>, transform_indices = @transform_2, window_bounds = array<i64: 1, 128>}, {transform_indices = @transform_3, window_bounds = array<i64: 16, 128>}]} {
    %c0 = arith.constant 0 : index
    %c0_0 = arith.constant 0 : index
    %0 = vector.load %arg1[%c0, %c0_0] : memref<16x128xbf16, #tpu.memory_space<vmem>>, vector<16x128xbf16>
    %1 = arith.extf %0 : vector<16x128xbf16> to vector<16x128xf32>
    %c0_1 = arith.constant 0 : index
    %c0_2 = arith.constant 0 : index
    %2 = vector.load %arg2[%c0_1, %c0_2] : memref<1x128xf32, #tpu.memory_space<vmem>>, vector<1x128xf32>
    %3 = vector.broadcast %2 : vector<1x128xf32> to vector<16x128xf32>
    %4 = arith.subf %1, %3 : vector<16x128xf32>
    %c0_3 = arith.constant 0 : index
    %c0_4 = arith.constant 0 : index
    %5 = vector.load %arg3[%c0_3, %c0_4] : memref<1x128xf32, #tpu.memory_space<vmem>>, vector<1x128xf32>
    %6 = vector.broadcast %5 : vector<1x128xf32> to vector<16x128xf32>
    %7 = arith.mulf %4, %6 : vector<16x128xf32>
    %8 = arith.truncf %7 : vector<16x128xf32> to vector<16x128xbf16>
    %c0_5 = arith.constant 0 : index
    %c0_6 = arith.constant 0 : index
    %9 = vector.load %arg4[%c0_5, %c0_6] : memref<16x128xbf16, #tpu.memory_space<vmem>>, vector<16x128xbf16>
    tpu.vector_store %arg4[%c0_5, %c0_6], %8 {strides = array<i32>} : memref<16x128xbf16, #tpu.memory_space<vmem>>, vector<16x128xbf16>,
    return
  }
  func.func @transform_0(%arg0: i32) -> (i32, i32) {
    %c0_i32 = arith.constant 0 : i32
    %c0_i32_0 = arith.constant 0 : i32
    return %arg0, %c0_i32 : i32, i32
  }
  func.func @transform_1(%arg0: i32) -> (i32, i32) {
    %c0_i32 = arith.constant 0 : i32
    %c0_i32_0 = arith.constant 0 : i32
    %c0_i32_1 = arith.constant 0 : i32
    return %c0_i32, %c0_i32_0 : i32, i32
  }
  func.func @transform_2(%arg0: i32) -> (i32, i32) {
    %c0_i32 = arith.constant 0 : i32
    %c0_i32_0 = arith.constant 0 : i32
    %c0_i32_1 = arith.constant 0 : i32
    return %c0_i32, %c0_i32_0 : i32, i32
  }
  func.func @transform_3(%arg0: i32) -> (i32, i32) {
    %c0_i32 = arith.constant 0 : i32
    %c0_i32_0 = arith.constant 0 : i32
    return %arg0, %c0_i32 : i32, i32
  }
}

module attributes {stable_mosaic.version = 11 : i64} {
  func.func @kernel(%arg0: i32, %arg1: i32, %arg2: i32, %arg3: memref<32x576xbf16, #tpu.memory_space<vmem>>, %arg4: memref<576x128xbf16, #tpu.memory_space<vmem>>, %arg5: memref<1x128xf32, #tpu.memory_space<vmem>>, %arg6: memref<32x64xbf16, #tpu.memory_space<vmem>>, %arg7: memref<1x8x64xf32, #tpu.memory_space<vmem>>, %arg8: memref<1x8x64xf32, #tpu.memory_space<vmem>>, %arg9: memref<32x128xf32, #tpu.memory_space<vmem>>) attributes {dimension_semantics = [#tpu.dimension_semantics<parallel>, #tpu.dimension_semantics<parallel>, #tpu.dimension_semantics<arbitrary>], iteration_bounds = array<i64: 1, 1, 1>, scalar_prefetch = 0 : i64, scratch_operands = 1 : i64, tpu.core_type = #tpu.core_type<tc>, window_params = [{transform_indices = @transform_0, window_bounds = array<i64: 32, 576>}, {transform_indices = @transform_1, window_bounds = array<i64: 576, 128>}, {transform_indices = @transform_2, window_bounds = array<i64: 1, 128>}, {transform_indices = @transform_3, window_bounds = array<i64: 32, 64>}, {transform_indices = @transform_4, window_bounds = array<i64: 1, 8, 64>}, {transform_indices = @transform_5, window_bounds = array<i64: 1, 8, 64>}]} {
    %c0_i32 = arith.constant 0 : i32
    %0 = arith.cmpi eq, %arg2, %c0_i32 : i32
    %1 = arith.extui %0 : i1 to i32
    %c0_i32_0 = arith.constant 0 : i32
    %2 = arith.cmpi ne, %1, %c0_i32_0 : i32
    scf.if %2 {
      %cst_11 = arith.constant 0.000000e+00 : f32
      %14 = vector.broadcast %cst_11 : f32 to vector<32x128xf32>
      %c0_12 = arith.constant 0 : index
      %c0_13 = arith.constant 0 : index
      %15 = vector.load %arg9[%c0_12, %c0_13] : memref<32x128xf32, #tpu.memory_space<vmem>>, vector<32x128xf32>
      tpu.vector_store %arg9[%c0_12, %c0_13], %14 {strides = array<i32>} : memref<32x128xf32, #tpu.memory_space<vmem>>, vector<32x128xf32>,
    } else {
    }
    %c0 = arith.constant 0 : index
    %c0_1 = arith.constant 0 : index
    %3 = vector.load %arg3[%c0, %c0_1] : memref<32x576xbf16, #tpu.memory_space<vmem>>, vector<32x576xbf16>
    %cst = arith.constant 0.000000e+00 : bf16
    %4 = vector.broadcast %cst : bf16 to vector<32x576xbf16>
    %5 = arith.maximumf %3, %4 : vector<32x576xbf16>
    %c0_2 = arith.constant 0 : index
    %c0_3 = arith.constant 0 : index
    %6 = vector.load %arg4[%c0_2, %c0_3] : memref<576x128xbf16, #tpu.memory_space<vmem>>, vector<576x128xbf16>
    %c0_4 = arith.constant 0 : index
    %c0_5 = arith.constant 0 : index
    %7 = vector.load %arg9[%c0_4, %c0_5] : memref<32x128xf32, #tpu.memory_space<vmem>>, vector<32x128xf32>
    %cst_6 = arith.constant dense<0.000000e+00> : vector<32x128xf32>
    %8 = tpu.matmul %5, %6, %cst_6 {dimension_numbers = #tpu.dot_dimension_numbers<[1], [0], [0], [1], [0, 0, 1, 1], [], []>} : vector<32x576xbf16>, vector<576x128xbf16>, vector<32x128xf32> -> vector<32x128xf32>
    %9 = arith.addf %7, %8 : vector<32x128xf32>
    %c0_7 = arith.constant 0 : index
    %c0_8 = arith.constant 0 : index
    %10 = vector.load %arg9[%c0_7, %c0_8] : memref<32x128xf32, #tpu.memory_space<vmem>>, vector<32x128xf32>
    tpu.vector_store %arg9[%c0_7, %c0_8], %9 {strides = array<i32>} : memref<32x128xf32, #tpu.memory_space<vmem>>, vector<32x128xf32>,
    %c0_i32_9 = arith.constant 0 : i32
    %11 = arith.cmpi eq, %arg2, %c0_i32_9 : i32
    %12 = arith.extui %11 : i1 to i32
    %c0_i32_10 = arith.constant 0 : i32
    %13 = arith.cmpi ne, %12, %c0_i32_10 : i32
    scf.if %13 {
      %c0_11 = arith.constant 0 : index
      %c0_12 = arith.constant 0 : index
      %14 = vector.load %arg9[%c0_11, %c0_12] : memref<32x128xf32, #tpu.memory_space<vmem>>, vector<32x128xf32>
      %c0_13 = arith.constant 0 : index
      %c0_14 = arith.constant 0 : index
      %15 = vector.load %arg5[%c0_13, %c0_14] : memref<1x128xf32, #tpu.memory_space<vmem>>, vector<1x128xf32>
      %16 = vector.broadcast %15 : vector<1x128xf32> to vector<32x128xf32>
      %17 = arith.addf %14, %16 : vector<32x128xf32>
      %18 = vector.extract_strided_slice %17 {offsets = [0, 0], sizes = [32, 64], strides = [1, 1]} : vector<32x128xf32> to vector<32x64xf32>
      %cst_15 = arith.constant dense<0.000000e+00> : vector<64xf32>
      %19 = vector.multi_reduction <add>, %18, %cst_15 [0] : vector<32x64xf32> to vector<64xf32>
      %20 = vector.shape_cast %19 : vector<64xf32> to vector<1x64xf32>
      %21 = arith.mulf %18, %18 : vector<32x64xf32>
      %cst_16 = arith.constant dense<0.000000e+00> : vector<64xf32>
      %22 = vector.multi_reduction <add>, %21, %cst_16 [0] : vector<32x64xf32> to vector<64xf32>
      %23 = vector.shape_cast %22 : vector<64xf32> to vector<1x64xf32>
      %24 = vector.shape_cast %20 : vector<1x64xf32> to vector<1x1x64xf32>
      %25 = vector.shape_cast %24 : vector<1x1x64xf32> to vector<1x1x64xf32>
      %26 = vector.broadcast %25 : vector<1x1x64xf32> to vector<1x8x64xf32>
      %c0_17 = arith.constant 0 : index
      %c0_18 = arith.constant 0 : index
      %c0_19 = arith.constant 0 : index
      %27 = vector.load %arg7[%c0_17, %c0_18, %c0_19] : memref<1x8x64xf32, #tpu.memory_space<vmem>>, vector<1x8x64xf32>
      tpu.vector_store %arg7[%c0_17, %c0_18, %c0_19], %26 {strides = array<i32>} : memref<1x8x64xf32, #tpu.memory_space<vmem>>, vector<1x8x64xf32>,
      %28 = vector.shape_cast %23 : vector<1x64xf32> to vector<1x1x64xf32>
      %29 = vector.shape_cast %28 : vector<1x1x64xf32> to vector<1x1x64xf32>
      %30 = vector.broadcast %29 : vector<1x1x64xf32> to vector<1x8x64xf32>
      %c0_20 = arith.constant 0 : index
      %c0_21 = arith.constant 0 : index
      %c0_22 = arith.constant 0 : index
      %31 = vector.load %arg8[%c0_20, %c0_21, %c0_22] : memref<1x8x64xf32, #tpu.memory_space<vmem>>, vector<1x8x64xf32>
      tpu.vector_store %arg8[%c0_20, %c0_21, %c0_22], %30 {strides = array<i32>} : memref<1x8x64xf32, #tpu.memory_space<vmem>>, vector<1x8x64xf32>,
      %32 = arith.truncf %18 : vector<32x64xf32> to vector<32x64xbf16>
      %c0_23 = arith.constant 0 : index
      %c0_24 = arith.constant 0 : index
      %33 = vector.load %arg6[%c0_23, %c0_24] : memref<32x64xbf16, #tpu.memory_space<vmem>>, vector<32x64xbf16>
      tpu.vector_store %arg6[%c0_23, %c0_24], %32 {strides = array<i32>} : memref<32x64xbf16, #tpu.memory_space<vmem>>, vector<32x64xbf16>,
    } else {
    }
    return
  }
  func.func @transform_0(%arg0: i32, %arg1: i32, %arg2: i32) -> (i32, i32) {
    %c0_i32 = arith.constant 0 : i32
    return %arg0, %arg2 : i32, i32
  }
  func.func @transform_1(%arg0: i32, %arg1: i32, %arg2: i32) -> (i32, i32) {
    %c0_i32 = arith.constant 0 : i32
    %c0_i32_0 = arith.constant 0 : i32
    return %c0_i32, %arg1 : i32, i32
  }
  func.func @transform_2(%arg0: i32, %arg1: i32, %arg2: i32) -> (i32, i32) {
    %c0_i32 = arith.constant 0 : i32
    %c0_i32_0 = arith.constant 0 : i32
    return %c0_i32, %arg1 : i32, i32
  }
  func.func @transform_3(%arg0: i32, %arg1: i32, %arg2: i32) -> (i32, i32) {
    %c0_i32 = arith.constant 0 : i32
    return %arg0, %arg1 : i32, i32
  }
  func.func @transform_4(%arg0: i32, %arg1: i32, %arg2: i32) -> (i32, i32, i32) {
    %c0_i32 = arith.constant 0 : i32
    %c0_i32_0 = arith.constant 0 : i32
    return %arg0, %c0_i32, %arg1 : i32, i32, i32
  }
  func.func @transform_5(%arg0: i32, %arg1: i32, %arg2: i32) -> (i32, i32, i32) {
    %c0_i32 = arith.constant 0 : i32
    %c0_i32_0 = arith.constant 0 : i32
    return %arg0, %c0_i32, %arg1 : i32, i32, i32
  }
}

module attributes {stable_mosaic.version = 11 : i64} {
  func.func @_bn_norm_kernel(%arg0: i32, %arg1: memref<32x64xbf16, #tpu.memory_space<vmem>>, %arg2: memref<1x64xf32, #tpu.memory_space<vmem>>, %arg3: memref<1x64xf32, #tpu.memory_space<vmem>>, %arg4: memref<32x64xbf16, #tpu.memory_space<vmem>>) attributes {dimension_semantics = [#tpu.dimension_semantics<parallel>], iteration_bounds = array<i64: 1>, scalar_prefetch = 0 : i64, scratch_operands = 0 : i64, tpu.core_type = #tpu.core_type<tc>, window_params = [{transform_indices = @transform_0, window_bounds = array<i64: 32, 64>}, {pipeline_mode = #tpu.pipeline_mode<synchronous>, transform_indices = @transform_1, window_bounds = array<i64: 1, 64>}, {pipeline_mode = #tpu.pipeline_mode<synchronous>, transform_indices = @transform_2, window_bounds = array<i64: 1, 64>}, {transform_indices = @transform_3, window_bounds = array<i64: 32, 64>}]} {
    %c0 = arith.constant 0 : index
    %c0_0 = arith.constant 0 : index
    %0 = vector.load %arg1[%c0, %c0_0] : memref<32x64xbf16, #tpu.memory_space<vmem>>, vector<32x64xbf16>
    %1 = arith.extf %0 : vector<32x64xbf16> to vector<32x64xf32>
    %c0_1 = arith.constant 0 : index
    %c0_2 = arith.constant 0 : index
    %2 = vector.load %arg2[%c0_1, %c0_2] : memref<1x64xf32, #tpu.memory_space<vmem>>, vector<1x64xf32>
    %3 = vector.broadcast %2 : vector<1x64xf32> to vector<32x64xf32>
    %4 = arith.subf %1, %3 : vector<32x64xf32>
    %c0_3 = arith.constant 0 : index
    %c0_4 = arith.constant 0 : index
    %5 = vector.load %arg3[%c0_3, %c0_4] : memref<1x64xf32, #tpu.memory_space<vmem>>, vector<1x64xf32>
    %6 = vector.broadcast %5 : vector<1x64xf32> to vector<32x64xf32>
    %7 = arith.mulf %4, %6 : vector<32x64xf32>
    %8 = arith.truncf %7 : vector<32x64xf32> to vector<32x64xbf16>
    %c0_5 = arith.constant 0 : index
    %c0_6 = arith.constant 0 : index
    %9 = vector.load %arg4[%c0_5, %c0_6] : memref<32x64xbf16, #tpu.memory_space<vmem>>, vector<32x64xbf16>
    tpu.vector_store %arg4[%c0_5, %c0_6], %8 {strides = array<i32>} : memref<32x64xbf16, #tpu.memory_space<vmem>>, vector<32x64xbf16>,
    return
  }
  func.func @transform_0(%arg0: i32) -> (i32, i32) {
    %c0_i32 = arith.constant 0 : i32
    %c0_i32_0 = arith.constant 0 : i32
    return %arg0, %c0_i32 : i32, i32
  }
  func.func @transform_1(%arg0: i32) -> (i32, i32) {
    %c0_i32 = arith.constant 0 : i32
    %c0_i32_0 = arith.constant 0 : i32
    %c0_i32_1 = arith.constant 0 : i32
    return %c0_i32, %c0_i32_0 : i32, i32
  }
  func.func @transform_2(%arg0: i32) -> (i32, i32) {
    %c0_i32 = arith.constant 0 : i32
    %c0_i32_0 = arith.constant 0 : i32
    %c0_i32_1 = arith.constant 0 : i32
    return %c0_i32, %c0_i32_0 : i32, i32
  }
  func.func @transform_3(%arg0: i32) -> (i32, i32) {
    %c0_i32 = arith.constant 0 : i32
    %c0_i32_0 = arith.constant 0 : i32
    return %arg0, %c0_i32 : i32, i32
  }
}

module attributes {stable_mosaic.version = 11 : i64} {
  func.func @kernel(%arg0: i32, %arg1: i32, %arg2: i32, %arg3: memref<128x288xbf16, #tpu.memory_space<vmem>>, %arg4: memref<288x128xbf16, #tpu.memory_space<vmem>>, %arg5: memref<1x128xf32, #tpu.memory_space<vmem>>, %arg6: memref<128x32xbf16, #tpu.memory_space<vmem>>, %arg7: memref<1x8x32xf32, #tpu.memory_space<vmem>>, %arg8: memref<1x8x32xf32, #tpu.memory_space<vmem>>, %arg9: memref<128x128xf32, #tpu.memory_space<vmem>>) attributes {dimension_semantics = [#tpu.dimension_semantics<parallel>, #tpu.dimension_semantics<parallel>, #tpu.dimension_semantics<arbitrary>], iteration_bounds = array<i64: 1, 1, 1>, scalar_prefetch = 0 : i64, scratch_operands = 1 : i64, tpu.core_type = #tpu.core_type<tc>, window_params = [{transform_indices = @transform_0, window_bounds = array<i64: 128, 288>}, {transform_indices = @transform_1, window_bounds = array<i64: 288, 128>}, {transform_indices = @transform_2, window_bounds = array<i64: 1, 128>}, {transform_indices = @transform_3, window_bounds = array<i64: 128, 32>}, {transform_indices = @transform_4, window_bounds = array<i64: 1, 8, 32>}, {transform_indices = @transform_5, window_bounds = array<i64: 1, 8, 32>}]} {
    %c0_i32 = arith.constant 0 : i32
    %0 = arith.cmpi eq, %arg2, %c0_i32 : i32
    %1 = arith.extui %0 : i1 to i32
    %c0_i32_0 = arith.constant 0 : i32
    %2 = arith.cmpi ne, %1, %c0_i32_0 : i32
    scf.if %2 {
      %cst_11 = arith.constant 0.000000e+00 : f32
      %14 = vector.broadcast %cst_11 : f32 to vector<128x128xf32>
      %c0_12 = arith.constant 0 : index
      %c0_13 = arith.constant 0 : index
      %15 = vector.load %arg9[%c0_12, %c0_13] : memref<128x128xf32, #tpu.memory_space<vmem>>, vector<128x128xf32>
      tpu.vector_store %arg9[%c0_12, %c0_13], %14 {strides = array<i32>} : memref<128x128xf32, #tpu.memory_space<vmem>>, vector<128x128xf32>,
    } else {
    }
    %c0 = arith.constant 0 : index
    %c0_1 = arith.constant 0 : index
    %3 = vector.load %arg3[%c0, %c0_1] : memref<128x288xbf16, #tpu.memory_space<vmem>>, vector<128x288xbf16>
    %cst = arith.constant 0.000000e+00 : bf16
    %4 = vector.broadcast %cst : bf16 to vector<128x288xbf16>
    %5 = arith.maximumf %3, %4 : vector<128x288xbf16>
    %c0_2 = arith.constant 0 : index
    %c0_3 = arith.constant 0 : index
    %6 = vector.load %arg4[%c0_2, %c0_3] : memref<288x128xbf16, #tpu.memory_space<vmem>>, vector<288x128xbf16>
    %c0_4 = arith.constant 0 : index
    %c0_5 = arith.constant 0 : index
    %7 = vector.load %arg9[%c0_4, %c0_5] : memref<128x128xf32, #tpu.memory_space<vmem>>, vector<128x128xf32>
    %cst_6 = arith.constant dense<0.000000e+00> : vector<128x128xf32>
    %8 = tpu.matmul %5, %6, %cst_6 {dimension_numbers = #tpu.dot_dimension_numbers<[1], [0], [0], [1], [0, 0, 1, 1], [], []>} : vector<128x288xbf16>, vector<288x128xbf16>, vector<128x128xf32> -> vector<128x128xf32>
    %9 = arith.addf %7, %8 : vector<128x128xf32>
    %c0_7 = arith.constant 0 : index
    %c0_8 = arith.constant 0 : index
    %10 = vector.load %arg9[%c0_7, %c0_8] : memref<128x128xf32, #tpu.memory_space<vmem>>, vector<128x128xf32>
    tpu.vector_store %arg9[%c0_7, %c0_8], %9 {strides = array<i32>} : memref<128x128xf32, #tpu.memory_space<vmem>>, vector<128x128xf32>,
    %c0_i32_9 = arith.constant 0 : i32
    %11 = arith.cmpi eq, %arg2, %c0_i32_9 : i32
    %12 = arith.extui %11 : i1 to i32
    %c0_i32_10 = arith.constant 0 : i32
    %13 = arith.cmpi ne, %12, %c0_i32_10 : i32
    scf.if %13 {
      %c0_11 = arith.constant 0 : index
      %c0_12 = arith.constant 0 : index
      %14 = vector.load %arg9[%c0_11, %c0_12] : memref<128x128xf32, #tpu.memory_space<vmem>>, vector<128x128xf32>
      %c0_13 = arith.constant 0 : index
      %c0_14 = arith.constant 0 : index
      %15 = vector.load %arg5[%c0_13, %c0_14] : memref<1x128xf32, #tpu.memory_space<vmem>>, vector<1x128xf32>
      %16 = vector.broadcast %15 : vector<1x128xf32> to vector<128x128xf32>
      %17 = arith.addf %14, %16 : vector<128x128xf32>
      %18 = vector.extract_strided_slice %17 {offsets = [0, 0], sizes = [128, 32], strides = [1, 1]} : vector<128x128xf32> to vector<128x32xf32>
      %cst_15 = arith.constant dense<0.000000e+00> : vector<32xf32>
      %19 = vector.multi_reduction <add>, %18, %cst_15 [0] : vector<128x32xf32> to vector<32xf32>
      %20 = vector.shape_cast %19 : vector<32xf32> to vector<1x32xf32>
      %21 = arith.mulf %18, %18 : vector<128x32xf32>
      %cst_16 = arith.constant dense<0.000000e+00> : vector<32xf32>
      %22 = vector.multi_reduction <add>, %21, %cst_16 [0] : vector<128x32xf32> to vector<32xf32>
      %23 = vector.shape_cast %22 : vector<32xf32> to vector<1x32xf32>
      %24 = vector.shape_cast %20 : vector<1x32xf32> to vector<1x1x32xf32>
      %25 = vector.shape_cast %24 : vector<1x1x32xf32> to vector<1x1x32xf32>
      %26 = vector.broadcast %25 : vector<1x1x32xf32> to vector<1x8x32xf32>
      %c0_17 = arith.constant 0 : index
      %c0_18 = arith.constant 0 : index
      %c0_19 = arith.constant 0 : index
      %27 = vector.load %arg7[%c0_17, %c0_18, %c0_19] : memref<1x8x32xf32, #tpu.memory_space<vmem>>, vector<1x8x32xf32>
      tpu.vector_store %arg7[%c0_17, %c0_18, %c0_19], %26 {strides = array<i32>} : memref<1x8x32xf32, #tpu.memory_space<vmem>>, vector<1x8x32xf32>,
      %28 = vector.shape_cast %23 : vector<1x32xf32> to vector<1x1x32xf32>
      %29 = vector.shape_cast %28 : vector<1x1x32xf32> to vector<1x1x32xf32>
      %30 = vector.broadcast %29 : vector<1x1x32xf32> to vector<1x8x32xf32>
      %c0_20 = arith.constant 0 : index
      %c0_21 = arith.constant 0 : index
      %c0_22 = arith.constant 0 : index
      %31 = vector.load %arg8[%c0_20, %c0_21, %c0_22] : memref<1x8x32xf32, #tpu.memory_space<vmem>>, vector<1x8x32xf32>
      tpu.vector_store %arg8[%c0_20, %c0_21, %c0_22], %30 {strides = array<i32>} : memref<1x8x32xf32, #tpu.memory_space<vmem>>, vector<1x8x32xf32>,
      %32 = arith.truncf %18 : vector<128x32xf32> to vector<128x32xbf16>
      %c0_23 = arith.constant 0 : index
      %c0_24 = arith.constant 0 : index
      %33 = vector.load %arg6[%c0_23, %c0_24] : memref<128x32xbf16, #tpu.memory_space<vmem>>, vector<128x32xbf16>
      tpu.vector_store %arg6[%c0_23, %c0_24], %32 {strides = array<i32>} : memref<128x32xbf16, #tpu.memory_space<vmem>>, vector<128x32xbf16>,
    } else {
    }
    return
  }
  func.func @transform_0(%arg0: i32, %arg1: i32, %arg2: i32) -> (i32, i32) {
    %c0_i32 = arith.constant 0 : i32
    return %arg0, %arg2 : i32, i32
  }
  func.func @transform_1(%arg0: i32, %arg1: i32, %arg2: i32) -> (i32, i32) {
    %c0_i32 = arith.constant 0 : i32
    %c0_i32_0 = arith.constant 0 : i32
    return %c0_i32, %arg1 : i32, i32
  }
  func.func @transform_2(%arg0: i32, %arg1: i32, %arg2: i32) -> (i32, i32) {
    %c0_i32 = arith.constant 0 : i32
    %c0_i32_0 = arith.constant 0 : i32
    return %c0_i32, %arg1 : i32, i32
  }
  func.func @transform_3(%arg0: i32, %arg1: i32, %arg2: i32) -> (i32, i32) {
    %c0_i32 = arith.constant 0 : i32
    return %arg0, %arg1 : i32, i32
  }
  func.func @transform_4(%arg0: i32, %arg1: i32, %arg2: i32) -> (i32, i32, i32) {
    %c0_i32 = arith.constant 0 : i32
    %c0_i32_0 = arith.constant 0 : i32
    return %arg0, %c0_i32, %arg1 : i32, i32, i32
  }
  func.func @transform_5(%arg0: i32, %arg1: i32, %arg2: i32) -> (i32, i32, i32) {
    %c0_i32 = arith.constant 0 : i32
    %c0_i32_0 = arith.constant 0 : i32
    return %arg0, %c0_i32, %arg1 : i32, i32, i32
  }
}

module attributes {stable_mosaic.version = 11 : i64} {
  func.func @_bn_norm_kernel(%arg0: i32, %arg1: memref<128x32xbf16, #tpu.memory_space<vmem>>, %arg2: memref<1x32xf32, #tpu.memory_space<vmem>>, %arg3: memref<1x32xf32, #tpu.memory_space<vmem>>, %arg4: memref<128x32xbf16, #tpu.memory_space<vmem>>) attributes {dimension_semantics = [#tpu.dimension_semantics<parallel>], iteration_bounds = array<i64: 1>, scalar_prefetch = 0 : i64, scratch_operands = 0 : i64, tpu.core_type = #tpu.core_type<tc>, window_params = [{transform_indices = @transform_0, window_bounds = array<i64: 128, 32>}, {pipeline_mode = #tpu.pipeline_mode<synchronous>, transform_indices = @transform_1, window_bounds = array<i64: 1, 32>}, {pipeline_mode = #tpu.pipeline_mode<synchronous>, transform_indices = @transform_2, window_bounds = array<i64: 1, 32>}, {transform_indices = @transform_3, window_bounds = array<i64: 128, 32>}]} {
    %c0 = arith.constant 0 : index
    %c0_0 = arith.constant 0 : index
    %0 = vector.load %arg1[%c0, %c0_0] : memref<128x32xbf16, #tpu.memory_space<vmem>>, vector<128x32xbf16>
    %1 = arith.extf %0 : vector<128x32xbf16> to vector<128x32xf32>
    %c0_1 = arith.constant 0 : index
    %c0_2 = arith.constant 0 : index
    %2 = vector.load %arg2[%c0_1, %c0_2] : memref<1x32xf32, #tpu.memory_space<vmem>>, vector<1x32xf32>
    %3 = vector.broadcast %2 : vector<1x32xf32> to vector<128x32xf32>
    %4 = arith.subf %1, %3 : vector<128x32xf32>
    %c0_3 = arith.constant 0 : index
    %c0_4 = arith.constant 0 : index
    %5 = vector.load %arg3[%c0_3, %c0_4] : memref<1x32xf32, #tpu.memory_space<vmem>>, vector<1x32xf32>
    %6 = vector.broadcast %5 : vector<1x32xf32> to vector<128x32xf32>
    %7 = arith.mulf %4, %6 : vector<128x32xf32>
    %8 = arith.truncf %7 : vector<128x32xf32> to vector<128x32xbf16>
    %c0_5 = arith.constant 0 : index
    %c0_6 = arith.constant 0 : index
    %9 = vector.load %arg4[%c0_5, %c0_6] : memref<128x32xbf16, #tpu.memory_space<vmem>>, vector<128x32xbf16>
    tpu.vector_store %arg4[%c0_5, %c0_6], %8 {strides = array<i32>} : memref<128x32xbf16, #tpu.memory_space<vmem>>, vector<128x32xbf16>,
    return
  }
  func.func @transform_0(%arg0: i32) -> (i32, i32) {
    %c0_i32 = arith.constant 0 : i32
    %c0_i32_0 = arith.constant 0 : i32
    return %arg0, %c0_i32 : i32, i32
  }
  func.func @transform_1(%arg0: i32) -> (i32, i32) {
    %c0_i32 = arith.constant 0 : i32
    %c0_i32_0 = arith.constant 0 : i32
    %c0_i32_1 = arith.constant 0 : i32
    return %c0_i32, %c0_i32_0 : i32, i32
  }
  func.func @transform_2(%arg0: i32) -> (i32, i32) {
    %c0_i32 = arith.constant 0 : i32
    %c0_i32_0 = arith.constant 0 : i32
    %c0_i32_1 = arith.constant 0 : i32
    return %c0_i32, %c0_i32_0 : i32, i32
  }
  func.func @transform_3(%arg0: i32) -> (i32, i32) {
    %c0_i32 = arith.constant 0 : i32
    %c0_i32_0 = arith.constant 0 : i32
    return %arg0, %c0_i32 : i32, i32
  }
}

module attributes {stable_mosaic.version = 11 : i64} {
  func.func @kernel(%arg0: i32, %arg1: i32, %arg2: i32, %arg3: memref<512x144xbf16, #tpu.memory_space<vmem>>, %arg4: memref<144x128xbf16, #tpu.memory_space<vmem>>, %arg5: memref<1x128xf32, #tpu.memory_space<vmem>>, %arg6: memref<512x12xf32, #tpu.memory_space<vmem>>, %arg7: memref<512x128xf32, #tpu.memory_space<vmem>>) attributes {dimension_semantics = [#tpu.dimension_semantics<parallel>, #tpu.dimension_semantics<parallel>, #tpu.dimension_semantics<arbitrary>], iteration_bounds = array<i64: 1, 1, 1>, scalar_prefetch = 0 : i64, scratch_operands = 1 : i64, tpu.core_type = #tpu.core_type<tc>, window_params = [{transform_indices = @transform_0, window_bounds = array<i64: 512, 144>}, {transform_indices = @transform_1, window_bounds = array<i64: 144, 128>}, {transform_indices = @transform_2, window_bounds = array<i64: 1, 128>}, {transform_indices = @transform_3, window_bounds = array<i64: 512, 12>}]} {
    %c0_i32 = arith.constant 0 : i32
    %0 = arith.cmpi eq, %arg2, %c0_i32 : i32
    %1 = arith.extui %0 : i1 to i32
    %c0_i32_0 = arith.constant 0 : i32
    %2 = arith.cmpi ne, %1, %c0_i32_0 : i32
    scf.if %2 {
      %cst_11 = arith.constant 0.000000e+00 : f32
      %14 = vector.broadcast %cst_11 : f32 to vector<512x128xf32>
      %c0_12 = arith.constant 0 : index
      %c0_13 = arith.constant 0 : index
      %15 = vector.load %arg7[%c0_12, %c0_13] : memref<512x128xf32, #tpu.memory_space<vmem>>, vector<512x128xf32>
      tpu.vector_store %arg7[%c0_12, %c0_13], %14 {strides = array<i32>} : memref<512x128xf32, #tpu.memory_space<vmem>>, vector<512x128xf32>,
    } else {
    }
    %c0 = arith.constant 0 : index
    %c0_1 = arith.constant 0 : index
    %3 = vector.load %arg3[%c0, %c0_1] : memref<512x144xbf16, #tpu.memory_space<vmem>>, vector<512x144xbf16>
    %cst = arith.constant 0.000000e+00 : bf16
    %4 = vector.broadcast %cst : bf16 to vector<512x144xbf16>
    %5 = arith.maximumf %3, %4 : vector<512x144xbf16>
    %c0_2 = arith.constant 0 : index
    %c0_3 = arith.constant 0 : index
    %6 = vector.load %arg4[%c0_2, %c0_3] : memref<144x128xbf16, #tpu.memory_space<vmem>>, vector<144x128xbf16>
    %c0_4 = arith.constant 0 : index
    %c0_5 = arith.constant 0 : index
    %7 = vector.load %arg7[%c0_4, %c0_5] : memref<512x128xf32, #tpu.memory_space<vmem>>, vector<512x128xf32>
    %cst_6 = arith.constant dense<0.000000e+00> : vector<512x128xf32>
    %8 = tpu.matmul %5, %6, %cst_6 {dimension_numbers = #tpu.dot_dimension_numbers<[1], [0], [0], [1], [0, 0, 1, 1], [], []>} : vector<512x144xbf16>, vector<144x128xbf16>, vector<512x128xf32> -> vector<512x128xf32>
    %9 = arith.addf %7, %8 : vector<512x128xf32>
    %c0_7 = arith.constant 0 : index
    %c0_8 = arith.constant 0 : index
    %10 = vector.load %arg7[%c0_7, %c0_8] : memref<512x128xf32, #tpu.memory_space<vmem>>, vector<512x128xf32>
    tpu.vector_store %arg7[%c0_7, %c0_8], %9 {strides = array<i32>} : memref<512x128xf32, #tpu.memory_space<vmem>>, vector<512x128xf32>,
    %c0_i32_9 = arith.constant 0 : i32
    %11 = arith.cmpi eq, %arg2, %c0_i32_9 : i32
    %12 = arith.extui %11 : i1 to i32
    %c0_i32_10 = arith.constant 0 : i32
    %13 = arith.cmpi ne, %12, %c0_i32_10 : i32
    scf.if %13 {
      %c0_11 = arith.constant 0 : index
      %c0_12 = arith.constant 0 : index
      %14 = vector.load %arg7[%c0_11, %c0_12] : memref<512x128xf32, #tpu.memory_space<vmem>>, vector<512x128xf32>
      %c0_13 = arith.constant 0 : index
      %c0_14 = arith.constant 0 : index
      %15 = vector.load %arg5[%c0_13, %c0_14] : memref<1x128xf32, #tpu.memory_space<vmem>>, vector<1x128xf32>
      %16 = vector.broadcast %15 : vector<1x128xf32> to vector<512x128xf32>
      %17 = arith.addf %14, %16 : vector<512x128xf32>
      %18 = vector.extract_strided_slice %17 {offsets = [0, 0], sizes = [512, 12], strides = [1, 1]} : vector<512x128xf32> to vector<512x12xf32>
      %19 = math.tanh %18 : vector<512x12xf32>
      %c0_15 = arith.constant 0 : index
      %c0_16 = arith.constant 0 : index
      %20 = vector.load %arg6[%c0_15, %c0_16] : memref<512x12xf32, #tpu.memory_space<vmem>>, vector<512x12xf32>
      tpu.vector_store %arg6[%c0_15, %c0_16], %19 {strides = array<i32>} : memref<512x12xf32, #tpu.memory_space<vmem>>, vector<512x12xf32>,
    } else {
    }
    return
  }
  func.func @transform_0(%arg0: i32, %arg1: i32, %arg2: i32) -> (i32, i32) {
    %c0_i32 = arith.constant 0 : i32
    return %arg0, %arg2 : i32, i32
  }
  func.func @transform_1(%arg0: i32, %arg1: i32, %arg2: i32) -> (i32, i32) {
    %c0_i32 = arith.constant 0 : i32
    %c0_i32_0 = arith.constant 0 : i32
    return %c0_i32, %arg1 : i32, i32
  }
  func.func @transform_2(%arg0: i32, %arg1: i32, %arg2: i32) -> (i32, i32) {
    %c0_i32 = arith.constant 0 : i32
    %c0_i32_0 = arith.constant 0 : i32
    return %c0_i32, %arg1 : i32, i32
  }
  func.func @transform_3(%arg0: i32, %arg1: i32, %arg2: i32) -> (i32, i32) {
    %c0_i32 = arith.constant 0 : i32
    return %arg0, %arg1 : i32, i32
  }
}

</mosaic_0001>

<llo_original>
// kernel: unet_forward.17
$region0: #{unet_forward.17}
  #allocation0 [shape = 'u32[]', space=smem, size = 0x4, offset = 0x4, fixed_abs, tag = 'smem constant byte address 0x4 - core index']
  #allocation1 [shape = 'u32[144,128]{1,0:T(1,128)}', space=vmem, size = 0x12000, scoped, tag = 'internal scratch']
  #allocation2 [shape = 'f32[512,128]{1,0:T(8,128)}', space=vmem, size = 0x40000, scoped, tag = 'scratch operand']
  %s0 = inlined_call_operand.vmem [shape: bf16[512,48], index: 0, kind: input, shape index: {}]
  %s1 = inlined_call_operand.vmem [shape: bf16[48,128], index: 1, kind: input, shape index: {}]
  %s2 = inlined_call_operand.vmem [shape: f32[1,128], index: 2, kind: input, shape index: {}]
  %s3 = inlined_call_operand.vmem [shape: bf16[512,8], index: 3, kind: output, shape index: {}]
  %s4 = sld [smem:[#allocation0]]
  $region30: #{unet_forward.17} parent=0
    _
  %s6 = ssub.s32 1, %s4
  %s7 = scalar_select 0, %s6, %s4
  // Predicated region
  $region2: #{unet_forward.17} parent=0 // pred_check
    _
  $region3: #{unet_forward.17} parent=0 // pred_check_branch
    %9 = sbr.rel (0) target = $region5
  $region4: #{unet_forward.17} parent=0 // pred_region
    _
  $region5: #{unet_forward.17} parent=0 // pred_fallthru
    _
  // Predicated region
  $region6: #{unet_forward.17} parent=0 // pred_check
    _
  $region7: #{unet_forward.17} parent=0 // pred_check_branch
    %11 = sbr.rel (0) target = $region9
  $region8: #{unet_forward.17} parent=0 // pred_region
    _
  $region9: #{unet_forward.17} parent=0 // pred_fallthru
    _
  // Predicated region
  $region10: #{unet_forward.17} parent=0 // pred_check
    _
  $region11: #{unet_forward.17} parent=0 // pred_check_branch
    %13 = sbr.rel (0) target = $region13
  $region12: #{unet_forward.17} parent=0 // pred_region
    _
  $region13: #{unet_forward.17} parent=0 // pred_fallthru
    _
  %p15 = scmp.eq.s32.totalorder 0, 0
  // Predicated region
  $region14: #{unet_forward.17} parent=0 // pred_check
    %p16 = pneg %p15
  $region15: #{unet_forward.17} parent=0 // pred_check_branch
    %18 = sbr.rel (%p16) target = $region17
  $region16: #{unet_forward.17} parent=0 // pred_region
    %19 = vst [vmem:[#allocation2] sm:$0xff] 0.0
    %20 = vst [vmem:[#allocation2 + $0x8] sm:$0xff] 0.0
    %21 = vst [vmem:[#allocation2 + $0x10] sm:$0xff] 0.0
    %22 = vst [vmem:[#allocation2 + $0x18] sm:$0xff] 0.0
    %23 = vst [vmem:[#allocation2 + $0x20] sm:$0xff] 0.0
    %24 = vst [vmem:[#allocation2 + $0x28] sm:$0xff] 0.0
    %25 = vst [vmem:[#allocation2 + $0x30] sm:$0xff] 0.0
    %26 = vst [vmem:[#allocation2 + $0x38] sm:$0xff] 0.0
    %27 = vst [vmem:[#allocation2 + $0x40] sm:$0xff] 0.0
    %28 = vst [vmem:[#allocation2 + $0x48] sm:$0xff] 0.0
    %29 = vst [vmem:[#allocation2 + $0x50] sm:$0xff] 0.0
    %30 = vst [vmem:[#allocation2 + $0x58] sm:$0xff] 0.0
    %31 = vst [vmem:[#allocation2 + $0x60] sm:$0xff] 0.0
    %32 = vst [vmem:[#allocation2 + $0x68] sm:$0xff] 0.0
    %33 = vst [vmem:[#allocation2 + $0x70] sm:$0xff] 0.0
    %34 = vst [vmem:[#allocation2 + $0x78] sm:$0xff] 0.0
    %35 = vst [vmem:[#allocation2 + $0x80] sm:$0xff] 0.0
    %36 = vst [vmem:[#allocation2 + $0x88] sm:$0xff] 0.0
    %37 = vst [vmem:[#allocation2 + $0x90] sm:$0xff] 0.0
    %38 = vst [vmem:[#allocation2 + $0x98] sm:$0xff] 0.0
    %39 = vst [vmem:[#allocation2 + $0xa0] sm:$0xff] 0.0
    %40 = vst [vmem:[#allocation2 + $0xa8] sm:$0xff] 0.0
    %41 = vst [vmem:[#allocation2 + $0xb0] sm:$0xff] 0.0
    %42 = vst [vmem:[#allocation2 + $0xb8] sm:$0xff] 0.0
    %43 = vst [vmem:[#allocation2 + $0xc0] sm:$0xff] 0.0
    %44 = vst [vmem:[#allocation2 + $0xc8] sm:$0xff] 0.0
    %45 = vst [vmem:[#allocation2 + $0xd0] sm:$0xff] 0.0
    %46 = vst [vmem:[#allocation2 + $0xd8] sm:$0xff] 0.0
    %47 = vst [vmem:[#allocation2 + $0xe0] sm:$0xff] 0.0
    %48 = vst [vmem:[#allocation2 + $0xe8] sm:$0xff] 0.0
    %49 = vst [vmem:[#allocation2 + $0xf0] sm:$0xff] 0.0
    %50 = vst [vmem:[#allocation2 + $0xf8] sm:$0xff] 0.0
    %51 = vst [vmem:[#allocation2 + $0x100] sm:$0xff] 0.0
    %52 = vst [vmem:[#allocation2 + $0x108] sm:$0xff] 0.0
    %53 = vst [vmem:[#allocation2 + $0x110] sm:$0xff] 0.0
    %54 = vst [vmem:[#allocation2 + $0x118] sm:$0xff] 0.0
    %55 = vst [vmem:[#allocation2 + $0x120] sm:$0xff] 0.0
    %56 = vst [vmem:[#allocation2 + $0x128] sm:$0xff] 0.0
    %57 = vst [vmem:[#allocation2 + $0x130] sm:$0xff] 0.0
    %58 = vst [vmem:[#allocation2 + $0x138] sm:$0xff] 0.0
    %59 = vst [vmem:[#allocation2 + $0x140] sm:$0xff] 0.0
    %60 = vst [vmem:[#allocation2 + $0x148] sm:$0xff] 0.0
    %61 = vst [vmem:[#allocation2 + $0x150] sm:$0xff] 0.0
    %62 = vst [vmem:[#allocation2 + $0x158] sm:$0xff] 0.0
    %63 = vst [vmem:[#allocation2 + $0x160] sm:$0xff] 0.0
    %64 = vst [vmem:[#allocation2 + $0x168] sm:$0xff] 0.0
    %65 = vst [vmem:[#allocation2 + $0x170] sm:$0xff] 0.0
    %66 = vst [vmem:[#allocation2 + $0x178] sm:$0xff] 0.0
    %67 = vst [vmem:[#allocation2 + $0x180] sm:$0xff] 0.0
    %68 = vst [vmem:[#allocation2 + $0x188] sm:$0xff] 0.0
    %69 = vst [vmem:[#allocation2 + $0x190] sm:$0xff] 0.0
    %70 = vst [vmem:[#allocation2 + $0x198] sm:$0xff] 0.0
    %71 = vst [vmem:[#allocation2 + $0x1a0] sm:$0xff] 0.0
    %72 = vst [vmem:[#allocation2 + $0x1a8] sm:$0xff] 0.0
    %73 = vst [vmem:[#allocation2 + $0x1b0] sm:$0xff] 0.0
    %74 = vst [vmem:[#allocation2 + $0x1b8] sm:$0xff] 0.0
    %75 = vst [vmem:[#allocation2 + $0x1c0] sm:$0xff] 0.0
    %76 = vst [vmem:[#allocation2 + $0x1c8] sm:$0xff] 0.0
    %77 = vst [vmem:[#allocation2 + $0x1d0] sm:$0xff] 0.0
    %78 = vst [vmem:[#allocation2 + $0x1d8] sm:$0xff] 0.0
    %79 = vst [vmem:[#allocation2 + $0x1e0] sm:$0xff] 0.0
    %80 = vst [vmem:[#allocation2 + $0x1e8] sm:$0xff] 0.0
    %81 = vst [vmem:[#allocation2 + $0x1f0] sm:$0xff] 0.0
    %82 = vst [vmem:[#allocation2 + $0x1f8] sm:$0xff] 0.0
  $region17: #{unet_forward.17} parent=0 // pred_fallthru
    _
  %v83 = vld [vmem:[%s0] sm:$0xf]
  %v84 = vld [vmem:[%s0 + $0x4] sm:$0xf]
  %v85 = vld [vmem:[%s0 + $0x8] sm:$0xf]
  %v86 = vld [vmem:[%s0 + $0xc] sm:$0xf]
  %v87 = vld [vmem:[%s0 + $0x10] sm:$0xf]
  %v88 = vld [vmem:[%s0 + $0x14] sm:$0xf]
  %v89 = vld [vmem:[%s0 + $0x18] sm:$0xf]
  %v90 = vld [vmem:[%s0 + $0x1c] sm:$0xf]
  %v91 = vld [vmem:[%s0 + $0x20] sm:$0xf]
  %v92 = vld [vmem:[%s0 + $0x24] sm:$0xf]
  %v93 = vld [vmem:[%s0 + $0x28] sm:$0xf]
  %v94 = vld [vmem:[%s0 + $0x2c] sm:$0xf]
  %v95 = vld [vmem:[%s0 + $0x30] sm:$0xf]
  %v96 = vld [vmem:[%s0 + $0x34] sm:$0xf]
  %v97 = vld [vmem:[%s0 + $0x38] sm:$0xf]
  %v98 = vld [vmem:[%s0 + $0x3c] sm:$0xf]
  %v99 = vld [vmem:[%s0 + $0x40] sm:$0xf]
  %v100 = vld [vmem:[%s0 + $0x44] sm:$0xf]
  %v101 = vld [vmem:[%s0 + $0x48] sm:$0xf]
  %v102 = vld [vmem:[%s0 + $0x4c] sm:$0xf]
  %v103 = vld [vmem:[%s0 + $0x50] sm:$0xf]
  %v104 = vld [vmem:[%s0 + $0x54] sm:$0xf]
  %v105 = vld [vmem:[%s0 + $0x58] sm:$0xf]
  %v106 = vld [vmem:[%s0 + $0x5c] sm:$0xf]
  %v107 = vld [vmem:[%s0 + $0x60] sm:$0xf]
  %v108 = vld [vmem:[%s0 + $0x64] sm:$0xf]
  %v109 = vld [vmem:[%s0 + $0x68] sm:$0xf]
  %v110 = vld [vmem:[%s0 + $0x6c] sm:$0xf]
  %v111 = vld [vmem:[%s0 + $0x70] sm:$0xf]
  %v112 = vld [vmem:[%s0 + $0x74] sm:$0xf]
  %v113 = vld [vmem:[%s0 + $0x78] sm:$0xf]
  %v114 = vld [vmem:[%s0 + $0x7c] sm:$0xf]
  %v115 = vld [vmem:[%s0 + $0x80] sm:$0xf]
  %v116 = vld [vmem:[%s0 + $0x84] sm:$0xf]
  %v117 = vld [vmem:[%s0 + $0x88] sm:$0xf]
  %v118 = vld [vmem:[%s0 + $0x8c] sm:$0xf]
  %v119 = vld [vmem:[%s0 + $0x90] sm:$0xf]
  %v120 = vld [vmem:[%s0 + $0x94] sm:$0xf]
  %v121 = vld [vmem:[%s0 + $0x98] sm:$0xf]
  %v122 = vld [vmem:[%s0 + $0x9c] sm:$0xf]
  %v123 = vld [vmem:[%s0 + $0xa0] sm:$0xf]
  %v124 = vld [vmem:[%s0 + $0xa4] sm:$0xf]
  %v125 = vld [vmem:[%s0 + $0xa8] sm:$0xf]
  %v126 = vld [vmem:[%s0 + $0xac] sm:$0xf]
  %v127 = vld [vmem:[%s0 + $0xb0] sm:$0xf]
  %v128 = vld [vmem:[%s0 + $0xb4] sm:$0xf]
  %v129 = vld [vmem:[%s0 + $0xb8] sm:$0xf]
  %v130 = vld [vmem:[%s0 + $0xbc] sm:$0xf]
  %v131 = vld [vmem:[%s0 + $0xc0] sm:$0xf]
  %v132 = vld [vmem:[%s0 + $0xc4] sm:$0xf]
  %v133 = vld [vmem:[%s0 + $0xc8] sm:$0xf]
  %v134 = vld [vmem:[%s0 + $0xcc] sm:$0xf]
  %v135 = vld [vmem:[%s0 + $0xd0] sm:$0xf]
  %v136 = vld [vmem:[%s0 + $0xd4] sm:$0xf]
  %v137 = vld [vmem:[%s0 + $0xd8] sm:$0xf]
  %v138 = vld [vmem:[%s0 + $0xdc] sm:$0xf]
  %v139 = vld [vmem:[%s0 + $0xe0] sm:$0xf]
  %v140 = vld [vmem:[%s0 + $0xe4] sm:$0xf]
  %v141 = vld [vmem:[%s0 + $0xe8] sm:$0xf]
  %v142 = vld [vmem:[%s0 + $0xec] sm:$0xf]
  %v143 = vld [vmem:[%s0 + $0xf0] sm:$0xf]
  %v144 = vld [vmem:[%s0 + $0xf4] sm:$0xf]
  %v145 = vld [vmem:[%s0 + $0xf8] sm:$0xf]
  %v146 = vld [vmem:[%s0 + $0xfc] sm:$0xf]
  %v147 = vld [vmem:[%s1] sm:$0xf]
  %v148 = vld [vmem:[%s1 + $0x4] sm:$0xf]
  %v149 = vld [vmem:[%s1 + $0x8] sm:$0xf]
  %v150 = vld [vmem:[%s1 + $0xc] sm:$0xf]
  %v151 = vld [vmem:[%s1 + $0x10] sm:$0xf]
  %v152 = vld [vmem:[%s1 + $0x14] sm:$0xf]
  %v153 = vld [vmem:[#allocation2] sm:$0xff]
  %v154 = vld [vmem:[#allocation2 + $0x8] sm:$0xff]
  %v155 = vld [vmem:[#allocation2 + $0x10] sm:$0xff]
  %v156 = vld [vmem:[#allocation2 + $0x18] sm:$0xff]
  %v157 = vld [vmem:[#allocation2 + $0x20] sm:$0xff]
  %v158 = vld [vmem:[#allocation2 + $0x28] sm:$0xff]
  %v159 = vld [vmem:[#allocation2 + $0x30] sm:$0xff]
  %v160 = vld [vmem:[#allocation2 + $0x38] sm:$0xff]
  %v161 = vld [vmem:[#allocation2 + $0x40] sm:$0xff]
  %v162 = vld [vmem:[#allocation2 + $0x48] sm:$0xff]
  %v163 = vld [vmem:[#allocation2 + $0x50] sm:$0xff]
  %v164 = vld [vmem:[#allocation2 + $0x58] sm:$0xff]
  %v165 = vld [vmem:[#allocation2 + $0x60] sm:$0xff]
  %v166 = vld [vmem:[#allocation2 + $0x68] sm:$0xff]
  %v167 = vld [vmem:[#allocation2 + $0x70] sm:$0xff]
  %v168 = vld [vmem:[#allocation2 + $0x78] sm:$0xff]
  %v169 = vld [vmem:[#allocation2 + $0x80] sm:$0xff]
  %v170 = vld [vmem:[#allocation2 + $0x88] sm:$0xff]
  %v171 = vld [vmem:[#allocation2 + $0x90] sm:$0xff]
  %v172 = vld [vmem:[#allocation2 + $0x98] sm:$0xff]
  %v173 = vld [vmem:[#allocation2 + $0xa0] sm:$0xff]
  %v174 = vld [vmem:[#allocation2 + $0xa8] sm:$0xff]
  %v175 = vld [vmem:[#allocation2 + $0xb0] sm:$0xff]
  %v176 = vld [vmem:[#allocation2 + $0xb8] sm:$0xff]
  %v177 = vld [vmem:[#allocation2 + $0xc0] sm:$0xff]
  %v178 = vld [vmem:[#allocation2 + $0xc8] sm:$0xff]
  %v179 = vld [vmem:[#allocation2 + $0xd0] sm:$0xff]
  %v180 = vld [vmem:[#allocation2 + $0xd8] sm:$0xff]
  %v181 = vld [vmem:[#allocation2 + $0xe0] sm:$0xff]
  %v182 = vld [vmem:[#allocation2 + $0xe8] sm:$0xff]
  %v183 = vld [vmem:[#allocation2 + $0xf0] sm:$0xff]
  %v184 = vld [vmem:[#allocation2 + $0xf8] sm:$0xff]
  %v185 = vld [vmem:[#allocation2 + $0x100] sm:$0xff]
  %v186 = vld [vmem:[#allocation2 + $0x108] sm:$0xff]
  %v187 = vld [vmem:[#allocation2 + $0x110] sm:$0xff]
  %v188 = vld [vmem:[#allocation2 + $0x118] sm:$0xff]
  %v189 = vld [vmem:[#allocation2 + $0x120] sm:$0xff]
  %v190 = vld [vmem:[#allocation2 + $0x128] sm:$0xff]
  %v191 = vld [vmem:[#allocation2 + $0x130] sm:$0xff]
  %v192 = vld [vmem:[#allocation2 + $0x138] sm:$0xff]
  %v193 = vld [vmem:[#allocation2 + $0x140] sm:$0xff]
  %v194 = vld [vmem:[#allocation2 + $0x148] sm:$0xff]
  %v195 = vld [vmem:[#allocation2 + $0x150] sm:$0xff]
  %v196 = vld [vmem:[#allocation2 + $0x158] sm:$0xff]
  %v197 = vld [vmem:[#allocation2 + $0x160] sm:$0xff]
  %v198 = vld [vmem:[#allocation2 + $0x168] sm:$0xff]
  %v199 = vld [vmem:[#allocation2 + $0x170] sm:$0xff]
  %v200 = vld [vmem:[#allocation2 + $0x178] sm:$0xff]
  %v201 = vld [vmem:[#allocation2 + $0x180] sm:$0xff]
  %v202 = vld [vmem:[#allocation2 + $0x188] sm:$0xff]
  %v203 = vld [vmem:[#allocation2 + $0x190] sm:$0xff]
  %v204 = vld [vmem:[#allocation2 + $0x198] sm:$0xff]
  %v205 = vld [vmem:[#allocation2 + $0x1a0] sm:$0xff]
  %v206 = vld [vmem:[#allocation2 + $0x1a8] sm:$0xff]
  %v207 = vld [vmem:[#allocation2 + $0x1b0] sm:$0xff]
  %v208 = vld [vmem:[#allocation2 + $0x1b8] sm:$0xff]
  %v209 = vld [vmem:[#allocation2 + $0x1c0] sm:$0xff]
  %v210 = vld [vmem:[#allocation2 + $0x1c8] sm:$0xff]
  %v211 = vld [vmem:[#allocation2 + $0x1d0] sm:$0xff]
  %v212 = vld [vmem:[#allocation2 + $0x1d8] sm:$0xff]
  %v213 = vld [vmem:[#allocation2 + $0x1e0] sm:$0xff]
  %v214 = vld [vmem:[#allocation2 + $0x1e8] sm:$0xff]
  %v215 = vld [vmem:[#allocation2 + $0x1f0] sm:$0xff]
  %v216 = vld [vmem:[#allocation2 + $0x1f8] sm:$0xff]
  %v281 = vunpack.c.l.b16 %v83
  %v282 = vunpack.c.l.b16 %v84
  %v283 = vunpack.c.l.b16 %v85
  %v284 = vunpack.c.l.b16 %v86
  %v285 = vunpack.c.l.b16 %v87
  %v286 = vunpack.c.l.b16 %v88
  %v287 = vunpack.c.l.b16 %v89
  %v288 = vunpack.c.l.b16 %v90
  %v289 = vunpack.c.l.b16 %v91
  %v290 = vunpack.c.l.b16 %v92
  %v291 = vunpack.c.l.b16 %v93
  %v292 = vunpack.c.l.b16 %v94
  %v293 = vunpack.c.l.b16 %v95
  %v294 = vunpack.c.l.b16 %v96
  %v295 = vunpack.c.l.b16 %v97
  %v296 = vunpack.c.l.b16 %v98
  %v297 = vunpack.c.l.b16 %v99
  %v298 = vunpack.c.l.b16 %v100
  %v299 = vunpack.c.l.b16 %v101
  %v300 = vunpack.c.l.b16 %v102
  %v301 = vunpack.c.l.b16 %v103
  %v302 = vunpack.c.l.b16 %v104
  %v303 = vunpack.c.l.b16 %v105
  %v304 = vunpack.c.l.b16 %v106
  %v305 = vunpack.c.l.b16 %v107
  %v306 = vunpack.c.l.b16 %v108
  %v307 = vunpack.c.l.b16 %v109
  %v308 = vunpack.c.l.b16 %v110
  %v309 = vunpack.c.l.b16 %v111
  %v310 = vunpack.c.l.b16 %v112
  %v311 = vunpack.c.l.b16 %v113
  %v312 = vunpack.c.l.b16 %v114
  %v313 = vunpack.c.l.b16 %v115
  %v314 = vunpack.c.l.b16 %v116
  %v315 = vunpack.c.l.b16 %v117
  %v316 = vunpack.c.l.b16 %v118
  %v317 = vunpack.c.l.b16 %v119
  %v318 = vunpack.c.l.b16 %v120
  %v319 = vunpack.c.l.b16 %v121
  %v320 = vunpack.c.l.b16 %v122
  %v321 = vunpack.c.l.b16 %v123
  %v322 = vunpack.c.l.b16 %v124
  %v323 = vunpack.c.l.b16 %v125
  %v324 = vunpack.c.l.b16 %v126
  %v325 = vunpack.c.l.b16 %v127
  %v326 = vunpack.c.l.b16 %v128
  %v327 = vunpack.c.l.b16 %v129
  %v328 = vunpack.c.l.b16 %v130
  %v329 = vunpack.c.l.b16 %v131
  %v330 = vunpack.c.l.b16 %v132
  %v331 = vunpack.c.l.b16 %v133
  %v332 = vunpack.c.l.b16 %v134
  %v333 = vunpack.c.l.b16 %v135
  %v334 = vunpack.c.l.b16 %v136
  %v335 = vunpack.c.l.b16 %v137
  %v336 = vunpack.c.l.b16 %v138
  %v337 = vunpack.c.l.b16 %v139
  %v338 = vunpack.c.l.b16 %v140
  %v339 = vunpack.c.l.b16 %v141
  %v340 = vunpack.c.l.b16 %v142
  %v341 = vunpack.c.l.b16 %v143
  %v342 = vunpack.c.l.b16 %v144
  %v343 = vunpack.c.l.b16 %v145
  %v344 = vunpack.c.l.b16 %v146
  %v345 = vpack.c.b16 %v282, %v281
  %v346 = vpack.c.b16 %v284, %v283
  %v347 = vpack.c.b16 %v286, %v285
  %v348 = vpack.c.b16 %v288, %v287
  %v349 = vpack.c.b16 %v290, %v289
  %v350 = vpack.c.b16 %v292, %v291
  %v351 = vpack.c.b16 %v294, %v293
  %v352 = vpack.c.b16 %v296, %v295
  %v353 = vpack.c.b16 %v298, %v297
  %v354 = vpack.c.b16 %v300, %v299
  %v355 = vpack.c.b16 %v302, %v301
  %v356 = vpack.c.b16 %v304, %v303
  %v357 = vpack.c.b16 %v306, %v305
  %v358 = vpack.c.b16 %v308, %v307
  %v359 = vpack.c.b16 %v310, %v309
  %v360 = vpack.c.b16 %v312, %v311
  %v361 = vpack.c.b16 %v314, %v313
  %v362 = vpack.c.b16 %v316, %v315
  %v363 = vpack.c.b16 %v318, %v317
  %v364 = vpack.c.b16 %v320, %v319
  %v365 = vpack.c.b16 %v322, %v321
  %v366 = vpack.c.b16 %v324, %v323
  %v367 = vpack.c.b16 %v326, %v325
  %v368 = vpack.c.b16 %v328, %v327
  %v369 = vpack.c.b16 %v330, %v329
  %v370 = vpack.c.b16 %v332, %v331
  %v371 = vpack.c.b16 %v334, %v333
  %v372 = vpack.c.b16 %v336, %v335
  %v373 = vpack.c.b16 %v338, %v337
  %v374 = vpack.c.b16 %v340, %v339
  %v375 = vpack.c.b16 %v342, %v341
  %v376 = vpack.c.b16 %v344, %v343
  %v383 = vunpack.c.l.b16 %v147
  %v384 = vunpack.c.l.b16 %v148
  %v385 = vunpack.c.l.b16 %v149
  %v386 = vunpack.c.l.b16 %v150
  %v387 = vunpack.c.l.b16 %v151
  %v388 = vunpack.c.l.b16 %v152
  %v389 = vpack.c.b16 %v384, %v383
  %v390 = vpack.c.b16 %v386, %v385
  %v391 = vpack.c.b16 %v388, %v387
  %vm395 = vcmask 392192
  %v397 = vsel %vm395, %v345, 0
  %v400 = vsel %vm395, %v346, 0
  %v403 = vsel %vm395, %v347, 0
  %v406 = vsel %vm395, %v348, 0
  %v409 = vsel %vm395, %v349, 0
  %v412 = vsel %vm395, %v350, 0
  %v415 = vsel %vm395, %v351, 0
  %v418 = vsel %vm395, %v352, 0
  %v421 = vsel %vm395, %v353, 0
  %v424 = vsel %vm395, %v354, 0
  %v427 = vsel %vm395, %v355, 0
  %v430 = vsel %vm395, %v356, 0
  %v433 = vsel %vm395, %v357, 0
  %v436 = vsel %vm395, %v358, 0
  %v439 = vsel %vm395, %v359, 0
  %v442 = vsel %vm395, %v360, 0
  %v445 = vsel %vm395, %v361, 0
  %v448 = vsel %vm395, %v362, 0
  %v451 = vsel %vm395, %v363, 0
  %v454 = vsel %vm395, %v364, 0
  %v457 = vsel %vm395, %v365, 0
  %v460 = vsel %vm395, %v366, 0
  %v463 = vsel %vm395, %v367, 0
  %v466 = vsel %vm395, %v368, 0
  %v469 = vsel %vm395, %v369, 0
  %v472 = vsel %vm395, %v370, 0
  %v475 = vsel %vm395, %v371, 0
  %v478 = vsel %vm395, %v372, 0
  %v481 = vsel %vm395, %v373, 0
  %v484 = vsel %vm395, %v374, 0
  %v487 = vsel %vm395, %v375, 0
  %v490 = vsel %vm395, %v376, 0
  %492 = vmatprep.subr.bf16.mxu0 0
  %493 = vmatpush1.bf16.msra.mxu0 0
  %494 = vmatprep.subr.bf16.mxu0 0
  %495 = vmatpush1.bf16.msra.mxu0 0
  %496 = vmatprep.subr.bf16.mxu0 0
  %497 = vmatpush1.bf16.msra.mxu0 0
  %498 = vmatprep.subr.bf16.mxu0 0
  %499 = vmatpush1.bf16.msra.mxu0 0
  %500 = vmatprep.subr.bf16.mxu0 0
  %501 = vmatpush1.bf16.msra.mxu0 0
  %502 = vmatprep.subr.bf16.mxu0 0
  %503 = vmatpush1.bf16.msra.mxu0 %v391
  %504 = vmatprep.subr.bf16.mxu0 0
  %505 = vmatpush1.bf16.msra.mxu0 %v390
  %506 = vmatprep.subr.bf16.mxu0 0
  %507 = vmatpush1.bf16.msra.mxu0 %v389
  %508 = vmatprep.subr.bf16.mxu0 0
  %509 = vmatpush2.bf16.msra.mxu0 0
  %510 = vmatprep.subr.bf16.mxu0 0
  %511 = vmatpush2.bf16.msra.mxu0 0
  %512 = vmatprep.subr.bf16.mxu0 0
  %513 = vmatpush2.bf16.msra.mxu0 0
  %514 = vmatprep.subr.bf16.mxu0 0
  %515 = vmatpush2.bf16.msra.mxu0 0
  %516 = vmatprep.subr.bf16.mxu0 0
  %517 = vmatpush2.bf16.msra.mxu0 0
  %518 = vmatprep.subr.bf16.mxu0 0
  %519 = vmatpush2.bf16.msra.mxu0 0
  %520 = vmatprep.subr.bf16.mxu0 0
  %521 = vmatpush2.bf16.msra.mxu0 0
  %522 = vmatprep.subr.bf16.mxu0 0
  %523 = vmatpush2.bf16.msra.mxu0 0
  %524 = vmatprep.mubr.bf16.mxu0 0
  %525 = vmatmul.mubr.bf16.gmra.mxu0 %v397
  %v526 = vpop.f32.mrf.mxu0
  %v527 = vadd.f32 0.0, %v526
  %v528 = vpop.f32.mrf.mxu0
  %v529 = vpop.f32.mrf.mxu0
  %v530 = vadd.f32 0.0, %v529
  %v531 = vpop.f32.mrf.mxu0
  %532 = vmatprep.mubr.bf16.mxu0 0
  %533 = vmatmul.mubr.bf16.gmra.mxu0 %v400
  %v534 = vpop.f32.mrf.mxu0
  %v535 = vadd.f32 0.0, %v534
  %v536 = vpop.f32.mrf.mxu0
  %v537 = vpop.f32.mrf.mxu0
  %v538 = vadd.f32 0.0, %v537
  %v539 = vpop.f32.mrf.mxu0
  %540 = vmatprep.mubr.bf16.mxu0 0
  %541 = vmatmul.mubr.bf16.gmra.mxu0 %v403
  %v542 = vpop.f32.mrf.mxu0
  %v543 = vadd.f32 0.0, %v542
  %v544 = vpop.f32.mrf.mxu0
  %v545 = vpop.f32.mrf.mxu0
  %v546 = vadd.f32 0.0, %v545
  %v547 = vpop.f32.mrf.mxu0
  %548 = vmatprep.mubr.bf16.mxu0 0
  %549 = vmatmul.mubr.bf16.gmra.mxu0 %v406
  %v550 = vpop.f32.mrf.mxu0
  %v551 = vadd.f32 0.0, %v550
  %v552 = vpop.f32.mrf.mxu0
  %v553 = vpop.f32.mrf.mxu0
  %v554 = vadd.f32 0.0, %v553
  %v555 = vpop.f32.mrf.mxu0
  %556 = vmatprep.mubr.bf16.mxu0 0
  %557 = vmatmul.mubr.bf16.gmra.mxu0 %v409
  %v558 = vpop.f32.mrf.mxu0
  %v559 = vadd.f32 0.0, %v558
  %v560 = vpop.f32.mrf.mxu0
  %v561 = vpop.f32.mrf.mxu0
  %v562 = vadd.f32 0.0, %v561
  %v563 = vpop.f32.mrf.mxu0
  %564 = vmatprep.mubr.bf16.mxu0 0
  %565 = vmatmul.mubr.bf16.gmra.mxu0 %v412
  %v566 = vpop.f32.mrf.mxu0
  %v567 = vadd.f32 0.0, %v566
  %v568 = vpop.f32.mrf.mxu0
  %v569 = vpop.f32.mrf.mxu0
  %v570 = vadd.f32 0.0, %v569
  %v571 = vpop.f32.mrf.mxu0
  %572 = vmatprep.mubr.bf16.mxu0 0
  %573 = vmatmul.mubr.bf16.gmra.mxu0 %v415
  %v574 = vpop.f32.mrf.mxu0
  %v575 = vadd.f32 0.0, %v574
  %v576 = vpop.f32.mrf.mxu0
  %v577 = vpop.f32.mrf.mxu0
  %v578 = vadd.f32 0.0, %v577
  %v579 = vpop.f32.mrf.mxu0
  %580 = vmatprep.mubr.bf16.mxu0 0
  %581 = vmatmul.mubr.bf16.gmra.mxu0 %v418
  %v582 = vpop.f32.mrf.mxu0
  %v583 = vadd.f32 0.0, %v582
  %v584 = vpop.f32.mrf.mxu0
  %v585 = vpop.f32.mrf.mxu0
  %v586 = vadd.f32 0.0, %v585
  %v587 = vpop.f32.mrf.mxu0
  %588 = vmatprep.mubr.bf16.mxu0 0
  %589 = vmatmul.mubr.bf16.gmra.mxu0 %v421
  %v590 = vpop.f32.mrf.mxu0
  %v591 = vadd.f32 0.0, %v590
  %v592 = vpop.f32.mrf.mxu0
  %v593 = vpop.f32.mrf.mxu0
  %v594 = vadd.f32 0.0, %v593
  %v595 = vpop.f32.mrf.mxu0
  %596 = vmatprep.mubr.bf16.mxu0 0
  %597 = vmatmul.mubr.bf16.gmra.mxu0 %v424
  %v598 = vpop.f32.mrf.mxu0
  %v599 = vadd.f32 0.0, %v598
  %v600 = vpop.f32.mrf.mxu0
  %v601 = vpop.f32.mrf.mxu0
  %v602 = vadd.f32 0.0, %v601
  %v603 = vpop.f32.mrf.mxu0
  %604 = vmatprep.mubr.bf16.mxu0 0
  %605 = vmatmul.mubr.bf16.gmra.mxu0 %v427
  %v606 = vpop.f32.mrf.mxu0
  %v607 = vadd.f32 0.0, %v606
  %v608 = vpop.f32.mrf.mxu0
  %v609 = vpop.f32.mrf.mxu0
  %v610 = vadd.f32 0.0, %v609
  %v611 = vpop.f32.mrf.mxu0
  %612 = vmatprep.mubr.bf16.mxu0 0
  %613 = vmatmul.mubr.bf16.gmra.mxu0 %v430
  %v614 = vpop.f32.mrf.mxu0
  %v615 = vadd.f32 0.0, %v614
  %v616 = vpop.f32.mrf.mxu0
  %v617 = vpop.f32.mrf.mxu0
  %v618 = vadd.f32 0.0, %v617
  %v619 = vpop.f32.mrf.mxu0
  %620 = vmatprep.mubr.bf16.mxu0 0
  %621 = vmatmul.mubr.bf16.gmra.mxu0 %v433
  %v622 = vpop.f32.mrf.mxu0
  %v623 = vadd.f32 0.0, %v622
  %v624 = vpop.f32.mrf.mxu0
  %v625 = vpop.f32.mrf.mxu0
  %v626 = vadd.f32 0.0, %v625
  %v627 = vpop.f32.mrf.mxu0
  %628 = vmatprep.mubr.bf16.mxu0 0
  %629 = vmatmul.mubr.bf16.gmra.mxu0 %v436
  %v630 = vpop.f32.mrf.mxu0
  %v631 = vadd.f32 0.0, %v630
  %v632 = vpop.f32.mrf.mxu0
  %v633 = vpop.f32.mrf.mxu0
  %v634 = vadd.f32 0.0, %v633
  %v635 = vpop.f32.mrf.mxu0
  %636 = vmatprep.mubr.bf16.mxu0 0
  %637 = vmatmul.mubr.bf16.gmra.mxu0 %v439
  %v638 = vpop.f32.mrf.mxu0
  %v639 = vadd.f32 0.0, %v638
  %v640 = vpop.f32.mrf.mxu0
  %v641 = vpop.f32.mrf.mxu0
  %v642 = vadd.f32 0.0, %v641
  %v643 = vpop.f32.mrf.mxu0
  %644 = vmatprep.mubr.bf16.mxu0 0
  %645 = vmatmul.mubr.bf16.gmra.mxu0 %v442
  %v646 = vpop.f32.mrf.mxu0
  %v647 = vadd.f32 0.0, %v646
  %v648 = vpop.f32.mrf.mxu0
  %v649 = vpop.f32.mrf.mxu0
  %v650 = vadd.f32 0.0, %v649
  %v651 = vpop.f32.mrf.mxu0
  %652 = vmatprep.mubr.bf16.mxu0 0
  %653 = vmatmul.mubr.bf16.gmra.mxu0 %v445
  %v654 = vpop.f32.mrf.mxu0
  %v655 = vadd.f32 0.0, %v654
  %v656 = vpop.f32.mrf.mxu0
  %v657 = vpop.f32.mrf.mxu0
  %v658 = vadd.f32 0.0, %v657
  %v659 = vpop.f32.mrf.mxu0
  %660 = vmatprep.mubr.bf16.mxu0 0
  %661 = vmatmul.mubr.bf16.gmra.mxu0 %v448
  %v662 = vpop.f32.mrf.mxu0
  %v663 = vadd.f32 0.0, %v662
  %v664 = vpop.f32.mrf.mxu0
  %v665 = vpop.f32.mrf.mxu0
  %v666 = vadd.f32 0.0, %v665
  %v667 = vpop.f32.mrf.mxu0
  %668 = vmatprep.mubr.bf16.mxu0 0
  %669 = vmatmul.mubr.bf16.gmra.mxu0 %v451
  %v670 = vpop.f32.mrf.mxu0
  %v671 = vadd.f32 0.0, %v670
  %v672 = vpop.f32.mrf.mxu0
  %v673 = vpop.f32.mrf.mxu0
  %v674 = vadd.f32 0.0, %v673
  %v675 = vpop.f32.mrf.mxu0
  %676 = vmatprep.mubr.bf16.mxu0 0
  %677 = vmatmul.mubr.bf16.gmra.mxu0 %v454
  %v678 = vpop.f32.mrf.mxu0
  %v679 = vadd.f32 0.0, %v678
  %v680 = vpop.f32.mrf.mxu0
  %v681 = vpop.f32.mrf.mxu0
  %v682 = vadd.f32 0.0, %v681
  %v683 = vpop.f32.mrf.mxu0
  %684 = vmatprep.mubr.bf16.mxu0 0
  %685 = vmatmul.mubr.bf16.gmra.mxu0 %v457
  %v686 = vpop.f32.mrf.mxu0
  %v687 = vadd.f32 0.0, %v686
  %v688 = vpop.f32.mrf.mxu0
  %v689 = vpop.f32.mrf.mxu0
  %v690 = vadd.f32 0.0, %v689
  %v691 = vpop.f32.mrf.mxu0
  %692 = vmatprep.mubr.bf16.mxu0 0
  %693 = vmatmul.mubr.bf16.gmra.mxu0 %v460
  %v694 = vpop.f32.mrf.mxu0
  %v695 = vadd.f32 0.0, %v694
  %v696 = vpop.f32.mrf.mxu0
  %v697 = vpop.f32.mrf.mxu0
  %v698 = vadd.f32 0.0, %v697
  %v699 = vpop.f32.mrf.mxu0
  %700 = vmatprep.mubr.bf16.mxu0 0
  %701 = vmatmul.mubr.bf16.gmra.mxu0 %v463
  %v702 = vpop.f32.mrf.mxu0
  %v703 = vadd.f32 0.0, %v702
  %v704 = vpop.f32.mrf.mxu0
  %v705 = vpop.f32.mrf.mxu0
  %v706 = vadd.f32 0.0, %v705
  %v707 = vpop.f32.mrf.mxu0
  %708 = vmatprep.mubr.bf16.mxu0 0
  %709 = vmatmul.mubr.bf16.gmra.mxu0 %v466
  %v710 = vpop.f32.mrf.mxu0
  %v711 = vadd.f32 0.0, %v710
  %v712 = vpop.f32.mrf.mxu0
  %v713 = vpop.f32.mrf.mxu0
  %v714 = vadd.f32 0.0, %v713
  %v715 = vpop.f32.mrf.mxu0
  %716 = vmatprep.mubr.bf16.mxu0 0
  %717 = vmatmul.mubr.bf16.gmra.mxu0 %v469
  %v718 = vpop.f32.mrf.mxu0
  %v719 = vadd.f32 0.0, %v718
  %v720 = vpop.f32.mrf.mxu0
  %v721 = vpop.f32.mrf.mxu0
  %v722 = vadd.f32 0.0, %v721
  %v723 = vpop.f32.mrf.mxu0
  %724 = vmatprep.mubr.bf16.mxu0 0
  %725 = vmatmul.mubr.bf16.gmra.mxu0 %v472
  %v726 = vpop.f32.mrf.mxu0
  %v727 = vadd.f32 0.0, %v726
  %v728 = vpop.f32.mrf.mxu0
  %v729 = vpop.f32.mrf.mxu0
  %v730 = vadd.f32 0.0, %v729
  %v731 = vpop.f32.mrf.mxu0
  %732 = vmatprep.mubr.bf16.mxu0 0
  %733 = vmatmul.mubr.bf16.gmra.mxu0 %v475
  %v734 = vpop.f32.mrf.mxu0
  %v735 = vadd.f32 0.0, %v734
  %v736 = vpop.f32.mrf.mxu0
  %v737 = vpop.f32.mrf.mxu0
  %v738 = vadd.f32 0.0, %v737
  %v739 = vpop.f32.mrf.mxu0
  %740 = vmatprep.mubr.bf16.mxu0 0
  %741 = vmatmul.mubr.bf16.gmra.mxu0 %v478
  %v742 = vpop.f32.mrf.mxu0
  %v743 = vadd.f32 0.0, %v742
  %v744 = vpop.f32.mrf.mxu0
  %v745 = vpop.f32.mrf.mxu0
  %v746 = vadd.f32 0.0, %v745
  %v747 = vpop.f32.mrf.mxu0
  %748 = vmatprep.mubr.bf16.mxu0 0
  %749 = vmatmul.mubr.bf16.gmra.mxu0 %v481
  %v750 = vpop.f32.mrf.mxu0
  %v751 = vadd.f32 0.0, %v750
  %v752 = vpop.f32.mrf.mxu0
  %v753 = vpop.f32.mrf.mxu0
  %v754 = vadd.f32 0.0, %v753
  %v755 = vpop.f32.mrf.mxu0
  %756 = vmatprep.mubr.bf16.mxu0 0
  %757 = vmatmul.mubr.bf16.gmra.mxu0 %v484
  %v758 = vpop.f32.mrf.mxu0
  %v759 = vadd.f32 0.0, %v758
  %v760 = vpop.f32.mrf.mxu0
  %v761 = vpop.f32.mrf.mxu0
  %v762 = vadd.f32 0.0, %v761
  %v763 = vpop.f32.mrf.mxu0
  %764 = vmatprep.mubr.bf16.mxu0 0
  %765 = vmatmul.mubr.bf16.gmra.mxu0 %v487
  %v766 = vpop.f32.mrf.mxu0
  %v767 = vadd.f32 0.0, %v766
  %v768 = vpop.f32.mrf.mxu0
  %v769 = vpop.f32.mrf.mxu0
  %v770 = vadd.f32 0.0, %v769
  %v771 = vpop.f32.mrf.mxu0
  %772 = vmatprep.mubr.bf16.mxu0 0
  %773 = vmatmul.mubr.bf16.gmra.mxu0 %v490
  %v774 = vpop.f32.mrf.mxu0
  %v775 = vadd.f32 0.0, %v774
  %v776 = vpop.f32.mrf.mxu0
  %v777 = vpop.f32.mrf.mxu0
  %v778 = vadd.f32 0.0, %v777
  %v779 = vpop.f32.mrf.mxu0
  %780 = vdwg.mxu0
  %v781 = vadd.f32 %v153, %v527
  %v782 = vadd.f32 %v154, %v530
  %v783 = vadd.f32 %v155, %v535
  %v784 = vadd.f32 %v156, %v538
  %v785 = vadd.f32 %v157, %v543
  %v786 = vadd.f32 %v158, %v546
  %v787 = vadd.f32 %v159, %v551
  %v788 = vadd.f32 %v160, %v554
  %v789 = vadd.f32 %v161, %v559
  %v790 = vadd.f32 %v162, %v562
  %v791 = vadd.f32 %v163, %v567
  %v792 = vadd.f32 %v164, %v570
  %v793 = vadd.f32 %v165, %v575
  %v794 = vadd.f32 %v166, %v578
  %v795 = vadd.f32 %v167, %v583
  %v796 = vadd.f32 %v168, %v586
  %v797 = vadd.f32 %v169, %v591
  %v798 = vadd.f32 %v170, %v594
  %v799 = vadd.f32 %v171, %v599
  %v800 = vadd.f32 %v172, %v602
  %v801 = vadd.f32 %v173, %v607
  %v802 = vadd.f32 %v174, %v610
  %v803 = vadd.f32 %v175, %v615
  %v804 = vadd.f32 %v176, %v618
  %v805 = vadd.f32 %v177, %v623
  %v806 = vadd.f32 %v178, %v626
  %v807 = vadd.f32 %v179, %v631
  %v808 = vadd.f32 %v180, %v634
  %v809 = vadd.f32 %v181, %v639
  %v810 = vadd.f32 %v182, %v642
  %v811 = vadd.f32 %v183, %v647
  %v812 = vadd.f32 %v184, %v650
  %v813 = vadd.f32 %v185, %v655
  %v814 = vadd.f32 %v186, %v658
  %v815 = vadd.f32 %v187, %v663
  %v816 = vadd.f32 %v188, %v666
  %v817 = vadd.f32 %v189, %v671
  %v818 = vadd.f32 %v190, %v674
  %v819 = vadd.f32 %v191, %v679
  %v820 = vadd.f32 %v192, %v682
  %v821 = vadd.f32 %v193, %v687
  %v822 = vadd.f32 %v194, %v690
  %v823 = vadd.f32 %v195, %v695
  %v824 = vadd.f32 %v196, %v698
  %v825 = vadd.f32 %v197, %v703
  %v826 = vadd.f32 %v198, %v706
  %v827 = vadd.f32 %v199, %v711
  %v828 = vadd.f32 %v200, %v714
  %v829 = vadd.f32 %v201, %v719
  %v830 = vadd.f32 %v202, %v722
  %v831 = vadd.f32 %v203, %v727
  %v832 = vadd.f32 %v204, %v730
  %v833 = vadd.f32 %v205, %v735
  %v834 = vadd.f32 %v206, %v738
  %v835 = vadd.f32 %v207, %v743
  %v836 = vadd.f32 %v208, %v746
  %v837 = vadd.f32 %v209, %v751
  %v838 = vadd.f32 %v210, %v754
  %v839 = vadd.f32 %v211, %v759
  %v840 = vadd.f32 %v212, %v762
  %v841 = vadd.f32 %v213, %v767
  %v842 = vadd.f32 %v214, %v770
  %v843 = vadd.f32 %v215, %v775
  %v844 = vadd.f32 %v216, %v778
  %845 = vst [vmem:[#allocation2] sm:$0xff] %v781
  %846 = vst [vmem:[#allocation2 + $0x8] sm:$0xff] %v782
  %847 = vst [vmem:[#allocation2 + $0x10] sm:$0xff] %v783
  %848 = vst [vmem:[#allocation2 + $0x18] sm:$0xff] %v784
  %849 = vst [vmem:[#allocation2 + $0x20] sm:$0xff] %v785
  %850 = vst [vmem:[#allocation2 + $0x28] sm:$0xff] %v786
  %851 = vst [vmem:[#allocation2 + $0x30] sm:$0xff] %v787
  %852 = vst [vmem:[#allocation2 + $0x38] sm:$0xff] %v788
  %853 = vst [vmem:[#allocation2 + $0x40] sm:$0xff] %v789
  %854 = vst [vmem:[#allocation2 + $0x48] sm:$0xff] %v790
  %855 = vst [vmem:[#allocation2 + $0x50] sm:$0xff] %v791
  %856 = vst [vmem:[#allocation2 + $0x58] sm:$0xff] %v792
  %857 = vst [vmem:[#allocation2 + $0x60] sm:$0xff] %v793
  %858 = vst [vmem:[#allocation2 + $0x68] sm:$0xff] %v794
  %859 = vst [vmem:[#allocation2 + $0x70] sm:$0xff] %v795
  %860 = vst [vmem:[#allocation2 + $0x78] sm:$0xff] %v796
  %861 = vst [vmem:[#allocation2 + $0x80] sm:$0xff] %v797
  %862 = vst [vmem:[#allocation2 + $0x88] sm:$0xff] %v798
  %863 = vst [vmem:[#allocation2 + $0x90] sm:$0xff] %v799
  %864 = vst [vmem:[#allocation2 + $0x98] sm:$0xff] %v800
  %865 = vst [vmem:[#allocation2 + $0xa0] sm:$0xff] %v801
  %866 = vst [vmem:[#allocation2 + $0xa8] sm:$0xff] %v802
  %867 = vst [vmem:[#allocation2 + $0xb0] sm:$0xff] %v803
  %868 = vst [vmem:[#allocation2 + $0xb8] sm:$0xff] %v804
  %869 = vst [vmem:[#allocation2 + $0xc0] sm:$0xff] %v805
  %870 = vst [vmem:[#allocation2 + $0xc8] sm:$0xff] %v806
  %871 = vst [vmem:[#allocation2 + $0xd0] sm:$0xff] %v807
  %872 = vst [vmem:[#allocation2 + $0xd8] sm:$0xff] %v808
  %873 = vst [vmem:[#allocation2 + $0xe0] sm:$0xff] %v809
  %874 = vst [vmem:[#allocation2 + $0xe8] sm:$0xff] %v810
  %875 = vst [vmem:[#allocation2 + $0xf0] sm:$0xff] %v811
  %876 = vst [vmem:[#allocation2 + $0xf8] sm:$0xff] %v812
  %877 = vst [vmem:[#allocation2 + $0x100] sm:$0xff] %v813
  %878 = vst [vmem:[#allocation2 + $0x108] sm:$0xff] %v814
  %879 = vst [vmem:[#allocation2 + $0x110] sm:$0xff] %v815
  %880 = vst [vmem:[#allocation2 + $0x118] sm:$0xff] %v816
  %881 = vst [vmem:[#allocation2 + $0x120] sm:$0xff] %v817
  %882 = vst [vmem:[#allocation2 + $0x128] sm:$0xff] %v818
  %883 = vst [vmem:[#allocation2 + $0x130] sm:$0xff] %v819
  %884 = vst [vmem:[#allocation2 + $0x138] sm:$0xff] %v820
  %885 = vst [vmem:[#allocation2 + $0x140] sm:$0xff] %v821
  %886 = vst [vmem:[#allocation2 + $0x148] sm:$0xff] %v822
  %887 = vst [vmem:[#allocation2 + $0x150] sm:$0xff] %v823
  %888 = vst [vmem:[#allocation2 + $0x158] sm:$0xff] %v824
  %889 = vst [vmem:[#allocation2 + $0x160] sm:$0xff] %v825
  %890 = vst [vmem:[#allocation2 + $0x168] sm:$0xff] %v826
  %891 = vst [vmem:[#allocation2 + $0x170] sm:$0xff] %v827
  %892 = vst [vmem:[#allocation2 + $0x178] sm:$0xff] %v828
  %893 = vst [vmem:[#allocation2 + $0x180] sm:$0xff] %v829
  %894 = vst [vmem:[#allocation2 + $0x188] sm:$0xff] %v830
  %895 = vst [vmem:[#allocation2 + $0x190] sm:$0xff] %v831
  %896 = vst [vmem:[#allocation2 + $0x198] sm:$0xff] %v832
  %897 = vst [vmem:[#allocation2 + $0x1a0] sm:$0xff] %v833
  %898 = vst [vmem:[#allocation2 + $0x1a8] sm:$0xff] %v834
  %899 = vst [vmem:[#allocation2 + $0x1b0] sm:$0xff] %v835
  %900 = vst [vmem:[#allocation2 + $0x1b8] sm:$0xff] %v836
  %901 = vst [vmem:[#allocation2 + $0x1c0] sm:$0xff] %v837
  %902 = vst [vmem:[#allocation2 + $0x1c8] sm:$0xff] %v838
  %903 = vst [vmem:[#allocation2 + $0x1d0] sm:$0xff] %v839
  %904 = vst [vmem:[#allocation2 + $0x1d8] sm:$0xff] %v840
  %905 = vst [vmem:[#allocation2 + $0x1e0] sm:$0xff] %v841
  %906 = vst [vmem:[#allocation2 + $0x1e8] sm:$0xff] %v842
  %907 = vst [vmem:[#allocation2 + $0x1f0] sm:$0xff] %v843
  %908 = vst [vmem:[#allocation2 + $0x1f8] sm:$0xff] %v844
  // Predicated region
  $region18: #{unet_forward.17} parent=0 // pred_check
    %p909 = pneg %p15
  $region19: #{unet_forward.17} parent=0 // pred_check_branch
    %911 = sbr.rel (%p909) target = $region21
  $region20: #{unet_forward.17} parent=0 // pred_region
    %v912 = vld [vmem:[#allocation2] sm:$0xff]
    %v913 = vld [vmem:[#allocation2 + $0x8] sm:$0xff]
    %v914 = vld [vmem:[#allocation2 + $0x10] sm:$0xff]
    %v915 = vld [vmem:[#allocation2 + $0x18] sm:$0xff]
    %v916 = vld [vmem:[#allocation2 + $0x20] sm:$0xff]
    %v917 = vld [vmem:[#allocation2 + $0x28] sm:$0xff]
    %v918 = vld [vmem:[#allocation2 + $0x30] sm:$0xff]
    %v919 = vld [vmem:[#allocation2 + $0x38] sm:$0xff]
    %v920 = vld [vmem:[#allocation2 + $0x40] sm:$0xff]
    %v921 = vld [vmem:[#allocation2 + $0x48] sm:$0xff]
    %v922 = vld [vmem:[#allocation2 + $0x50] sm:$0xff]
    %v923 = vld [vmem:[#allocation2 + $0x58] sm:$0xff]
    %v924 = vld [vmem:[#allocation2 + $0x60] sm:$0xff]
    %v925 = vld [vmem:[#allocation2 + $0x68] sm:$0xff]
    %v926 = vld [vmem:[#allocation2 + $0x70] sm:$0xff]
    %v927 = vld [vmem:[#allocation2 + $0x78] sm:$0xff]
    %v928 = vld [vmem:[#allocation2 + $0x80] sm:$0xff]
    %v929 = vld [vmem:[#allocation2 + $0x88] sm:$0xff]
    %v930 = vld [vmem:[#allocation2 + $0x90] sm:$0xff]
    %v931 = vld [vmem:[#allocation2 + $0x98] sm:$0xff]
    %v932 = vld [vmem:[#allocation2 + $0xa0] sm:$0xff]
    %v933 = vld [vmem:[#allocation2 + $0xa8] sm:$0xff]
    %v934 = vld [vmem:[#allocation2 + $0xb0] sm:$0xff]
    %v935 = vld [vmem:[#allocation2 + $0xb8] sm:$0xff]
    %v936 = vld [vmem:[#allocation2 + $0xc0] sm:$0xff]
    %v937 = vld [vmem:[#allocation2 + $0xc8] sm:$0xff]
    %v938 = vld [vmem:[#allocation2 + $0xd0] sm:$0xff]
    %v939 = vld [vmem:[#allocation2 + $0xd8] sm:$0xff]
    %v940 = vld [vmem:[#allocation2 + $0xe0] sm:$0xff]
    %v941 = vld [vmem:[#allocation2 + $0xe8] sm:$0xff]
    %v942 = vld [vmem:[#allocation2 + $0xf0] sm:$0xff]
    %v943 = vld [vmem:[#allocation2 + $0xf8] sm:$0xff]
    %v944 = vld [vmem:[#allocation2 + $0x100] sm:$0xff]
    %v945 = vld [vmem:[#allocation2 + $0x108] sm:$0xff]
    %v946 = vld [vmem:[#allocation2 + $0x110] sm:$0xff]
    %v947 = vld [vmem:[#allocation2 + $0x118] sm:$0xff]
    %v948 = vld [vmem:[#allocation2 + $0x120] sm:$0xff]
    %v949 = vld [vmem:[#allocation2 + $0x128] sm:$0xff]
    %v950 = vld [vmem:[#allocation2 + $0x130] sm:$0xff]
    %v951 = vld [vmem:[#allocation2 + $0x138] sm:$0xff]
    %v952 = vld [vmem:[#allocation2 + $0x140] sm:$0xff]
    %v953 = vld [vmem:[#allocation2 + $0x148] sm:$0xff]
    %v954 = vld [vmem:[#allocation2 + $0x150] sm:$0xff]
    %v955 = vld [vmem:[#allocation2 + $0x158] sm:$0xff]
    %v956 = vld [vmem:[#allocation2 + $0x160] sm:$0xff]
    %v957 = vld [vmem:[#allocation2 + $0x168] sm:$0xff]
    %v958 = vld [vmem:[#allocation2 + $0x170] sm:$0xff]
    %v959 = vld [vmem:[#allocation2 + $0x178] sm:$0xff]
    %v960 = vld [vmem:[#allocation2 + $0x180] sm:$0xff]
    %v961 = vld [vmem:[#allocation2 + $0x188] sm:$0xff]
    %v962 = vld [vmem:[#allocation2 + $0x190] sm:$0xff]
    %v963 = vld [vmem:[#allocation2 + $0x198] sm:$0xff]
    %v964 = vld [vmem:[#allocation2 + $0x1a0] sm:$0xff]
    %v965 = vld [vmem:[#allocation2 + $0x1a8] sm:$0xff]
    %v966 = vld [vmem:[#allocation2 + $0x1b0] sm:$0xff]
    %v967 = vld [vmem:[#allocation2 + $0x1b8] sm:$0xff]
    %v968 = vld [vmem:[#allocation2 + $0x1c0] sm:$0xff]
    %v969 = vld [vmem:[#allocation2 + $0x1c8] sm:$0xff]
    %v970 = vld [vmem:[#allocation2 + $0x1d0] sm:$0xff]
    %v971 = vld [vmem:[#allocation2 + $0x1d8] sm:$0xff]
    %v972 = vld [vmem:[#allocation2 + $0x1e0] sm:$0xff]
    %v973 = vld [vmem:[#allocation2 + $0x1e8] sm:$0xff]
    %v974 = vld [vmem:[#allocation2 + $0x1f0] sm:$0xff]
    %v975 = vld [vmem:[#allocation2 + $0x1f8] sm:$0xff]
    %v976 = vld [vmem:[%s2] sm:$0x1]
    %v978 = vlaneseq
    %v979 = vshrl.u32 %v978, 7
    %v980 = vsub.s32 0, %v979
    %v981 = vrot.slane %v976, %v980
    %v983 = vadd.f32 %v912, %v981
    %v984 = vadd.f32 %v913, %v981
    %v985 = vadd.f32 %v914, %v981
    %v986 = vadd.f32 %v915, %v981
    %v987 = vadd.f32 %v916, %v981
    %v988 = vadd.f32 %v917, %v981
    %v989 = vadd.f32 %v918, %v981
    %v990 = vadd.f32 %v919, %v981
    %v991 = vadd.f32 %v920, %v981
    %v992 = vadd.f32 %v921, %v981
    %v993 = vadd.f32 %v922, %v981
    %v994 = vadd.f32 %v923, %v981
    %v995 = vadd.f32 %v924, %v981
    %v996 = vadd.f32 %v925, %v981
    %v997 = vadd.f32 %v926, %v981
    %v998 = vadd.f32 %v927, %v981
    %v999 = vadd.f32 %v928, %v981
    %v1000 = vadd.f32 %v929, %v981
    %v1001 = vadd.f32 %v930, %v981
    %v1002 = vadd.f32 %v931, %v981
    %v1003 = vadd.f32 %v932, %v981
    %v1004 = vadd.f32 %v933, %v981
    %v1005 = vadd.f32 %v934, %v981
    %v1006 = vadd.f32 %v935, %v981
    %v1007 = vadd.f32 %v936, %v981
    %v1008 = vadd.f32 %v937, %v981
    %v1009 = vadd.f32 %v938, %v981
    %v1010 = vadd.f32 %v939, %v981
    %v1011 = vadd.f32 %v940, %v981
    %v1012 = vadd.f32 %v941, %v981
    %v1013 = vadd.f32 %v942, %v981
    %v1014 = vadd.f32 %v943, %v981
    %v1015 = vadd.f32 %v944, %v981
    %v1016 = vadd.f32 %v945, %v981
    %v1017 = vadd.f32 %v946, %v981
    %v1018 = vadd.f32 %v947, %v981
    %v1019 = vadd.f32 %v948, %v981
    %v1020 = vadd.f32 %v949, %v981
    %v1021 = vadd.f32 %v950, %v981
    %v1022 = vadd.f32 %v951, %v981
    %v1023 = vadd.f32 %v952, %v981
    %v1024 = vadd.f32 %v953, %v981
    %v1025 = vadd.f32 %v954, %v981
    %v1026 = vadd.f32 %v955, %v981
    %v1027 = vadd.f32 %v956, %v981
    %v1028 = vadd.f32 %v957, %v981
    %v1029 = vadd.f32 %v958, %v981
    %v1030 = vadd.f32 %v959, %v981
    %v1031 = vadd.f32 %v960, %v981
    %v1032 = vadd.f32 %v961, %v981
    %v1033 = vadd.f32 %v962, %v981
    %v1034 = vadd.f32 %v963, %v981
    %v1035 = vadd.f32 %v964, %v981
    %v1036 = vadd.f32 %v965, %v981
    %v1037 = vadd.f32 %v966, %v981
    %v1038 = vadd.f32 %v967, %v981
    %v1039 = vadd.f32 %v968, %v981
    %v1040 = vadd.f32 %v969, %v981
    %v1041 = vadd.f32 %v970, %v981
    %v1042 = vadd.f32 %v971, %v981
    %v1043 = vadd.f32 %v972, %v981
    %v1044 = vadd.f32 %v973, %v981
    %v1045 = vadd.f32 %v974, %v981
    %v1046 = vadd.f32 %v975, %v981
    %v1047 = vpack.c.bf16 %v984, %v983
    %v1048 = vpack.c.bf16 %v986, %v985
    %v1049 = vpack.c.bf16 %v988, %v987
    %v1050 = vpack.c.bf16 %v990, %v989
    %v1051 = vpack.c.bf16 %v992, %v991
    %v1052 = vpack.c.bf16 %v994, %v993
    %v1053 = vpack.c.bf16 %v996, %v995
    %v1054 = vpack.c.bf16 %v998, %v997
    %v1055 = vpack.c.bf16 %v1000, %v999
    %v1056 = vpack.c.bf16 %v1002, %v1001
    %v1057 = vpack.c.bf16 %v1004, %v1003
    %v1058 = vpack.c.bf16 %v1006, %v1005
    %v1059 = vpack.c.bf16 %v1008, %v1007
    %v1060 = vpack.c.bf16 %v1010, %v1009
    %v1061 = vpack.c.bf16 %v1012, %v1011
    %v1062 = vpack.c.bf16 %v1014, %v1013
    %v1063 = vpack.c.bf16 %v1016, %v1015
    %v1064 = vpack.c.bf16 %v1018, %v1017
    %v1065 = vpack.c.bf16 %v1020, %v1019
    %v1066 = vpack.c.bf16 %v1022, %v1021
    %v1067 = vpack.c.bf16 %v1024, %v1023
    %v1068 = vpack.c.bf16 %v1026, %v1025
    %v1069 = vpack.c.bf16 %v1028, %v1027
    %v1070 = vpack.c.bf16 %v1030, %v1029
    %v1071 = vpack.c.bf16 %v1032, %v1031
    %v1072 = vpack.c.bf16 %v1034, %v1033
    %v1073 = vpack.c.bf16 %v1036, %v1035
    %v1074 = vpack.c.bf16 %v1038, %v1037
    %v1075 = vpack.c.bf16 %v1040, %v1039
    %v1076 = vpack.c.bf16 %v1042, %v1041
    %v1077 = vpack.c.bf16 %v1044, %v1043
    %v1078 = vpack.c.bf16 %v1046, %v1045
    %v1111 = vunpack.c.l.b16 %v1047
    %v1112 = vunpack.c.h.b16 %v1047
    %v1113 = vunpack.c.l.b16 %v1048
    %v1114 = vunpack.c.h.b16 %v1048
    %v1115 = vunpack.c.l.b16 %v1049
    %v1116 = vunpack.c.h.b16 %v1049
    %v1117 = vunpack.c.l.b16 %v1050
    %v1118 = vunpack.c.h.b16 %v1050
    %v1119 = vunpack.c.l.b16 %v1051
    %v1120 = vunpack.c.h.b16 %v1051
    %v1121 = vunpack.c.l.b16 %v1052
    %v1122 = vunpack.c.h.b16 %v1052
    %v1123 = vunpack.c.l.b16 %v1053
    %v1124 = vunpack.c.h.b16 %v1053
    %v1125 = vunpack.c.l.b16 %v1054
    %v1126 = vunpack.c.h.b16 %v1054
    %v1127 = vunpack.c.l.b16 %v1055
    %v1128 = vunpack.c.h.b16 %v1055
    %v1129 = vunpack.c.l.b16 %v1056
    %v1130 = vunpack.c.h.b16 %v1056
    %v1131 = vunpack.c.l.b16 %v1057
    %v1132 = vunpack.c.h.b16 %v1057
    %v1133 = vunpack.c.l.b16 %v1058
    %v1134 = vunpack.c.h.b16 %v1058
    %v1135 = vunpack.c.l.b16 %v1059
    %v1136 = vunpack.c.h.b16 %v1059
    %v1137 = vunpack.c.l.b16 %v1060
    %v1138 = vunpack.c.h.b16 %v1060
    %v1139 = vunpack.c.l.b16 %v1061
    %v1140 = vunpack.c.h.b16 %v1061
    %v1141 = vunpack.c.l.b16 %v1062
    %v1142 = vunpack.c.h.b16 %v1062
    %v1143 = vunpack.c.l.b16 %v1063
    %v1144 = vunpack.c.h.b16 %v1063
    %v1145 = vunpack.c.l.b16 %v1064
    %v1146 = vunpack.c.h.b16 %v1064
    %v1147 = vunpack.c.l.b16 %v1065
    %v1148 = vunpack.c.h.b16 %v1065
    %v1149 = vunpack.c.l.b16 %v1066
    %v1150 = vunpack.c.h.b16 %v1066
    %v1151 = vunpack.c.l.b16 %v1067
    %v1152 = vunpack.c.h.b16 %v1067
    %v1153 = vunpack.c.l.b16 %v1068
    %v1154 = vunpack.c.h.b16 %v1068
    %v1155 = vunpack.c.l.b16 %v1069
    %v1156 = vunpack.c.h.b16 %v1069
    %v1157 = vunpack.c.l.b16 %v1070
    %v1158 = vunpack.c.h.b16 %v1070
    %v1159 = vunpack.c.l.b16 %v1071
    %v1160 = vunpack.c.h.b16 %v1071
    %v1161 = vunpack.c.l.b16 %v1072
    %v1162 = vunpack.c.h.b16 %v1072
    %v1163 = vunpack.c.l.b16 %v1073
    %v1164 = vunpack.c.h.b16 %v1073
    %v1165 = vunpack.c.l.b16 %v1074
    %v1166 = vunpack.c.h.b16 %v1074
    %v1167 = vunpack.c.l.b16 %v1075
    %v1168 = vunpack.c.h.b16 %v1075
    %v1169 = vunpack.c.l.b16 %v1076
    %v1170 = vunpack.c.h.b16 %v1076
    %v1171 = vunpack.c.l.b16 %v1077
    %v1172 = vunpack.c.h.b16 %v1077
    %v1173 = vunpack.c.l.b16 %v1078
    %v1174 = vunpack.c.h.b16 %v1078
    %v1175 = vpack.c.b16 %v1111, %v1111
    %v1176 = vpack.c.b16 %v1112, %v1112
    %v1177 = vpack.c.b16 %v1113, %v1113
    %v1178 = vpack.c.b16 %v1114, %v1114
    %v1179 = vpack.c.b16 %v1115, %v1115
    %v1180 = vpack.c.b16 %v1116, %v1116
    %v1181 = vpack.c.b16 %v1117, %v1117
    %v1182 = vpack.c.b16 %v1118, %v1118
    %v1183 = vpack.c.b16 %v1119, %v1119
    %v1184 = vpack.c.b16 %v1120, %v1120
    %v1185 = vpack.c.b16 %v1121, %v1121
    %v1186 = vpack.c.b16 %v1122, %v1122
    %v1187 = vpack.c.b16 %v1123, %v1123
    %v1188 = vpack.c.b16 %v1124, %v1124
    %v1189 = vpack.c.b16 %v1125, %v1125
    %v1190 = vpack.c.b16 %v1126, %v1126
    %v1191 = vpack.c.b16 %v1127, %v1127
    %v1192 = vpack.c.b16 %v1128, %v1128
    %v1193 = vpack.c.b16 %v1129, %v1129
    %v1194 = vpack.c.b16 %v1130, %v1130
    %v1195 = vpack.c.b16 %v1131, %v1131
    %v1196 = vpack.c.b16 %v1132, %v1132
    %v1197 = vpack.c.b16 %v1133, %v1133
    %v1198 = vpack.c.b16 %v1134, %v1134
    %v1199 = vpack.c.b16 %v1135, %v1135
    %v1200 = vpack.c.b16 %v1136, %v1136
    %v1201 = vpack.c.b16 %v1137, %v1137
    %v1202 = vpack.c.b16 %v1138, %v1138
    %v1203 = vpack.c.b16 %v1139, %v1139
    %v1204 = vpack.c.b16 %v1140, %v1140
    %v1205 = vpack.c.b16 %v1141, %v1141
    %v1206 = vpack.c.b16 %v1142, %v1142
    %v1207 = vpack.c.b16 %v1143, %v1143
    %v1208 = vpack.c.b16 %v1144, %v1144
    %v1209 = vpack.c.b16 %v1145, %v1145
    %v1210 = vpack.c.b16 %v1146, %v1146
    %v1211 = vpack.c.b16 %v1147, %v1147
    %v1212 = vpack.c.b16 %v1148, %v1148
    %v1213 = vpack.c.b16 %v1149, %v1149
    %v1214 = vpack.c.b16 %v1150, %v1150
    %v1215 = vpack.c.b16 %v1151, %v1151
    %v1216 = vpack.c.b16 %v1152, %v1152
    %v1217 = vpack.c.b16 %v1153, %v1153
    %v1218 = vpack.c.b16 %v1154, %v1154
    %v1219 = vpack.c.b16 %v1155, %v1155
    %v1220 = vpack.c.b16 %v1156, %v1156
    %v1221 = vpack.c.b16 %v1157, %v1157
    %v1222 = vpack.c.b16 %v1158, %v1158
    %v1223 = vpack.c.b16 %v1159, %v1159
    %v1224 = vpack.c.b16 %v1160, %v1160
    %v1225 = vpack.c.b16 %v1161, %v1161
    %v1226 = vpack.c.b16 %v1162, %v1162
    %v1227 = vpack.c.b16 %v1163, %v1163
    %v1228 = vpack.c.b16 %v1164, %v1164
    %v1229 = vpack.c.b16 %v1165, %v1165
    %v1230 = vpack.c.b16 %v1166, %v1166
    %v1231 = vpack.c.b16 %v1167, %v1167
    %v1232 = vpack.c.b16 %v1168, %v1168
    %v1233 = vpack.c.b16 %v1169, %v1169
    %v1234 = vpack.c.b16 %v1170, %v1170
    %v1235 = vpack.c.b16 %v1171, %v1171
    %v1236 = vpack.c.b16 %v1172, %v1172
    %v1237 = vpack.c.b16 %v1173, %v1173
    %v1238 = vpack.c.b16 %v1174, %v1174
    %vm1303 = vcmask 60416
    %1304 = vst.msk [vmem:[%s3] sm:$0xf] %vm1303, %v1175
    %1305 = vst.msk [vmem:[%s3 + $0x4] sm:$0xf] %vm1303, %v1176
    %1306 = vst.msk [vmem:[%s3 + $0x8] sm:$0xf] %vm1303, %v1177
    %1307 = vst.msk [vmem:[%s3 + $0xc] sm:$0xf] %vm1303, %v1178
    %1308 = vst.msk [vmem:[%s3 + $0x10] sm:$0xf] %vm1303, %v1179
    %1309 = vst.msk [vmem:[%s3 + $0x14] sm:$0xf] %vm1303, %v1180
    %1310 = vst.msk [vmem:[%s3 + $0x18] sm:$0xf] %vm1303, %v1181
    %1311 = vst.msk [vmem:[%s3 + $0x1c] sm:$0xf] %vm1303, %v1182
    %1312 = vst.msk [vmem:[%s3 + $0x20] sm:$0xf] %vm1303, %v1183
    %1313 = vst.msk [vmem:[%s3 + $0x24] sm:$0xf] %vm1303, %v1184
    %1314 = vst.msk [vmem:[%s3 + $0x28] sm:$0xf] %vm1303, %v1185
    %1315 = vst.msk [vmem:[%s3 + $0x2c] sm:$0xf] %vm1303, %v1186
    %1316 = vst.msk [vmem:[%s3 + $0x30] sm:$0xf] %vm1303, %v1187
    %1317 = vst.msk [vmem:[%s3 + $0x34] sm:$0xf] %vm1303, %v1188
    %1318 = vst.msk [vmem:[%s3 + $0x38] sm:$0xf] %vm1303, %v1189
    %1319 = vst.msk [vmem:[%s3 + $0x3c] sm:$0xf] %vm1303, %v1190
    %1320 = vst.msk [vmem:[%s3 + $0x40] sm:$0xf] %vm1303, %v1191
    %1321 = vst.msk [vmem:[%s3 + $0x44] sm:$0xf] %vm1303, %v1192
    %1322 = vst.msk [vmem:[%s3 + $0x48] sm:$0xf] %vm1303, %v1193
    %1323 = vst.msk [vmem:[%s3 + $0x4c] sm:$0xf] %vm1303, %v1194
    %1324 = vst.msk [vmem:[%s3 + $0x50] sm:$0xf] %vm1303, %v1195
    %1325 = vst.msk [vmem:[%s3 + $0x54] sm:$0xf] %vm1303, %v1196
    %1326 = vst.msk [vmem:[%s3 + $0x58] sm:$0xf] %vm1303, %v1197
    %1327 = vst.msk [vmem:[%s3 + $0x5c] sm:$0xf] %vm1303, %v1198
    %1328 = vst.msk [vmem:[%s3 + $0x60] sm:$0xf] %vm1303, %v1199
    %1329 = vst.msk [vmem:[%s3 + $0x64] sm:$0xf] %vm1303, %v1200
    %1330 = vst.msk [vmem:[%s3 + $0x68] sm:$0xf] %vm1303, %v1201
    %1331 = vst.msk [vmem:[%s3 + $0x6c] sm:$0xf] %vm1303, %v1202
    %1332 = vst.msk [vmem:[%s3 + $0x70] sm:$0xf] %vm1303, %v1203
    %1333 = vst.msk [vmem:[%s3 + $0x74] sm:$0xf] %vm1303, %v1204
    %1334 = vst.msk [vmem:[%s3 + $0x78] sm:$0xf] %vm1303, %v1205
    %1335 = vst.msk [vmem:[%s3 + $0x7c] sm:$0xf] %vm1303, %v1206
    %1336 = vst.msk [vmem:[%s3 + $0x80] sm:$0xf] %vm1303, %v1207
    %1337 = vst.msk [vmem:[%s3 + $0x84] sm:$0xf] %vm1303, %v1208
    %1338 = vst.msk [vmem:[%s3 + $0x88] sm:$0xf] %vm1303, %v1209
    %1339 = vst.msk [vmem:[%s3 + $0x8c] sm:$0xf] %vm1303, %v1210
    %1340 = vst.msk [vmem:[%s3 + $0x90] sm:$0xf] %vm1303, %v1211
    %1341 = vst.msk [vmem:[%s3 + $0x94] sm:$0xf] %vm1303, %v1212
    %1342 = vst.msk [vmem:[%s3 + $0x98] sm:$0xf] %vm1303, %v1213
    %1343 = vst.msk [vmem:[%s3 + $0x9c] sm:$0xf] %vm1303, %v1214
    %1344 = vst.msk [vmem:[%s3 + $0xa0] sm:$0xf] %vm1303, %v1215
    %1345 = vst.msk [vmem:[%s3 + $0xa4] sm:$0xf] %vm1303, %v1216
    %1346 = vst.msk [vmem:[%s3 + $0xa8] sm:$0xf] %vm1303, %v1217
    %1347 = vst.msk [vmem:[%s3 + $0xac] sm:$0xf] %vm1303, %v1218
    %1348 = vst.msk [vmem:[%s3 + $0xb0] sm:$0xf] %vm1303, %v1219
    %1349 = vst.msk [vmem:[%s3 + $0xb4] sm:$0xf] %vm1303, %v1220
    %1350 = vst.msk [vmem:[%s3 + $0xb8] sm:$0xf] %vm1303, %v1221
    %1351 = vst.msk [vmem:[%s3 + $0xbc] sm:$0xf] %vm1303, %v1222
    %1352 = vst.msk [vmem:[%s3 + $0xc0] sm:$0xf] %vm1303, %v1223
    %1353 = vst.msk [vmem:[%s3 + $0xc4] sm:$0xf] %vm1303, %v1224
    %1354 = vst.msk [vmem:[%s3 + $0xc8] sm:$0xf] %vm1303, %v1225
    %1355 = vst.msk [vmem:[%s3 + $0xcc] sm:$0xf] %vm1303, %v1226
    %1356 = vst.msk [vmem:[%s3 + $0xd0] sm:$0xf] %vm1303, %v1227
    %1357 = vst.msk [vmem:[%s3 + $0xd4] sm:$0xf] %vm1303, %v1228
    %1358 = vst.msk [vmem:[%s3 + $0xd8] sm:$0xf] %vm1303, %v1229
    %1359 = vst.msk [vmem:[%s3 + $0xdc] sm:$0xf] %vm1303, %v1230
    %1360 = vst.msk [vmem:[%s3 + $0xe0] sm:$0xf] %vm1303, %v1231
    %1361 = vst.msk [vmem:[%s3 + $0xe4] sm:$0xf] %vm1303, %v1232
    %1362 = vst.msk [vmem:[%s3 + $0xe8] sm:$0xf] %vm1303, %v1233
    %1363 = vst.msk [vmem:[%s3 + $0xec] sm:$0xf] %vm1303, %v1234
    %1364 = vst.msk [vmem:[%s3 + $0xf0] sm:$0xf] %vm1303, %v1235
    %1365 = vst.msk [vmem:[%s3 + $0xf4] sm:$0xf] %vm1303, %v1236
    %1366 = vst.msk [vmem:[%s3 + $0xf8] sm:$0xf] %vm1303, %v1237
    %1367 = vst.msk [vmem:[%s3 + $0xfc] sm:$0xf] %vm1303, %v1238
  $region21: #{unet_forward.17} parent=0 // pred_fallthru
    _
  // Predicated region
  $region22: #{unet_forward.17} parent=0 // pred_check
    _
  $region23: #{unet_forward.17} parent=0 // pred_check_branch
    %1369 = sbr.rel (0) target = $region25
  $region24: #{unet_forward.17} parent=0 // pred_region
    _
  $region25: #{unet_forward.17} parent=0 // pred_fallthru
    _
  // Predicated region
  $region26: #{unet_forward.17} parent=0 // pred_check
    _
  $region27: #{unet_forward.17} parent=0 // pred_check_branch
    %1371 = sbr.rel (0) target = $region29
  $region28: #{unet_forward.17} parent=0 // pred_region
    _
  $region29: #{unet_forward.17} parent=0 // pred_fallthru
    _

// kernel: unet_forward.18
$region0: #{unet_forward.18}
  #allocation0 [shape = 'u32[]', space=smem, size = 0x4, offset = 0x4, fixed_abs, tag = 'smem constant byte address 0x4 - core index']
  #allocation1 [shape = 'u32[144,128]{1,0:T(1,128)}', space=vmem, size = 0x12000, scoped, tag = 'internal scratch']
  #allocation2 [shape = 'f32[128,128]{1,0:T(8,128)}', space=vmem, size = 0x10000, scoped, tag = 'scratch operand']
  %s0 = inlined_call_operand.vmem [shape: bf16[128,128], index: 0, kind: input, shape index: {}]
  %s1 = inlined_call_operand.vmem [shape: bf16[128,128], index: 1, kind: input, shape index: {}]
  %s2 = inlined_call_operand.vmem [shape: f32[1,128], index: 2, kind: input, shape index: {}]
  %s3 = inlined_call_operand.vmem [shape: bf16[128,16], index: 3, kind: output, shape index: {0}]
  %s4 = inlined_call_operand.vmem [shape: f32[1,8,16], index: 4, kind: output, shape index: {1}]
  %s5 = inlined_call_operand.vmem [shape: f32[1,8,16], index: 5, kind: output, shape index: {2}]
  %6 = xla_tuple %s3, %s4, %s5
  %s7 = sld [smem:[#allocation0]]
  $region46: #{unet_forward.18} parent=0
    _
  %s9 = ssub.s32 1, %s7
  %s10 = scalar_select 0, %s9, %s7
  // Predicated region
  $region2: #{unet_forward.18} parent=0 // pred_check
    _
  $region3: #{unet_forward.18} parent=0 // pred_check_branch
    %12 = sbr.rel (0) target = $region5
  $region4: #{unet_forward.18} parent=0 // pred_region
    _
  $region5: #{unet_forward.18} parent=0 // pred_fallthru
    _
  // Predicated region
  $region6: #{unet_forward.18} parent=0 // pred_check
    _
  $region7: #{unet_forward.18} parent=0 // pred_check_branch
    %14 = sbr.rel (0) target = $region9
  $region8: #{unet_forward.18} parent=0 // pred_region
    _
  $region9: #{unet_forward.18} parent=0 // pred_fallthru
    _
  // Predicated region
  $region10: #{unet_forward.18} parent=0 // pred_check
    _
  $region11: #{unet_forward.18} parent=0 // pred_check_branch
    %16 = sbr.rel (0) target = $region13
  $region12: #{unet_forward.18} parent=0 // pred_region
    _
  $region13: #{unet_forward.18} parent=0 // pred_fallthru
    _
  %p19 = scmp.eq.s32.totalorder 0, 0
  // Predicated region
  $region14: #{unet_forward.18} parent=0 // pred_check
    %p20 = pneg %p19
  $region15: #{unet_forward.18} parent=0 // pred_check_branch
    %22 = sbr.rel (%p20) target = $region17
  $region16: #{unet_forward.18} parent=0 // pred_region
    %23 = vst [vmem:[#allocation2] sm:$0xff] 0.0
    %24 = vst [vmem:[#allocation2 + $0x8] sm:$0xff] 0.0
    %25 = vst [vmem:[#allocation2 + $0x10] sm:$0xff] 0.0
    %26 = vst [vmem:[#allocation2 + $0x18] sm:$0xff] 0.0
    %27 = vst [vmem:[#allocation2 + $0x20] sm:$0xff] 0.0
    %28 = vst [vmem:[#allocation2 + $0x28] sm:$0xff] 0.0
    %29 = vst [vmem:[#allocation2 + $0x30] sm:$0xff] 0.0
    %30 = vst [vmem:[#allocation2 + $0x38] sm:$0xff] 0.0
    %31 = vst [vmem:[#allocation2 + $0x40] sm:$0xff] 0.0
    %32 = vst [vmem:[#allocation2 + $0x48] sm:$0xff] 0.0
    %33 = vst [vmem:[#allocation2 + $0x50] sm:$0xff] 0.0
    %34 = vst [vmem:[#allocation2 + $0x58] sm:$0xff] 0.0
    %35 = vst [vmem:[#allocation2 + $0x60] sm:$0xff] 0.0
    %36 = vst [vmem:[#allocation2 + $0x68] sm:$0xff] 0.0
    %37 = vst [vmem:[#allocation2 + $0x70] sm:$0xff] 0.0
    %38 = vst [vmem:[#allocation2 + $0x78] sm:$0xff] 0.0
  $region17: #{unet_forward.18} parent=0 // pred_fallthru
    _
  %v39 = vld [vmem:[%s0] sm:$0xf]
  %v40 = vld [vmem:[%s0 + $0x4] sm:$0xf]
  %v41 = vld [vmem:[%s0 + $0x8] sm:$0xf]
  %v42 = vld [vmem:[%s0 + $0xc] sm:$0xf]
  %v43 = vld [vmem:[%s0 + $0x10] sm:$0xf]
  %v44 = vld [vmem:[%s0 + $0x14] sm:$0xf]
  %v45 = vld [vmem:[%s0 + $0x18] sm:$0xf]
  %v46 = vld [vmem:[%s0 + $0x1c] sm:$0xf]
  %v47 = vld [vmem:[%s0 + $0x20] sm:$0xf]
  %v48 = vld [vmem:[%s0 + $0x24] sm:$0xf]
  %v49 = vld [vmem:[%s0 + $0x28] sm:$0xf]
  %v50 = vld [vmem:[%s0 + $0x2c] sm:$0xf]
  %v51 = vld [vmem:[%s0 + $0x30] sm:$0xf]
  %v52 = vld [vmem:[%s0 + $0x34] sm:$0xf]
  %v53 = vld [vmem:[%s0 + $0x38] sm:$0xf]
  %v54 = vld [vmem:[%s0 + $0x3c] sm:$0xf]
  %vm55 = vcmp.gt.bf16.partialorder %v39, 0
  %vm56 = vcmp.gt.bf16.partialorder %v40, 0
  %vm57 = vcmp.gt.bf16.partialorder %v41, 0
  %vm58 = vcmp.gt.bf16.partialorder %v42, 0
  %vm59 = vcmp.gt.bf16.partialorder %v43, 0
  %vm60 = vcmp.gt.bf16.partialorder %v44, 0
  %vm61 = vcmp.gt.bf16.partialorder %v45, 0
  %vm62 = vcmp.gt.bf16.partialorder %v46, 0
  %vm63 = vcmp.gt.bf16.partialorder %v47, 0
  %vm64 = vcmp.gt.bf16.partialorder %v48, 0
  %vm65 = vcmp.gt.bf16.partialorder %v49, 0
  %vm66 = vcmp.gt.bf16.partialorder %v50, 0
  %vm67 = vcmp.gt.bf16.partialorder %v51, 0
  %vm68 = vcmp.gt.bf16.partialorder %v52, 0
  %vm69 = vcmp.gt.bf16.partialorder %v53, 0
  %vm70 = vcmp.gt.bf16.partialorder %v54, 0
  %v71 = vmul.bf16 %v39, 1045249613
  %v72 = vmul.bf16 %v40, 1045249613
  %v73 = vmul.bf16 %v41, 1045249613
  %v74 = vmul.bf16 %v42, 1045249613
  %v75 = vmul.bf16 %v43, 1045249613
  %v76 = vmul.bf16 %v44, 1045249613
  %v77 = vmul.bf16 %v45, 1045249613
  %v78 = vmul.bf16 %v46, 1045249613
  %v79 = vmul.bf16 %v47, 1045249613
  %v80 = vmul.bf16 %v48, 1045249613
  %v81 = vmul.bf16 %v49, 1045249613
  %v82 = vmul.bf16 %v50, 1045249613
  %v83 = vmul.bf16 %v51, 1045249613
  %v84 = vmul.bf16 %v52, 1045249613
  %v85 = vmul.bf16 %v53, 1045249613
  %v86 = vmul.bf16 %v54, 1045249613
  %v87 = vsel %vm55, %v39, %v71
  %v88 = vsel %vm56, %v40, %v72
  %v89 = vsel %vm57, %v41, %v73
  %v90 = vsel %vm58, %v42, %v74
  %v91 = vsel %vm59, %v43, %v75
  %v92 = vsel %vm60, %v44, %v76
  %v93 = vsel %vm61, %v45, %v77
  %v94 = vsel %vm62, %v46, %v78
  %v95 = vsel %vm63, %v47, %v79
  %v96 = vsel %vm64, %v48, %v80
  %v97 = vsel %vm65, %v49, %v81
  %v98 = vsel %vm66, %v50, %v82
  %v99 = vsel %vm67, %v51, %v83
  %v100 = vsel %vm68, %v52, %v84
  %v101 = vsel %vm69, %v53, %v85
  %v102 = vsel %vm70, %v54, %v86
  %v103 = vld [vmem:[%s1] sm:$0xf]
  %v104 = vld [vmem:[%s1 + $0x4] sm:$0xf]
  %v105 = vld [vmem:[%s1 + $0x8] sm:$0xf]
  %v106 = vld [vmem:[%s1 + $0xc] sm:$0xf]
  %v107 = vld [vmem:[%s1 + $0x10] sm:$0xf]
  %v108 = vld [vmem:[%s1 + $0x14] sm:$0xf]
  %v109 = vld [vmem:[%s1 + $0x18] sm:$0xf]
  %v110 = vld [vmem:[%s1 + $0x1c] sm:$0xf]
  %v111 = vld [vmem:[%s1 + $0x20] sm:$0xf]
  %v112 = vld [vmem:[%s1 + $0x24] sm:$0xf]
  %v113 = vld [vmem:[%s1 + $0x28] sm:$0xf]
  %v114 = vld [vmem:[%s1 + $0x2c] sm:$0xf]
  %v115 = vld [vmem:[%s1 + $0x30] sm:$0xf]
  %v116 = vld [vmem:[%s1 + $0x34] sm:$0xf]
  %v117 = vld [vmem:[%s1 + $0x38] sm:$0xf]
  %v118 = vld [vmem:[%s1 + $0x3c] sm:$0xf]
  %v119 = vld [vmem:[#allocation2] sm:$0xff]
  %v120 = vld [vmem:[#allocation2 + $0x8] sm:$0xff]
  %v121 = vld [vmem:[#allocation2 + $0x10] sm:$0xff]
  %v122 = vld [vmem:[#allocation2 + $0x18] sm:$0xff]
  %v123 = vld [vmem:[#allocation2 + $0x20] sm:$0xff]
  %v124 = vld [vmem:[#allocation2 + $0x28] sm:$0xff]
  %v125 = vld [vmem:[#allocation2 + $0x30] sm:$0xff]
  %v126 = vld [vmem:[#allocation2 + $0x38] sm:$0xff]
  %v127 = vld [vmem:[#allocation2 + $0x40] sm:$0xff]
  %v128 = vld [vmem:[#allocation2 + $0x48] sm:$0xff]
  %v129 = vld [vmem:[#allocation2 + $0x50] sm:$0xff]
  %v130 = vld [vmem:[#allocation2 + $0x58] sm:$0xff]
  %v131 = vld [vmem:[#allocation2 + $0x60] sm:$0xff]
  %v132 = vld [vmem:[#allocation2 + $0x68] sm:$0xff]
  %v133 = vld [vmem:[#allocation2 + $0x70] sm:$0xff]
  %v134 = vld [vmem:[#allocation2 + $0x78] sm:$0xff]
  %v151 = vunpack.c.l.b16 %v87
  %v152 = vunpack.c.l.b16 %v88
  %v153 = vunpack.c.l.b16 %v89
  %v154 = vunpack.c.l.b16 %v90
  %v155 = vunpack.c.l.b16 %v91
  %v156 = vunpack.c.l.b16 %v92
  %v157 = vunpack.c.l.b16 %v93
  %v158 = vunpack.c.l.b16 %v94
  %v159 = vunpack.c.l.b16 %v95
  %v160 = vunpack.c.l.b16 %v96
  %v161 = vunpack.c.l.b16 %v97
  %v162 = vunpack.c.l.b16 %v98
  %v163 = vunpack.c.l.b16 %v99
  %v164 = vunpack.c.l.b16 %v100
  %v165 = vunpack.c.l.b16 %v101
  %v166 = vunpack.c.l.b16 %v102
  %v167 = vpack.c.b16 %v152, %v151
  %v168 = vpack.c.b16 %v154, %v153
  %v169 = vpack.c.b16 %v156, %v155
  %v170 = vpack.c.b16 %v158, %v157
  %v171 = vpack.c.b16 %v160, %v159
  %v172 = vpack.c.b16 %v162, %v161
  %v173 = vpack.c.b16 %v164, %v163
  %v174 = vpack.c.b16 %v166, %v165
  %v199 = vunpack.c.l.b16 %v103
  %v200 = vunpack.c.l.b16 %v104
  %v201 = vunpack.c.l.b16 %v105
  %v202 = vunpack.c.l.b16 %v106
  %v203 = vunpack.c.l.b16 %v107
  %v204 = vunpack.c.l.b16 %v108
  %v205 = vunpack.c.l.b16 %v109
  %v206 = vunpack.c.l.b16 %v110
  %v207 = vunpack.c.l.b16 %v111
  %v208 = vunpack.c.l.b16 %v112
  %v209 = vunpack.c.l.b16 %v113
  %v210 = vunpack.c.l.b16 %v114
  %v211 = vunpack.c.l.b16 %v115
  %v212 = vunpack.c.l.b16 %v116
  %v213 = vunpack.c.l.b16 %v117
  %v214 = vunpack.c.l.b16 %v118
  %v215 = vpack.c.b16 %v200, %v199
  %v216 = vpack.c.b16 %v202, %v201
  %v217 = vpack.c.b16 %v204, %v203
  %v218 = vpack.c.b16 %v206, %v205
  %v219 = vpack.c.b16 %v208, %v207
  %v220 = vpack.c.b16 %v210, %v209
  %v221 = vpack.c.b16 %v212, %v211
  %v222 = vpack.c.b16 %v214, %v213
  %231 = vmatprep.subr.bf16.mxu0 0
  %232 = vmatpush1.bf16.msra.mxu0 %v222
  %233 = vmatprep.subr.bf16.mxu0 0
  %234 = vmatpush1.bf16.msra.mxu0 %v221
  %235 = vmatprep.subr.bf16.mxu0 0
  %236 = vmatpush1.bf16.msra.mxu0 %v220
  %237 = vmatprep.subr.bf16.mxu0 0
  %238 = vmatpush1.bf16.msra.mxu0 %v219
  %239 = vmatprep.subr.bf16.mxu0 0
  %240 = vmatpush1.bf16.msra.mxu0 %v218
  %241 = vmatprep.subr.bf16.mxu0 0
  %242 = vmatpush1.bf16.msra.mxu0 %v217
  %243 = vmatprep.subr.bf16.mxu0 0
  %244 = vmatpush1.bf16.msra.mxu0 %v216
  %245 = vmatprep.subr.bf16.mxu0 0
  %246 = vmatpush1.bf16.msra.mxu0 %v215
  %247 = vmatprep.subr.bf16.mxu0 0
  %248 = vmatpush2.bf16.msra.mxu0 0
  %249 = vmatprep.subr.bf16.mxu0 0
  %250 = vmatpush2.bf16.msra.mxu0 0
  %251 = vmatprep.subr.bf16.mxu0 0
  %252 = vmatpush2.bf16.msra.mxu0 0
  %253 = vmatprep.subr.bf16.mxu0 0
  %254 = vmatpush2.bf16.msra.mxu0 0
  %255 = vmatprep.subr.bf16.mxu0 0
  %256 = vmatpush2.bf16.msra.mxu0 0
  %257 = vmatprep.subr.bf16.mxu0 0
  %258 = vmatpush2.bf16.msra.mxu0 0
  %259 = vmatprep.subr.bf16.mxu0 0
  %260 = vmatpush2.bf16.msra.mxu0 0
  %261 = vmatprep.subr.bf16.mxu0 0
  %262 = vmatpush2.bf16.msra.mxu0 0
  %263 = vmatprep.mubr.bf16.mxu0 0
  %264 = vmatmul.mubr.bf16.gmra.mxu0 %v167
  %v265 = vpop.f32.mrf.mxu0
  %v266 = vadd.f32 0.0, %v265
  %v267 = vpop.f32.mrf.mxu0
  %v268 = vpop.f32.mrf.mxu0
  %v269 = vadd.f32 0.0, %v268
  %v270 = vpop.f32.mrf.mxu0
  %271 = vmatprep.mubr.bf16.mxu0 0
  %272 = vmatmul.mubr.bf16.gmra.mxu0 %v168
  %v273 = vpop.f32.mrf.mxu0
  %v274 = vadd.f32 0.0, %v273
  %v275 = vpop.f32.mrf.mxu0
  %v276 = vpop.f32.mrf.mxu0
  %v277 = vadd.f32 0.0, %v276
  %v278 = vpop.f32.mrf.mxu0
  %279 = vmatprep.mubr.bf16.mxu0 0
  %280 = vmatmul.mubr.bf16.gmra.mxu0 %v169
  %v281 = vpop.f32.mrf.mxu0
  %v282 = vadd.f32 0.0, %v281
  %v283 = vpop.f32.mrf.mxu0
  %v284 = vpop.f32.mrf.mxu0
  %v285 = vadd.f32 0.0, %v284
  %v286 = vpop.f32.mrf.mxu0
  %287 = vmatprep.mubr.bf16.mxu0 0
  %288 = vmatmul.mubr.bf16.gmra.mxu0 %v170
  %v289 = vpop.f32.mrf.mxu0
  %v290 = vadd.f32 0.0, %v289
  %v291 = vpop.f32.mrf.mxu0
  %v292 = vpop.f32.mrf.mxu0
  %v293 = vadd.f32 0.0, %v292
  %v294 = vpop.f32.mrf.mxu0
  %295 = vmatprep.mubr.bf16.mxu0 0
  %296 = vmatmul.mubr.bf16.gmra.mxu0 %v171
  %v297 = vpop.f32.mrf.mxu0
  %v298 = vadd.f32 0.0, %v297
  %v299 = vpop.f32.mrf.mxu0
  %v300 = vpop.f32.mrf.mxu0
  %v301 = vadd.f32 0.0, %v300
  %v302 = vpop.f32.mrf.mxu0
  %303 = vmatprep.mubr.bf16.mxu0 0
  %304 = vmatmul.mubr.bf16.gmra.mxu0 %v172
  %v305 = vpop.f32.mrf.mxu0
  %v306 = vadd.f32 0.0, %v305
  %v307 = vpop.f32.mrf.mxu0
  %v308 = vpop.f32.mrf.mxu0
  %v309 = vadd.f32 0.0, %v308
  %v310 = vpop.f32.mrf.mxu0
  %311 = vmatprep.mubr.bf16.mxu0 0
  %312 = vmatmul.mubr.bf16.gmra.mxu0 %v173
  %v313 = vpop.f32.mrf.mxu0
  %v314 = vadd.f32 0.0, %v313
  %v315 = vpop.f32.mrf.mxu0
  %v316 = vpop.f32.mrf.mxu0
  %v317 = vadd.f32 0.0, %v316
  %v318 = vpop.f32.mrf.mxu0
  %319 = vmatprep.mubr.bf16.mxu0 0
  %320 = vmatmul.mubr.bf16.gmra.mxu0 %v174
  %v321 = vpop.f32.mrf.mxu0
  %v322 = vadd.f32 0.0, %v321
  %v323 = vpop.f32.mrf.mxu0
  %v324 = vpop.f32.mrf.mxu0
  %v325 = vadd.f32 0.0, %v324
  %v326 = vpop.f32.mrf.mxu0
  %327 = vdwg.mxu0
  %v328 = vadd.f32 %v119, %v266
  %v329 = vadd.f32 %v120, %v269
  %v330 = vadd.f32 %v121, %v274
  %v331 = vadd.f32 %v122, %v277
  %v332 = vadd.f32 %v123, %v282
  %v333 = vadd.f32 %v124, %v285
  %v334 = vadd.f32 %v125, %v290
  %v335 = vadd.f32 %v126, %v293
  %v336 = vadd.f32 %v127, %v298
  %v337 = vadd.f32 %v128, %v301
  %v338 = vadd.f32 %v129, %v306
  %v339 = vadd.f32 %v130, %v309
  %v340 = vadd.f32 %v131, %v314
  %v341 = vadd.f32 %v132, %v317
  %v342 = vadd.f32 %v133, %v322
  %v343 = vadd.f32 %v134, %v325
  %344 = vst [vmem:[#allocation2] sm:$0xff] %v328
  %345 = vst [vmem:[#allocation2 + $0x8] sm:$0xff] %v329
  %346 = vst [vmem:[#allocation2 + $0x10] sm:$0xff] %v330
  %347 = vst [vmem:[#allocation2 + $0x18] sm:$0xff] %v331
  %348 = vst [vmem:[#allocation2 + $0x20] sm:$0xff] %v332
  %349 = vst [vmem:[#allocation2 + $0x28] sm:$0xff] %v333
  %350 = vst [vmem:[#allocation2 + $0x30] sm:$0xff] %v334
  %351 = vst [vmem:[#allocation2 + $0x38] sm:$0xff] %v335
  %352 = vst [vmem:[#allocation2 + $0x40] sm:$0xff] %v336
  %353 = vst [vmem:[#allocation2 + $0x48] sm:$0xff] %v337
  %354 = vst [vmem:[#allocation2 + $0x50] sm:$0xff] %v338
  %355 = vst [vmem:[#allocation2 + $0x58] sm:$0xff] %v339
  %356 = vst [vmem:[#allocation2 + $0x60] sm:$0xff] %v340
  %357 = vst [vmem:[#allocation2 + $0x68] sm:$0xff] %v341
  %358 = vst [vmem:[#allocation2 + $0x70] sm:$0xff] %v342
  %359 = vst [vmem:[#allocation2 + $0x78] sm:$0xff] %v343
  // Predicated region
  $region18: #{unet_forward.18} parent=0 // pred_check
    %p360 = pneg %p19
  $region19: #{unet_forward.18} parent=0 // pred_check_branch
    %362 = sbr.rel (%p360) target = $region21
  $region20: #{unet_forward.18} parent=0 // pred_region
    %v363 = vld [vmem:[#allocation2] sm:$0xff]
    %v364 = vld [vmem:[#allocation2 + $0x8] sm:$0xff]
    %v365 = vld [vmem:[#allocation2 + $0x10] sm:$0xff]
    %v366 = vld [vmem:[#allocation2 + $0x18] sm:$0xff]
    %v367 = vld [vmem:[#allocation2 + $0x20] sm:$0xff]
    %v368 = vld [vmem:[#allocation2 + $0x28] sm:$0xff]
    %v369 = vld [vmem:[#allocation2 + $0x30] sm:$0xff]
    %v370 = vld [vmem:[#allocation2 + $0x38] sm:$0xff]
    %v371 = vld [vmem:[#allocation2 + $0x40] sm:$0xff]
    %v372 = vld [vmem:[#allocation2 + $0x48] sm:$0xff]
    %v373 = vld [vmem:[#allocation2 + $0x50] sm:$0xff]
    %v374 = vld [vmem:[#allocation2 + $0x58] sm:$0xff]
    %v375 = vld [vmem:[#allocation2 + $0x60] sm:$0xff]
    %v376 = vld [vmem:[#allocation2 + $0x68] sm:$0xff]
    %v377 = vld [vmem:[#allocation2 + $0x70] sm:$0xff]
    %v378 = vld [vmem:[#allocation2 + $0x78] sm:$0xff]
    %v379 = vld [vmem:[%s2] sm:$0x1]
    %v381 = vlaneseq
    %v382 = vshrl.u32 %v381, 7
    %v383 = vsub.s32 0, %v382
    %v384 = vrot.slane %v379, %v383
    %v386 = vadd.f32 %v363, %v384
    %v387 = vadd.f32 %v364, %v384
    %v388 = vadd.f32 %v365, %v384
    %v389 = vadd.f32 %v366, %v384
    %v390 = vadd.f32 %v367, %v384
    %v391 = vadd.f32 %v368, %v384
    %v392 = vadd.f32 %v369, %v384
    %v393 = vadd.f32 %v370, %v384
    %v394 = vadd.f32 %v371, %v384
    %v395 = vadd.f32 %v372, %v384
    %v396 = vadd.f32 %v373, %v384
    %v397 = vadd.f32 %v374, %v384
    %v398 = vadd.f32 %v375, %v384
    %v399 = vadd.f32 %v376, %v384
    %v400 = vadd.f32 %v377, %v384
    %v401 = vadd.f32 %v378, %v384
    %vm402 = vcmask 130048
    %v403 = vsel %vm402, %v386, 0.0
    %v404 = vsel %vm402, %v387, 0.0
    %v405 = vadd.f32 %v403, %v404
    %v406 = vsel %vm402, %v388, 0.0
    %v407 = vadd.f32 %v405, %v406
    %v408 = vsel %vm402, %v389, 0.0
    %v409 = vadd.f32 %v407, %v408
    %v410 = vsel %vm402, %v390, 0.0
    %v411 = vadd.f32 %v409, %v410
    %v412 = vsel %vm402, %v391, 0.0
    %v413 = vadd.f32 %v411, %v412
    %v414 = vsel %vm402, %v392, 0.0
    %v415 = vadd.f32 %v413, %v414
    %v416 = vsel %vm402, %v393, 0.0
    %v417 = vadd.f32 %v415, %v416
    %v418 = vsel %vm402, %v394, 0.0
    %v419 = vadd.f32 %v417, %v418
    %v420 = vsel %vm402, %v395, 0.0
    %v421 = vadd.f32 %v419, %v420
    %v422 = vsel %vm402, %v396, 0.0
    %v423 = vadd.f32 %v421, %v422
    %v424 = vsel %vm402, %v397, 0.0
    %v425 = vadd.f32 %v423, %v424
    %v426 = vsel %vm402, %v398, 0.0
    %v427 = vadd.f32 %v425, %v426
    %v428 = vsel %vm402, %v399, 0.0
    %v429 = vadd.f32 %v427, %v428
    %v430 = vsel %vm402, %v400, 0.0
    %v431 = vadd.f32 %v429, %v430
    %v432 = vsel %vm402, %v401, 0.0
    %v433 = vadd.f32 %v431, %v432
    %v434 = vrot.slane %v433, 4
    %v435 = vadd.f32 %v433, %v434
    %v436 = vrot.slane %v435, 2
    %v437 = vadd.f32 %v435, %v436
    %v438 = vrot.slane %v437, 1
    %v439 = vadd.f32 %v437, %v438
    %v440 = vmul.f32 %v386, %v386
    %v441 = vmul.f32 %v387, %v387
    %v442 = vmul.f32 %v388, %v388
    %v443 = vmul.f32 %v389, %v389
    %v444 = vmul.f32 %v390, %v390
    %v445 = vmul.f32 %v391, %v391
    %v446 = vmul.f32 %v392, %v392
    %v447 = vmul.f32 %v393, %v393
    %v448 = vmul.f32 %v394, %v394
    %v449 = vmul.f32 %v395, %v395
    %v450 = vmul.f32 %v396, %v396
    %v451 = vmul.f32 %v397, %v397
    %v452 = vmul.f32 %v398, %v398
    %v453 = vmul.f32 %v399, %v399
    %v454 = vmul.f32 %v400, %v400
    %v455 = vmul.f32 %v401, %v401
    %v456 = vsel %vm402, %v440, 0.0
    %v457 = vsel %vm402, %v441, 0.0
    %v458 = vadd.f32 %v456, %v457
    %v459 = vsel %vm402, %v442, 0.0
    %v460 = vadd.f32 %v458, %v459
    %v461 = vsel %vm402, %v443, 0.0
    %v462 = vadd.f32 %v460, %v461
    %v463 = vsel %vm402, %v444, 0.0
    %v464 = vadd.f32 %v462, %v463
    %v465 = vsel %vm402, %v445, 0.0
    %v466 = vadd.f32 %v464, %v465
    %v467 = vsel %vm402, %v446, 0.0
    %v468 = vadd.f32 %v466, %v467
    %v469 = vsel %vm402, %v447, 0.0
    %v470 = vadd.f32 %v468, %v469
    %v471 = vsel %vm402, %v448, 0.0
    %v472 = vadd.f32 %v470, %v471
    %v473 = vsel %vm402, %v449, 0.0
    %v474 = vadd.f32 %v472, %v473
    %v475 = vsel %vm402, %v450, 0.0
    %v476 = vadd.f32 %v474, %v475
    %v477 = vsel %vm402, %v451, 0.0
    %v478 = vadd.f32 %v476, %v477
    %v479 = vsel %vm402, %v452, 0.0
    %v480 = vadd.f32 %v478, %v479
    %v481 = vsel %vm402, %v453, 0.0
    %v482 = vadd.f32 %v480, %v481
    %v483 = vsel %vm402, %v454, 0.0
    %v484 = vadd.f32 %v482, %v483
    %v485 = vsel %vm402, %v455, 0.0
    %v486 = vadd.f32 %v484, %v485
    %v487 = vrot.slane %v486, 4
    %v488 = vadd.f32 %v486, %v487
    %v489 = vrot.slane %v488, 2
    %v490 = vadd.f32 %v488, %v489
    %v491 = vrot.slane %v490, 1
    %v492 = vadd.f32 %v490, %v491
    %493 = vst.msk [vmem:[%s4] sm:$0xff] %vm402, %v439
    %494 = vst.msk [vmem:[%s5] sm:$0xff] %vm402, %v492
    %v495 = vpack.c.bf16 %v387, %v386
    %v496 = vpack.c.bf16 %v389, %v388
    %v497 = vpack.c.bf16 %v391, %v390
    %v498 = vpack.c.bf16 %v393, %v392
    %v499 = vpack.c.bf16 %v395, %v394
    %v500 = vpack.c.bf16 %v397, %v396
    %v501 = vpack.c.bf16 %v399, %v398
    %v502 = vpack.c.bf16 %v401, %v400
    %v511 = vunpack.c.l.b16 %v495
    %v512 = vunpack.c.h.b16 %v495
    %v513 = vunpack.c.l.b16 %v496
    %v514 = vunpack.c.h.b16 %v496
    %v515 = vunpack.c.l.b16 %v497
    %v516 = vunpack.c.h.b16 %v497
    %v517 = vunpack.c.l.b16 %v498
    %v518 = vunpack.c.h.b16 %v498
    %v519 = vunpack.c.l.b16 %v499
    %v520 = vunpack.c.h.b16 %v499
    %v521 = vunpack.c.l.b16 %v500
    %v522 = vunpack.c.h.b16 %v500
    %v523 = vunpack.c.l.b16 %v501
    %v524 = vunpack.c.h.b16 %v501
    %v525 = vunpack.c.l.b16 %v502
    %v526 = vunpack.c.h.b16 %v502
    %v527 = vpack.c.b16 %v511, %v511
    %v528 = vpack.c.b16 %v512, %v512
    %v529 = vpack.c.b16 %v513, %v513
    %v530 = vpack.c.b16 %v514, %v514
    %v531 = vpack.c.b16 %v515, %v515
    %v532 = vpack.c.b16 %v516, %v516
    %v533 = vpack.c.b16 %v517, %v517
    %v534 = vpack.c.b16 %v518, %v518
    %v535 = vpack.c.b16 %v519, %v519
    %v536 = vpack.c.b16 %v520, %v520
    %v537 = vpack.c.b16 %v521, %v521
    %v538 = vpack.c.b16 %v522, %v522
    %v539 = vpack.c.b16 %v523, %v523
    %v540 = vpack.c.b16 %v524, %v524
    %v541 = vpack.c.b16 %v525, %v525
    %v542 = vpack.c.b16 %v526, %v526
    %vm559 = vcmask 125952
    %560 = vst.msk [vmem:[%s3] sm:$0xf] %vm559, %v527
    %561 = vst.msk [vmem:[%s3 + $0x4] sm:$0xf] %vm559, %v528
    %562 = vst.msk [vmem:[%s3 + $0x8] sm:$0xf] %vm559, %v529
    %563 = vst.msk [vmem:[%s3 + $0xc] sm:$0xf] %vm559, %v530
    %564 = vst.msk [vmem:[%s3 + $0x10] sm:$0xf] %vm559, %v531
    %565 = vst.msk [vmem:[%s3 + $0x14] sm:$0xf] %vm559, %v532
    %566 = vst.msk [vmem:[%s3 + $0x18] sm:$0xf] %vm559, %v533
    %567 = vst.msk [vmem:[%s3 + $0x1c] sm:$0xf] %vm559, %v534
    %568 = vst.msk [vmem:[%s3 + $0x20] sm:$0xf] %vm559, %v535
    %569 = vst.msk [vmem:[%s3 + $0x24] sm:$0xf] %vm559, %v536
    %570 = vst.msk [vmem:[%s3 + $0x28] sm:$0xf] %vm559, %v537
    %571 = vst.msk [vmem:[%s3 + $0x2c] sm:$0xf] %vm559, %v538
    %572 = vst.msk [vmem:[%s3 + $0x30] sm:$0xf] %vm559, %v539
    %573 = vst.msk [vmem:[%s3 + $0x34] sm:$0xf] %vm559, %v540
    %574 = vst.msk [vmem:[%s3 + $0x38] sm:$0xf] %vm559, %v541
    %575 = vst.msk [vmem:[%s3 + $0x3c] sm:$0xf] %vm559, %v542
  $region21: #{unet_forward.18} parent=0 // pred_fallthru
    _
  // Predicated region
  $region22: #{unet_forward.18} parent=0 // pred_check
    _
  $region23: #{unet_forward.18} parent=0 // pred_check_branch
    %577 = sbr.rel (0) target = $region25
  $region24: #{unet_forward.18} parent=0 // pred_region
    _
  $region25: #{unet_forward.18} parent=0 // pred_fallthru
    _
  // Predicated region
  $region26: #{unet_forward.18} parent=0 // pred_check
    _
  $region27: #{unet_forward.18} parent=0 // pred_check_branch
    %579 = sbr.rel (0) target = $region29
  $region28: #{unet_forward.18} parent=0 // pred_region
    _
  $region29: #{unet_forward.18} parent=0 // pred_fallthru
    _
  // Predicated region
  $region30: #{unet_forward.18} parent=0 // pred_check
    _
  $region31: #{unet_forward.18} parent=0 // pred_check_branch
    %581 = sbr.rel (0) target = $region33
  $region32: #{unet_forward.18} parent=0 // pred_region
    _
  $region33: #{unet_forward.18} parent=0 // pred_fallthru
    _
  // Predicated region
  $region34: #{unet_forward.18} parent=0 // pred_check
    _
  $region35: #{unet_forward.18} parent=0 // pred_check_branch
    %583 = sbr.rel (0) target = $region37
  $region36: #{unet_forward.18} parent=0 // pred_region
    _
  $region37: #{unet_forward.18} parent=0 // pred_fallthru
    _
  // Predicated region
  $region38: #{unet_forward.18} parent=0 // pred_check
    _
  $region39: #{unet_forward.18} parent=0 // pred_check_branch
    %585 = sbr.rel (0) target = $region41
  $region40: #{unet_forward.18} parent=0 // pred_region
    _
  $region41: #{unet_forward.18} parent=0 // pred_fallthru
    _
  // Predicated region
  $region42: #{unet_forward.18} parent=0 // pred_check
    _
  $region43: #{unet_forward.18} parent=0 // pred_check_branch
    %587 = sbr.rel (0) target = $region45
  $region44: #{unet_forward.18} parent=0 // pred_region
    _
  $region45: #{unet_forward.18} parent=0 // pred_fallthru
    _

// kernel: unet_forward.19
$region0: #{unet_forward.19}
  #allocation0 [shape = 'u32[]', space=smem, size = 0x4, offset = 0x4, fixed_abs, tag = 'smem constant byte address 0x4 - core index']
  #allocation1 [shape = 'u32[144,128]{1,0:T(1,128)}', space=vmem, size = 0x12000, scoped, tag = 'internal scratch']
  %s0 = inlined_call_operand.vmem [shape: bf16[128,16], index: 0, kind: input, shape index: {}]
  %s1 = inlined_call_operand.vmem [shape: f32[1,16], index: 1, kind: input, shape index: {}]
  %s2 = inlined_call_operand.vmem [shape: f32[1,16], index: 2, kind: input, shape index: {}]
  %s3 = inlined_call_operand.vmem [shape: bf16[128,16], index: 3, kind: output, shape index: {}]
  %s4 = sld [smem:[#allocation0]]
  $region22: #{unet_forward.19} parent=0
    _
  %s6 = ssub.s32 1, %s4
  %s7 = scalar_select 0, %s6, %s4
  // Predicated region
  $region2: #{unet_forward.19} parent=0 // pred_check
    _
  $region3: #{unet_forward.19} parent=0 // pred_check_branch
    %9 = sbr.rel (0) target = $region5
  $region4: #{unet_forward.19} parent=0 // pred_region
    _
  $region5: #{unet_forward.19} parent=0 // pred_fallthru
    _
  // Predicated region
  $region6: #{unet_forward.19} parent=0 // pred_check
    _
  $region7: #{unet_forward.19} parent=0 // pred_check_branch
    %11 = sbr.rel (0) target = $region9
  $region8: #{unet_forward.19} parent=0 // pred_region
    _
  $region9: #{unet_forward.19} parent=0 // pred_fallthru
    _
  // Predicated region
  $region10: #{unet_forward.19} parent=0 // pred_check
    _
  $region11: #{unet_forward.19} parent=0 // pred_check_branch
    %13 = sbr.rel (0) target = $region13
  $region12: #{unet_forward.19} parent=0 // pred_region
    _
  $region13: #{unet_forward.19} parent=0 // pred_fallthru
    _
  %v14 = vld [vmem:[%s0] sm:$0xf]
  %v15 = vld [vmem:[%s0 + $0x4] sm:$0xf]
  %v16 = vld [vmem:[%s0 + $0x8] sm:$0xf]
  %v17 = vld [vmem:[%s0 + $0xc] sm:$0xf]
  %v18 = vld [vmem:[%s0 + $0x10] sm:$0xf]
  %v19 = vld [vmem:[%s0 + $0x14] sm:$0xf]
  %v20 = vld [vmem:[%s0 + $0x18] sm:$0xf]
  %v21 = vld [vmem:[%s0 + $0x1c] sm:$0xf]
  %v22 = vld [vmem:[%s0 + $0x20] sm:$0xf]
  %v23 = vld [vmem:[%s0 + $0x24] sm:$0xf]
  %v24 = vld [vmem:[%s0 + $0x28] sm:$0xf]
  %v25 = vld [vmem:[%s0 + $0x2c] sm:$0xf]
  %v26 = vld [vmem:[%s0 + $0x30] sm:$0xf]
  %v27 = vld [vmem:[%s0 + $0x34] sm:$0xf]
  %v28 = vld [vmem:[%s0 + $0x38] sm:$0xf]
  %v29 = vld [vmem:[%s0 + $0x3c] sm:$0xf]
  %v30 = vunpack.c.l.bf16 %v14
  %v31 = vunpack.c.l.bf16 %v15
  %v32 = vunpack.c.l.bf16 %v16
  %v33 = vunpack.c.l.bf16 %v17
  %v34 = vunpack.c.l.bf16 %v18
  %v35 = vunpack.c.l.bf16 %v19
  %v36 = vunpack.c.l.bf16 %v20
  %v37 = vunpack.c.l.bf16 %v21
  %v38 = vunpack.c.l.bf16 %v22
  %v39 = vunpack.c.l.bf16 %v23
  %v40 = vunpack.c.l.bf16 %v24
  %v41 = vunpack.c.l.bf16 %v25
  %v42 = vunpack.c.l.bf16 %v26
  %v43 = vunpack.c.l.bf16 %v27
  %v44 = vunpack.c.l.bf16 %v28
  %v45 = vunpack.c.l.bf16 %v29
  %v46 = vld [vmem:[%s1] sm:$0x1]
  %v48 = vlaneseq
  %v49 = vshrl.u32 %v48, 7
  %v50 = vsub.s32 0, %v49
  %v51 = vrot.slane %v46, %v50
  %v53 = vsub.f32 %v30, %v51
  %v54 = vsub.f32 %v31, %v51
  %v55 = vsub.f32 %v32, %v51
  %v56 = vsub.f32 %v33, %v51
  %v57 = vsub.f32 %v34, %v51
  %v58 = vsub.f32 %v35, %v51
  %v59 = vsub.f32 %v36, %v51
  %v60 = vsub.f32 %v37, %v51
  %v61 = vsub.f32 %v38, %v51
  %v62 = vsub.f32 %v39, %v51
  %v63 = vsub.f32 %v40, %v51
  %v64 = vsub.f32 %v41, %v51
  %v65 = vsub.f32 %v42, %v51
  %v66 = vsub.f32 %v43, %v51
  %v67 = vsub.f32 %v44, %v51
  %v68 = vsub.f32 %v45, %v51
  %v69 = vld [vmem:[%s2] sm:$0x1]
  %v71 = vlaneseq
  %v72 = vshrl.u32 %v71, 7
  %v73 = vsub.s32 0, %v72
  %v74 = vrot.slane %v69, %v73
  %v76 = vmul.f32 %v53, %v74
  %v77 = vmul.f32 %v54, %v74
  %v78 = vmul.f32 %v55, %v74
  %v79 = vmul.f32 %v56, %v74
  %v80 = vmul.f32 %v57, %v74
  %v81 = vmul.f32 %v58, %v74
  %v82 = vmul.f32 %v59, %v74
  %v83 = vmul.f32 %v60, %v74
  %v84 = vmul.f32 %v61, %v74
  %v85 = vmul.f32 %v62, %v74
  %v86 = vmul.f32 %v63, %v74
  %v87 = vmul.f32 %v64, %v74
  %v88 = vmul.f32 %v65, %v74
  %v89 = vmul.f32 %v66, %v74
  %v90 = vmul.f32 %v67, %v74
  %v91 = vmul.f32 %v68, %v74
  %v92 = vpack.c.bf16 %v77, %v76
  %v93 = vpack.c.bf16 %v79, %v78
  %v94 = vpack.c.bf16 %v81, %v80
  %v95 = vpack.c.bf16 %v83, %v82
  %v96 = vpack.c.bf16 %v85, %v84
  %v97 = vpack.c.bf16 %v87, %v86
  %v98 = vpack.c.bf16 %v89, %v88
  %v99 = vpack.c.bf16 %v91, %v90
  %v108 = vunpack.c.l.b16 %v92
  %v109 = vunpack.c.h.b16 %v92
  %v110 = vunpack.c.l.b16 %v93
  %v111 = vunpack.c.h.b16 %v93
  %v112 = vunpack.c.l.b16 %v94
  %v113 = vunpack.c.h.b16 %v94
  %v114 = vunpack.c.l.b16 %v95
  %v115 = vunpack.c.h.b16 %v95
  %v116 = vunpack.c.l.b16 %v96
  %v117 = vunpack.c.h.b16 %v96
  %v118 = vunpack.c.l.b16 %v97
  %v119 = vunpack.c.h.b16 %v97
  %v120 = vunpack.c.l.b16 %v98
  %v121 = vunpack.c.h.b16 %v98
  %v122 = vunpack.c.l.b16 %v99
  %v123 = vunpack.c.h.b16 %v99
  %v124 = vpack.c.b16 %v108, %v108
  %v125 = vpack.c.b16 %v109, %v109
  %v126 = vpack.c.b16 %v110, %v110
  %v127 = vpack.c.b16 %v111, %v111
  %v128 = vpack.c.b16 %v112, %v112
  %v129 = vpack.c.b16 %v113, %v113
  %v130 = vpack.c.b16 %v114, %v114
  %v131 = vpack.c.b16 %v115, %v115
  %v132 = vpack.c.b16 %v116, %v116
  %v133 = vpack.c.b16 %v117, %v117
  %v134 = vpack.c.b16 %v118, %v118
  %v135 = vpack.c.b16 %v119, %v119
  %v136 = vpack.c.b16 %v120, %v120
  %v137 = vpack.c.b16 %v121, %v121
  %v138 = vpack.c.b16 %v122, %v122
  %v139 = vpack.c.b16 %v123, %v123
  %vm156 = vcmask 125952
  %157 = vst.msk [vmem:[%s3] sm:$0xf] %vm156, %v124
  %158 = vst.msk [vmem:[%s3 + $0x4] sm:$0xf] %vm156, %v125
  %159 = vst.msk [vmem:[%s3 + $0x8] sm:$0xf] %vm156, %v126
  %160 = vst.msk [vmem:[%s3 + $0xc] sm:$0xf] %vm156, %v127
  %161 = vst.msk [vmem:[%s3 + $0x10] sm:$0xf] %vm156, %v128
  %162 = vst.msk [vmem:[%s3 + $0x14] sm:$0xf] %vm156, %v129
  %163 = vst.msk [vmem:[%s3 + $0x18] sm:$0xf] %vm156, %v130
  %164 = vst.msk [vmem:[%s3 + $0x1c] sm:$0xf] %vm156, %v131
  %165 = vst.msk [vmem:[%s3 + $0x20] sm:$0xf] %vm156, %v132
  %166 = vst.msk [vmem:[%s3 + $0x24] sm:$0xf] %vm156, %v133
  %167 = vst.msk [vmem:[%s3 + $0x28] sm:$0xf] %vm156, %v134
  %168 = vst.msk [vmem:[%s3 + $0x2c] sm:$0xf] %vm156, %v135
  %169 = vst.msk [vmem:[%s3 + $0x30] sm:$0xf] %vm156, %v136
  %170 = vst.msk [vmem:[%s3 + $0x34] sm:$0xf] %vm156, %v137
  %171 = vst.msk [vmem:[%s3 + $0x38] sm:$0xf] %vm156, %v138
  %172 = vst.msk [vmem:[%s3 + $0x3c] sm:$0xf] %vm156, %v139
  // Predicated region
  $region14: #{unet_forward.19} parent=0 // pred_check
    _
  $region15: #{unet_forward.19} parent=0 // pred_check_branch
    %174 = sbr.rel (0) target = $region17
  $region16: #{unet_forward.19} parent=0 // pred_region
    _
  $region17: #{unet_forward.19} parent=0 // pred_fallthru
    _
  // Predicated region
  $region18: #{unet_forward.19} parent=0 // pred_check
    _
  $region19: #{unet_forward.19} parent=0 // pred_check_branch
    %176 = sbr.rel (0) target = $region21
  $region20: #{unet_forward.19} parent=0 // pred_region
    _
  $region21: #{unet_forward.19} parent=0 // pred_fallthru
    _

// kernel: unet_forward.21
$region0: #{unet_forward.21}
  #allocation0 [shape = 'u32[]', space=smem, size = 0x4, offset = 0x4, fixed_abs, tag = 'smem constant byte address 0x4 - core index']
  #allocation1 [shape = 'u32[144,128]{1,0:T(1,128)}', space=vmem, size = 0x12000, scoped, tag = 'internal scratch']
  %s0 = inlined_call_operand.vmem [shape: bf16[32,32], index: 0, kind: input, shape index: {}]
  %s1 = inlined_call_operand.vmem [shape: f32[1,32], index: 1, kind: input, shape index: {}]
  %s2 = inlined_call_operand.vmem [shape: f32[1,32], index: 2, kind: input, shape index: {}]
  %s3 = inlined_call_operand.vmem [shape: bf16[32,32], index: 3, kind: output, shape index: {}]
  %s4 = sld [smem:[#allocation0]]
  $region22: #{unet_forward.21} parent=0
    _
  %s6 = ssub.s32 1, %s4
  %s7 = scalar_select 0, %s6, %s4
  // Predicated region
  $region2: #{unet_forward.21} parent=0 // pred_check
    _
  $region3: #{unet_forward.21} parent=0 // pred_check_branch
    %9 = sbr.rel (0) target = $region5
  $region4: #{unet_forward.21} parent=0 // pred_region
    _
  $region5: #{unet_forward.21} parent=0 // pred_fallthru
    _
  // Predicated region
  $region6: #{unet_forward.21} parent=0 // pred_check
    _
  $region7: #{unet_forward.21} parent=0 // pred_check_branch
    %11 = sbr.rel (0) target = $region9
  $region8: #{unet_forward.21} parent=0 // pred_region
    _
  $region9: #{unet_forward.21} parent=0 // pred_fallthru
    _
  // Predicated region
  $region10: #{unet_forward.21} parent=0 // pred_check
    _
  $region11: #{unet_forward.21} parent=0 // pred_check_branch
    %13 = sbr.rel (0) target = $region13
  $region12: #{unet_forward.21} parent=0 // pred_region
    _
  $region13: #{unet_forward.21} parent=0 // pred_fallthru
    _
  %v14 = vld [vmem:[%s0] sm:$0xf]
  %v15 = vld [vmem:[%s0 + $0x4] sm:$0xf]
  %v16 = vld [vmem:[%s0 + $0x8] sm:$0xf]
  %v17 = vld [vmem:[%s0 + $0xc] sm:$0xf]
  %v18 = vunpack.c.l.bf16 %v14
  %v19 = vunpack.c.l.bf16 %v15
  %v20 = vunpack.c.l.bf16 %v16
  %v21 = vunpack.c.l.bf16 %v17
  %v22 = vld [vmem:[%s1] sm:$0x1]
  %v24 = vlaneseq
  %v25 = vshrl.u32 %v24, 7
  %v26 = vsub.s32 0, %v25
  %v27 = vrot.slane %v22, %v26
  %v29 = vsub.f32 %v18, %v27
  %v30 = vsub.f32 %v19, %v27
  %v31 = vsub.f32 %v20, %v27
  %v32 = vsub.f32 %v21, %v27
  %v33 = vld [vmem:[%s2] sm:$0x1]
  %v35 = vlaneseq
  %v36 = vshrl.u32 %v35, 7
  %v37 = vsub.s32 0, %v36
  %v38 = vrot.slane %v33, %v37
  %v40 = vmul.f32 %v29, %v38
  %v41 = vmul.f32 %v30, %v38
  %v42 = vmul.f32 %v31, %v38
  %v43 = vmul.f32 %v32, %v38
  %v44 = vpack.c.bf16 %v41, %v40
  %v45 = vpack.c.bf16 %v43, %v42
  %v48 = vunpack.c.l.b16 %v44
  %v49 = vunpack.c.h.b16 %v44
  %v50 = vunpack.c.l.b16 %v45
  %v51 = vunpack.c.h.b16 %v45
  %v52 = vpack.c.b16 %v48, %v48
  %v53 = vpack.c.b16 %v49, %v49
  %v54 = vpack.c.b16 %v50, %v50
  %v55 = vpack.c.b16 %v51, %v51
  %vm60 = vcmask 257024
  %61 = vst.msk [vmem:[%s3] sm:$0xf] %vm60, %v52
  %62 = vst.msk [vmem:[%s3 + $0x4] sm:$0xf] %vm60, %v53
  %63 = vst.msk [vmem:[%s3 + $0x8] sm:$0xf] %vm60, %v54
  %64 = vst.msk [vmem:[%s3 + $0xc] sm:$0xf] %vm60, %v55
  // Predicated region
  $region14: #{unet_forward.21} parent=0 // pred_check
    _
  $region15: #{unet_forward.21} parent=0 // pred_check_branch
    %66 = sbr.rel (0) target = $region17
  $region16: #{unet_forward.21} parent=0 // pred_region
    _
  $region17: #{unet_forward.21} parent=0 // pred_fallthru
    _
  // Predicated region
  $region18: #{unet_forward.21} parent=0 // pred_check
    _
  $region19: #{unet_forward.21} parent=0 // pred_check_branch
    %68 = sbr.rel (0) target = $region21
  $region20: #{unet_forward.21} parent=0 // pred_region
    _
  $region21: #{unet_forward.21} parent=0 // pred_fallthru
    _

// kernel: unet_forward.20
$region0: #{unet_forward.20}
  #allocation0 [shape = 'u32[]', space=smem, size = 0x4, offset = 0x4, fixed_abs, tag = 'smem constant byte address 0x4 - core index']
  #allocation1 [shape = 'u32[144,128]{1,0:T(1,128)}', space=vmem, size = 0x12000, scoped, tag = 'internal scratch']
  #allocation2 [shape = 'f32[32,128]{1,0:T(8,128)}', space=vmem, size = 0x4000, scoped, tag = 'scratch operand']
  %s0 = inlined_call_operand.vmem [shape: bf16[32,256], index: 0, kind: input, shape index: {}]
  %s1 = inlined_call_operand.vmem [shape: bf16[256,128], index: 1, kind: input, shape index: {}]
  %s2 = inlined_call_operand.vmem [shape: f32[1,128], index: 2, kind: input, shape index: {}]
  %s3 = inlined_call_operand.vmem [shape: bf16[32,32], index: 3, kind: output, shape index: {0}]
  %s4 = inlined_call_operand.vmem [shape: f32[1,8,32], index: 4, kind: output, shape index: {1}]
  %s5 = inlined_call_operand.vmem [shape: f32[1,8,32], index: 5, kind: output, shape index: {2}]
  %6 = xla_tuple %s3, %s4, %s5
  %s7 = sld [smem:[#allocation0]]
  $region46: #{unet_forward.20} parent=0
    _
  %s9 = ssub.s32 1, %s7
  %s10 = scalar_select 0, %s9, %s7
  // Predicated region
  $region2: #{unet_forward.20} parent=0 // pred_check
    _
  $region3: #{unet_forward.20} parent=0 // pred_check_branch
    %12 = sbr.rel (0) target = $region5
  $region4: #{unet_forward.20} parent=0 // pred_region
    _
  $region5: #{unet_forward.20} parent=0 // pred_fallthru
    _
  // Predicated region
  $region6: #{unet_forward.20} parent=0 // pred_check
    _
  $region7: #{unet_forward.20} parent=0 // pred_check_branch
    %14 = sbr.rel (0) target = $region9
  $region8: #{unet_forward.20} parent=0 // pred_region
    _
  $region9: #{unet_forward.20} parent=0 // pred_fallthru
    _
  // Predicated region
  $region10: #{unet_forward.20} parent=0 // pred_check
    _
  $region11: #{unet_forward.20} parent=0 // pred_check_branch
    %16 = sbr.rel (0) target = $region13
  $region12: #{unet_forward.20} parent=0 // pred_region
    _
  $region13: #{unet_forward.20} parent=0 // pred_fallthru
    _
  %p19 = scmp.eq.s32.totalorder 0, 0
  // Predicated region
  $region14: #{unet_forward.20} parent=0 // pred_check
    %p20 = pneg %p19
  $region15: #{unet_forward.20} parent=0 // pred_check_branch
    %22 = sbr.rel (%p20) target = $region17
  $region16: #{unet_forward.20} parent=0 // pred_region
    %23 = vst [vmem:[#allocation2] sm:$0xff] 0.0
    %24 = vst [vmem:[#allocation2 + $0x8] sm:$0xff] 0.0
    %25 = vst [vmem:[#allocation2 + $0x10] sm:$0xff] 0.0
    %26 = vst [vmem:[#allocation2 + $0x18] sm:$0xff] 0.0
  $region17: #{unet_forward.20} parent=0 // pred_fallthru
    _
  %v27 = vld [vmem:[%s0] sm:$0xff]
  %v28 = vld [vmem:[%s0 + $0x8] sm:$0xff]
  %v29 = vld [vmem:[%s0 + $0x10] sm:$0xff]
  %v30 = vld [vmem:[%s0 + $0x18] sm:$0xff]
  %vm31 = vcmp.gt.bf16.partialorder %v27, 0
  %vm32 = vcmp.gt.bf16.partialorder %v28, 0
  %vm33 = vcmp.gt.bf16.partialorder %v29, 0
  %vm34 = vcmp.gt.bf16.partialorder %v30, 0
  %v35 = vmul.bf16 %v27, 1045249613
  %v36 = vmul.bf16 %v28, 1045249613
  %v37 = vmul.bf16 %v29, 1045249613
  %v38 = vmul.bf16 %v30, 1045249613
  %v39 = vsel %vm31, %v27, %v35
  %v40 = vsel %vm32, %v28, %v36
  %v41 = vsel %vm33, %v29, %v37
  %v42 = vsel %vm34, %v30, %v38
  %v43 = vld [vmem:[%s1] sm:$0xf]
  %v44 = vld [vmem:[%s1 + $0x4] sm:$0xf]
  %v45 = vld [vmem:[%s1 + $0x8] sm:$0xf]
  %v46 = vld [vmem:[%s1 + $0xc] sm:$0xf]
  %v47 = vld [vmem:[%s1 + $0x10] sm:$0xf]
  %v48 = vld [vmem:[%s1 + $0x14] sm:$0xf]
  %v49 = vld [vmem:[%s1 + $0x18] sm:$0xf]
  %v50 = vld [vmem:[%s1 + $0x1c] sm:$0xf]
  %v51 = vld [vmem:[%s1 + $0x20] sm:$0xf]
  %v52 = vld [vmem:[%s1 + $0x24] sm:$0xf]
  %v53 = vld [vmem:[%s1 + $0x28] sm:$0xf]
  %v54 = vld [vmem:[%s1 + $0x2c] sm:$0xf]
  %v55 = vld [vmem:[%s1 + $0x30] sm:$0xf]
  %v56 = vld [vmem:[%s1 + $0x34] sm:$0xf]
  %v57 = vld [vmem:[%s1 + $0x38] sm:$0xf]
  %v58 = vld [vmem:[%s1 + $0x3c] sm:$0xf]
  %v59 = vld [vmem:[%s1 + $0x40] sm:$0xf]
  %v60 = vld [vmem:[%s1 + $0x44] sm:$0xf]
  %v61 = vld [vmem:[%s1 + $0x48] sm:$0xf]
  %v62 = vld [vmem:[%s1 + $0x4c] sm:$0xf]
  %v63 = vld [vmem:[%s1 + $0x50] sm:$0xf]
  %v64 = vld [vmem:[%s1 + $0x54] sm:$0xf]
  %v65 = vld [vmem:[%s1 + $0x58] sm:$0xf]
  %v66 = vld [vmem:[%s1 + $0x5c] sm:$0xf]
  %v67 = vld [vmem:[%s1 + $0x60] sm:$0xf]
  %v68 = vld [vmem:[%s1 + $0x64] sm:$0xf]
  %v69 = vld [vmem:[%s1 + $0x68] sm:$0xf]
  %v70 = vld [vmem:[%s1 + $0x6c] sm:$0xf]
  %v71 = vld [vmem:[%s1 + $0x70] sm:$0xf]
  %v72 = vld [vmem:[%s1 + $0x74] sm:$0xf]
  %v73 = vld [vmem:[%s1 + $0x78] sm:$0xf]
  %v74 = vld [vmem:[%s1 + $0x7c] sm:$0xf]
  %v75 = vld [vmem:[#allocation2] sm:$0xff]
  %v76 = vld [vmem:[#allocation2 + $0x8] sm:$0xff]
  %v77 = vld [vmem:[#allocation2 + $0x10] sm:$0xff]
  %v78 = vld [vmem:[#allocation2 + $0x18] sm:$0xff]
  %v83 = vunpack.c.l.b16 %v39
  %v84 = vunpack.c.h.b16 %v39
  %v85 = vunpack.c.l.b16 %v40
  %v86 = vunpack.c.h.b16 %v40
  %v87 = vunpack.c.l.b16 %v41
  %v88 = vunpack.c.h.b16 %v41
  %v89 = vunpack.c.l.b16 %v42
  %v90 = vunpack.c.h.b16 %v42
  %v91 = vpack.c.b16 %v85, %v83
  %v92 = vpack.c.b16 %v86, %v84
  %v93 = vpack.c.b16 %v89, %v87
  %v94 = vpack.c.b16 %v90, %v88
  %v131 = vunpack.c.l.b16 %v43
  %v132 = vunpack.c.l.b16 %v44
  %v133 = vunpack.c.l.b16 %v45
  %v134 = vunpack.c.l.b16 %v46
  %v135 = vunpack.c.l.b16 %v47
  %v136 = vunpack.c.l.b16 %v48
  %v137 = vunpack.c.l.b16 %v49
  %v138 = vunpack.c.l.b16 %v50
  %v139 = vunpack.c.l.b16 %v51
  %v140 = vunpack.c.l.b16 %v52
  %v141 = vunpack.c.l.b16 %v53
  %v142 = vunpack.c.l.b16 %v54
  %v143 = vunpack.c.l.b16 %v55
  %v144 = vunpack.c.l.b16 %v56
  %v145 = vunpack.c.l.b16 %v57
  %v146 = vunpack.c.l.b16 %v58
  %v147 = vunpack.c.l.b16 %v59
  %v148 = vunpack.c.l.b16 %v60
  %v149 = vunpack.c.l.b16 %v61
  %v150 = vunpack.c.l.b16 %v62
  %v151 = vunpack.c.l.b16 %v63
  %v152 = vunpack.c.l.b16 %v64
  %v153 = vunpack.c.l.b16 %v65
  %v154 = vunpack.c.l.b16 %v66
  %v155 = vunpack.c.l.b16 %v67
  %v156 = vunpack.c.l.b16 %v68
  %v157 = vunpack.c.l.b16 %v69
  %v158 = vunpack.c.l.b16 %v70
  %v159 = vunpack.c.l.b16 %v71
  %v160 = vunpack.c.l.b16 %v72
  %v161 = vunpack.c.l.b16 %v73
  %v162 = vunpack.c.l.b16 %v74
  %v163 = vpack.c.b16 %v132, %v131
  %v164 = vpack.c.b16 %v134, %v133
  %v165 = vpack.c.b16 %v136, %v135
  %v166 = vpack.c.b16 %v138, %v137
  %v167 = vpack.c.b16 %v140, %v139
  %v168 = vpack.c.b16 %v142, %v141
  %v169 = vpack.c.b16 %v144, %v143
  %v170 = vpack.c.b16 %v146, %v145
  %v171 = vpack.c.b16 %v148, %v147
  %v172 = vpack.c.b16 %v150, %v149
  %v173 = vpack.c.b16 %v152, %v151
  %v174 = vpack.c.b16 %v154, %v153
  %v175 = vpack.c.b16 %v156, %v155
  %v176 = vpack.c.b16 %v158, %v157
  %v177 = vpack.c.b16 %v160, %v159
  %v178 = vpack.c.b16 %v162, %v161
  %195 = vmatprep.subr.bf16.mxu0 0
  %196 = vmatpush1.bf16.msra.mxu0 %v170
  %197 = vmatprep.subr.bf16.mxu0 0
  %198 = vmatpush1.bf16.msra.mxu0 %v169
  %199 = vmatprep.subr.bf16.mxu0 0
  %200 = vmatpush1.bf16.msra.mxu0 %v168
  %201 = vmatprep.subr.bf16.mxu0 0
  %202 = vmatpush1.bf16.msra.mxu0 %v167
  %203 = vmatprep.subr.bf16.mxu0 0
  %204 = vmatpush1.bf16.msra.mxu0 %v166
  %205 = vmatprep.subr.bf16.mxu0 0
  %206 = vmatpush1.bf16.msra.mxu0 %v165
  %207 = vmatprep.subr.bf16.mxu0 0
  %208 = vmatpush1.bf16.msra.mxu0 %v164
  %209 = vmatprep.subr.bf16.mxu0 0
  %210 = vmatpush1.bf16.msra.mxu0 %v163
  %211 = vmatprep.subr.bf16.mxu0 0
  %212 = vmatpush2.bf16.msra.mxu0 %v178
  %213 = vmatprep.subr.bf16.mxu0 0
  %214 = vmatpush2.bf16.msra.mxu0 %v177
  %215 = vmatprep.subr.bf16.mxu0 0
  %216 = vmatpush2.bf16.msra.mxu0 %v176
  %217 = vmatprep.subr.bf16.mxu0 0
  %218 = vmatpush2.bf16.msra.mxu0 %v175
  %219 = vmatprep.subr.bf16.mxu0 0
  %220 = vmatpush2.bf16.msra.mxu0 %v174
  %221 = vmatprep.subr.bf16.mxu0 0
  %222 = vmatpush2.bf16.msra.mxu0 %v173
  %223 = vmatprep.subr.bf16.mxu0 0
  %224 = vmatpush2.bf16.msra.mxu0 %v172
  %225 = vmatprep.subr.bf16.mxu0 0
  %226 = vmatpush2.bf16.msra.mxu0 %v171
  %227 = vmatprep.mubr.bf16.mxu0 %v92
  %228 = vmatmul.mubr.bf16.gmra.mxu0 %v91
  %v229 = vpop.f32.mrf.mxu0
  %v230 = vadd.f32 0.0, %v229
  %v231 = vpop.f32.mrf.mxu0
  %v232 = vpop.f32.mrf.mxu0
  %v233 = vadd.f32 0.0, %v232
  %v234 = vpop.f32.mrf.mxu0
  %235 = vmatprep.mubr.bf16.mxu0 %v94
  %236 = vmatmul.mubr.bf16.gmra.mxu0 %v93
  %v237 = vpop.f32.mrf.mxu0
  %v238 = vadd.f32 0.0, %v237
  %v239 = vpop.f32.mrf.mxu0
  %v240 = vpop.f32.mrf.mxu0
  %v241 = vadd.f32 0.0, %v240
  %v242 = vpop.f32.mrf.mxu0
  %243 = vdwg.mxu0
  %v244 = vadd.f32 %v75, %v230
  %v245 = vadd.f32 %v76, %v233
  %v246 = vadd.f32 %v77, %v238
  %v247 = vadd.f32 %v78, %v241
  %248 = vst [vmem:[#allocation2] sm:$0xff] %v244
  %249 = vst [vmem:[#allocation2 + $0x8] sm:$0xff] %v245
  %250 = vst [vmem:[#allocation2 + $0x10] sm:$0xff] %v246
  %251 = vst [vmem:[#allocation2 + $0x18] sm:$0xff] %v247
  // Predicated region
  $region18: #{unet_forward.20} parent=0 // pred_check
    %p252 = pneg %p19
  $region19: #{unet_forward.20} parent=0 // pred_check_branch
    %254 = sbr.rel (%p252) target = $region21
  $region20: #{unet_forward.20} parent=0 // pred_region
    %v255 = vld [vmem:[#allocation2] sm:$0xff]
    %v256 = vld [vmem:[#allocation2 + $0x8] sm:$0xff]
    %v257 = vld [vmem:[#allocation2 + $0x10] sm:$0xff]
    %v258 = vld [vmem:[#allocation2 + $0x18] sm:$0xff]
    %v259 = vld [vmem:[%s2] sm:$0x1]
    %v261 = vlaneseq
    %v262 = vshrl.u32 %v261, 7
    %v263 = vsub.s32 0, %v262
    %v264 = vrot.slane %v259, %v263
    %v266 = vadd.f32 %v255, %v264
    %v267 = vadd.f32 %v256, %v264
    %v268 = vadd.f32 %v257, %v264
    %v269 = vadd.f32 %v258, %v264
    %vm270 = vcmask 261120
    %v271 = vsel %vm270, %v266, 0.0
    %v272 = vsel %vm270, %v267, 0.0
    %v273 = vadd.f32 %v271, %v272
    %v274 = vsel %vm270, %v268, 0.0
    %v275 = vadd.f32 %v273, %v274
    %v276 = vsel %vm270, %v269, 0.0
    %v277 = vadd.f32 %v275, %v276
    %v278 = vrot.slane %v277, 4
    %v279 = vadd.f32 %v277, %v278
    %v280 = vrot.slane %v279, 2
    %v281 = vadd.f32 %v279, %v280
    %v282 = vrot.slane %v281, 1
    %v283 = vadd.f32 %v281, %v282
    %v284 = vmul.f32 %v266, %v266
    %v285 = vmul.f32 %v267, %v267
    %v286 = vmul.f32 %v268, %v268
    %v287 = vmul.f32 %v269, %v269
    %v288 = vsel %vm270, %v284, 0.0
    %v289 = vsel %vm270, %v285, 0.0
    %v290 = vadd.f32 %v288, %v289
    %v291 = vsel %vm270, %v286, 0.0
    %v292 = vadd.f32 %v290, %v291
    %v293 = vsel %vm270, %v287, 0.0
    %v294 = vadd.f32 %v292, %v293
    %v295 = vrot.slane %v294, 4
    %v296 = vadd.f32 %v294, %v295
    %v297 = vrot.slane %v296, 2
    %v298 = vadd.f32 %v296, %v297
    %v299 = vrot.slane %v298, 1
    %v300 = vadd.f32 %v298, %v299
    %301 = vst.msk [vmem:[%s4] sm:$0xff] %vm270, %v283
    %302 = vst.msk [vmem:[%s5] sm:$0xff] %vm270, %v300
    %v303 = vpack.c.bf16 %v267, %v266
    %v304 = vpack.c.bf16 %v269, %v268
    %v307 = vunpack.c.l.b16 %v303
    %v308 = vunpack.c.h.b16 %v303
    %v309 = vunpack.c.l.b16 %v304
    %v310 = vunpack.c.h.b16 %v304
    %v311 = vpack.c.b16 %v307, %v307
    %v312 = vpack.c.b16 %v308, %v308
    %v313 = vpack.c.b16 %v309, %v309
    %v314 = vpack.c.b16 %v310, %v310
    %vm319 = vcmask 257024
    %320 = vst.msk [vmem:[%s3] sm:$0xf] %vm319, %v311
    %321 = vst.msk [vmem:[%s3 + $0x4] sm:$0xf] %vm319, %v312
    %322 = vst.msk [vmem:[%s3 + $0x8] sm:$0xf] %vm319, %v313
    %323 = vst.msk [vmem:[%s3 + $0xc] sm:$0xf] %vm319, %v314
  $region21: #{unet_forward.20} parent=0 // pred_fallthru
    _
  // Predicated region
  $region22: #{unet_forward.20} parent=0 // pred_check
    _
  $region23: #{unet_forward.20} parent=0 // pred_check_branch
    %325 = sbr.rel (0) target = $region25
  $region24: #{unet_forward.20} parent=0 // pred_region
    _
  $region25: #{unet_forward.20} parent=0 // pred_fallthru
    _
  // Predicated region
  $region26: #{unet_forward.20} parent=0 // pred_check
    _
  $region27: #{unet_forward.20} parent=0 // pred_check_branch
    %327 = sbr.rel (0) target = $region29
  $region28: #{unet_forward.20} parent=0 // pred_region
    _
  $region29: #{unet_forward.20} parent=0 // pred_fallthru
    _
  // Predicated region
  $region30: #{unet_forward.20} parent=0 // pred_check
    _
  $region31: #{unet_forward.20} parent=0 // pred_check_branch
    %329 = sbr.rel (0) target = $region33
  $region32: #{unet_forward.20} parent=0 // pred_region
    _
  $region33: #{unet_forward.20} parent=0 // pred_fallthru
    _
  // Predicated region
  $region34: #{unet_forward.20} parent=0 // pred_check
    _
  $region35: #{unet_forward.20} parent=0 // pred_check_branch
    %331 = sbr.rel (0) target = $region37
  $region36: #{unet_forward.20} parent=0 // pred_region
    _
  $region37: #{unet_forward.20} parent=0 // pred_fallthru
    _
  // Predicated region
  $region38: #{unet_forward.20} parent=0 // pred_check
    _
  $region39: #{unet_forward.20} parent=0 // pred_check_branch
    %333 = sbr.rel (0) target = $region41
  $region40: #{unet_forward.20} parent=0 // pred_region
    _
  $region41: #{unet_forward.20} parent=0 // pred_fallthru
    _
  // Predicated region
  $region42: #{unet_forward.20} parent=0 // pred_check
    _
  $region43: #{unet_forward.20} parent=0 // pred_check_branch
    %335 = sbr.rel (0) target = $region45
  $region44: #{unet_forward.20} parent=0 // pred_region
    _
  $region45: #{unet_forward.20} parent=0 // pred_fallthru
    _

// kernel: unet_forward.23
$region0: #{unet_forward.23}
  #allocation0 [shape = 'u32[]', space=smem, size = 0x4, offset = 0x4, fixed_abs, tag = 'smem constant byte address 0x4 - core index']
  #allocation1 [shape = 'u32[144,128]{1,0:T(1,128)}', space=vmem, size = 0x12000, scoped, tag = 'internal scratch']
  %s0 = inlined_call_operand.vmem [shape: bf16[16,64], index: 0, kind: input, shape index: {}]
  %s1 = inlined_call_operand.vmem [shape: f32[1,64], index: 1, kind: input, shape index: {}]
  %s2 = inlined_call_operand.vmem [shape: f32[1,64], index: 2, kind: input, shape index: {}]
  %s3 = inlined_call_operand.vmem [shape: bf16[16,64], index: 3, kind: output, shape index: {}]
  %s4 = sld [smem:[#allocation0]]
  $region22: #{unet_forward.23} parent=0
    _
  %s6 = ssub.s32 1, %s4
  %s7 = scalar_select 0, %s6, %s4
  // Predicated region
  $region2: #{unet_forward.23} parent=0 // pred_check
    _
  $region3: #{unet_forward.23} parent=0 // pred_check_branch
    %9 = sbr.rel (0) target = $region5
  $region4: #{unet_forward.23} parent=0 // pred_region
    _
  $region5: #{unet_forward.23} parent=0 // pred_fallthru
    _
  // Predicated region
  $region6: #{unet_forward.23} parent=0 // pred_check
    _
  $region7: #{unet_forward.23} parent=0 // pred_check_branch
    %11 = sbr.rel (0) target = $region9
  $region8: #{unet_forward.23} parent=0 // pred_region
    _
  $region9: #{unet_forward.23} parent=0 // pred_fallthru
    _
  // Predicated region
  $region10: #{unet_forward.23} parent=0 // pred_check
    _
  $region11: #{unet_forward.23} parent=0 // pred_check_branch
    %13 = sbr.rel (0) target = $region13
  $region12: #{unet_forward.23} parent=0 // pred_region
    _
  $region13: #{unet_forward.23} parent=0 // pred_fallthru
    _
  %v14 = vld [vmem:[%s0] sm:$0xf]
  %v15 = vld [vmem:[%s0 + $0x4] sm:$0xf]
  %v16 = vunpack.c.l.bf16 %v14
  %v17 = vunpack.c.l.bf16 %v15
  %v18 = vld [vmem:[%s1] sm:$0x1]
  %v20 = vlaneseq
  %v21 = vshrl.u32 %v20, 7
  %v22 = vsub.s32 0, %v21
  %v23 = vrot.slane %v18, %v22
  %v25 = vsub.f32 %v16, %v23
  %v26 = vsub.f32 %v17, %v23
  %v27 = vld [vmem:[%s2] sm:$0x1]
  %v29 = vlaneseq
  %v30 = vshrl.u32 %v29, 7
  %v31 = vsub.s32 0, %v30
  %v32 = vrot.slane %v27, %v31
  %v34 = vmul.f32 %v25, %v32
  %v35 = vmul.f32 %v26, %v32
  %v36 = vpack.c.bf16 %v35, %v34
  %v38 = vunpack.c.l.b16 %v36
  %v39 = vunpack.c.h.b16 %v36
  %v40 = vpack.c.b16 %v38, %v38
  %v41 = vpack.c.b16 %v39, %v39
  %vm44 = vcmask 519168
  %45 = vst.msk [vmem:[%s3] sm:$0xf] %vm44, %v40
  %46 = vst.msk [vmem:[%s3 + $0x4] sm:$0xf] %vm44, %v41
  // Predicated region
  $region14: #{unet_forward.23} parent=0 // pred_check
    _
  $region15: #{unet_forward.23} parent=0 // pred_check_branch
    %48 = sbr.rel (0) target = $region17
  $region16: #{unet_forward.23} parent=0 // pred_region
    _
  $region17: #{unet_forward.23} parent=0 // pred_fallthru
    _
  // Predicated region
  $region18: #{unet_forward.23} parent=0 // pred_check
    _
  $region19: #{unet_forward.23} parent=0 // pred_check_branch
    %50 = sbr.rel (0) target = $region21
  $region20: #{unet_forward.23} parent=0 // pred_region
    _
  $region21: #{unet_forward.23} parent=0 // pred_fallthru
    _

// kernel: unet_forward.22
$region0: #{unet_forward.22}
  #allocation0 [shape = 'u32[]', space=smem, size = 0x4, offset = 0x4, fixed_abs, tag = 'smem constant byte address 0x4 - core index']
  #allocation1 [shape = 'u32[144,128]{1,0:T(1,128)}', space=vmem, size = 0x12000, scoped, tag = 'internal scratch']
  #allocation2 [shape = 'f32[16,128]{1,0:T(8,128)}', space=vmem, size = 0x2000, scoped, tag = 'scratch operand']
  %s0 = inlined_call_operand.vmem [shape: bf16[16,512], index: 0, kind: input, shape index: {}]
  %s1 = inlined_call_operand.vmem [shape: bf16[512,128], index: 1, kind: input, shape index: {}]
  %s2 = inlined_call_operand.vmem [shape: f32[1,128], index: 2, kind: input, shape index: {}]
  %s3 = inlined_call_operand.vmem [shape: bf16[16,64], index: 3, kind: output, shape index: {0}]
  %s4 = inlined_call_operand.vmem [shape: f32[1,8,64], index: 4, kind: output, shape index: {1}]
  %s5 = inlined_call_operand.vmem [shape: f32[1,8,64], index: 5, kind: output, shape index: {2}]
  %6 = xla_tuple %s3, %s4, %s5
  %s7 = sld [smem:[#allocation0]]
  $region46: #{unet_forward.22} parent=0
    _
  %s9 = ssub.s32 1, %s7
  %s10 = scalar_select 0, %s9, %s7
  // Predicated region
  $region2: #{unet_forward.22} parent=0 // pred_check
    _
  $region3: #{unet_forward.22} parent=0 // pred_check_branch
    %12 = sbr.rel (0) target = $region5
  $region4: #{unet_forward.22} parent=0 // pred_region
    _
  $region5: #{unet_forward.22} parent=0 // pred_fallthru
    _
  // Predicated region
  $region6: #{unet_forward.22} parent=0 // pred_check
    _
  $region7: #{unet_forward.22} parent=0 // pred_check_branch
    %14 = sbr.rel (0) target = $region9
  $region8: #{unet_forward.22} parent=0 // pred_region
    _
  $region9: #{unet_forward.22} parent=0 // pred_fallthru
    _
  // Predicated region
  $region10: #{unet_forward.22} parent=0 // pred_check
    _
  $region11: #{unet_forward.22} parent=0 // pred_check_branch
    %16 = sbr.rel (0) target = $region13
  $region12: #{unet_forward.22} parent=0 // pred_region
    _
  $region13: #{unet_forward.22} parent=0 // pred_fallthru
    _
  %p19 = scmp.eq.s32.totalorder 0, 0
  // Predicated region
  $region14: #{unet_forward.22} parent=0 // pred_check
    %p20 = pneg %p19
  $region15: #{unet_forward.22} parent=0 // pred_check_branch
    %22 = sbr.rel (%p20) target = $region17
  $region16: #{unet_forward.22} parent=0 // pred_region
    %23 = vst [vmem:[#allocation2] sm:$0xff] 0.0
    %24 = vst [vmem:[#allocation2 + $0x8] sm:$0xff] 0.0
  $region17: #{unet_forward.22} parent=0 // pred_fallthru
    _
  %v25 = vld [vmem:[%s0] sm:$0xff]
  %v26 = vld [vmem:[%s0 + $0x8] sm:$0xff]
  %v27 = vld [vmem:[%s0 + $0x10] sm:$0xff]
  %v28 = vld [vmem:[%s0 + $0x18] sm:$0xff]
  %vm29 = vcmp.gt.bf16.partialorder %v25, 0
  %vm30 = vcmp.gt.bf16.partialorder %v26, 0
  %vm31 = vcmp.gt.bf16.partialorder %v27, 0
  %vm32 = vcmp.gt.bf16.partialorder %v28, 0
  %v33 = vmul.bf16 %v25, 1045249613
  %v34 = vmul.bf16 %v26, 1045249613
  %v35 = vmul.bf16 %v27, 1045249613
  %v36 = vmul.bf16 %v28, 1045249613
  %v37 = vsel %vm29, %v25, %v33
  %v38 = vsel %vm30, %v26, %v34
  %v39 = vsel %vm31, %v27, %v35
  %v40 = vsel %vm32, %v28, %v36
  %v41 = vld [vmem:[%s1] sm:$0xf]
  %v42 = vld [vmem:[%s1 + $0x4] sm:$0xf]
  %v43 = vld [vmem:[%s1 + $0x8] sm:$0xf]
  %v44 = vld [vmem:[%s1 + $0xc] sm:$0xf]
  %v45 = vld [vmem:[%s1 + $0x10] sm:$0xf]
  %v46 = vld [vmem:[%s1 + $0x14] sm:$0xf]
  %v47 = vld [vmem:[%s1 + $0x18] sm:$0xf]
  %v48 = vld [vmem:[%s1 + $0x1c] sm:$0xf]
  %v49 = vld [vmem:[%s1 + $0x20] sm:$0xf]
  %v50 = vld [vmem:[%s1 + $0x24] sm:$0xf]
  %v51 = vld [vmem:[%s1 + $0x28] sm:$0xf]
  %v52 = vld [vmem:[%s1 + $0x2c] sm:$0xf]
  %v53 = vld [vmem:[%s1 + $0x30] sm:$0xf]
  %v54 = vld [vmem:[%s1 + $0x34] sm:$0xf]
  %v55 = vld [vmem:[%s1 + $0x38] sm:$0xf]
  %v56 = vld [vmem:[%s1 + $0x3c] sm:$0xf]
  %v57 = vld [vmem:[%s1 + $0x40] sm:$0xf]
  %v58 = vld [vmem:[%s1 + $0x44] sm:$0xf]
  %v59 = vld [vmem:[%s1 + $0x48] sm:$0xf]
  %v60 = vld [vmem:[%s1 + $0x4c] sm:$0xf]
  %v61 = vld [vmem:[%s1 + $0x50] sm:$0xf]
  %v62 = vld [vmem:[%s1 + $0x54] sm:$0xf]
  %v63 = vld [vmem:[%s1 + $0x58] sm:$0xf]
  %v64 = vld [vmem:[%s1 + $0x5c] sm:$0xf]
  %v65 = vld [vmem:[%s1 + $0x60] sm:$0xf]
  %v66 = vld [vmem:[%s1 + $0x64] sm:$0xf]
  %v67 = vld [vmem:[%s1 + $0x68] sm:$0xf]
  %v68 = vld [vmem:[%s1 + $0x6c] sm:$0xf]
  %v69 = vld [vmem:[%s1 + $0x70] sm:$0xf]
  %v70 = vld [vmem:[%s1 + $0x74] sm:$0xf]
  %v71 = vld [vmem:[%s1 + $0x78] sm:$0xf]
  %v72 = vld [vmem:[%s1 + $0x7c] sm:$0xf]
  %v73 = vld [vmem:[%s1 + $0x80] sm:$0xf]
  %v74 = vld [vmem:[%s1 + $0x84] sm:$0xf]
  %v75 = vld [vmem:[%s1 + $0x88] sm:$0xf]
  %v76 = vld [vmem:[%s1 + $0x8c] sm:$0xf]
  %v77 = vld [vmem:[%s1 + $0x90] sm:$0xf]
  %v78 = vld [vmem:[%s1 + $0x94] sm:$0xf]
  %v79 = vld [vmem:[%s1 + $0x98] sm:$0xf]
  %v80 = vld [vmem:[%s1 + $0x9c] sm:$0xf]
  %v81 = vld [vmem:[%s1 + $0xa0] sm:$0xf]
  %v82 = vld [vmem:[%s1 + $0xa4] sm:$0xf]
  %v83 = vld [vmem:[%s1 + $0xa8] sm:$0xf]
  %v84 = vld [vmem:[%s1 + $0xac] sm:$0xf]
  %v85 = vld [vmem:[%s1 + $0xb0] sm:$0xf]
  %v86 = vld [vmem:[%s1 + $0xb4] sm:$0xf]
  %v87 = vld [vmem:[%s1 + $0xb8] sm:$0xf]
  %v88 = vld [vmem:[%s1 + $0xbc] sm:$0xf]
  %v89 = vld [vmem:[%s1 + $0xc0] sm:$0xf]
  %v90 = vld [vmem:[%s1 + $0xc4] sm:$0xf]
  %v91 = vld [vmem:[%s1 + $0xc8] sm:$0xf]
  %v92 = vld [vmem:[%s1 + $0xcc] sm:$0xf]
  %v93 = vld [vmem:[%s1 + $0xd0] sm:$0xf]
  %v94 = vld [vmem:[%s1 + $0xd4] sm:$0xf]
  %v95 = vld [vmem:[%s1 + $0xd8] sm:$0xf]
  %v96 = vld [vmem:[%s1 + $0xdc] sm:$0xf]
  %v97 = vld [vmem:[%s1 + $0xe0] sm:$0xf]
  %v98 = vld [vmem:[%s1 + $0xe4] sm:$0xf]
  %v99 = vld [vmem:[%s1 + $0xe8] sm:$0xf]
  %v100 = vld [vmem:[%s1 + $0xec] sm:$0xf]
  %v101 = vld [vmem:[%s1 + $0xf0] sm:$0xf]
  %v102 = vld [vmem:[%s1 + $0xf4] sm:$0xf]
  %v103 = vld [vmem:[%s1 + $0xf8] sm:$0xf]
  %v104 = vld [vmem:[%s1 + $0xfc] sm:$0xf]
  %v105 = vld [vmem:[#allocation2] sm:$0xff]
  %v106 = vld [vmem:[#allocation2 + $0x8] sm:$0xff]
  %v111 = vunpack.c.l.b16 %v37
  %v112 = vunpack.c.h.b16 %v37
  %v113 = vunpack.c.l.b16 %v38
  %v114 = vunpack.c.h.b16 %v38
  %v115 = vunpack.c.l.b16 %v39
  %v116 = vunpack.c.h.b16 %v39
  %v117 = vunpack.c.l.b16 %v40
  %v118 = vunpack.c.h.b16 %v40
  %v119 = vpack.c.b16 %v115, %v111
  %v120 = vpack.c.b16 %v116, %v112
  %v121 = vpack.c.b16 %v117, %v113
  %v122 = vpack.c.b16 %v118, %v114
  %v191 = vunpack.c.l.b16 %v41
  %v192 = vunpack.c.l.b16 %v42
  %v193 = vunpack.c.l.b16 %v43
  %v194 = vunpack.c.l.b16 %v44
  %v195 = vunpack.c.l.b16 %v45
  %v196 = vunpack.c.l.b16 %v46
  %v197 = vunpack.c.l.b16 %v47
  %v198 = vunpack.c.l.b16 %v48
  %v199 = vunpack.c.l.b16 %v49
  %v200 = vunpack.c.l.b16 %v50
  %v201 = vunpack.c.l.b16 %v51
  %v202 = vunpack.c.l.b16 %v52
  %v203 = vunpack.c.l.b16 %v53
  %v204 = vunpack.c.l.b16 %v54
  %v205 = vunpack.c.l.b16 %v55
  %v206 = vunpack.c.l.b16 %v56
  %v207 = vunpack.c.l.b16 %v57
  %v208 = vunpack.c.l.b16 %v58
  %v209 = vunpack.c.l.b16 %v59
  %v210 = vunpack.c.l.b16 %v60
  %v211 = vunpack.c.l.b16 %v61
  %v212 = vunpack.c.l.b16 %v62
  %v213 = vunpack.c.l.b16 %v63
  %v214 = vunpack.c.l.b16 %v64
  %v215 = vunpack.c.l.b16 %v65
  %v216 = vunpack.c.l.b16 %v66
  %v217 = vunpack.c.l.b16 %v67
  %v218 = vunpack.c.l.b16 %v68
  %v219 = vunpack.c.l.b16 %v69
  %v220 = vunpack.c.l.b16 %v70
  %v221 = vunpack.c.l.b16 %v71
  %v222 = vunpack.c.l.b16 %v72
  %v223 = vunpack.c.l.b16 %v73
  %v224 = vunpack.c.l.b16 %v74
  %v225 = vunpack.c.l.b16 %v75
  %v226 = vunpack.c.l.b16 %v76
  %v227 = vunpack.c.l.b16 %v77
  %v228 = vunpack.c.l.b16 %v78
  %v229 = vunpack.c.l.b16 %v79
  %v230 = vunpack.c.l.b16 %v80
  %v231 = vunpack.c.l.b16 %v81
  %v232 = vunpack.c.l.b16 %v82
  %v233 = vunpack.c.l.b16 %v83
  %v234 = vunpack.c.l.b16 %v84
  %v235 = vunpack.c.l.b16 %v85
  %v236 = vunpack.c.l.b16 %v86
  %v237 = vunpack.c.l.b16 %v87
  %v238 = vunpack.c.l.b16 %v88
  %v239 = vunpack.c.l.b16 %v89
  %v240 = vunpack.c.l.b16 %v90
  %v241 = vunpack.c.l.b16 %v91
  %v242 = vunpack.c.l.b16 %v92
  %v243 = vunpack.c.l.b16 %v93
  %v244 = vunpack.c.l.b16 %v94
  %v245 = vunpack.c.l.b16 %v95
  %v246 = vunpack.c.l.b16 %v96
  %v247 = vunpack.c.l.b16 %v97
  %v248 = vunpack.c.l.b16 %v98
  %v249 = vunpack.c.l.b16 %v99
  %v250 = vunpack.c.l.b16 %v100
  %v251 = vunpack.c.l.b16 %v101
  %v252 = vunpack.c.l.b16 %v102
  %v253 = vunpack.c.l.b16 %v103
  %v254 = vunpack.c.l.b16 %v104
  %v255 = vpack.c.b16 %v192, %v191
  %v256 = vpack.c.b16 %v194, %v193
  %v257 = vpack.c.b16 %v196, %v195
  %v258 = vpack.c.b16 %v198, %v197
  %v259 = vpack.c.b16 %v200, %v199
  %v260 = vpack.c.b16 %v202, %v201
  %v261 = vpack.c.b16 %v204, %v203
  %v262 = vpack.c.b16 %v206, %v205
  %v263 = vpack.c.b16 %v208, %v207
  %v264 = vpack.c.b16 %v210, %v209
  %v265 = vpack.c.b16 %v212, %v211
  %v266 = vpack.c.b16 %v214, %v213
  %v267 = vpack.c.b16 %v216, %v215
  %v268 = vpack.c.b16 %v218, %v217
  %v269 = vpack.c.b16 %v220, %v219
  %v270 = vpack.c.b16 %v222, %v221
  %v271 = vpack.c.b16 %v224, %v223
  %v272 = vpack.c.b16 %v226, %v225
  %v273 = vpack.c.b16 %v228, %v227
  %v274 = vpack.c.b16 %v230, %v229
  %v275 = vpack.c.b16 %v232, %v231
  %v276 = vpack.c.b16 %v234, %v233
  %v277 = vpack.c.b16 %v236, %v235
  %v278 = vpack.c.b16 %v238, %v237
  %v279 = vpack.c.b16 %v240, %v239
  %v280 = vpack.c.b16 %v242, %v241
  %v281 = vpack.c.b16 %v244, %v243
  %v282 = vpack.c.b16 %v246, %v245
  %v283 = vpack.c.b16 %v248, %v247
  %v284 = vpack.c.b16 %v250, %v249
  %v285 = vpack.c.b16 %v252, %v251
  %v286 = vpack.c.b16 %v254, %v253
  %319 = vmatprep.subr.bf16.mxu0 0
  %320 = vmatpush1.bf16.msra.mxu0 %v262
  %321 = vmatprep.subr.bf16.mxu0 0
  %322 = vmatpush1.bf16.msra.mxu0 %v261
  %323 = vmatprep.subr.bf16.mxu0 0
  %324 = vmatpush1.bf16.msra.mxu0 %v260
  %325 = vmatprep.subr.bf16.mxu0 0
  %326 = vmatpush1.bf16.msra.mxu0 %v259
  %327 = vmatprep.subr.bf16.mxu0 0
  %328 = vmatpush1.bf16.msra.mxu0 %v258
  %329 = vmatprep.subr.bf16.mxu0 0
  %330 = vmatpush1.bf16.msra.mxu0 %v257
  %331 = vmatprep.subr.bf16.mxu0 0
  %332 = vmatpush1.bf16.msra.mxu0 %v256
  %333 = vmatprep.subr.bf16.mxu0 0
  %334 = vmatpush1.bf16.msra.mxu0 %v255
  %335 = vmatprep.subr.bf16.mxu0 0
  %336 = vmatpush2.bf16.msra.mxu0 %v270
  %337 = vmatprep.subr.bf16.mxu0 0
  %338 = vmatpush2.bf16.msra.mxu0 %v269
  %339 = vmatprep.subr.bf16.mxu0 0
  %340 = vmatpush2.bf16.msra.mxu0 %v268
  %341 = vmatprep.subr.bf16.mxu0 0
  %342 = vmatpush2.bf16.msra.mxu0 %v267
  %343 = vmatprep.subr.bf16.mxu0 0
  %344 = vmatpush2.bf16.msra.mxu0 %v266
  %345 = vmatprep.subr.bf16.mxu0 0
  %346 = vmatpush2.bf16.msra.mxu0 %v265
  %347 = vmatprep.subr.bf16.mxu0 0
  %348 = vmatpush2.bf16.msra.mxu0 %v264
  %349 = vmatprep.subr.bf16.mxu0 0
  %350 = vmatpush2.bf16.msra.mxu0 %v263
  %351 = vmatprep.mubr.bf16.mxu0 %v120
  %352 = vmatmul.mubr.bf16.gmra.mxu0 %v119
  %v353 = vpop.f32.mrf.mxu0
  %v354 = vadd.f32 0.0, %v353
  %v355 = vpop.f32.mrf.mxu0
  %v356 = vpop.f32.mrf.mxu0
  %v357 = vadd.f32 0.0, %v356
  %v358 = vpop.f32.mrf.mxu0
  %359 = vdwg.mxu0
  %360 = vmatprep.subr.bf16.mxu0 0
  %361 = vmatpush1.bf16.msra.mxu0 %v278
  %362 = vmatprep.subr.bf16.mxu0 0
  %363 = vmatpush1.bf16.msra.mxu0 %v277
  %364 = vmatprep.subr.bf16.mxu0 0
  %365 = vmatpush1.bf16.msra.mxu0 %v276
  %366 = vmatprep.subr.bf16.mxu0 0
  %367 = vmatpush1.bf16.msra.mxu0 %v275
  %368 = vmatprep.subr.bf16.mxu0 0
  %369 = vmatpush1.bf16.msra.mxu0 %v274
  %370 = vmatprep.subr.bf16.mxu0 0
  %371 = vmatpush1.bf16.msra.mxu0 %v273
  %372 = vmatprep.subr.bf16.mxu0 0
  %373 = vmatpush1.bf16.msra.mxu0 %v272
  %374 = vmatprep.subr.bf16.mxu0 0
  %375 = vmatpush1.bf16.msra.mxu0 %v271
  %376 = vmatprep.subr.bf16.mxu0 0
  %377 = vmatpush2.bf16.msra.mxu0 %v286
  %378 = vmatprep.subr.bf16.mxu0 0
  %379 = vmatpush2.bf16.msra.mxu0 %v285
  %380 = vmatprep.subr.bf16.mxu0 0
  %381 = vmatpush2.bf16.msra.mxu0 %v284
  %382 = vmatprep.subr.bf16.mxu0 0
  %383 = vmatpush2.bf16.msra.mxu0 %v283
  %384 = vmatprep.subr.bf16.mxu0 0
  %385 = vmatpush2.bf16.msra.mxu0 %v282
  %386 = vmatprep.subr.bf16.mxu0 0
  %387 = vmatpush2.bf16.msra.mxu0 %v281
  %388 = vmatprep.subr.bf16.mxu0 0
  %389 = vmatpush2.bf16.msra.mxu0 %v280
  %390 = vmatprep.subr.bf16.mxu0 0
  %391 = vmatpush2.bf16.msra.mxu0 %v279
  %392 = vmatprep.mubr.bf16.mxu0 %v122
  %393 = vmatmul.mubr.bf16.gmra.mxu0 %v121
  %v394 = vpop.f32.mrf.mxu0
  %v395 = vadd.f32 %v354, %v394
  %v396 = vpop.f32.mrf.mxu0
  %v397 = vpop.f32.mrf.mxu0
  %v398 = vadd.f32 %v357, %v397
  %v399 = vpop.f32.mrf.mxu0
  %400 = vdwg.mxu0
  %v401 = vadd.f32 %v105, %v395
  %v402 = vadd.f32 %v106, %v398
  %403 = vst [vmem:[#allocation2] sm:$0xff] %v401
  %404 = vst [vmem:[#allocation2 + $0x8] sm:$0xff] %v402
  // Predicated region
  $region18: #{unet_forward.22} parent=0 // pred_check
    %p405 = pneg %p19
  $region19: #{unet_forward.22} parent=0 // pred_check_branch
    %407 = sbr.rel (%p405) target = $region21
  $region20: #{unet_forward.22} parent=0 // pred_region
    %v408 = vld [vmem:[#allocation2] sm:$0xff]
    %v409 = vld [vmem:[#allocation2 + $0x8] sm:$0xff]
    %v410 = vld [vmem:[%s2] sm:$0x1]
    %v412 = vlaneseq
    %v413 = vshrl.u32 %v412, 7
    %v414 = vsub.s32 0, %v413
    %v415 = vrot.slane %v410, %v414
    %v417 = vadd.f32 %v408, %v415
    %v418 = vadd.f32 %v409, %v415
    %vm419 = vcmask 523264
    %v420 = vsel %vm419, %v417, 0.0
    %v421 = vsel %vm419, %v418, 0.0
    %v422 = vadd.f32 %v420, %v421
    %v423 = vrot.slane %v422, 4
    %v424 = vadd.f32 %v422, %v423
    %v425 = vrot.slane %v424, 2
    %v426 = vadd.f32 %v424, %v425
    %v427 = vrot.slane %v426, 1
    %v428 = vadd.f32 %v426, %v427
    %v429 = vmul.f32 %v417, %v417
    %v430 = vmul.f32 %v418, %v418
    %v431 = vsel %vm419, %v429, 0.0
    %v432 = vsel %vm419, %v430, 0.0
    %v433 = vadd.f32 %v431, %v432
    %v434 = vrot.slane %v433, 4
    %v435 = vadd.f32 %v433, %v434
    %v436 = vrot.slane %v435, 2
    %v437 = vadd.f32 %v435, %v436
    %v438 = vrot.slane %v437, 1
    %v439 = vadd.f32 %v437, %v438
    %440 = vst.msk [vmem:[%s4] sm:$0xff] %vm419, %v428
    %441 = vst.msk [vmem:[%s5] sm:$0xff] %vm419, %v439
    %v442 = vpack.c.bf16 %v418, %v417
    %v444 = vunpack.c.l.b16 %v442
    %v445 = vunpack.c.h.b16 %v442
    %v446 = vpack.c.b16 %v444, %v444
    %v447 = vpack.c.b16 %v445, %v445
    %vm450 = vcmask 519168
    %451 = vst.msk [vmem:[%s3] sm:$0xf] %vm450, %v446
    %452 = vst.msk [vmem:[%s3 + $0x4] sm:$0xf] %vm450, %v447
  $region21: #{unet_forward.22} parent=0 // pred_fallthru
    _
  // Predicated region
  $region22: #{unet_forward.22} parent=0 // pred_check
    _
  $region23: #{unet_forward.22} parent=0 // pred_check_branch
    %454 = sbr.rel (0) target = $region25
  $region24: #{unet_forward.22} parent=0 // pred_region
    _
  $region25: #{unet_forward.22} parent=0 // pred_fallthru
    _
  // Predicated region
  $region26: #{unet_forward.22} parent=0 // pred_check
    _
  $region27: #{unet_forward.22} parent=0 // pred_check_branch
    %456 = sbr.rel (0) target = $region29
  $region28: #{unet_forward.22} parent=0 // pred_region
    _
  $region29: #{unet_forward.22} parent=0 // pred_fallthru
    _
  // Predicated region
  $region30: #{unet_forward.22} parent=0 // pred_check
    _
  $region31: #{unet_forward.22} parent=0 // pred_check_branch
    %458 = sbr.rel (0) target = $region33
  $region32: #{unet_forward.22} parent=0 // pred_region
    _
  $region33: #{unet_forward.22} parent=0 // pred_fallthru
    _
  // Predicated region
  $region34: #{unet_forward.22} parent=0 // pred_check
    _
  $region35: #{unet_forward.22} parent=0 // pred_check_branch
    %460 = sbr.rel (0) target = $region37
  $region36: #{unet_forward.22} parent=0 // pred_region
    _
  $region37: #{unet_forward.22} parent=0 // pred_fallthru
    _
  // Predicated region
  $region38: #{unet_forward.22} parent=0 // pred_check
    _
  $region39: #{unet_forward.22} parent=0 // pred_check_branch
    %462 = sbr.rel (0) target = $region41
  $region40: #{unet_forward.22} parent=0 // pred_region
    _
  $region41: #{unet_forward.22} parent=0 // pred_fallthru
    _
  // Predicated region
  $region42: #{unet_forward.22} parent=0 // pred_check
    _
  $region43: #{unet_forward.22} parent=0 // pred_check_branch
    %464 = sbr.rel (0) target = $region45
  $region44: #{unet_forward.22} parent=0 // pred_region
    _
  $region45: #{unet_forward.22} parent=0 // pred_fallthru
    _

// kernel: tile.47
$region0: #{tile.47}
  #allocation0 [shape = 's32[1]{0}', space=sflag, size = 0x4, scoped, tag = 'scoped memory for tile.47']
  %s0 = inlined_call_operand.vmem [shape: f32[64], index: 0, kind: input, shape index: {}]
  %s1 = inlined_call_operand.vmem [shape: f32[4,64], index: 1, kind: output, shape index: {}]
  // Predicated region
  $region2: #{tile.47} parent=0 // pred_check
    _
  $region3: #{tile.47} parent=0 // pred_check_branch
    %3 = sbr.rel (0) target = $region5
  $region4: #{tile.47} parent=0 // pred_region
    _
  $region5: #{tile.47} parent=0 // pred_fallthru
    _
  %v4 = vld [vmem:[%s0] ss:$0 sm:$0xff]
  %5 = vst [vmem:[%s1] sm:$0xf] %v4

// kernel: tile.49
$region0: #{tile.49}
  %s0 = inlined_call_operand.vmem [shape: f32[4,64], index: 0, kind: input, shape index: {}]
  %s1 = inlined_call_operand.vmem [shape: f32[1,256], index: 1, kind: output, shape index: {}]
  $region1: #{tile.49} parent=0
    #allocation0 [shape = 'u8[8192]{0}', space=vmem, size = 0x2000, scoped, tag = 'scoped mem for output reshape']
    #allocation1 [shape = 'u8[4096]{0}', space=vmem, size = 0x1000, scoped, tag = 'scoped mem for input reshape']
    %s3 = sshll.u32 1, 4
    %s4 = ssub.s32 %s3, 1
    %v5 = vld [vmem:[%s0] sm:%s4]
    %6 = vst [vmem:[#allocation1] sm:%s4] %v5
    %s7 = smov 3
    %v8 = vld [vmem:[#allocation1] ss:$2 sm:%s7]
    %vm9 = vcmask 523264
    %10 = vst.msk [vmem:[#allocation0] ss:$8 sm:$0x3] %vm9, %v8
    %s11 = scalar_lea.vmem [#allocation1], 1
    %s12 = smov 3
    %v13 = vld [vmem:[%s11] ss:$2 sm:%s12]
    %14 = vrot.lane.b32.xlu0 %v13, 64
    %v15 = vpop.permute.xlu0 %14
    %vm16 = vcmask 1048064
    %17 = vst.msk [vmem:[#allocation0] ss:$8 sm:$0x3] %vm16, %v15
    %s19 = sshll.u32 1, 1
    %s20 = ssub.s32 %s19, 1
    %v22 = vld [vmem:[#allocation0] sm:%s20]
    %s23 = sshll.u32 1, 1
    %s24 = ssub.s32 %s23, 1
    %25 = vst [vmem:[%s1] sm:%s24] %v22
    %s26 = scalar_lea.vmem [#allocation0], 8
    %v27 = vld [vmem:[%s26] sm:%s20]
    %s28 = sshll.u32 1, 1
    %s29 = ssub.s32 %s28, 1
    %s30 = scalar_lea.vmem %s1, 1
    %31 = vst [vmem:[%s30] sm:%s29] %v27

// kernel: unet_forward.25
$region0: #{unet_forward.25}
  #allocation0 [shape = 'u32[]', space=smem, size = 0x4, offset = 0x4, fixed_abs, tag = 'smem constant byte address 0x4 - core index']
  #allocation1 [shape = 'u32[144,128]{1,0:T(1,128)}', space=vmem, size = 0x12000, scoped, tag = 'internal scratch']
  #allocation2 [shape = 'f32[16,256]{1,0:T(8,128)}', space=vmem, size = 0x4000, scoped, tag = 'scratch operand']
  %s0 = inlined_call_operand.vmem [shape: bf16[16,576], index: 0, kind: input, shape index: {}]
  %s1 = inlined_call_operand.vmem [shape: bf16[576,256], index: 1, kind: input, shape index: {}]
  %s2 = inlined_call_operand.vmem [shape: f32[1,256], index: 2, kind: input, shape index: {}]
  %s3 = inlined_call_operand.vmem [shape: bf16[16,256], index: 3, kind: output, shape index: {0}]
  %s4 = inlined_call_operand.vmem [shape: f32[1,8,256], index: 4, kind: output, shape index: {1}]
  %s5 = inlined_call_operand.vmem [shape: f32[1,8,256], index: 5, kind: output, shape index: {2}]
  %6 = xla_tuple %s3, %s4, %s5
  %s7 = sld [smem:[#allocation0]]
  $region46: #{unet_forward.25} parent=0
    _
  %s9 = ssub.s32 1, %s7
  %s10 = scalar_select 0, %s9, %s7
  // Predicated region
  $region2: #{unet_forward.25} parent=0 // pred_check
    _
  $region3: #{unet_forward.25} parent=0 // pred_check_branch
    %12 = sbr.rel (0) target = $region5
  $region4: #{unet_forward.25} parent=0 // pred_region
    _
  $region5: #{unet_forward.25} parent=0 // pred_fallthru
    _
  // Predicated region
  $region6: #{unet_forward.25} parent=0 // pred_check
    _
  $region7: #{unet_forward.25} parent=0 // pred_check_branch
    %14 = sbr.rel (0) target = $region9
  $region8: #{unet_forward.25} parent=0 // pred_region
    _
  $region9: #{unet_forward.25} parent=0 // pred_fallthru
    _
  // Predicated region
  $region10: #{unet_forward.25} parent=0 // pred_check
    _
  $region11: #{unet_forward.25} parent=0 // pred_check_branch
    %16 = sbr.rel (0) target = $region13
  $region12: #{unet_forward.25} parent=0 // pred_region
    _
  $region13: #{unet_forward.25} parent=0 // pred_fallthru
    _
  %p18 = scmp.eq.s32.totalorder 0, 0
  // Predicated region
  $region14: #{unet_forward.25} parent=0 // pred_check
    %p19 = pneg %p18
  $region15: #{unet_forward.25} parent=0 // pred_check_branch
    %21 = sbr.rel (%p19) target = $region17
  $region16: #{unet_forward.25} parent=0 // pred_region
    %22 = vst [vmem:[#allocation2] sm:$0xff] 0.0
    %23 = vst [vmem:[#allocation2 + $0x8] sm:$0xff] 0.0
    %24 = vst [vmem:[#allocation2 + $0x10] sm:$0xff] 0.0
    %25 = vst [vmem:[#allocation2 + $0x18] sm:$0xff] 0.0
  $region17: #{unet_forward.25} parent=0 // pred_fallthru
    _
  %v26 = vld [vmem:[%s0] sm:$0xff]
  %v27 = vld [vmem:[%s0 + $0x8] sm:$0xff]
  %v28 = vld [vmem:[%s0 + $0x10] sm:$0xf]
  %v29 = vld [vmem:[%s0 + $0x14] sm:$0xff]
  %v30 = vld [vmem:[%s0 + $0x1c] sm:$0xff]
  %v31 = vld [vmem:[%s0 + $0x24] sm:$0xf]
  %v32 = vld [vmem:[%s1] sm:$0xff]
  %v33 = vld [vmem:[%s1 + $0x8] sm:$0xff]
  %v34 = vld [vmem:[%s1 + $0x10] sm:$0xff]
  %v35 = vld [vmem:[%s1 + $0x18] sm:$0xff]
  %v36 = vld [vmem:[%s1 + $0x20] sm:$0xff]
  %v37 = vld [vmem:[%s1 + $0x28] sm:$0xff]
  %v38 = vld [vmem:[%s1 + $0x30] sm:$0xff]
  %v39 = vld [vmem:[%s1 + $0x38] sm:$0xff]
  %v40 = vld [vmem:[%s1 + $0x40] sm:$0xff]
  %v41 = vld [vmem:[%s1 + $0x48] sm:$0xff]
  %v42 = vld [vmem:[%s1 + $0x50] sm:$0xff]
  %v43 = vld [vmem:[%s1 + $0x58] sm:$0xff]
  %v44 = vld [vmem:[%s1 + $0x60] sm:$0xff]
  %v45 = vld [vmem:[%s1 + $0x68] sm:$0xff]
  %v46 = vld [vmem:[%s1 + $0x70] sm:$0xff]
  %v47 = vld [vmem:[%s1 + $0x78] sm:$0xff]
  %v48 = vld [vmem:[%s1 + $0x80] sm:$0xff]
  %v49 = vld [vmem:[%s1 + $0x88] sm:$0xff]
  %v50 = vld [vmem:[%s1 + $0x90] sm:$0xff]
  %v51 = vld [vmem:[%s1 + $0x98] sm:$0xff]
  %v52 = vld [vmem:[%s1 + $0xa0] sm:$0xff]
  %v53 = vld [vmem:[%s1 + $0xa8] sm:$0xff]
  %v54 = vld [vmem:[%s1 + $0xb0] sm:$0xff]
  %v55 = vld [vmem:[%s1 + $0xb8] sm:$0xff]
  %v56 = vld [vmem:[%s1 + $0xc0] sm:$0xff]
  %v57 = vld [vmem:[%s1 + $0xc8] sm:$0xff]
  %v58 = vld [vmem:[%s1 + $0xd0] sm:$0xff]
  %v59 = vld [vmem:[%s1 + $0xd8] sm:$0xff]
  %v60 = vld [vmem:[%s1 + $0xe0] sm:$0xff]
  %v61 = vld [vmem:[%s1 + $0xe8] sm:$0xff]
  %v62 = vld [vmem:[%s1 + $0xf0] sm:$0xff]
  %v63 = vld [vmem:[%s1 + $0xf8] sm:$0xff]
  %v64 = vld [vmem:[%s1 + $0x100] sm:$0xff]
  %v65 = vld [vmem:[%s1 + $0x108] sm:$0xff]
  %v66 = vld [vmem:[%s1 + $0x110] sm:$0xff]
  %v67 = vld [vmem:[%s1 + $0x118] sm:$0xff]
  %v68 = vld [vmem:[%s1 + $0x120] sm:$0xff]
  %v69 = vld [vmem:[%s1 + $0x128] sm:$0xff]
  %v70 = vld [vmem:[%s1 + $0x130] sm:$0xff]
  %v71 = vld [vmem:[%s1 + $0x138] sm:$0xff]
  %v72 = vld [vmem:[%s1 + $0x140] sm:$0xff]
  %v73 = vld [vmem:[%s1 + $0x148] sm:$0xff]
  %v74 = vld [vmem:[%s1 + $0x150] sm:$0xff]
  %v75 = vld [vmem:[%s1 + $0x158] sm:$0xff]
  %v76 = vld [vmem:[%s1 + $0x160] sm:$0xff]
  %v77 = vld [vmem:[%s1 + $0x168] sm:$0xff]
  %v78 = vld [vmem:[%s1 + $0x170] sm:$0xff]
  %v79 = vld [vmem:[%s1 + $0x178] sm:$0xff]
  %v80 = vld [vmem:[%s1 + $0x180] sm:$0xff]
  %v81 = vld [vmem:[%s1 + $0x188] sm:$0xff]
  %v82 = vld [vmem:[%s1 + $0x190] sm:$0xff]
  %v83 = vld [vmem:[%s1 + $0x198] sm:$0xff]
  %v84 = vld [vmem:[%s1 + $0x1a0] sm:$0xff]
  %v85 = vld [vmem:[%s1 + $0x1a8] sm:$0xff]
  %v86 = vld [vmem:[%s1 + $0x1b0] sm:$0xff]
  %v87 = vld [vmem:[%s1 + $0x1b8] sm:$0xff]
  %v88 = vld [vmem:[%s1 + $0x1c0] sm:$0xff]
  %v89 = vld [vmem:[%s1 + $0x1c8] sm:$0xff]
  %v90 = vld [vmem:[%s1 + $0x1d0] sm:$0xff]
  %v91 = vld [vmem:[%s1 + $0x1d8] sm:$0xff]
  %v92 = vld [vmem:[%s1 + $0x1e0] sm:$0xff]
  %v93 = vld [vmem:[%s1 + $0x1e8] sm:$0xff]
  %v94 = vld [vmem:[%s1 + $0x1f0] sm:$0xff]
  %v95 = vld [vmem:[%s1 + $0x1f8] sm:$0xff]
  %v96 = vld [vmem:[%s1 + $0x200] sm:$0xff]
  %v97 = vld [vmem:[%s1 + $0x208] sm:$0xff]
  %v98 = vld [vmem:[%s1 + $0x210] sm:$0xff]
  %v99 = vld [vmem:[%s1 + $0x218] sm:$0xff]
  %v100 = vld [vmem:[%s1 + $0x220] sm:$0xff]
  %v101 = vld [vmem:[%s1 + $0x228] sm:$0xff]
  %v102 = vld [vmem:[%s1 + $0x230] sm:$0xff]
  %v103 = vld [vmem:[%s1 + $0x238] sm:$0xff]
  %v104 = vld [vmem:[#allocation2] sm:$0xff]
  %v105 = vld [vmem:[#allocation2 + $0x8] sm:$0xff]
  %v106 = vld [vmem:[#allocation2 + $0x10] sm:$0xff]
  %v107 = vld [vmem:[#allocation2 + $0x18] sm:$0xff]
  %v114 = vunpack.c.l.b16 %v26
  %v115 = vunpack.c.h.b16 %v26
  %v116 = vunpack.c.l.b16 %v27
  %v117 = vunpack.c.h.b16 %v27
  %v118 = vunpack.c.l.b16 %v28
  %v119 = vunpack.c.l.b16 %v29
  %v120 = vunpack.c.h.b16 %v29
  %v121 = vunpack.c.l.b16 %v30
  %v122 = vunpack.c.h.b16 %v30
  %v123 = vunpack.c.l.b16 %v31
  %v124 = vpack.c.b16 %v119, %v114
  %v125 = vpack.c.b16 %v120, %v115
  %v126 = vpack.c.b16 %v121, %v116
  %v127 = vpack.c.b16 %v122, %v117
  %v128 = vpack.c.b16 %v123, %v118
  %v205 = vunpack.c.l.b16 %v32
  %v206 = vunpack.c.h.b16 %v32
  %v207 = vunpack.c.l.b16 %v33
  %v208 = vunpack.c.h.b16 %v33
  %v209 = vunpack.c.l.b16 %v34
  %v210 = vunpack.c.h.b16 %v34
  %v211 = vunpack.c.l.b16 %v35
  %v212 = vunpack.c.h.b16 %v35
  %v213 = vunpack.c.l.b16 %v36
  %v214 = vunpack.c.h.b16 %v36
  %v215 = vunpack.c.l.b16 %v37
  %v216 = vunpack.c.h.b16 %v37
  %v217 = vunpack.c.l.b16 %v38
  %v218 = vunpack.c.h.b16 %v38
  %v219 = vunpack.c.l.b16 %v39
  %v220 = vunpack.c.h.b16 %v39
  %v221 = vunpack.c.l.b16 %v40
  %v222 = vunpack.c.h.b16 %v40
  %v223 = vunpack.c.l.b16 %v41
  %v224 = vunpack.c.h.b16 %v41
  %v225 = vunpack.c.l.b16 %v42
  %v226 = vunpack.c.h.b16 %v42
  %v227 = vunpack.c.l.b16 %v43
  %v228 = vunpack.c.h.b16 %v43
  %v229 = vunpack.c.l.b16 %v44
  %v230 = vunpack.c.h.b16 %v44
  %v231 = vunpack.c.l.b16 %v45
  %v232 = vunpack.c.h.b16 %v45
  %v233 = vunpack.c.l.b16 %v46
  %v234 = vunpack.c.h.b16 %v46
  %v235 = vunpack.c.l.b16 %v47
  %v236 = vunpack.c.h.b16 %v47
  %v237 = vunpack.c.l.b16 %v48
  %v238 = vunpack.c.h.b16 %v48
  %v239 = vunpack.c.l.b16 %v49
  %v240 = vunpack.c.h.b16 %v49
  %v241 = vunpack.c.l.b16 %v50
  %v242 = vunpack.c.h.b16 %v50
  %v243 = vunpack.c.l.b16 %v51
  %v244 = vunpack.c.h.b16 %v51
  %v245 = vunpack.c.l.b16 %v52
  %v246 = vunpack.c.h.b16 %v52
  %v247 = vunpack.c.l.b16 %v53
  %v248 = vunpack.c.h.b16 %v53
  %v249 = vunpack.c.l.b16 %v54
  %v250 = vunpack.c.h.b16 %v54
  %v251 = vunpack.c.l.b16 %v55
  %v252 = vunpack.c.h.b16 %v55
  %v253 = vunpack.c.l.b16 %v56
  %v254 = vunpack.c.h.b16 %v56
  %v255 = vunpack.c.l.b16 %v57
  %v256 = vunpack.c.h.b16 %v57
  %v257 = vunpack.c.l.b16 %v58
  %v258 = vunpack.c.h.b16 %v58
  %v259 = vunpack.c.l.b16 %v59
  %v260 = vunpack.c.h.b16 %v59
  %v261 = vunpack.c.l.b16 %v60
  %v262 = vunpack.c.h.b16 %v60
  %v263 = vunpack.c.l.b16 %v61
  %v264 = vunpack.c.h.b16 %v61
  %v265 = vunpack.c.l.b16 %v62
  %v266 = vunpack.c.h.b16 %v62
  %v267 = vunpack.c.l.b16 %v63
  %v268 = vunpack.c.h.b16 %v63
  %v269 = vunpack.c.l.b16 %v64
  %v270 = vunpack.c.h.b16 %v64
  %v271 = vunpack.c.l.b16 %v65
  %v272 = vunpack.c.h.b16 %v65
  %v273 = vunpack.c.l.b16 %v66
  %v274 = vunpack.c.h.b16 %v66
  %v275 = vunpack.c.l.b16 %v67
  %v276 = vunpack.c.h.b16 %v67
  %v277 = vunpack.c.l.b16 %v68
  %v278 = vunpack.c.h.b16 %v68
  %v279 = vunpack.c.l.b16 %v69
  %v280 = vunpack.c.h.b16 %v69
  %v281 = vunpack.c.l.b16 %v70
  %v282 = vunpack.c.h.b16 %v70
  %v283 = vunpack.c.l.b16 %v71
  %v284 = vunpack.c.h.b16 %v71
  %v285 = vunpack.c.l.b16 %v72
  %v286 = vunpack.c.h.b16 %v72
  %v287 = vunpack.c.l.b16 %v73
  %v288 = vunpack.c.h.b16 %v73
  %v289 = vunpack.c.l.b16 %v74
  %v290 = vunpack.c.h.b16 %v74
  %v291 = vunpack.c.l.b16 %v75
  %v292 = vunpack.c.h.b16 %v75
  %v293 = vunpack.c.l.b16 %v76
  %v294 = vunpack.c.h.b16 %v76
  %v295 = vunpack.c.l.b16 %v77
  %v296 = vunpack.c.h.b16 %v77
  %v297 = vunpack.c.l.b16 %v78
  %v298 = vunpack.c.h.b16 %v78
  %v299 = vunpack.c.l.b16 %v79
  %v300 = vunpack.c.h.b16 %v79
  %v301 = vunpack.c.l.b16 %v80
  %v302 = vunpack.c.h.b16 %v80
  %v303 = vunpack.c.l.b16 %v81
  %v304 = vunpack.c.h.b16 %v81
  %v305 = vunpack.c.l.b16 %v82
  %v306 = vunpack.c.h.b16 %v82
  %v307 = vunpack.c.l.b16 %v83
  %v308 = vunpack.c.h.b16 %v83
  %v309 = vunpack.c.l.b16 %v84
  %v310 = vunpack.c.h.b16 %v84
  %v311 = vunpack.c.l.b16 %v85
  %v312 = vunpack.c.h.b16 %v85
  %v313 = vunpack.c.l.b16 %v86
  %v314 = vunpack.c.h.b16 %v86
  %v315 = vunpack.c.l.b16 %v87
  %v316 = vunpack.c.h.b16 %v87
  %v317 = vunpack.c.l.b16 %v88
  %v318 = vunpack.c.h.b16 %v88
  %v319 = vunpack.c.l.b16 %v89
  %v320 = vunpack.c.h.b16 %v89
  %v321 = vunpack.c.l.b16 %v90
  %v322 = vunpack.c.h.b16 %v90
  %v323 = vunpack.c.l.b16 %v91
  %v324 = vunpack.c.h.b16 %v91
  %v325 = vunpack.c.l.b16 %v92
  %v326 = vunpack.c.h.b16 %v92
  %v327 = vunpack.c.l.b16 %v93
  %v328 = vunpack.c.h.b16 %v93
  %v329 = vunpack.c.l.b16 %v94
  %v330 = vunpack.c.h.b16 %v94
  %v331 = vunpack.c.l.b16 %v95
  %v332 = vunpack.c.h.b16 %v95
  %v333 = vunpack.c.l.b16 %v96
  %v334 = vunpack.c.h.b16 %v96
  %v335 = vunpack.c.l.b16 %v97
  %v336 = vunpack.c.h.b16 %v97
  %v337 = vunpack.c.l.b16 %v98
  %v338 = vunpack.c.h.b16 %v98
  %v339 = vunpack.c.l.b16 %v99
  %v340 = vunpack.c.h.b16 %v99
  %v341 = vunpack.c.l.b16 %v100
  %v342 = vunpack.c.h.b16 %v100
  %v343 = vunpack.c.l.b16 %v101
  %v344 = vunpack.c.h.b16 %v101
  %v345 = vunpack.c.l.b16 %v102
  %v346 = vunpack.c.h.b16 %v102
  %v347 = vunpack.c.l.b16 %v103
  %v348 = vunpack.c.h.b16 %v103
  %v349 = vpack.c.b16 %v207, %v205
  %v350 = vpack.c.b16 %v208, %v206
  %v351 = vpack.c.b16 %v211, %v209
  %v352 = vpack.c.b16 %v212, %v210
  %v353 = vpack.c.b16 %v215, %v213
  %v354 = vpack.c.b16 %v216, %v214
  %v355 = vpack.c.b16 %v219, %v217
  %v356 = vpack.c.b16 %v220, %v218
  %v357 = vpack.c.b16 %v223, %v221
  %v358 = vpack.c.b16 %v224, %v222
  %v359 = vpack.c.b16 %v227, %v225
  %v360 = vpack.c.b16 %v228, %v226
  %v361 = vpack.c.b16 %v231, %v229
  %v362 = vpack.c.b16 %v232, %v230
  %v363 = vpack.c.b16 %v235, %v233
  %v364 = vpack.c.b16 %v236, %v234
  %v365 = vpack.c.b16 %v239, %v237
  %v366 = vpack.c.b16 %v240, %v238
  %v367 = vpack.c.b16 %v243, %v241
  %v368 = vpack.c.b16 %v244, %v242
  %v369 = vpack.c.b16 %v247, %v245
  %v370 = vpack.c.b16 %v248, %v246
  %v371 = vpack.c.b16 %v251, %v249
  %v372 = vpack.c.b16 %v252, %v250
  %v373 = vpack.c.b16 %v255, %v253
  %v374 = vpack.c.b16 %v256, %v254
  %v375 = vpack.c.b16 %v259, %v257
  %v376 = vpack.c.b16 %v260, %v258
  %v377 = vpack.c.b16 %v263, %v261
  %v378 = vpack.c.b16 %v264, %v262
  %v379 = vpack.c.b16 %v267, %v265
  %v380 = vpack.c.b16 %v268, %v266
  %v381 = vpack.c.b16 %v271, %v269
  %v382 = vpack.c.b16 %v272, %v270
  %v383 = vpack.c.b16 %v275, %v273
  %v384 = vpack.c.b16 %v276, %v274
  %v385 = vpack.c.b16 %v279, %v277
  %v386 = vpack.c.b16 %v280, %v278
  %v387 = vpack.c.b16 %v283, %v281
  %v388 = vpack.c.b16 %v284, %v282
  %v389 = vpack.c.b16 %v287, %v285
  %v390 = vpack.c.b16 %v288, %v286
  %v391 = vpack.c.b16 %v291, %v289
  %v392 = vpack.c.b16 %v292, %v290
  %v393 = vpack.c.b16 %v295, %v293
  %v394 = vpack.c.b16 %v296, %v294
  %v395 = vpack.c.b16 %v299, %v297
  %v396 = vpack.c.b16 %v300, %v298
  %v397 = vpack.c.b16 %v303, %v301
  %v398 = vpack.c.b16 %v304, %v302
  %v399 = vpack.c.b16 %v307, %v305
  %v400 = vpack.c.b16 %v308, %v306
  %v401 = vpack.c.b16 %v311, %v309
  %v402 = vpack.c.b16 %v312, %v310
  %v403 = vpack.c.b16 %v315, %v313
  %v404 = vpack.c.b16 %v316, %v314
  %v405 = vpack.c.b16 %v319, %v317
  %v406 = vpack.c.b16 %v320, %v318
  %v407 = vpack.c.b16 %v323, %v321
  %v408 = vpack.c.b16 %v324, %v322
  %v409 = vpack.c.b16 %v327, %v325
  %v410 = vpack.c.b16 %v328, %v326
  %v411 = vpack.c.b16 %v331, %v329
  %v412 = vpack.c.b16 %v332, %v330
  %v413 = vpack.c.b16 %v335, %v333
  %v414 = vpack.c.b16 %v336, %v334
  %v415 = vpack.c.b16 %v339, %v337
  %v416 = vpack.c.b16 %v340, %v338
  %v417 = vpack.c.b16 %v343, %v341
  %v418 = vpack.c.b16 %v344, %v342
  %v419 = vpack.c.b16 %v347, %v345
  %v420 = vpack.c.b16 %v348, %v346
  %vm493 = vcmask 523264
  %v495 = vsel %vm493, %v128, 0
  %497 = vmatprep.subr.bf16.mxu0 %v364
  %498 = vmatpush1.bf16.msra.mxu0 %v363
  %499 = vmatprep.subr.bf16.mxu0 %v362
  %500 = vmatpush1.bf16.msra.mxu0 %v361
  %501 = vmatprep.subr.bf16.mxu0 %v360
  %502 = vmatpush1.bf16.msra.mxu0 %v359
  %503 = vmatprep.subr.bf16.mxu0 %v358
  %504 = vmatpush1.bf16.msra.mxu0 %v357
  %505 = vmatprep.subr.bf16.mxu0 %v356
  %506 = vmatpush1.bf16.msra.mxu0 %v355
  %507 = vmatprep.subr.bf16.mxu0 %v354
  %508 = vmatpush1.bf16.msra.mxu0 %v353
  %509 = vmatprep.subr.bf16.mxu0 %v352
  %510 = vmatpush1.bf16.msra.mxu0 %v351
  %511 = vmatprep.subr.bf16.mxu0 %v350
  %512 = vmatpush1.bf16.msra.mxu0 %v349
  %513 = vmatprep.subr.bf16.mxu0 %v380
  %514 = vmatpush2.bf16.msra.mxu0 %v379
  %515 = vmatprep.subr.bf16.mxu0 %v378
  %516 = vmatpush2.bf16.msra.mxu0 %v377
  %517 = vmatprep.subr.bf16.mxu0 %v376
  %518 = vmatpush2.bf16.msra.mxu0 %v375
  %519 = vmatprep.subr.bf16.mxu0 %v374
  %520 = vmatpush2.bf16.msra.mxu0 %v373
  %521 = vmatprep.subr.bf16.mxu0 %v372
  %522 = vmatpush2.bf16.msra.mxu0 %v371
  %523 = vmatprep.subr.bf16.mxu0 %v370
  %524 = vmatpush2.bf16.msra.mxu0 %v369
  %525 = vmatprep.subr.bf16.mxu0 %v368
  %526 = vmatpush2.bf16.msra.mxu0 %v367
  %527 = vmatprep.subr.bf16.mxu0 %v366
  %528 = vmatpush2.bf16.msra.mxu0 %v365
  %529 = vmatprep.mubr.bf16.mxu0 %v125
  %530 = vmatmul.mubr.bf16.gmra.mxu0 %v124
  %v531 = vpop.f32.mrf.mxu0
  %v532 = vadd.f32 0.0, %v531
  %v533 = vpop.f32.mrf.mxu0
  %v534 = vadd.f32 0.0, %v533
  %v535 = vpop.f32.mrf.mxu0
  %v536 = vadd.f32 0.0, %v535
  %v537 = vpop.f32.mrf.mxu0
  %v538 = vadd.f32 0.0, %v537
  %539 = vdwg.mxu0
  %540 = vmatprep.subr.bf16.mxu0 %v396
  %541 = vmatpush1.bf16.msra.mxu0 %v395
  %542 = vmatprep.subr.bf16.mxu0 %v394
  %543 = vmatpush1.bf16.msra.mxu0 %v393
  %544 = vmatprep.subr.bf16.mxu0 %v392
  %545 = vmatpush1.bf16.msra.mxu0 %v391
  %546 = vmatprep.subr.bf16.mxu0 %v390
  %547 = vmatpush1.bf16.msra.mxu0 %v389
  %548 = vmatprep.subr.bf16.mxu0 %v388
  %549 = vmatpush1.bf16.msra.mxu0 %v387
  %550 = vmatprep.subr.bf16.mxu0 %v386
  %551 = vmatpush1.bf16.msra.mxu0 %v385
  %552 = vmatprep.subr.bf16.mxu0 %v384
  %553 = vmatpush1.bf16.msra.mxu0 %v383
  %554 = vmatprep.subr.bf16.mxu0 %v382
  %555 = vmatpush1.bf16.msra.mxu0 %v381
  %556 = vmatprep.subr.bf16.mxu0 %v412
  %557 = vmatpush2.bf16.msra.mxu0 %v411
  %558 = vmatprep.subr.bf16.mxu0 %v410
  %559 = vmatpush2.bf16.msra.mxu0 %v409
  %560 = vmatprep.subr.bf16.mxu0 %v408
  %561 = vmatpush2.bf16.msra.mxu0 %v407
  %562 = vmatprep.subr.bf16.mxu0 %v406
  %563 = vmatpush2.bf16.msra.mxu0 %v405
  %564 = vmatprep.subr.bf16.mxu0 %v404
  %565 = vmatpush2.bf16.msra.mxu0 %v403
  %566 = vmatprep.subr.bf16.mxu0 %v402
  %567 = vmatpush2.bf16.msra.mxu0 %v401
  %568 = vmatprep.subr.bf16.mxu0 %v400
  %569 = vmatpush2.bf16.msra.mxu0 %v399
  %570 = vmatprep.subr.bf16.mxu0 %v398
  %571 = vmatpush2.bf16.msra.mxu0 %v397
  %572 = vmatprep.mubr.bf16.mxu0 %v127
  %573 = vmatmul.mubr.bf16.gmra.mxu0 %v126
  %v574 = vpop.f32.mrf.mxu0
  %v575 = vadd.f32 %v532, %v574
  %v576 = vpop.f32.mrf.mxu0
  %v577 = vadd.f32 %v534, %v576
  %v578 = vpop.f32.mrf.mxu0
  %v579 = vadd.f32 %v536, %v578
  %v580 = vpop.f32.mrf.mxu0
  %v581 = vadd.f32 %v538, %v580
  %582 = vdwg.mxu0
  %583 = vmatprep.subr.bf16.mxu0 0
  %584 = vmatpush1.bf16.msra.mxu0 0
  %585 = vmatprep.subr.bf16.mxu0 0
  %586 = vmatpush1.bf16.msra.mxu0 0
  %587 = vmatprep.subr.bf16.mxu0 0
  %588 = vmatpush1.bf16.msra.mxu0 0
  %589 = vmatprep.subr.bf16.mxu0 0
  %590 = vmatpush1.bf16.msra.mxu0 0
  %591 = vmatprep.subr.bf16.mxu0 %v420
  %592 = vmatpush1.bf16.msra.mxu0 %v419
  %593 = vmatprep.subr.bf16.mxu0 %v418
  %594 = vmatpush1.bf16.msra.mxu0 %v417
  %595 = vmatprep.subr.bf16.mxu0 %v416
  %596 = vmatpush1.bf16.msra.mxu0 %v415
  %597 = vmatprep.subr.bf16.mxu0 %v414
  %598 = vmatpush1.bf16.msra.mxu0 %v413
  %599 = vmatprep.subr.bf16.mxu0 0
  %600 = vmatpush2.bf16.msra.mxu0 0
  %601 = vmatprep.subr.bf16.mxu0 0
  %602 = vmatpush2.bf16.msra.mxu0 0
  %603 = vmatprep.subr.bf16.mxu0 0
  %604 = vmatpush2.bf16.msra.mxu0 0
  %605 = vmatprep.subr.bf16.mxu0 0
  %606 = vmatpush2.bf16.msra.mxu0 0
  %607 = vmatprep.subr.bf16.mxu0 0
  %608 = vmatpush2.bf16.msra.mxu0 0
  %609 = vmatprep.subr.bf16.mxu0 0
  %610 = vmatpush2.bf16.msra.mxu0 0
  %611 = vmatprep.subr.bf16.mxu0 0
  %612 = vmatpush2.bf16.msra.mxu0 0
  %613 = vmatprep.subr.bf16.mxu0 0
  %614 = vmatpush2.bf16.msra.mxu0 0
  %615 = vmatprep.mubr.bf16.mxu0 0
  %616 = vmatmul.mubr.bf16.gmra.mxu0 %v495
  %v617 = vpop.f32.mrf.mxu0
  %v618 = vadd.f32 %v575, %v617
  %v619 = vpop.f32.mrf.mxu0
  %v620 = vadd.f32 %v577, %v619
  %v621 = vpop.f32.mrf.mxu0
  %v622 = vadd.f32 %v579, %v621
  %v623 = vpop.f32.mrf.mxu0
  %v624 = vadd.f32 %v581, %v623
  %625 = vdwg.mxu0
  %v626 = vadd.f32 %v104, %v618
  %v627 = vadd.f32 %v105, %v620
  %v628 = vadd.f32 %v106, %v622
  %v629 = vadd.f32 %v107, %v624
  %630 = vst [vmem:[#allocation2] sm:$0xff] %v626
  %631 = vst [vmem:[#allocation2 + $0x8] sm:$0xff] %v627
  %632 = vst [vmem:[#allocation2 + $0x10] sm:$0xff] %v628
  %633 = vst [vmem:[#allocation2 + $0x18] sm:$0xff] %v629
  // Predicated region
  $region18: #{unet_forward.25} parent=0 // pred_check
    %p634 = pneg %p18
  $region19: #{unet_forward.25} parent=0 // pred_check_branch
    %636 = sbr.rel (%p634) target = $region21
  $region20: #{unet_forward.25} parent=0 // pred_region
    %v637 = vld [vmem:[#allocation2] sm:$0xff]
    %v638 = vld [vmem:[#allocation2 + $0x8] sm:$0xff]
    %v639 = vld [vmem:[#allocation2 + $0x10] sm:$0xff]
    %v640 = vld [vmem:[#allocation2 + $0x18] sm:$0xff]
    %v641 = vld [vmem:[%s2] sm:$0x3]
    %v643 = vlaneseq
    %v644 = vshrl.u32 %v643, 7
    %v645 = vsub.s32 0, %v644
    %v646 = vrot.slane %v641, %v645
    %v647 = vlaneseq
    %v648 = vshrl.u32 %v647, 7
    %v649 = vsub.s32 1, %v648
    %v650 = vrot.slane %v641, %v649
    %v653 = vadd.f32 %v637, %v646
    %v654 = vadd.f32 %v638, %v650
    %v655 = vadd.f32 %v639, %v646
    %v656 = vadd.f32 %v640, %v650
    %v657 = vadd.f32 %v653, %v655
    %v658 = vrot.slane %v657, 4
    %v659 = vadd.f32 %v657, %v658
    %v660 = vrot.slane %v659, 2
    %v661 = vadd.f32 %v659, %v660
    %v662 = vrot.slane %v661, 1
    %v663 = vadd.f32 %v661, %v662
    %v664 = vadd.f32 %v654, %v656
    %v665 = vrot.slane %v664, 4
    %v666 = vadd.f32 %v664, %v665
    %v667 = vrot.slane %v666, 2
    %v668 = vadd.f32 %v666, %v667
    %v669 = vrot.slane %v668, 1
    %v670 = vadd.f32 %v668, %v669
    %v671 = vmul.f32 %v653, %v653
    %v672 = vmul.f32 %v654, %v654
    %v673 = vmul.f32 %v655, %v655
    %v674 = vmul.f32 %v656, %v656
    %v675 = vadd.f32 %v671, %v673
    %v676 = vrot.slane %v675, 4
    %v677 = vadd.f32 %v675, %v676
    %v678 = vrot.slane %v677, 2
    %v679 = vadd.f32 %v677, %v678
    %v680 = vrot.slane %v679, 1
    %v681 = vadd.f32 %v679, %v680
    %v682 = vadd.f32 %v672, %v674
    %v683 = vrot.slane %v682, 4
    %v684 = vadd.f32 %v682, %v683
    %v685 = vrot.slane %v684, 2
    %v686 = vadd.f32 %v684, %v685
    %v687 = vrot.slane %v686, 1
    %v688 = vadd.f32 %v686, %v687
    %689 = vst [vmem:[%s4] sm:$0xff] %v663
    %690 = vst [vmem:[%s4 + $0x8] sm:$0xff] %v670
    %691 = vst [vmem:[%s5] sm:$0xff] %v681
    %692 = vst [vmem:[%s5 + $0x8] sm:$0xff] %v688
    %v693 = vpack.c.bf16 %v655, %v653
    %v694 = vpack.c.bf16 %v656, %v654
    %v697 = vunpack.c.l.b16 %v693
    %v698 = vunpack.c.l.b16 %v694
    %v699 = vunpack.c.h.b16 %v693
    %v700 = vunpack.c.h.b16 %v694
    %v701 = vpack.c.b16 %v698, %v697
    %v702 = vpack.c.b16 %v700, %v699
    %705 = vst [vmem:[%s3] sm:$0xff] %v701
    %706 = vst [vmem:[%s3 + $0x8] sm:$0xff] %v702
  $region21: #{unet_forward.25} parent=0 // pred_fallthru
    _
  // Predicated region
  $region22: #{unet_forward.25} parent=0 // pred_check
    _
  $region23: #{unet_forward.25} parent=0 // pred_check_branch
    %708 = sbr.rel (0) target = $region25
  $region24: #{unet_forward.25} parent=0 // pred_region
    _
  $region25: #{unet_forward.25} parent=0 // pred_fallthru
    _
  // Predicated region
  $region26: #{unet_forward.25} parent=0 // pred_check
    _
  $region27: #{unet_forward.25} parent=0 // pred_check_branch
    %710 = sbr.rel (0) target = $region29
  $region28: #{unet_forward.25} parent=0 // pred_region
    _
  $region29: #{unet_forward.25} parent=0 // pred_fallthru
    _
  // Predicated region
  $region30: #{unet_forward.25} parent=0 // pred_check
    _
  $region31: #{unet_forward.25} parent=0 // pred_check_branch
    %712 = sbr.rel (0) target = $region33
  $region32: #{unet_forward.25} parent=0 // pred_region
    _
  $region33: #{unet_forward.25} parent=0 // pred_fallthru
    _
  // Predicated region
  $region34: #{unet_forward.25} parent=0 // pred_check
    _
  $region35: #{unet_forward.25} parent=0 // pred_check_branch
    %714 = sbr.rel (0) target = $region37
  $region36: #{unet_forward.25} parent=0 // pred_region
    _
  $region37: #{unet_forward.25} parent=0 // pred_fallthru
    _
  // Predicated region
  $region38: #{unet_forward.25} parent=0 // pred_check
    _
  $region39: #{unet_forward.25} parent=0 // pred_check_branch
    %716 = sbr.rel (0) target = $region41
  $region40: #{unet_forward.25} parent=0 // pred_region
    _
  $region41: #{unet_forward.25} parent=0 // pred_fallthru
    _
  // Predicated region
  $region42: #{unet_forward.25} parent=0 // pred_check
    _
  $region43: #{unet_forward.25} parent=0 // pred_check_branch
    %718 = sbr.rel (0) target = $region45
  $region44: #{unet_forward.25} parent=0 // pred_region
    _
  $region45: #{unet_forward.25} parent=0 // pred_fallthru
    _

// kernel: unet_forward.26
$region0: #{unet_forward.26}
  #allocation0 [shape = 'u32[]', space=smem, size = 0x4, offset = 0x4, fixed_abs, tag = 'smem constant byte address 0x4 - core index']
  #allocation1 [shape = 'u32[144,128]{1,0:T(1,128)}', space=vmem, size = 0x12000, scoped, tag = 'internal scratch']
  %s0 = inlined_call_operand.vmem [shape: bf16[16,256], index: 0, kind: input, shape index: {}]
  %s1 = inlined_call_operand.vmem [shape: f32[1,256], index: 1, kind: input, shape index: {}]
  %s2 = inlined_call_operand.vmem [shape: f32[1,256], index: 2, kind: input, shape index: {}]
  %s3 = inlined_call_operand.vmem [shape: bf16[16,256], index: 3, kind: output, shape index: {}]
  %s4 = sld [smem:[#allocation0]]
  $region22: #{unet_forward.26} parent=0
    _
  %s6 = ssub.s32 1, %s4
  %s7 = scalar_select 0, %s6, %s4
  // Predicated region
  $region2: #{unet_forward.26} parent=0 // pred_check
    _
  $region3: #{unet_forward.26} parent=0 // pred_check_branch
    %9 = sbr.rel (0) target = $region5
  $region4: #{unet_forward.26} parent=0 // pred_region
    _
  $region5: #{unet_forward.26} parent=0 // pred_fallthru
    _
  // Predicated region
  $region6: #{unet_forward.26} parent=0 // pred_check
    _
  $region7: #{unet_forward.26} parent=0 // pred_check_branch
    %11 = sbr.rel (0) target = $region9
  $region8: #{unet_forward.26} parent=0 // pred_region
    _
  $region9: #{unet_forward.26} parent=0 // pred_fallthru
    _
  // Predicated region
  $region10: #{unet_forward.26} parent=0 // pred_check
    _
  $region11: #{unet_forward.26} parent=0 // pred_check_branch
    %13 = sbr.rel (0) target = $region13
  $region12: #{unet_forward.26} parent=0 // pred_region
    _
  $region13: #{unet_forward.26} parent=0 // pred_fallthru
    _
  %v14 = vld [vmem:[%s0] sm:$0xff]
  %v15 = vld [vmem:[%s0 + $0x8] sm:$0xff]
  %v16 = vunpack.c.l.bf16 %v14
  %v17 = vunpack.c.h.bf16 %v14
  %v18 = vunpack.c.l.bf16 %v15
  %v19 = vunpack.c.h.bf16 %v15
  %v20 = vld [vmem:[%s1] sm:$0x3]
  %v22 = vlaneseq
  %v23 = vshrl.u32 %v22, 7
  %v24 = vsub.s32 0, %v23
  %v25 = vrot.slane %v20, %v24
  %v26 = vlaneseq
  %v27 = vshrl.u32 %v26, 7
  %v28 = vsub.s32 1, %v27
  %v29 = vrot.slane %v20, %v28
  %v32 = vsub.f32 %v16, %v25
  %v33 = vsub.f32 %v17, %v29
  %v34 = vsub.f32 %v18, %v25
  %v35 = vsub.f32 %v19, %v29
  %v36 = vld [vmem:[%s2] sm:$0x3]
  %v38 = vlaneseq
  %v39 = vshrl.u32 %v38, 7
  %v40 = vsub.s32 0, %v39
  %v41 = vrot.slane %v36, %v40
  %v42 = vlaneseq
  %v43 = vshrl.u32 %v42, 7
  %v44 = vsub.s32 1, %v43
  %v45 = vrot.slane %v36, %v44
  %v48 = vmul.f32 %v32, %v41
  %v49 = vmul.f32 %v33, %v45
  %v50 = vmul.f32 %v34, %v41
  %v51 = vmul.f32 %v35, %v45
  %v52 = vpack.c.bf16 %v50, %v48
  %v53 = vpack.c.bf16 %v51, %v49
  %v56 = vunpack.c.l.b16 %v52
  %v57 = vunpack.c.l.b16 %v53
  %v58 = vunpack.c.h.b16 %v52
  %v59 = vunpack.c.h.b16 %v53
  %v60 = vpack.c.b16 %v57, %v56
  %v61 = vpack.c.b16 %v59, %v58
  %64 = vst [vmem:[%s3] sm:$0xff] %v60
  %65 = vst [vmem:[%s3 + $0x8] sm:$0xff] %v61
  // Predicated region
  $region14: #{unet_forward.26} parent=0 // pred_check
    _
  $region15: #{unet_forward.26} parent=0 // pred_check_branch
    %67 = sbr.rel (0) target = $region17
  $region16: #{unet_forward.26} parent=0 // pred_region
    _
  $region17: #{unet_forward.26} parent=0 // pred_fallthru
    _
  // Predicated region
  $region18: #{unet_forward.26} parent=0 // pred_check
    _
  $region19: #{unet_forward.26} parent=0 // pred_check_branch
    %69 = sbr.rel (0) target = $region21
  $region20: #{unet_forward.26} parent=0 // pred_region
    _
  $region21: #{unet_forward.26} parent=0 // pred_fallthru
    _

// kernel: tile.57
$region0: #{tile.57}
  #allocation0 [shape = 's32[1]{0}', space=sflag, size = 0x4, scoped, tag = 'scoped memory for tile.57']
  %s0 = inlined_call_operand.vmem [shape: f32[32], index: 0, kind: input, shape index: {}]
  %s1 = inlined_call_operand.vmem [shape: f32[4,32], index: 1, kind: output, shape index: {}]
  // Predicated region
  $region2: #{tile.57} parent=0 // pred_check
    _
  $region3: #{tile.57} parent=0 // pred_check_branch
    %3 = sbr.rel (0) target = $region5
  $region4: #{tile.57} parent=0 // pred_region
    _
  $region5: #{tile.57} parent=0 // pred_fallthru
    _
  %v4 = vld [vmem:[%s0] ss:$0 sm:$0xff]
  %5 = vst [vmem:[%s1] sm:$0xf] %v4

// kernel: tile.59
$region0: #{tile.59}
  %s0 = inlined_call_operand.vmem [shape: f32[4,32], index: 0, kind: input, shape index: {}]
  %s1 = inlined_call_operand.vmem [shape: f32[1,128], index: 1, kind: output, shape index: {}]
  $region1: #{tile.59} parent=0
    #allocation0 [shape = 'u8[4096]{0}', space=vmem, size = 0x1000, scoped, tag = 'scoped mem for output reshape']
    #allocation1 [shape = 'u8[4096]{0}', space=vmem, size = 0x1000, scoped, tag = 'scoped mem for input reshape']
    %s3 = sshll.u32 1, 4
    %s4 = ssub.s32 %s3, 1
    %v5 = vld [vmem:[%s0] sm:%s4]
    %6 = vst [vmem:[#allocation1] sm:%s4] %v5
    %v7 = vld [vmem:[#allocation1] sm:$0x1]
    %vm8 = vcmask 261120
    %9 = vst.msk [vmem:[#allocation0] sm:$0x1] %vm8, %v7
    %s10 = scalar_lea.vmem [#allocation1], 3
    %v11 = vld [vmem:[%s10] sm:$0x1]
    %12 = vrot.lane.b32.xlu0 %v11, 96
    %v13 = vpop.permute.xlu0 %12
    %vm14 = vcmask 1048320
    %15 = vst.msk [vmem:[#allocation0] sm:$0x1] %vm14, %v13
    %s16 = scalar_lea.vmem [#allocation1], 2
    %v17 = vld [vmem:[%s16] sm:$0x1]
    %18 = vrot.lane.b32.xlu0 %v17, 64
    %v19 = vpop.permute.xlu0 %18
    %vm20 = vcmask 785920
    %21 = vst.msk [vmem:[#allocation0] sm:$0x1] %vm20, %v19
    %s22 = scalar_lea.vmem [#allocation1], 1
    %v23 = vld [vmem:[%s22] sm:$0x1]
    %24 = vrot.lane.b32.xlu0 %v23, 32
    %v25 = vpop.permute.xlu0 %24
    %vm26 = vcmask 523520
    %27 = vst.msk [vmem:[#allocation0] sm:$0x1] %vm26, %v25
    %s29 = sshll.u32 1, 1
    %s30 = ssub.s32 %s29, 1
    %v32 = vld [vmem:[#allocation0] sm:%s30]
    %s33 = sshll.u32 1, 1
    %s34 = ssub.s32 %s33, 1
    %35 = vst [vmem:[%s1] sm:%s34] %v32

// kernel: unet_forward.24
$region0: #{unet_forward.24}
  #allocation0 [shape = 'u32[]', space=smem, size = 0x4, offset = 0x4, fixed_abs, tag = 'smem constant byte address 0x4 - core index']
  #allocation1 [shape = 'u32[144,128]{1,0:T(1,128)}', space=vmem, size = 0x12000, scoped, tag = 'internal scratch']
  #allocation2 [shape = 'f32[16,128]{1,0:T(8,128)}', space=vmem, size = 0x2000, scoped, tag = 'scratch operand']
  %s0 = inlined_call_operand.vmem [shape: bf16[16,1024], index: 0, kind: input, shape index: {}]
  %s1 = inlined_call_operand.vmem [shape: bf16[1024,128], index: 1, kind: input, shape index: {}]
  %s2 = inlined_call_operand.vmem [shape: f32[1,128], index: 2, kind: input, shape index: {}]
  %s3 = inlined_call_operand.vmem [shape: bf16[16,64], index: 3, kind: output, shape index: {}]
  %s4 = sld [smem:[#allocation0]]
  $region30: #{unet_forward.24} parent=0
    _
  %s6 = ssub.s32 1, %s4
  %s7 = scalar_select 0, %s6, %s4
  // Predicated region
  $region2: #{unet_forward.24} parent=0 // pred_check
    _
  $region3: #{unet_forward.24} parent=0 // pred_check_branch
    %9 = sbr.rel (0) target = $region5
  $region4: #{unet_forward.24} parent=0 // pred_region
    _
  $region5: #{unet_forward.24} parent=0 // pred_fallthru
    _
  // Predicated region
  $region6: #{unet_forward.24} parent=0 // pred_check
    _
  $region7: #{unet_forward.24} parent=0 // pred_check_branch
    %11 = sbr.rel (0) target = $region9
  $region8: #{unet_forward.24} parent=0 // pred_region
    _
  $region9: #{unet_forward.24} parent=0 // pred_fallthru
    _
  // Predicated region
  $region10: #{unet_forward.24} parent=0 // pred_check
    _
  $region11: #{unet_forward.24} parent=0 // pred_check_branch
    %13 = sbr.rel (0) target = $region13
  $region12: #{unet_forward.24} parent=0 // pred_region
    _
  $region13: #{unet_forward.24} parent=0 // pred_fallthru
    _
  %p16 = scmp.eq.s32.totalorder 0, 0
  // Predicated region
  $region14: #{unet_forward.24} parent=0 // pred_check
    %p17 = pneg %p16
  $region15: #{unet_forward.24} parent=0 // pred_check_branch
    %19 = sbr.rel (%p17) target = $region17
  $region16: #{unet_forward.24} parent=0 // pred_region
    %20 = vst [vmem:[#allocation2] sm:$0xff] 0.0
    %21 = vst [vmem:[#allocation2 + $0x8] sm:$0xff] 0.0
  $region17: #{unet_forward.24} parent=0 // pred_fallthru
    _
  %v22 = vld [vmem:[%s0] sm:$0xff]
  %v23 = vld [vmem:[%s0 + $0x8] sm:$0xff]
  %v24 = vld [vmem:[%s0 + $0x10] sm:$0xff]
  %v25 = vld [vmem:[%s0 + $0x18] sm:$0xff]
  %v26 = vld [vmem:[%s0 + $0x20] sm:$0xff]
  %v27 = vld [vmem:[%s0 + $0x28] sm:$0xff]
  %v28 = vld [vmem:[%s0 + $0x30] sm:$0xff]
  %v29 = vld [vmem:[%s0 + $0x38] sm:$0xff]
  %vm30 = vcmp.gt.bf16.partialorder %v22, 0
  %vm31 = vcmp.gt.bf16.partialorder %v23, 0
  %vm32 = vcmp.gt.bf16.partialorder %v24, 0
  %vm33 = vcmp.gt.bf16.partialorder %v25, 0
  %vm34 = vcmp.gt.bf16.partialorder %v26, 0
  %vm35 = vcmp.gt.bf16.partialorder %v27, 0
  %vm36 = vcmp.gt.bf16.partialorder %v28, 0
  %vm37 = vcmp.gt.bf16.partialorder %v29, 0
  %v38 = vmul.bf16 %v22, 1045249613
  %v39 = vmul.bf16 %v23, 1045249613
  %v40 = vmul.bf16 %v24, 1045249613
  %v41 = vmul.bf16 %v25, 1045249613
  %v42 = vmul.bf16 %v26, 1045249613
  %v43 = vmul.bf16 %v27, 1045249613
  %v44 = vmul.bf16 %v28, 1045249613
  %v45 = vmul.bf16 %v29, 1045249613
  %v46 = vsel %vm30, %v22, %v38
  %v47 = vsel %vm31, %v23, %v39
  %v48 = vsel %vm32, %v24, %v40
  %v49 = vsel %vm33, %v25, %v41
  %v50 = vsel %vm34, %v26, %v42
  %v51 = vsel %vm35, %v27, %v43
  %v52 = vsel %vm36, %v28, %v44
  %v53 = vsel %vm37, %v29, %v45
  %v54 = vld [vmem:[%s1] sm:$0xf]
  %v55 = vld [vmem:[%s1 + $0x4] sm:$0xf]
  %v56 = vld [vmem:[%s1 + $0x8] sm:$0xf]
  %v57 = vld [vmem:[%s1 + $0xc] sm:$0xf]
  %v58 = vld [vmem:[%s1 + $0x10] sm:$0xf]
  %v59 = vld [vmem:[%s1 + $0x14] sm:$0xf]
  %v60 = vld [vmem:[%s1 + $0x18] sm:$0xf]
  %v61 = vld [vmem:[%s1 + $0x1c] sm:$0xf]
  %v62 = vld [vmem:[%s1 + $0x20] sm:$0xf]
  %v63 = vld [vmem:[%s1 + $0x24] sm:$0xf]
  %v64 = vld [vmem:[%s1 + $0x28] sm:$0xf]
  %v65 = vld [vmem:[%s1 + $0x2c] sm:$0xf]
  %v66 = vld [vmem:[%s1 + $0x30] sm:$0xf]
  %v67 = vld [vmem:[%s1 + $0x34] sm:$0xf]
  %v68 = vld [vmem:[%s1 + $0x38] sm:$0xf]
  %v69 = vld [vmem:[%s1 + $0x3c] sm:$0xf]
  %v70 = vld [vmem:[%s1 + $0x40] sm:$0xf]
  %v71 = vld [vmem:[%s1 + $0x44] sm:$0xf]
  %v72 = vld [vmem:[%s1 + $0x48] sm:$0xf]
  %v73 = vld [vmem:[%s1 + $0x4c] sm:$0xf]
  %v74 = vld [vmem:[%s1 + $0x50] sm:$0xf]
  %v75 = vld [vmem:[%s1 + $0x54] sm:$0xf]
  %v76 = vld [vmem:[%s1 + $0x58] sm:$0xf]
  %v77 = vld [vmem:[%s1 + $0x5c] sm:$0xf]
  %v78 = vld [vmem:[%s1 + $0x60] sm:$0xf]
  %v79 = vld [vmem:[%s1 + $0x64] sm:$0xf]
  %v80 = vld [vmem:[%s1 + $0x68] sm:$0xf]
  %v81 = vld [vmem:[%s1 + $0x6c] sm:$0xf]
  %v82 = vld [vmem:[%s1 + $0x70] sm:$0xf]
  %v83 = vld [vmem:[%s1 + $0x74] sm:$0xf]
  %v84 = vld [vmem:[%s1 + $0x78] sm:$0xf]
  %v85 = vld [vmem:[%s1 + $0x7c] sm:$0xf]
  %v86 = vld [vmem:[%s1 + $0x80] sm:$0xf]
  %v87 = vld [vmem:[%s1 + $0x84] sm:$0xf]
  %v88 = vld [vmem:[%s1 + $0x88] sm:$0xf]
  %v89 = vld [vmem:[%s1 + $0x8c] sm:$0xf]
  %v90 = vld [vmem:[%s1 + $0x90] sm:$0xf]
  %v91 = vld [vmem:[%s1 + $0x94] sm:$0xf]
  %v92 = vld [vmem:[%s1 + $0x98] sm:$0xf]
  %v93 = vld [vmem:[%s1 + $0x9c] sm:$0xf]
  %v94 = vld [vmem:[%s1 + $0xa0] sm:$0xf]
  %v95 = vld [vmem:[%s1 + $0xa4] sm:$0xf]
  %v96 = vld [vmem:[%s1 + $0xa8] sm:$0xf]
  %v97 = vld [vmem:[%s1 + $0xac] sm:$0xf]
  %v98 = vld [vmem:[%s1 + $0xb0] sm:$0xf]
  %v99 = vld [vmem:[%s1 + $0xb4] sm:$0xf]
  %v100 = vld [vmem:[%s1 + $0xb8] sm:$0xf]
  %v101 = vld [vmem:[%s1 + $0xbc] sm:$0xf]
  %v102 = vld [vmem:[%s1 + $0xc0] sm:$0xf]
  %v103 = vld [vmem:[%s1 + $0xc4] sm:$0xf]
  %v104 = vld [vmem:[%s1 + $0xc8] sm:$0xf]
  %v105 = vld [vmem:[%s1 + $0xcc] sm:$0xf]
  %v106 = vld [vmem:[%s1 + $0xd0] sm:$0xf]
  %v107 = vld [vmem:[%s1 + $0xd4] sm:$0xf]
  %v108 = vld [vmem:[%s1 + $0xd8] sm:$0xf]
  %v109 = vld [vmem:[%s1 + $0xdc] sm:$0xf]
  %v110 = vld [vmem:[%s1 + $0xe0] sm:$0xf]
  %v111 = vld [vmem:[%s1 + $0xe4] sm:$0xf]
  %v112 = vld [vmem:[%s1 + $0xe8] sm:$0xf]
  %v113 = vld [vmem:[%s1 + $0xec] sm:$0xf]
  %v114 = vld [vmem:[%s1 + $0xf0] sm:$0xf]
  %v115 = vld [vmem:[%s1 + $0xf4] sm:$0xf]
  %v116 = vld [vmem:[%s1 + $0xf8] sm:$0xf]
  %v117 = vld [vmem:[%s1 + $0xfc] sm:$0xf]
  %v118 = vld [vmem:[%s1 + $0x100] sm:$0xf]
  %v119 = vld [vmem:[%s1 + $0x104] sm:$0xf]
  %v120 = vld [vmem:[%s1 + $0x108] sm:$0xf]
  %v121 = vld [vmem:[%s1 + $0x10c] sm:$0xf]
  %v122 = vld [vmem:[%s1 + $0x110] sm:$0xf]
  %v123 = vld [vmem:[%s1 + $0x114] sm:$0xf]
  %v124 = vld [vmem:[%s1 + $0x118] sm:$0xf]
  %v125 = vld [vmem:[%s1 + $0x11c] sm:$0xf]
  %v126 = vld [vmem:[%s1 + $0x120] sm:$0xf]
  %v127 = vld [vmem:[%s1 + $0x124] sm:$0xf]
  %v128 = vld [vmem:[%s1 + $0x128] sm:$0xf]
  %v129 = vld [vmem:[%s1 + $0x12c] sm:$0xf]
  %v130 = vld [vmem:[%s1 + $0x130] sm:$0xf]
  %v131 = vld [vmem:[%s1 + $0x134] sm:$0xf]
  %v132 = vld [vmem:[%s1 + $0x138] sm:$0xf]
  %v133 = vld [vmem:[%s1 + $0x13c] sm:$0xf]
  %v134 = vld [vmem:[%s1 + $0x140] sm:$0xf]
  %v135 = vld [vmem:[%s1 + $0x144] sm:$0xf]
  %v136 = vld [vmem:[%s1 + $0x148] sm:$0xf]
  %v137 = vld [vmem:[%s1 + $0x14c] sm:$0xf]
  %v138 = vld [vmem:[%s1 + $0x150] sm:$0xf]
  %v139 = vld [vmem:[%s1 + $0x154] sm:$0xf]
  %v140 = vld [vmem:[%s1 + $0x158] sm:$0xf]
  %v141 = vld [vmem:[%s1 + $0x15c] sm:$0xf]
  %v142 = vld [vmem:[%s1 + $0x160] sm:$0xf]
  %v143 = vld [vmem:[%s1 + $0x164] sm:$0xf]
  %v144 = vld [vmem:[%s1 + $0x168] sm:$0xf]
  %v145 = vld [vmem:[%s1 + $0x16c] sm:$0xf]
  %v146 = vld [vmem:[%s1 + $0x170] sm:$0xf]
  %v147 = vld [vmem:[%s1 + $0x174] sm:$0xf]
  %v148 = vld [vmem:[%s1 + $0x178] sm:$0xf]
  %v149 = vld [vmem:[%s1 + $0x17c] sm:$0xf]
  %v150 = vld [vmem:[%s1 + $0x180] sm:$0xf]
  %v151 = vld [vmem:[%s1 + $0x184] sm:$0xf]
  %v152 = vld [vmem:[%s1 + $0x188] sm:$0xf]
  %v153 = vld [vmem:[%s1 + $0x18c] sm:$0xf]
  %v154 = vld [vmem:[%s1 + $0x190] sm:$0xf]
  %v155 = vld [vmem:[%s1 + $0x194] sm:$0xf]
  %v156 = vld [vmem:[%s1 + $0x198] sm:$0xf]
  %v157 = vld [vmem:[%s1 + $0x19c] sm:$0xf]
  %v158 = vld [vmem:[%s1 + $0x1a0] sm:$0xf]
  %v159 = vld [vmem:[%s1 + $0x1a4] sm:$0xf]
  %v160 = vld [vmem:[%s1 + $0x1a8] sm:$0xf]
  %v161 = vld [vmem:[%s1 + $0x1ac] sm:$0xf]
  %v162 = vld [vmem:[%s1 + $0x1b0] sm:$0xf]
  %v163 = vld [vmem:[%s1 + $0x1b4] sm:$0xf]
  %v164 = vld [vmem:[%s1 + $0x1b8] sm:$0xf]
  %v165 = vld [vmem:[%s1 + $0x1bc] sm:$0xf]
  %v166 = vld [vmem:[%s1 + $0x1c0] sm:$0xf]
  %v167 = vld [vmem:[%s1 + $0x1c4] sm:$0xf]
  %v168 = vld [vmem:[%s1 + $0x1c8] sm:$0xf]
  %v169 = vld [vmem:[%s1 + $0x1cc] sm:$0xf]
  %v170 = vld [vmem:[%s1 + $0x1d0] sm:$0xf]
  %v171 = vld [vmem:[%s1 + $0x1d4] sm:$0xf]
  %v172 = vld [vmem:[%s1 + $0x1d8] sm:$0xf]
  %v173 = vld [vmem:[%s1 + $0x1dc] sm:$0xf]
  %v174 = vld [vmem:[%s1 + $0x1e0] sm:$0xf]
  %v175 = vld [vmem:[%s1 + $0x1e4] sm:$0xf]
  %v176 = vld [vmem:[%s1 + $0x1e8] sm:$0xf]
  %v177 = vld [vmem:[%s1 + $0x1ec] sm:$0xf]
  %v178 = vld [vmem:[%s1 + $0x1f0] sm:$0xf]
  %v179 = vld [vmem:[%s1 + $0x1f4] sm:$0xf]
  %v180 = vld [vmem:[%s1 + $0x1f8] sm:$0xf]
  %v181 = vld [vmem:[%s1 + $0x1fc] sm:$0xf]
  %v182 = vld [vmem:[#allocation2] sm:$0xff]
  %v183 = vld [vmem:[#allocation2 + $0x8] sm:$0xff]
  %v192 = vunpack.c.l.b16 %v46
  %v193 = vunpack.c.h.b16 %v46
  %v194 = vunpack.c.l.b16 %v47
  %v195 = vunpack.c.h.b16 %v47
  %v196 = vunpack.c.l.b16 %v48
  %v197 = vunpack.c.h.b16 %v48
  %v198 = vunpack.c.l.b16 %v49
  %v199 = vunpack.c.h.b16 %v49
  %v200 = vunpack.c.l.b16 %v50
  %v201 = vunpack.c.h.b16 %v50
  %v202 = vunpack.c.l.b16 %v51
  %v203 = vunpack.c.h.b16 %v51
  %v204 = vunpack.c.l.b16 %v52
  %v205 = vunpack.c.h.b16 %v52
  %v206 = vunpack.c.l.b16 %v53
  %v207 = vunpack.c.h.b16 %v53
  %v208 = vpack.c.b16 %v200, %v192
  %v209 = vpack.c.b16 %v201, %v193
  %v210 = vpack.c.b16 %v202, %v194
  %v211 = vpack.c.b16 %v203, %v195
  %v212 = vpack.c.b16 %v204, %v196
  %v213 = vpack.c.b16 %v205, %v197
  %v214 = vpack.c.b16 %v206, %v198
  %v215 = vpack.c.b16 %v207, %v199
  %v352 = vunpack.c.l.b16 %v54
  %v353 = vunpack.c.l.b16 %v55
  %v354 = vunpack.c.l.b16 %v56
  %v355 = vunpack.c.l.b16 %v57
  %v356 = vunpack.c.l.b16 %v58
  %v357 = vunpack.c.l.b16 %v59
  %v358 = vunpack.c.l.b16 %v60
  %v359 = vunpack.c.l.b16 %v61
  %v360 = vunpack.c.l.b16 %v62
  %v361 = vunpack.c.l.b16 %v63
  %v362 = vunpack.c.l.b16 %v64
  %v363 = vunpack.c.l.b16 %v65
  %v364 = vunpack.c.l.b16 %v66
  %v365 = vunpack.c.l.b16 %v67
  %v366 = vunpack.c.l.b16 %v68
  %v367 = vunpack.c.l.b16 %v69
  %v368 = vunpack.c.l.b16 %v70
  %v369 = vunpack.c.l.b16 %v71
  %v370 = vunpack.c.l.b16 %v72
  %v371 = vunpack.c.l.b16 %v73
  %v372 = vunpack.c.l.b16 %v74
  %v373 = vunpack.c.l.b16 %v75
  %v374 = vunpack.c.l.b16 %v76
  %v375 = vunpack.c.l.b16 %v77
  %v376 = vunpack.c.l.b16 %v78
  %v377 = vunpack.c.l.b16 %v79
  %v378 = vunpack.c.l.b16 %v80
  %v379 = vunpack.c.l.b16 %v81
  %v380 = vunpack.c.l.b16 %v82
  %v381 = vunpack.c.l.b16 %v83
  %v382 = vunpack.c.l.b16 %v84
  %v383 = vunpack.c.l.b16 %v85
  %v384 = vunpack.c.l.b16 %v86
  %v385 = vunpack.c.l.b16 %v87
  %v386 = vunpack.c.l.b16 %v88
  %v387 = vunpack.c.l.b16 %v89
  %v388 = vunpack.c.l.b16 %v90
  %v389 = vunpack.c.l.b16 %v91
  %v390 = vunpack.c.l.b16 %v92
  %v391 = vunpack.c.l.b16 %v93
  %v392 = vunpack.c.l.b16 %v94
  %v393 = vunpack.c.l.b16 %v95
  %v394 = vunpack.c.l.b16 %v96
  %v395 = vunpack.c.l.b16 %v97
  %v396 = vunpack.c.l.b16 %v98
  %v397 = vunpack.c.l.b16 %v99
  %v398 = vunpack.c.l.b16 %v100
  %v399 = vunpack.c.l.b16 %v101
  %v400 = vunpack.c.l.b16 %v102
  %v401 = vunpack.c.l.b16 %v103
  %v402 = vunpack.c.l.b16 %v104
  %v403 = vunpack.c.l.b16 %v105
  %v404 = vunpack.c.l.b16 %v106
  %v405 = vunpack.c.l.b16 %v107
  %v406 = vunpack.c.l.b16 %v108
  %v407 = vunpack.c.l.b16 %v109
  %v408 = vunpack.c.l.b16 %v110
  %v409 = vunpack.c.l.b16 %v111
  %v410 = vunpack.c.l.b16 %v112
  %v411 = vunpack.c.l.b16 %v113
  %v412 = vunpack.c.l.b16 %v114
  %v413 = vunpack.c.l.b16 %v115
  %v414 = vunpack.c.l.b16 %v116
  %v415 = vunpack.c.l.b16 %v117
  %v416 = vunpack.c.l.b16 %v118
  %v417 = vunpack.c.l.b16 %v119
  %v418 = vunpack.c.l.b16 %v120
  %v419 = vunpack.c.l.b16 %v121
  %v420 = vunpack.c.l.b16 %v122
  %v421 = vunpack.c.l.b16 %v123
  %v422 = vunpack.c.l.b16 %v124
  %v423 = vunpack.c.l.b16 %v125
  %v424 = vunpack.c.l.b16 %v126
  %v425 = vunpack.c.l.b16 %v127
  %v426 = vunpack.c.l.b16 %v128
  %v427 = vunpack.c.l.b16 %v129
  %v428 = vunpack.c.l.b16 %v130
  %v429 = vunpack.c.l.b16 %v131
  %v430 = vunpack.c.l.b16 %v132
  %v431 = vunpack.c.l.b16 %v133
  %v432 = vunpack.c.l.b16 %v134
  %v433 = vunpack.c.l.b16 %v135
  %v434 = vunpack.c.l.b16 %v136
  %v435 = vunpack.c.l.b16 %v137
  %v436 = vunpack.c.l.b16 %v138
  %v437 = vunpack.c.l.b16 %v139
  %v438 = vunpack.c.l.b16 %v140
  %v439 = vunpack.c.l.b16 %v141
  %v440 = vunpack.c.l.b16 %v142
  %v441 = vunpack.c.l.b16 %v143
  %v442 = vunpack.c.l.b16 %v144
  %v443 = vunpack.c.l.b16 %v145
  %v444 = vunpack.c.l.b16 %v146
  %v445 = vunpack.c.l.b16 %v147
  %v446 = vunpack.c.l.b16 %v148
  %v447 = vunpack.c.l.b16 %v149
  %v448 = vunpack.c.l.b16 %v150
  %v449 = vunpack.c.l.b16 %v151
  %v450 = vunpack.c.l.b16 %v152
  %v451 = vunpack.c.l.b16 %v153
  %v452 = vunpack.c.l.b16 %v154
  %v453 = vunpack.c.l.b16 %v155
  %v454 = vunpack.c.l.b16 %v156
  %v455 = vunpack.c.l.b16 %v157
  %v456 = vunpack.c.l.b16 %v158
  %v457 = vunpack.c.l.b16 %v159
  %v458 = vunpack.c.l.b16 %v160
  %v459 = vunpack.c.l.b16 %v161
  %v460 = vunpack.c.l.b16 %v162
  %v461 = vunpack.c.l.b16 %v163
  %v462 = vunpack.c.l.b16 %v164
  %v463 = vunpack.c.l.b16 %v165
  %v464 = vunpack.c.l.b16 %v166
  %v465 = vunpack.c.l.b16 %v167
  %v466 = vunpack.c.l.b16 %v168
  %v467 = vunpack.c.l.b16 %v169
  %v468 = vunpack.c.l.b16 %v170
  %v469 = vunpack.c.l.b16 %v171
  %v470 = vunpack.c.l.b16 %v172
  %v471 = vunpack.c.l.b16 %v173
  %v472 = vunpack.c.l.b16 %v174
  %v473 = vunpack.c.l.b16 %v175
  %v474 = vunpack.c.l.b16 %v176
  %v475 = vunpack.c.l.b16 %v177
  %v476 = vunpack.c.l.b16 %v178
  %v477 = vunpack.c.l.b16 %v179
  %v478 = vunpack.c.l.b16 %v180
  %v479 = vunpack.c.l.b16 %v181
  %v480 = vpack.c.b16 %v353, %v352
  %v481 = vpack.c.b16 %v355, %v354
  %v482 = vpack.c.b16 %v357, %v356
  %v483 = vpack.c.b16 %v359, %v358
  %v484 = vpack.c.b16 %v361, %v360
  %v485 = vpack.c.b16 %v363, %v362
  %v486 = vpack.c.b16 %v365, %v364
  %v487 = vpack.c.b16 %v367, %v366
  %v488 = vpack.c.b16 %v369, %v368
  %v489 = vpack.c.b16 %v371, %v370
  %v490 = vpack.c.b16 %v373, %v372
  %v491 = vpack.c.b16 %v375, %v374
  %v492 = vpack.c.b16 %v377, %v376
  %v493 = vpack.c.b16 %v379, %v378
  %v494 = vpack.c.b16 %v381, %v380
  %v495 = vpack.c.b16 %v383, %v382
  %v496 = vpack.c.b16 %v385, %v384
  %v497 = vpack.c.b16 %v387, %v386
  %v498 = vpack.c.b16 %v389, %v388
  %v499 = vpack.c.b16 %v391, %v390
  %v500 = vpack.c.b16 %v393, %v392
  %v501 = vpack.c.b16 %v395, %v394
  %v502 = vpack.c.b16 %v397, %v396
  %v503 = vpack.c.b16 %v399, %v398
  %v504 = vpack.c.b16 %v401, %v400
  %v505 = vpack.c.b16 %v403, %v402
  %v506 = vpack.c.b16 %v405, %v404
  %v507 = vpack.c.b16 %v407, %v406
  %v508 = vpack.c.b16 %v409, %v408
  %v509 = vpack.c.b16 %v411, %v410
  %v510 = vpack.c.b16 %v413, %v412
  %v511 = vpack.c.b16 %v415, %v414
  %v512 = vpack.c.b16 %v417, %v416
  %v513 = vpack.c.b16 %v419, %v418
  %v514 = vpack.c.b16 %v421, %v420
  %v515 = vpack.c.b16 %v423, %v422
  %v516 = vpack.c.b16 %v425, %v424
  %v517 = vpack.c.b16 %v427, %v426
  %v518 = vpack.c.b16 %v429, %v428
  %v519 = vpack.c.b16 %v431, %v430
  %v520 = vpack.c.b16 %v433, %v432
  %v521 = vpack.c.b16 %v435, %v434
  %v522 = vpack.c.b16 %v437, %v436
  %v523 = vpack.c.b16 %v439, %v438
  %v524 = vpack.c.b16 %v441, %v440
  %v525 = vpack.c.b16 %v443, %v442
  %v526 = vpack.c.b16 %v445, %v444
  %v527 = vpack.c.b16 %v447, %v446
  %v528 = vpack.c.b16 %v449, %v448
  %v529 = vpack.c.b16 %v451, %v450
  %v530 = vpack.c.b16 %v453, %v452
  %v531 = vpack.c.b16 %v455, %v454
  %v532 = vpack.c.b16 %v457, %v456
  %v533 = vpack.c.b16 %v459, %v458
  %v534 = vpack.c.b16 %v461, %v460
  %v535 = vpack.c.b16 %v463, %v462
  %v536 = vpack.c.b16 %v465, %v464
  %v537 = vpack.c.b16 %v467, %v466
  %v538 = vpack.c.b16 %v469, %v468
  %v539 = vpack.c.b16 %v471, %v470
  %v540 = vpack.c.b16 %v473, %v472
  %v541 = vpack.c.b16 %v475, %v474
  %v542 = vpack.c.b16 %v477, %v476
  %v543 = vpack.c.b16 %v479, %v478
  %608 = vmatprep.subr.bf16.mxu0 0
  %609 = vmatpush1.bf16.msra.mxu0 %v487
  %610 = vmatprep.subr.bf16.mxu0 0
  %611 = vmatpush1.bf16.msra.mxu0 %v486
  %612 = vmatprep.subr.bf16.mxu0 0
  %613 = vmatpush1.bf16.msra.mxu0 %v485
  %614 = vmatprep.subr.bf16.mxu0 0
  %615 = vmatpush1.bf16.msra.mxu0 %v484
  %616 = vmatprep.subr.bf16.mxu0 0
  %617 = vmatpush1.bf16.msra.mxu0 %v483
  %618 = vmatprep.subr.bf16.mxu0 0
  %619 = vmatpush1.bf16.msra.mxu0 %v482
  %620 = vmatprep.subr.bf16.mxu0 0
  %621 = vmatpush1.bf16.msra.mxu0 %v481
  %622 = vmatprep.subr.bf16.mxu0 0
  %623 = vmatpush1.bf16.msra.mxu0 %v480
  %624 = vmatprep.subr.bf16.mxu0 0
  %625 = vmatpush2.bf16.msra.mxu0 %v495
  %626 = vmatprep.subr.bf16.mxu0 0
  %627 = vmatpush2.bf16.msra.mxu0 %v494
  %628 = vmatprep.subr.bf16.mxu0 0
  %629 = vmatpush2.bf16.msra.mxu0 %v493
  %630 = vmatprep.subr.bf16.mxu0 0
  %631 = vmatpush2.bf16.msra.mxu0 %v492
  %632 = vmatprep.subr.bf16.mxu0 0
  %633 = vmatpush2.bf16.msra.mxu0 %v491
  %634 = vmatprep.subr.bf16.mxu0 0
  %635 = vmatpush2.bf16.msra.mxu0 %v490
  %636 = vmatprep.subr.bf16.mxu0 0
  %637 = vmatpush2.bf16.msra.mxu0 %v489
  %638 = vmatprep.subr.bf16.mxu0 0
  %639 = vmatpush2.bf16.msra.mxu0 %v488
  %640 = vmatprep.mubr.bf16.mxu0 %v209
  %641 = vmatmul.mubr.bf16.gmra.mxu0 %v208
  %v642 = vpop.f32.mrf.mxu0
  %v643 = vadd.f32 0.0, %v642
  %v644 = vpop.f32.mrf.mxu0
  %v645 = vpop.f32.mrf.mxu0
  %v646 = vadd.f32 0.0, %v645
  %v647 = vpop.f32.mrf.mxu0
  %648 = vdwg.mxu0
  %649 = vmatprep.subr.bf16.mxu0 0
  %650 = vmatpush1.bf16.msra.mxu0 %v503
  %651 = vmatprep.subr.bf16.mxu0 0
  %652 = vmatpush1.bf16.msra.mxu0 %v502
  %653 = vmatprep.subr.bf16.mxu0 0
  %654 = vmatpush1.bf16.msra.mxu0 %v501
  %655 = vmatprep.subr.bf16.mxu0 0
  %656 = vmatpush1.bf16.msra.mxu0 %v500
  %657 = vmatprep.subr.bf16.mxu0 0
  %658 = vmatpush1.bf16.msra.mxu0 %v499
  %659 = vmatprep.subr.bf16.mxu0 0
  %660 = vmatpush1.bf16.msra.mxu0 %v498
  %661 = vmatprep.subr.bf16.mxu0 0
  %662 = vmatpush1.bf16.msra.mxu0 %v497
  %663 = vmatprep.subr.bf16.mxu0 0
  %664 = vmatpush1.bf16.msra.mxu0 %v496
  %665 = vmatprep.subr.bf16.mxu0 0
  %666 = vmatpush2.bf16.msra.mxu0 %v511
  %667 = vmatprep.subr.bf16.mxu0 0
  %668 = vmatpush2.bf16.msra.mxu0 %v510
  %669 = vmatprep.subr.bf16.mxu0 0
  %670 = vmatpush2.bf16.msra.mxu0 %v509
  %671 = vmatprep.subr.bf16.mxu0 0
  %672 = vmatpush2.bf16.msra.mxu0 %v508
  %673 = vmatprep.subr.bf16.mxu0 0
  %674 = vmatpush2.bf16.msra.mxu0 %v507
  %675 = vmatprep.subr.bf16.mxu0 0
  %676 = vmatpush2.bf16.msra.mxu0 %v506
  %677 = vmatprep.subr.bf16.mxu0 0
  %678 = vmatpush2.bf16.msra.mxu0 %v505
  %679 = vmatprep.subr.bf16.mxu0 0
  %680 = vmatpush2.bf16.msra.mxu0 %v504
  %681 = vmatprep.mubr.bf16.mxu0 %v211
  %682 = vmatmul.mubr.bf16.gmra.mxu0 %v210
  %v683 = vpop.f32.mrf.mxu0
  %v684 = vadd.f32 %v643, %v683
  %v685 = vpop.f32.mrf.mxu0
  %v686 = vpop.f32.mrf.mxu0
  %v687 = vadd.f32 %v646, %v686
  %v688 = vpop.f32.mrf.mxu0
  %689 = vdwg.mxu0
  %690 = vmatprep.subr.bf16.mxu0 0
  %691 = vmatpush1.bf16.msra.mxu0 %v519
  %692 = vmatprep.subr.bf16.mxu0 0
  %693 = vmatpush1.bf16.msra.mxu0 %v518
  %694 = vmatprep.subr.bf16.mxu0 0
  %695 = vmatpush1.bf16.msra.mxu0 %v517
  %696 = vmatprep.subr.bf16.mxu0 0
  %697 = vmatpush1.bf16.msra.mxu0 %v516
  %698 = vmatprep.subr.bf16.mxu0 0
  %699 = vmatpush1.bf16.msra.mxu0 %v515
  %700 = vmatprep.subr.bf16.mxu0 0
  %701 = vmatpush1.bf16.msra.mxu0 %v514
  %702 = vmatprep.subr.bf16.mxu0 0
  %703 = vmatpush1.bf16.msra.mxu0 %v513
  %704 = vmatprep.subr.bf16.mxu0 0
  %705 = vmatpush1.bf16.msra.mxu0 %v512
  %706 = vmatprep.subr.bf16.mxu0 0
  %707 = vmatpush2.bf16.msra.mxu0 %v527
  %708 = vmatprep.subr.bf16.mxu0 0
  %709 = vmatpush2.bf16.msra.mxu0 %v526
  %710 = vmatprep.subr.bf16.mxu0 0
  %711 = vmatpush2.bf16.msra.mxu0 %v525
  %712 = vmatprep.subr.bf16.mxu0 0
  %713 = vmatpush2.bf16.msra.mxu0 %v524
  %714 = vmatprep.subr.bf16.mxu0 0
  %715 = vmatpush2.bf16.msra.mxu0 %v523
  %716 = vmatprep.subr.bf16.mxu0 0
  %717 = vmatpush2.bf16.msra.mxu0 %v522
  %718 = vmatprep.subr.bf16.mxu0 0
  %719 = vmatpush2.bf16.msra.mxu0 %v521
  %720 = vmatprep.subr.bf16.mxu0 0
  %721 = vmatpush2.bf16.msra.mxu0 %v520
  %722 = vmatprep.mubr.bf16.mxu0 %v213
  %723 = vmatmul.mubr.bf16.gmra.mxu0 %v212
  %v724 = vpop.f32.mrf.mxu0
  %v725 = vadd.f32 %v684, %v724
  %v726 = vpop.f32.mrf.mxu0
  %v727 = vpop.f32.mrf.mxu0
  %v728 = vadd.f32 %v687, %v727
  %v729 = vpop.f32.mrf.mxu0
  %730 = vdwg.mxu0
  %731 = vmatprep.subr.bf16.mxu0 0
  %732 = vmatpush1.bf16.msra.mxu0 %v535
  %733 = vmatprep.subr.bf16.mxu0 0
  %734 = vmatpush1.bf16.msra.mxu0 %v534
  %735 = vmatprep.subr.bf16.mxu0 0
  %736 = vmatpush1.bf16.msra.mxu0 %v533
  %737 = vmatprep.subr.bf16.mxu0 0
  %738 = vmatpush1.bf16.msra.mxu0 %v532
  %739 = vmatprep.subr.bf16.mxu0 0
  %740 = vmatpush1.bf16.msra.mxu0 %v531
  %741 = vmatprep.subr.bf16.mxu0 0
  %742 = vmatpush1.bf16.msra.mxu0 %v530
  %743 = vmatprep.subr.bf16.mxu0 0
  %744 = vmatpush1.bf16.msra.mxu0 %v529
  %745 = vmatprep.subr.bf16.mxu0 0
  %746 = vmatpush1.bf16.msra.mxu0 %v528
  %747 = vmatprep.subr.bf16.mxu0 0
  %748 = vmatpush2.bf16.msra.mxu0 %v543
  %749 = vmatprep.subr.bf16.mxu0 0
  %750 = vmatpush2.bf16.msra.mxu0 %v542
  %751 = vmatprep.subr.bf16.mxu0 0
  %752 = vmatpush2.bf16.msra.mxu0 %v541
  %753 = vmatprep.subr.bf16.mxu0 0
  %754 = vmatpush2.bf16.msra.mxu0 %v540
  %755 = vmatprep.subr.bf16.mxu0 0
  %756 = vmatpush2.bf16.msra.mxu0 %v539
  %757 = vmatprep.subr.bf16.mxu0 0
  %758 = vmatpush2.bf16.msra.mxu0 %v538
  %759 = vmatprep.subr.bf16.mxu0 0
  %760 = vmatpush2.bf16.msra.mxu0 %v537
  %761 = vmatprep.subr.bf16.mxu0 0
  %762 = vmatpush2.bf16.msra.mxu0 %v536
  %763 = vmatprep.mubr.bf16.mxu0 %v215
  %764 = vmatmul.mubr.bf16.gmra.mxu0 %v214
  %v765 = vpop.f32.mrf.mxu0
  %v766 = vadd.f32 %v725, %v765
  %v767 = vpop.f32.mrf.mxu0
  %v768 = vpop.f32.mrf.mxu0
  %v769 = vadd.f32 %v728, %v768
  %v770 = vpop.f32.mrf.mxu0
  %771 = vdwg.mxu0
  %v772 = vadd.f32 %v182, %v766
  %v773 = vadd.f32 %v183, %v769
  %774 = vst [vmem:[#allocation2] sm:$0xff] %v772
  %775 = vst [vmem:[#allocation2 + $0x8] sm:$0xff] %v773
  // Predicated region
  $region18: #{unet_forward.24} parent=0 // pred_check
    %p776 = pneg %p16
  $region19: #{unet_forward.24} parent=0 // pred_check_branch
    %778 = sbr.rel (%p776) target = $region21
  $region20: #{unet_forward.24} parent=0 // pred_region
    %v779 = vld [vmem:[#allocation2] sm:$0xff]
    %v780 = vld [vmem:[#allocation2 + $0x8] sm:$0xff]
    %v781 = vld [vmem:[%s2] sm:$0x1]
    %v783 = vlaneseq
    %v784 = vshrl.u32 %v783, 7
    %v785 = vsub.s32 0, %v784
    %v786 = vrot.slane %v781, %v785
    %v788 = vadd.f32 %v779, %v786
    %v789 = vadd.f32 %v780, %v786
    %v790 = vmax.f32 %v788, 0.0
    %v791 = vmax.f32 %v789, 0.0
    %v792 = vpack.c.bf16 %v791, %v790
    %v794 = vunpack.c.l.b16 %v792
    %v795 = vunpack.c.h.b16 %v792
    %v796 = vpack.c.b16 %v794, %v794
    %v797 = vpack.c.b16 %v795, %v795
    %vm800 = vcmask 519168
    %801 = vst.msk [vmem:[%s3] sm:$0xf] %vm800, %v796
    %802 = vst.msk [vmem:[%s3 + $0x4] sm:$0xf] %vm800, %v797
  $region21: #{unet_forward.24} parent=0 // pred_fallthru
    _
  // Predicated region
  $region22: #{unet_forward.24} parent=0 // pred_check
    _
  $region23: #{unet_forward.24} parent=0 // pred_check_branch
    %804 = sbr.rel (0) target = $region25
  $region24: #{unet_forward.24} parent=0 // pred_region
    _
  $region25: #{unet_forward.24} parent=0 // pred_fallthru
    _
  // Predicated region
  $region26: #{unet_forward.24} parent=0 // pred_check
    _
  $region27: #{unet_forward.24} parent=0 // pred_check_branch
    %806 = sbr.rel (0) target = $region29
  $region28: #{unet_forward.24} parent=0 // pred_region
    _
  $region29: #{unet_forward.24} parent=0 // pred_fallthru
    _

// kernel: unet_forward.28
$region0: #{unet_forward.28}
  #allocation0 [shape = 'u32[]', space=smem, size = 0x4, offset = 0x4, fixed_abs, tag = 'smem constant byte address 0x4 - core index']
  #allocation1 [shape = 'u32[144,128]{1,0:T(1,128)}', space=vmem, size = 0x12000, scoped, tag = 'internal scratch']
  %s0 = inlined_call_operand.vmem [shape: bf16[16,128], index: 0, kind: input, shape index: {}]
  %s1 = inlined_call_operand.vmem [shape: f32[1,128], index: 1, kind: input, shape index: {}]
  %s2 = inlined_call_operand.vmem [shape: f32[1,128], index: 2, kind: input, shape index: {}]
  %s3 = inlined_call_operand.vmem [shape: bf16[16,128], index: 3, kind: output, shape index: {}]
  %s4 = sld [smem:[#allocation0]]
  $region22: #{unet_forward.28} parent=0
    _
  %s6 = ssub.s32 1, %s4
  %s7 = scalar_select 0, %s6, %s4
  // Predicated region
  $region2: #{unet_forward.28} parent=0 // pred_check
    _
  $region3: #{unet_forward.28} parent=0 // pred_check_branch
    %9 = sbr.rel (0) target = $region5
  $region4: #{unet_forward.28} parent=0 // pred_region
    _
  $region5: #{unet_forward.28} parent=0 // pred_fallthru
    _
  // Predicated region
  $region6: #{unet_forward.28} parent=0 // pred_check
    _
  $region7: #{unet_forward.28} parent=0 // pred_check_branch
    %11 = sbr.rel (0) target = $region9
  $region8: #{unet_forward.28} parent=0 // pred_region
    _
  $region9: #{unet_forward.28} parent=0 // pred_fallthru
    _
  // Predicated region
  $region10: #{unet_forward.28} parent=0 // pred_check
    _
  $region11: #{unet_forward.28} parent=0 // pred_check_branch
    %13 = sbr.rel (0) target = $region13
  $region12: #{unet_forward.28} parent=0 // pred_region
    _
  $region13: #{unet_forward.28} parent=0 // pred_fallthru
    _
  %v14 = vld [vmem:[%s0] sm:$0xf]
  %v15 = vld [vmem:[%s0 + $0x4] sm:$0xf]
  %v16 = vunpack.c.l.bf16 %v14
  %v17 = vunpack.c.l.bf16 %v15
  %v18 = vld [vmem:[%s1] sm:$0x1]
  %v20 = vlaneseq
  %v21 = vshrl.u32 %v20, 7
  %v22 = vsub.s32 0, %v21
  %v23 = vrot.slane %v18, %v22
  %v25 = vsub.f32 %v16, %v23
  %v26 = vsub.f32 %v17, %v23
  %v27 = vld [vmem:[%s2] sm:$0x1]
  %v29 = vlaneseq
  %v30 = vshrl.u32 %v29, 7
  %v31 = vsub.s32 0, %v30
  %v32 = vrot.slane %v27, %v31
  %v34 = vmul.f32 %v25, %v32
  %v35 = vmul.f32 %v26, %v32
  %v36 = vpack.c.bf16 %v35, %v34
  %v38 = vunpack.c.l.b16 %v36
  %v39 = vunpack.c.h.b16 %v36
  %v40 = vpack.c.b16 %v38, %v38
  %v41 = vpack.c.b16 %v39, %v39
  %44 = vst [vmem:[%s3] sm:$0xf] %v40
  %45 = vst [vmem:[%s3 + $0x4] sm:$0xf] %v41
  // Predicated region
  $region14: #{unet_forward.28} parent=0 // pred_check
    _
  $region15: #{unet_forward.28} parent=0 // pred_check_branch
    %47 = sbr.rel (0) target = $region17
  $region16: #{unet_forward.28} parent=0 // pred_region
    _
  $region17: #{unet_forward.28} parent=0 // pred_fallthru
    _
  // Predicated region
  $region18: #{unet_forward.28} parent=0 // pred_check
    _
  $region19: #{unet_forward.28} parent=0 // pred_check_branch
    %49 = sbr.rel (0) target = $region21
  $region20: #{unet_forward.28} parent=0 // pred_region
    _
  $region21: #{unet_forward.28} parent=0 // pred_fallthru
    _

// kernel: unet_forward.27
$region0: #{unet_forward.27}
  #allocation0 [shape = 'u32[]', space=smem, size = 0x4, offset = 0x4, fixed_abs, tag = 'smem constant byte address 0x4 - core index']
  #allocation1 [shape = 'u32[144,128]{1,0:T(1,128)}', space=vmem, size = 0x12000, scoped, tag = 'internal scratch']
  #allocation2 [shape = 'f32[16,128]{1,0:T(8,128)}', space=vmem, size = 0x2000, scoped, tag = 'scratch operand']
  %s0 = inlined_call_operand.vmem [shape: bf16[16,1152], index: 0, kind: input, shape index: {}]
  %s1 = inlined_call_operand.vmem [shape: bf16[1152,128], index: 1, kind: input, shape index: {}]
  %s2 = inlined_call_operand.vmem [shape: f32[1,128], index: 2, kind: input, shape index: {}]
  %s3 = inlined_call_operand.vmem [shape: bf16[16,128], index: 3, kind: output, shape index: {0}]
  %s4 = inlined_call_operand.vmem [shape: f32[1,8,128], index: 4, kind: output, shape index: {1}]
  %s5 = inlined_call_operand.vmem [shape: f32[1,8,128], index: 5, kind: output, shape index: {2}]
  %6 = xla_tuple %s3, %s4, %s5
  %s7 = sld [smem:[#allocation0]]
  $region95: #{unet_forward.27} parent=0
    _
  %s9 = ssub.s32 1, %s7
  %s10 = scalar_select 0, %s9, %s7
  $region1: #{unet_forward.27} parent=0
    #allocation3 [shape = 'u8[24576]{0}', space=vmem, size = 0x6000, scoped, tag = 'input window, operand 0']
    loop: start=0, step=1, limit=5
    $region2: #{unet_forward.27} parent=1 // loop_pre_header
      _
    $region3: #{unet_forward.27} parent=1 // loop_header
      %s12 = sphi 0, %s16
      %p13 = scmp.ge.s32.totalorder %s12, 5
      %s19 = sphi 0, %s38
      %s20 = sphi 0, %s34
      %s21 = sphi 0, %s30
      %s22 = sphi 0, %s19
      %s23 = sphi 0, %s20
      %s24 = sphi 0, %s21
      %s25 = sphi 0, %s22
      %s26 = sphi 0, %s23
      %s27 = sphi 0, %s24
      %s43 = sphi 0, %s45
      %s46 = sphi 0, %s43
      %s47 = sphi 0, %s46
      %s63 = sphi 0, %s47
      %s69 = sphi 0, %s71
      %s72 = sphi 0, %s69
      %s73 = sphi 0, %s72
      %s89 = sphi 0, %s73
      %s95 = sphi 0, %s97
      %s98 = sphi 0, %s95
      %s99 = sphi 0, %s98
      %s115 = sphi 0, %s99
      %s123 = sphi 0, %s125
      %s126 = sphi 0, %s123
      %s127 = sphi 0, %s126
      %s143 = sphi 0, %s127
      %s151 = sphi 0, %s153
      %s154 = sphi 0, %s151
      %s155 = sphi 0, %s154
      %s171 = sphi 0, %s155
      %s179 = sphi 0, %s181
      %s182 = sphi 0, %s179
      %s183 = sphi 0, %s182
      %s199 = sphi 0, %s183
    $region4: #{unet_forward.27} parent=1 // loop_header_branch
      %15 = sbr.rel (%p13) target = $region8
    $region5: #{unet_forward.27} parent=1 // loop_body
      %s17 = ssub.s32 %s12, 1
      %s18 = ssub.s32 %s12, 2
      %s28 = sadd.s32 1, %s21
      %p29 = scmp.ge.s32.totalorder %s28, 3
      %s30 = scalar_select %p29, 0, %s28
      %s31 = sadd.s32 1, %s20
      %s32 = scalar_select %p29, %s31, %s20
      %p33 = scmp.ge.s32.totalorder %s32, 1
      %s34 = scalar_select %p33, 0, %s32
      %s35 = sadd.s32 1, %s19
      %s36 = scalar_select %p33, %s35, %s19
      %p37 = scmp.ge.s32.totalorder %s36, 1
      %s38 = scalar_select %p37, 0, %s36
      %s39 = ssub.s32 %s19, %s38
      %s40 = ssub.s32 %s21, %s30
      %s41 = sor.u32 %s39, %s40
      %p42 = scmp.eq.s32.totalorder %s41, 0
      %s44 = sadd.s32 %s43, 1
      %s45 = scalar_select %p42, %s43, %s44
      %p48 = pneg %p42
      %p49 = scmp.eq.s32.totalorder %s12, 2
      %p50 = por %p48, %p49
      %p51 = scmp.ne.s32.totalorder %s43, %s46
      %p52 = scmp.eq.s32.totalorder %s12, 0
      %p53 = por %p51, %p52
      %p54 = scmp.ne.s32.totalorder %s43, %s46
      %p55 = scmp.eq.s32.totalorder %s17, 2
      %p56 = por %p54, %p55
      %p57 = scmp.ne.s32.totalorder %s46, %s47
      %p58 = scmp.eq.s32.totalorder %s17, 0
      %p59 = por %p57, %p58
      %p60 = scmp.ne.s32.totalorder %s46, %s47
      %p61 = scmp.eq.s32.totalorder %s18, 2
      %p62 = por %p60, %p61
      %p64 = scmp.ne.s32.totalorder %s47, %s63
      %p65 = scmp.eq.s32.totalorder %s18, 0
      %p66 = por %p64, %p65
      %s67 = ssub.s32 %s20, %s34
      %p68 = scmp.eq.s32.totalorder %s67, 0
      %s70 = sadd.s32 %s69, 1
      %s71 = scalar_select %p68, %s69, %s70
      %p74 = pneg %p68
      %p75 = scmp.eq.s32.totalorder %s12, 2
      %p76 = por %p74, %p75
      %p77 = scmp.ne.s32.totalorder %s69, %s72
      %p78 = scmp.eq.s32.totalorder %s12, 0
      %p79 = por %p77, %p78
      %p80 = scmp.ne.s32.totalorder %s69, %s72
      %p81 = scmp.eq.s32.totalorder %s17, 2
      %p82 = por %p80, %p81
      %p83 = scmp.ne.s32.totalorder %s72, %s73
      %p84 = scmp.eq.s32.totalorder %s17, 0
      %p85 = por %p83, %p84
      %p86 = scmp.ne.s32.totalorder %s72, %s73
      %p87 = scmp.eq.s32.totalorder %s18, 2
      %p88 = por %p86, %p87
      %p90 = scmp.ne.s32.totalorder %s73, %s89
      %p91 = scmp.eq.s32.totalorder %s18, 0
      %p92 = por %p90, %p91
      %s93 = ssub.s32 %s20, %s34
      %p94 = scmp.eq.s32.totalorder %s93, 0
      %s96 = sadd.s32 %s95, 1
      %s97 = scalar_select %p94, %s95, %s96
      %p100 = pneg %p94
      %p101 = scmp.eq.s32.totalorder %s12, 2
      %p102 = por %p100, %p101
      %p103 = scmp.ne.s32.totalorder %s95, %s98
      %p104 = scmp.eq.s32.totalorder %s12, 0
      %p105 = por %p103, %p104
      %p106 = scmp.ne.s32.totalorder %s95, %s98
      %p107 = scmp.eq.s32.totalorder %s17, 2
      %p108 = por %p106, %p107
      %p109 = scmp.ne.s32.totalorder %s98, %s99
      %p110 = scmp.eq.s32.totalorder %s17, 0
      %p111 = por %p109, %p110
      %p112 = scmp.ne.s32.totalorder %s98, %s99
      %p113 = scmp.eq.s32.totalorder %s18, 2
      %p114 = por %p112, %p113
      %p116 = scmp.ne.s32.totalorder %s99, %s115
      %p117 = scmp.eq.s32.totalorder %s18, 0
      %p118 = por %p116, %p117
      %s119 = ssub.s32 %s19, %s38
      %s120 = ssub.s32 %s20, %s34
      %s121 = sor.u32 %s119, %s120
      %p122 = scmp.eq.s32.totalorder %s121, 0
      %s124 = sadd.s32 %s123, 1
      %s125 = scalar_select %p122, %s123, %s124
      %p128 = pneg %p122
      %p129 = scmp.eq.s32.totalorder %s12, 2
      %p130 = por %p128, %p129
      %p131 = scmp.ne.s32.totalorder %s123, %s126
      %p132 = scmp.eq.s32.totalorder %s12, 0
      %p133 = por %p131, %p132
      %p134 = scmp.ne.s32.totalorder %s123, %s126
      %p135 = scmp.eq.s32.totalorder %s17, 2
      %p136 = por %p134, %p135
      %p137 = scmp.ne.s32.totalorder %s126, %s127
      %p138 = scmp.eq.s32.totalorder %s17, 0
      %p139 = por %p137, %p138
      %p140 = scmp.ne.s32.totalorder %s126, %s127
      %p141 = scmp.eq.s32.totalorder %s18, 2
      %p142 = por %p140, %p141
      %p144 = scmp.ne.s32.totalorder %s127, %s143
      %p145 = scmp.eq.s32.totalorder %s18, 0
      %p146 = por %p144, %p145
      %s147 = ssub.s32 %s19, %s38
      %s148 = ssub.s32 %s20, %s34
      %s149 = sor.u32 %s147, %s148
      %p150 = scmp.eq.s32.totalorder %s149, 0
      %s152 = sadd.s32 %s151, 1
      %s153 = scalar_select %p150, %s151, %s152
      %p156 = pneg %p150
      %p157 = scmp.eq.s32.totalorder %s12, 2
      %p158 = por %p156, %p157
      %p159 = scmp.ne.s32.totalorder %s151, %s154
      %p160 = scmp.eq.s32.totalorder %s12, 0
      %p161 = por %p159, %p160
      %p162 = scmp.ne.s32.totalorder %s151, %s154
      %p163 = scmp.eq.s32.totalorder %s17, 2
      %p164 = por %p162, %p163
      %p165 = scmp.ne.s32.totalorder %s154, %s155
      %p166 = scmp.eq.s32.totalorder %s17, 0
      %p167 = por %p165, %p166
      %p168 = scmp.ne.s32.totalorder %s154, %s155
      %p169 = scmp.eq.s32.totalorder %s18, 2
      %p170 = por %p168, %p169
      %p172 = scmp.ne.s32.totalorder %s155, %s171
      %p173 = scmp.eq.s32.totalorder %s18, 0
      %p174 = por %p172, %p173
      %s175 = ssub.s32 %s19, %s38
      %s176 = ssub.s32 %s20, %s34
      %s177 = sor.u32 %s175, %s176
      %p178 = scmp.eq.s32.totalorder %s177, 0
      %s180 = sadd.s32 %s179, 1
      %s181 = scalar_select %p178, %s179, %s180
      %p184 = pneg %p178
      %p185 = scmp.eq.s32.totalorder %s12, 2
      %p186 = por %p184, %p185
      %p187 = scmp.ne.s32.totalorder %s179, %s182
      %p188 = scmp.eq.s32.totalorder %s12, 0
      %p189 = por %p187, %p188
      %p190 = scmp.ne.s32.totalorder %s179, %s182
      %p191 = scmp.eq.s32.totalorder %s17, 2
      %p192 = por %p190, %p191
      %p193 = scmp.ne.s32.totalorder %s182, %s183
      %p194 = scmp.eq.s32.totalorder %s17, 0
      %p195 = por %p193, %p194
      %p196 = scmp.ne.s32.totalorder %s182, %s183
      %p197 = scmp.eq.s32.totalorder %s18, 2
      %p198 = por %p196, %p197
      %p200 = scmp.ne.s32.totalorder %s183, %s199
      %p201 = scmp.eq.s32.totalorder %s18, 0
      %p202 = por %p200, %p201
      %p203 = scmp.le.s32.totalorder 1, %s12
      %p204 = scmp.lt.s32.totalorder %s12, 4
      %p205 = pnand %p203, %p204
      %p206 = pneg %p205
      // Predicated region
      $region9: #{unet_forward.27} parent=5 // pred_check
        _
      $region10: #{unet_forward.27} parent=5 // pred_check_branch
        %208 = sbr.rel (%p205) target = $region12
      $region11: #{unet_forward.27} parent=5 // pred_region
        %s209 = ssub.s32 %s12, 1
        // Predicated region
        $region13: #{unet_forward.27} parent=11 // pred_check
          %p210 = pneg %p85
        $region14: #{unet_forward.27} parent=11 // pred_check_branch
          %212 = sbr.rel (%p210) target = $region16
        $region15: #{unet_forward.27} parent=11 // pred_region
          %p213 = scmp.lt.s32.totalorder %s23, 0
          %s214 = scalar_select %p213, %s23, 0
          %s215 = smul.addr %s214, 4
          %s216 = scalar_lea.vmem %s1, %s215
        $region16: #{unet_forward.27} parent=11 // pred_fallthru
          _
        // Predicated region
        $region17: #{unet_forward.27} parent=11 // pred_check
          %p217 = pneg %p111
        $region18: #{unet_forward.27} parent=11 // pred_check_branch
          %219 = sbr.rel (%p217) target = $region20
        $region19: #{unet_forward.27} parent=11 // pred_region
          %p220 = scmp.lt.s32.totalorder %s23, 0
          %s221 = scalar_select %p220, %s23, 0
          %s222 = scalar_lea.vmem %s2, %s221
        $region20: #{unet_forward.27} parent=11 // pred_fallthru
          _
      $region12: #{unet_forward.27} parent=5 // pred_fallthru
        _
      %p223 = scmp.lt.s32.totalorder %s12, 3
      // Predicated region
      $region21: #{unet_forward.27} parent=5 // pred_check
        %p224 = pneg %p223
      $region22: #{unet_forward.27} parent=5 // pred_check_branch
        %226 = sbr.rel (%p224) target = $region24
      $region23: #{unet_forward.27} parent=5 // pred_region
        // Predicated region
        $region25: #{unet_forward.27} parent=23 // pred_check
          %p227 = pneg %p53
        $region26: #{unet_forward.27} parent=23 // pred_check_branch
          %229 = sbr.rel (%p227) target = $region28
        $region27: #{unet_forward.27} parent=23 // pred_region
          %s230 = sand.u32 %s43, 1
          %s231 = sand.u32 %s43, 1
          %s232 = smul.addr %s231, 24
          %s233 = scalar_lea.vmem [#allocation3], %s232
          %s234 = smul.u32 2, %s19
          %s235 = smul.u32 3, %s21
          %s236 = smul.addr %s234, 9
          %s237 = sadd.s32 %s235, %s236
          %s238 = smul.addr %s237, 4
          %s239 = scalar_lea.vmem %s0, %s238
          // Predicated region
          $region29: #{unet_forward.27} parent=27 // pred_check
            _
          $region30: #{unet_forward.27} parent=27 // pred_check_branch
            %241 = sbr.rel (0) target = $region32
          $region31: #{unet_forward.27} parent=27 // pred_region
            // Predicated region
            $region33: #{unet_forward.27} parent=31 // pred_check
              _
            $region34: #{unet_forward.27} parent=31 // pred_check_branch
              %243 = sbr.rel (0) target = $region36
            $region35: #{unet_forward.27} parent=31 // pred_region
              %s244 = scalar_lea.vmem %s239, 8
              %s245 = scalar_lea.vmem %s233, 8 [#allocation3]
              loop: start=0, step=1, limit=1
              $region37: #{unet_forward.27} parent=35 // loop_pre_header
                _
              $region38: #{unet_forward.27} parent=35 // loop_header
                %s247 = sphi 0, %s251
                %p248 = scmp.ge.s32.totalorder %s247, 1
                %s252 = sphi %s239, %s239
                %s253 = sphi %s233, %s233
              $region39: #{unet_forward.27} parent=35 // loop_header_branch
                %250 = sbr.rel (%p248) target = $region43
              $region40: #{unet_forward.27} parent=35 // loop_body
                %v254 = vld [vmem:[%s252] sm:$0xff]
                %255 = vst [vmem:[%s253] sm:$0xff] %v254
                %v256 = vld [vmem:[%s252 + $0x24] sm:$0xff]
                %257 = vst [vmem:[%s253 + $0xc] sm:$0xff] %v256
              $region41: #{unet_forward.27} parent=35 // loop_footer
                %s251 = sadd.s32 1, %s247
              $region42: #{unet_forward.27} parent=35 // loop_footer_branch
                %246 = sbr.rel target = $region38
              $region43: #{unet_forward.27} parent=35 // loop_exit
                _
              %s259 = ssub.s32 16, 1
              loop: start=0, step=1, limit=1
              $region44: #{unet_forward.27} parent=35 // loop_pre_header
                _
              $region45: #{unet_forward.27} parent=35 // loop_header
                %s261 = sphi 0, %s265
                %p262 = scmp.ge.s32.totalorder %s261, 1
                %s266 = sphi %s244, %s244
                %s267 = sphi %s245, %s245
              $region46: #{unet_forward.27} parent=35 // loop_header_branch
                %264 = sbr.rel (%p262) target = $region50
              $region47: #{unet_forward.27} parent=35 // loop_body
                %v268 = vld [vmem:[%s266] sm:%s259]
                %269 = vst [vmem:[%s267] sm:%s259] %v268
                %v270 = vld [vmem:[%s266 + $0x24] sm:%s259]
                %271 = vst [vmem:[%s267 + $0xc] sm:%s259] %v270
              $region48: #{unet_forward.27} parent=35 // loop_footer
                %s265 = sadd.s32 1, %s261
              $region49: #{unet_forward.27} parent=35 // loop_footer_branch
                %260 = sbr.rel target = $region45
              $region50: #{unet_forward.27} parent=35 // loop_exit
                _
            $region36: #{unet_forward.27} parent=31 // pred_fallthru
              _
          $region32: #{unet_forward.27} parent=27 // pred_fallthru
            _
          %272 = vnop
        $region28: #{unet_forward.27} parent=23 // pred_fallthru
          _
      $region24: #{unet_forward.27} parent=5 // pred_fallthru
        _
      %p273 = scmp.le.s32.totalorder 1, %s12
      %p274 = scmp.lt.s32.totalorder %s12, 4
      %p275 = pnand %p273, %p274
      %p276 = pneg %p275
      // Predicated region
      $region51: #{unet_forward.27} parent=5 // pred_check
        _
      $region52: #{unet_forward.27} parent=5 // pred_check_branch
        %278 = sbr.rel (%p275) target = $region54
      $region53: #{unet_forward.27} parent=5 // pred_region
        %s279 = ssub.s32 %s12, 1
        %s280 = sand.u32 %s46, 1
        %s281 = sand.u32 %s46, 1
        %s282 = smul.addr %s281, 24
        %s283 = scalar_lea.vmem [#allocation3], %s282
        // Predicated region
        $region55: #{unet_forward.27} parent=53 // pred_check
          %p284 = pneg %p59
        $region56: #{unet_forward.27} parent=53 // pred_check_branch
          %286 = sbr.rel (%p284) target = $region58
        $region57: #{unet_forward.27} parent=53 // pred_region
          _
        $region58: #{unet_forward.27} parent=53 // pred_fallthru
          _
        %s287 = sand.u32 %s46, 1
        %s288 = sand.u32 %s46, 1
        %s289 = smul.addr %s288, 24
        %s290 = scalar_lea.vmem [#allocation3], %s289
        %p291 = pneg %p59
        %p292 = pneg %p56
        %p293 = scmp.lt.s32.totalorder %s23, 0
        %s294 = scalar_select %p293, %s23, 0
        %s295 = smul.addr %s294, 4
        %s296 = scalar_lea.vmem %s1, %s295
        %p297 = pneg %p85
        %p298 = pneg %p82
        %p299 = scmp.lt.s32.totalorder %s23, 0
        %s300 = scalar_select %p299, %s23, 0
        %s301 = scalar_lea.vmem %s2, %s300
        %p302 = pneg %p111
        %p303 = pneg %p108
        %p304 = pneg %p139
        %p305 = pneg %p136
        %s306 = smul.u32 2, %s22
        %p307 = scmp.lt.s32.totalorder %s306, 1
        %s308 = scalar_select %p307, %s306, 1
        %p309 = scmp.lt.s32.totalorder %s23, 0
        %s310 = scalar_select %p309, %s23, 0
        %s311 = sadd.s32 %s310, %s308
        %s312 = smul.addr %s311, 4
        %s313 = scalar_lea.vmem %s3, %s312
        %p314 = pneg %p167
        %p315 = pneg %p164
        %p316 = scmp.lt.s32.totalorder %s22, 0
        %s317 = scalar_select %p316, %s22, 0
        %p318 = scmp.lt.s32.totalorder %s23, 0
        %s319 = scalar_select %p318, %s23, 0
        %s320 = sadd.s32 %s319, %s317
        %s321 = smul.addr %s320, 8
        %s322 = scalar_lea.vmem %s4, %s321
        %p323 = pneg %p195
        %p324 = pneg %p192
        %p325 = scmp.lt.s32.totalorder %s22, 0
        %s326 = scalar_select %p325, %s22, 0
        %p327 = scmp.lt.s32.totalorder %s23, 0
        %s328 = scalar_select %p327, %s23, 0
        %s329 = sadd.s32 %s328, %s326
        %s330 = smul.addr %s329, 8
        %s331 = scalar_lea.vmem %s5, %s330
        %s332 = smul.u32 2, %s22
        %s333 = smul.u32 3, %s24
        %p334 = scmp.lt.s32.totalorder %s23, 0
        %s335 = scalar_select %p334, %s23, 0
        %s336 = smul.addr %s335, 4
        %s337 = scalar_lea.vmem %s1, %s336
        %p338 = scmp.lt.s32.totalorder %s23, 0
        %s339 = scalar_select %p338, %s23, 0
        %s340 = scalar_lea.vmem %s2, %s339
        %s341 = smul.u32 2, %s22
        %p342 = scmp.lt.s32.totalorder %s341, 1
        %s343 = scalar_select %p342, %s341, 1
        %p344 = scmp.lt.s32.totalorder %s23, 0
        %s345 = scalar_select %p344, %s23, 0
        %s346 = sadd.s32 %s345, %s343
        %s347 = smul.addr %s346, 4
        %s348 = scalar_lea.vmem %s3, %s347
        %s349 = smul.u32 2, %s22
        %p350 = scmp.lt.s32.totalorder %s22, 0
        %s351 = scalar_select %p350, %s22, 0
        %p352 = scmp.lt.s32.totalorder %s23, 0
        %s353 = scalar_select %p352, %s23, 0
        %s354 = sadd.s32 %s353, %s351
        %s355 = smul.addr %s354, 8
        %s356 = scalar_lea.vmem %s4, %s355
        %p357 = scmp.lt.s32.totalorder %s22, 0
        %s358 = scalar_select %p357, %s22, 0
        %p359 = scmp.lt.s32.totalorder %s23, 0
        %s360 = scalar_select %p359, %s23, 0
        %s361 = sadd.s32 %s360, %s358
        %s362 = smul.addr %s361, 8
        %s363 = scalar_lea.vmem %s5, %s362
        %p365 = scmp.eq.s32.totalorder %s24, 0
        // Predicated region
        $region59: #{unet_forward.27} parent=53 // pred_check
          %p366 = pneg %p365
        $region60: #{unet_forward.27} parent=53 // pred_check_branch
          %368 = sbr.rel (%p366) target = $region62
        $region61: #{unet_forward.27} parent=53 // pred_region
          %369 = vst [vmem:[#allocation2] sm:$0xff] 0.0
          %370 = vst [vmem:[#allocation2 + $0x8] sm:$0xff] 0.0
        $region62: #{unet_forward.27} parent=53 // pred_fallthru
          _
        %v371 = vld [vmem:[%s283] sm:$0xff]
        %v372 = vld [vmem:[%s283 + $0x8] sm:$0xf]
        %v373 = vld [vmem:[%s283 + $0xc] sm:$0xff]
        %v374 = vld [vmem:[%s283 + $0x14] sm:$0xf]
        %v375 = vmax.bf16 %v371, 0
        %v376 = vmax.bf16 %v372, 0
        %v377 = vmax.bf16 %v373, 0
        %v378 = vmax.bf16 %v374, 0
        %s379 = smul.u32 %s24, 384
        %s380 = sshra.s32 %s379, 3
        %s381 = sand.u32 %s379, 7
        %s382 = smul.addr %s380, 4
        %s383 = scalar_lea.vmem %s337, %s382
        %v384 = vld [vmem:[%s383] sm:$0xf]
        %v385 = vld [vmem:[%s383 + $0x4] sm:$0xf]
        %v386 = vld [vmem:[%s383 + $0x8] sm:$0xf]
        %v387 = vld [vmem:[%s383 + $0xc] sm:$0xf]
        %v388 = vld [vmem:[%s383 + $0x10] sm:$0xf]
        %v389 = vld [vmem:[%s383 + $0x14] sm:$0xf]
        %v390 = vld [vmem:[%s383 + $0x18] sm:$0xf]
        %v391 = vld [vmem:[%s383 + $0x1c] sm:$0xf]
        %v392 = vld [vmem:[%s383 + $0x20] sm:$0xf]
        %v393 = vld [vmem:[%s383 + $0x24] sm:$0xf]
        %v394 = vld [vmem:[%s383 + $0x28] sm:$0xf]
        %v395 = vld [vmem:[%s383 + $0x2c] sm:$0xf]
        %v396 = vld [vmem:[%s383 + $0x30] sm:$0xf]
        %v397 = vld [vmem:[%s383 + $0x34] sm:$0xf]
        %v398 = vld [vmem:[%s383 + $0x38] sm:$0xf]
        %v399 = vld [vmem:[%s383 + $0x3c] sm:$0xf]
        %v400 = vld [vmem:[%s383 + $0x40] sm:$0xf]
        %v401 = vld [vmem:[%s383 + $0x44] sm:$0xf]
        %v402 = vld [vmem:[%s383 + $0x48] sm:$0xf]
        %v403 = vld [vmem:[%s383 + $0x4c] sm:$0xf]
        %v404 = vld [vmem:[%s383 + $0x50] sm:$0xf]
        %v405 = vld [vmem:[%s383 + $0x54] sm:$0xf]
        %v406 = vld [vmem:[%s383 + $0x58] sm:$0xf]
        %v407 = vld [vmem:[%s383 + $0x5c] sm:$0xf]
        %v408 = vld [vmem:[%s383 + $0x60] sm:$0xf]
        %v409 = vld [vmem:[%s383 + $0x64] sm:$0xf]
        %v410 = vld [vmem:[%s383 + $0x68] sm:$0xf]
        %v411 = vld [vmem:[%s383 + $0x6c] sm:$0xf]
        %v412 = vld [vmem:[%s383 + $0x70] sm:$0xf]
        %v413 = vld [vmem:[%s383 + $0x74] sm:$0xf]
        %v414 = vld [vmem:[%s383 + $0x78] sm:$0xf]
        %v415 = vld [vmem:[%s383 + $0x7c] sm:$0xf]
        %v416 = vld [vmem:[%s383 + $0x80] sm:$0xf]
        %v417 = vld [vmem:[%s383 + $0x84] sm:$0xf]
        %v418 = vld [vmem:[%s383 + $0x88] sm:$0xf]
        %v419 = vld [vmem:[%s383 + $0x8c] sm:$0xf]
        %v420 = vld [vmem:[%s383 + $0x90] sm:$0xf]
        %v421 = vld [vmem:[%s383 + $0x94] sm:$0xf]
        %v422 = vld [vmem:[%s383 + $0x98] sm:$0xf]
        %v423 = vld [vmem:[%s383 + $0x9c] sm:$0xf]
        %v424 = vld [vmem:[%s383 + $0xa0] sm:$0xf]
        %v425 = vld [vmem:[%s383 + $0xa4] sm:$0xf]
        %v426 = vld [vmem:[%s383 + $0xa8] sm:$0xf]
        %v427 = vld [vmem:[%s383 + $0xac] sm:$0xf]
        %v428 = vld [vmem:[%s383 + $0xb0] sm:$0xf]
        %v429 = vld [vmem:[%s383 + $0xb4] sm:$0xf]
        %v430 = vld [vmem:[%s383 + $0xb8] sm:$0xf]
        %v431 = vld [vmem:[%s383 + $0xbc] sm:$0xf]
        %v432 = vld [vmem:[#allocation2] sm:$0xff]
        %v433 = vld [vmem:[#allocation2 + $0x8] sm:$0xff]
        %v438 = vunpack.c.l.b16 %v375
        %v439 = vunpack.c.h.b16 %v375
        %v440 = vunpack.c.l.b16 %v376
        %v441 = vunpack.c.l.b16 %v377
        %v442 = vunpack.c.h.b16 %v377
        %v443 = vunpack.c.l.b16 %v378
        %v444 = vpack.c.b16 %v441, %v438
        %v445 = vpack.c.b16 %v442, %v439
        %v446 = vpack.c.b16 %v443, %v440
        %v498 = vunpack.c.l.b16 %v384
        %v499 = vunpack.c.l.b16 %v385
        %v500 = vunpack.c.l.b16 %v386
        %v501 = vunpack.c.l.b16 %v387
        %v502 = vunpack.c.l.b16 %v388
        %v503 = vunpack.c.l.b16 %v389
        %v504 = vunpack.c.l.b16 %v390
        %v505 = vunpack.c.l.b16 %v391
        %v506 = vunpack.c.l.b16 %v392
        %v507 = vunpack.c.l.b16 %v393
        %v508 = vunpack.c.l.b16 %v394
        %v509 = vunpack.c.l.b16 %v395
        %v510 = vunpack.c.l.b16 %v396
        %v511 = vunpack.c.l.b16 %v397
        %v512 = vunpack.c.l.b16 %v398
        %v513 = vunpack.c.l.b16 %v399
        %v514 = vunpack.c.l.b16 %v400
        %v515 = vunpack.c.l.b16 %v401
        %v516 = vunpack.c.l.b16 %v402
        %v517 = vunpack.c.l.b16 %v403
        %v518 = vunpack.c.l.b16 %v404
        %v519 = vunpack.c.l.b16 %v405
        %v520 = vunpack.c.l.b16 %v406
        %v521 = vunpack.c.l.b16 %v407
        %v522 = vunpack.c.l.b16 %v408
        %v523 = vunpack.c.l.b16 %v409
        %v524 = vunpack.c.l.b16 %v410
        %v525 = vunpack.c.l.b16 %v411
        %v526 = vunpack.c.l.b16 %v412
        %v527 = vunpack.c.l.b16 %v413
        %v528 = vunpack.c.l.b16 %v414
        %v529 = vunpack.c.l.b16 %v415
        %v530 = vunpack.c.l.b16 %v416
        %v531 = vunpack.c.l.b16 %v417
        %v532 = vunpack.c.l.b16 %v418
        %v533 = vunpack.c.l.b16 %v419
        %v534 = vunpack.c.l.b16 %v420
        %v535 = vunpack.c.l.b16 %v421
        %v536 = vunpack.c.l.b16 %v422
        %v537 = vunpack.c.l.b16 %v423
        %v538 = vunpack.c.l.b16 %v424
        %v539 = vunpack.c.l.b16 %v425
        %v540 = vunpack.c.l.b16 %v426
        %v541 = vunpack.c.l.b16 %v427
        %v542 = vunpack.c.l.b16 %v428
        %v543 = vunpack.c.l.b16 %v429
        %v544 = vunpack.c.l.b16 %v430
        %v545 = vunpack.c.l.b16 %v431
        %v546 = vpack.c.b16 %v499, %v498
        %v547 = vpack.c.b16 %v501, %v500
        %v548 = vpack.c.b16 %v503, %v502
        %v549 = vpack.c.b16 %v505, %v504
        %v550 = vpack.c.b16 %v507, %v506
        %v551 = vpack.c.b16 %v509, %v508
        %v552 = vpack.c.b16 %v511, %v510
        %v553 = vpack.c.b16 %v513, %v512
        %v554 = vpack.c.b16 %v515, %v514
        %v555 = vpack.c.b16 %v517, %v516
        %v556 = vpack.c.b16 %v519, %v518
        %v557 = vpack.c.b16 %v521, %v520
        %v558 = vpack.c.b16 %v523, %v522
        %v559 = vpack.c.b16 %v525, %v524
        %v560 = vpack.c.b16 %v527, %v526
        %v561 = vpack.c.b16 %v529, %v528
        %v562 = vpack.c.b16 %v531, %v530
        %v563 = vpack.c.b16 %v533, %v532
        %v564 = vpack.c.b16 %v535, %v534
        %v565 = vpack.c.b16 %v537, %v536
        %v566 = vpack.c.b16 %v539, %v538
        %v567 = vpack.c.b16 %v541, %v540
        %v568 = vpack.c.b16 %v543, %v542
        %v569 = vpack.c.b16 %v545, %v544
        %594 = vmatprep.subr.bf16.mxu0 0
        %595 = vmatpush1.bf16.msra.mxu0 %v553
        %596 = vmatprep.subr.bf16.mxu0 0
        %597 = vmatpush1.bf16.msra.mxu0 %v552
        %598 = vmatprep.subr.bf16.mxu0 0
        %599 = vmatpush1.bf16.msra.mxu0 %v551
        %600 = vmatprep.subr.bf16.mxu0 0
        %601 = vmatpush1.bf16.msra.mxu0 %v550
        %602 = vmatprep.subr.bf16.mxu0 0
        %603 = vmatpush1.bf16.msra.mxu0 %v549
        %604 = vmatprep.subr.bf16.mxu0 0
        %605 = vmatpush1.bf16.msra.mxu0 %v548
        %606 = vmatprep.subr.bf16.mxu0 0
        %607 = vmatpush1.bf16.msra.mxu0 %v547
        %608 = vmatprep.subr.bf16.mxu0 0
        %609 = vmatpush1.bf16.msra.mxu0 %v546
        %610 = vmatprep.subr.bf16.mxu0 0
        %611 = vmatpush2.bf16.msra.mxu0 %v561
        %612 = vmatprep.subr.bf16.mxu0 0
        %613 = vmatpush2.bf16.msra.mxu0 %v560
        %614 = vmatprep.subr.bf16.mxu0 0
        %615 = vmatpush2.bf16.msra.mxu0 %v559
        %616 = vmatprep.subr.bf16.mxu0 0
        %617 = vmatpush2.bf16.msra.mxu0 %v558
        %618 = vmatprep.subr.bf16.mxu0 0
        %619 = vmatpush2.bf16.msra.mxu0 %v557
        %620 = vmatprep.subr.bf16.mxu0 0
        %621 = vmatpush2.bf16.msra.mxu0 %v556
        %622 = vmatprep.subr.bf16.mxu0 0
        %623 = vmatpush2.bf16.msra.mxu0 %v555
        %624 = vmatprep.subr.bf16.mxu0 0
        %625 = vmatpush2.bf16.msra.mxu0 %v554
        %626 = vmatprep.mubr.bf16.mxu0 %v445
        %627 = vmatmul.mubr.bf16.gmra.mxu0 %v444
        %v628 = vpop.f32.mrf.mxu0
        %v629 = vadd.f32 0.0, %v628
        %v630 = vpop.f32.mrf.mxu0
        %v631 = vpop.f32.mrf.mxu0
        %v632 = vadd.f32 0.0, %v631
        %v633 = vpop.f32.mrf.mxu0
        %634 = vdwg.mxu0
        %635 = vmatprep.subr.bf16.mxu0 0
        %636 = vmatpush1.bf16.msra.mxu0 %v569
        %637 = vmatprep.subr.bf16.mxu0 0
        %638 = vmatpush1.bf16.msra.mxu0 %v568
        %639 = vmatprep.subr.bf16.mxu0 0
        %640 = vmatpush1.bf16.msra.mxu0 %v567
        %641 = vmatprep.subr.bf16.mxu0 0
        %642 = vmatpush1.bf16.msra.mxu0 %v566
        %643 = vmatprep.subr.bf16.mxu0 0
        %644 = vmatpush1.bf16.msra.mxu0 %v565
        %645 = vmatprep.subr.bf16.mxu0 0
        %646 = vmatpush1.bf16.msra.mxu0 %v564
        %647 = vmatprep.subr.bf16.mxu0 0
        %648 = vmatpush1.bf16.msra.mxu0 %v563
        %649 = vmatprep.subr.bf16.mxu0 0
        %650 = vmatpush1.bf16.msra.mxu0 %v562
        %651 = vmatprep.subr.bf16.mxu0 0
        %652 = vmatpush2.bf16.msra.mxu0 0
        %653 = vmatprep.subr.bf16.mxu0 0
        %654 = vmatpush2.bf16.msra.mxu0 0
        %655 = vmatprep.subr.bf16.mxu0 0
        %656 = vmatpush2.bf16.msra.mxu0 0
        %657 = vmatprep.subr.bf16.mxu0 0
        %658 = vmatpush2.bf16.msra.mxu0 0
        %659 = vmatprep.subr.bf16.mxu0 0
        %660 = vmatpush2.bf16.msra.mxu0 0
        %661 = vmatprep.subr.bf16.mxu0 0
        %662 = vmatpush2.bf16.msra.mxu0 0
        %663 = vmatprep.subr.bf16.mxu0 0
        %664 = vmatpush2.bf16.msra.mxu0 0
        %665 = vmatprep.subr.bf16.mxu0 0
        %666 = vmatpush2.bf16.msra.mxu0 0
        %667 = vmatprep.mubr.bf16.mxu0 0
        %668 = vmatmul.mubr.bf16.gmra.mxu0 %v446
        %v669 = vpop.f32.mrf.mxu0
        %v670 = vadd.f32 %v629, %v669
        %v671 = vpop.f32.mrf.mxu0
        %v672 = vpop.f32.mrf.mxu0
        %v673 = vadd.f32 %v632, %v672
        %v674 = vpop.f32.mrf.mxu0
        %675 = vdwg.mxu0
        %v676 = vadd.f32 %v432, %v670
        %v677 = vadd.f32 %v433, %v673
        %678 = vst [vmem:[#allocation2] sm:$0xff] %v676
        %679 = vst [vmem:[#allocation2 + $0x8] sm:$0xff] %v677
        %p680 = scmp.eq.s32.totalorder %s24, 2
        // Predicated region
        $region63: #{unet_forward.27} parent=53 // pred_check
          %p681 = pneg %p680
        $region64: #{unet_forward.27} parent=53 // pred_check_branch
          %683 = sbr.rel (%p681) target = $region66
        $region65: #{unet_forward.27} parent=53 // pred_region
          %v684 = vld [vmem:[#allocation2] sm:$0xff]
          %v685 = vld [vmem:[#allocation2 + $0x8] sm:$0xff]
          %v686 = vld [vmem:[%s340] sm:$0x1]
          %v688 = vlaneseq
          %v689 = vshrl.u32 %v688, 7
          %v690 = vsub.s32 0, %v689
          %v691 = vrot.slane %v686, %v690
          %v693 = vadd.f32 %v684, %v691
          %v694 = vadd.f32 %v685, %v691
          %v695 = vadd.f32 %v693, %v694
          %v696 = vrot.slane %v695, 4
          %v697 = vadd.f32 %v695, %v696
          %v698 = vrot.slane %v697, 2
          %v699 = vadd.f32 %v697, %v698
          %v700 = vrot.slane %v699, 1
          %v701 = vadd.f32 %v699, %v700
          %v702 = vmul.f32 %v693, %v693
          %v703 = vmul.f32 %v694, %v694
          %v704 = vadd.f32 %v702, %v703
          %v705 = vrot.slane %v704, 4
          %v706 = vadd.f32 %v704, %v705
          %v707 = vrot.slane %v706, 2
          %v708 = vadd.f32 %v706, %v707
          %v709 = vrot.slane %v708, 1
          %v710 = vadd.f32 %v708, %v709
          %711 = vst [vmem:[%s356] sm:$0xff] %v701
          %712 = vst [vmem:[%s363] sm:$0xff] %v710
          %v713 = vpack.c.bf16 %v694, %v693
          %v715 = vunpack.c.l.b16 %v713
          %v716 = vunpack.c.h.b16 %v713
          %v717 = vpack.c.b16 %v715, %v715
          %v718 = vpack.c.b16 %v716, %v716
          %721 = vst [vmem:[%s348] sm:$0xf] %v717
          %722 = vst [vmem:[%s348 + $0x4] sm:$0xf] %v718
        $region66: #{unet_forward.27} parent=53 // pred_fallthru
          _
        %s723 = smul.u32 2, %s22
        %p724 = scmp.lt.s32.totalorder %s723, 1
        %s725 = scalar_select %p724, %s723, 1
        %p726 = scmp.lt.s32.totalorder %s23, 0
        %s727 = scalar_select %p726, %s23, 0
        %s728 = sadd.s32 %s727, %s725
        %s729 = smul.addr %s728, 4
        %s730 = scalar_lea.vmem %s3, %s729
        %p731 = scmp.lt.s32.totalorder %s22, 0
        %s732 = scalar_select %p731, %s22, 0
        %p733 = scmp.lt.s32.totalorder %s23, 0
        %s734 = scalar_select %p733, %s23, 0
        %s735 = sadd.s32 %s734, %s732
        %s736 = smul.addr %s735, 8
        %s737 = scalar_lea.vmem %s4, %s736
        %p738 = scmp.lt.s32.totalorder %s22, 0
        %s739 = scalar_select %p738, %s22, 0
        %p740 = scmp.lt.s32.totalorder %s23, 0
        %s741 = scalar_select %p740, %s23, 0
        %s742 = sadd.s32 %s741, %s739
        %s743 = smul.addr %s742, 8
        %s744 = scalar_lea.vmem %s5, %s743
        // Predicated region
        $region67: #{unet_forward.27} parent=53 // pred_check
          %p745 = pneg %p136
        $region68: #{unet_forward.27} parent=53 // pred_check_branch
          %747 = sbr.rel (%p745) target = $region70
        $region69: #{unet_forward.27} parent=53 // pred_region
          %s748 = smul.u32 2, %s22
        $region70: #{unet_forward.27} parent=53 // pred_fallthru
          _
        // Predicated region
        $region71: #{unet_forward.27} parent=53 // pred_check
          %p749 = pneg %p164
        $region72: #{unet_forward.27} parent=53 // pred_check_branch
          %751 = sbr.rel (%p749) target = $region74
        $region73: #{unet_forward.27} parent=53 // pred_region
          _
        $region74: #{unet_forward.27} parent=53 // pred_fallthru
          _
        // Predicated region
        $region75: #{unet_forward.27} parent=53 // pred_check
          %p752 = pneg %p192
        $region76: #{unet_forward.27} parent=53 // pred_check_branch
          %754 = sbr.rel (%p752) target = $region78
        $region77: #{unet_forward.27} parent=53 // pred_region
          _
        $region78: #{unet_forward.27} parent=53 // pred_fallthru
          _
        // Predicated region
        $region79: #{unet_forward.27} parent=53 // pred_check
          %p755 = pneg %p136
        $region80: #{unet_forward.27} parent=53 // pred_check_branch
          %757 = sbr.rel (%p755) target = $region82
        $region81: #{unet_forward.27} parent=53 // pred_region
          %s758 = smul.u32 2, %s22
          %p759 = scmp.lt.s32.totalorder %s758, 1
          %s760 = scalar_select %p759, %s758, 1
          %p761 = scmp.lt.s32.totalorder %s23, 0
          %s762 = scalar_select %p761, %s23, 0
          %s763 = sadd.s32 %s762, %s760
          %s764 = smul.addr %s763, 4
          %s765 = scalar_lea.vmem %s3, %s764
        $region82: #{unet_forward.27} parent=53 // pred_fallthru
          _
        // Predicated region
        $region83: #{unet_forward.27} parent=53 // pred_check
          %p766 = pneg %p164
        $region84: #{unet_forward.27} parent=53 // pred_check_branch
          %768 = sbr.rel (%p766) target = $region86
        $region85: #{unet_forward.27} parent=53 // pred_region
          %p769 = scmp.lt.s32.totalorder %s22, 0
          %s770 = scalar_select %p769, %s22, 0
          %p771 = scmp.lt.s32.totalorder %s23, 0
          %s772 = scalar_select %p771, %s23, 0
          %s773 = sadd.s32 %s772, %s770
          %s774 = smul.addr %s773, 8
          %s775 = scalar_lea.vmem %s4, %s774
        $region86: #{unet_forward.27} parent=53 // pred_fallthru
          _
        // Predicated region
        $region87: #{unet_forward.27} parent=53 // pred_check
          %p776 = pneg %p192
        $region88: #{unet_forward.27} parent=53 // pred_check_branch
          %778 = sbr.rel (%p776) target = $region90
        $region89: #{unet_forward.27} parent=53 // pred_region
          %p779 = scmp.lt.s32.totalorder %s22, 0
          %s780 = scalar_select %p779, %s22, 0
          %p781 = scmp.lt.s32.totalorder %s23, 0
          %s782 = scalar_select %p781, %s23, 0
          %s783 = sadd.s32 %s782, %s780
          %s784 = smul.addr %s783, 8
          %s785 = scalar_lea.vmem %s5, %s784
        $region90: #{unet_forward.27} parent=53 // pred_fallthru
          _
      $region54: #{unet_forward.27} parent=5 // pred_fallthru
        _
      %p786 = scmp.le.s32.totalorder 2, %s12
      // Predicated region
      $region91: #{unet_forward.27} parent=5 // pred_check
        %p787 = pneg %p786
      $region92: #{unet_forward.27} parent=5 // pred_check_branch
        %789 = sbr.rel (%p787) target = $region94
      $region93: #{unet_forward.27} parent=5 // pred_region
        %s790 = ssub.s32 %s12, 2
      $region94: #{unet_forward.27} parent=5 // pred_fallthru
        _
    $region6: #{unet_forward.27} parent=1 // loop_footer
      %s16 = sadd.s32 1, %s12
    $region7: #{unet_forward.27} parent=1 // loop_footer_branch
      %11 = sbr.rel target = $region3
    $region8: #{unet_forward.27} parent=1 // loop_exit
      _

// kernel: tile.67
$region0: #{tile.67}
  #allocation0 [shape = 's32[1]{0}', space=sflag, size = 0x4, scoped, tag = 'scoped memory for tile.67']
  %s0 = inlined_call_operand.vmem [shape: f32[16], index: 0, kind: input, shape index: {}]
  %s1 = inlined_call_operand.vmem [shape: f32[4,16], index: 1, kind: output, shape index: {}]
  // Predicated region
  $region2: #{tile.67} parent=0 // pred_check
    _
  $region3: #{tile.67} parent=0 // pred_check_branch
    %3 = sbr.rel (0) target = $region5
  $region4: #{tile.67} parent=0 // pred_region
    _
  $region5: #{tile.67} parent=0 // pred_fallthru
    _
  %v4 = vld [vmem:[%s0] ss:$0 sm:$0xff]
  %5 = vst [vmem:[%s1] sm:$0xf] %v4

// kernel: tile.69
$region0: #{tile.69}
  %s0 = inlined_call_operand.vmem [shape: f32[4,16], index: 0, kind: input, shape index: {}]
  %s1 = inlined_call_operand.vmem [shape: f32[1,64], index: 1, kind: output, shape index: {}]
  $region1: #{tile.69} parent=0
    #allocation0 [shape = 'u8[4096]{0}', space=vmem, size = 0x1000, scoped, tag = 'scoped mem for output reshape']
    #allocation1 [shape = 'u8[4096]{0}', space=vmem, size = 0x1000, scoped, tag = 'scoped mem for input reshape']
    %s3 = sshll.u32 1, 4
    %s4 = ssub.s32 %s3, 1
    %v5 = vld [vmem:[%s0] sm:%s4]
    %6 = vst [vmem:[#allocation1] sm:%s4] %v5
    %v7 = vld [vmem:[#allocation1] sm:$0x1]
    %vm8 = vcmask 130048
    %9 = vst.msk [vmem:[#allocation0] sm:$0x1] %vm8, %v7
    %s10 = scalar_lea.vmem [#allocation1], 3
    %v11 = vld [vmem:[%s10] sm:$0x1]
    %12 = vrot.lane.b32.xlu0 %v11, 48
    %v13 = vpop.permute.xlu0 %12
    %vm14 = vcmask 523648
    %15 = vst.msk [vmem:[#allocation0] sm:$0x1] %vm14, %v13
    %s16 = scalar_lea.vmem [#allocation1], 2
    %v17 = vld [vmem:[%s16] sm:$0x1]
    %18 = vrot.lane.b32.xlu0 %v17, 32
    %v19 = vpop.permute.xlu0 %18
    %vm20 = vcmask 392448
    %21 = vst.msk [vmem:[#allocation0] sm:$0x1] %vm20, %v19
    %s22 = scalar_lea.vmem [#allocation1], 1
    %v23 = vld [vmem:[%s22] sm:$0x1]
    %24 = vrot.lane.b32.xlu0 %v23, 16
    %v25 = vpop.permute.xlu0 %24
    %vm26 = vcmask 261248
    %27 = vst.msk [vmem:[#allocation0] sm:$0x1] %vm26, %v25
    %s29 = sshll.u32 1, 1
    %s30 = ssub.s32 %s29, 1
    %v32 = vld [vmem:[#allocation0] sm:%s30]
    %s33 = sshll.u32 1, 1
    %s34 = ssub.s32 %s33, 1
    %35 = vst [vmem:[%s1] sm:%s34] %v32

// kernel: unet_forward.30
$region0: #{unet_forward.30}
  #allocation0 [shape = 'u32[]', space=smem, size = 0x4, offset = 0x4, fixed_abs, tag = 'smem constant byte address 0x4 - core index']
  #allocation1 [shape = 'u32[144,128]{1,0:T(1,128)}', space=vmem, size = 0x12000, scoped, tag = 'internal scratch']
  %s0 = inlined_call_operand.vmem [shape: bf16[32,64], index: 0, kind: input, shape index: {}]
  %s1 = inlined_call_operand.vmem [shape: f32[1,64], index: 1, kind: input, shape index: {}]
  %s2 = inlined_call_operand.vmem [shape: f32[1,64], index: 2, kind: input, shape index: {}]
  %s3 = inlined_call_operand.vmem [shape: bf16[32,64], index: 3, kind: output, shape index: {}]
  %s4 = sld [smem:[#allocation0]]
  $region22: #{unet_forward.30} parent=0
    _
  %s6 = ssub.s32 1, %s4
  %s7 = scalar_select 0, %s6, %s4
  // Predicated region
  $region2: #{unet_forward.30} parent=0 // pred_check
    _
  $region3: #{unet_forward.30} parent=0 // pred_check_branch
    %9 = sbr.rel (0) target = $region5
  $region4: #{unet_forward.30} parent=0 // pred_region
    _
  $region5: #{unet_forward.30} parent=0 // pred_fallthru
    _
  // Predicated region
  $region6: #{unet_forward.30} parent=0 // pred_check
    _
  $region7: #{unet_forward.30} parent=0 // pred_check_branch
    %11 = sbr.rel (0) target = $region9
  $region8: #{unet_forward.30} parent=0 // pred_region
    _
  $region9: #{unet_forward.30} parent=0 // pred_fallthru
    _
  // Predicated region
  $region10: #{unet_forward.30} parent=0 // pred_check
    _
  $region11: #{unet_forward.30} parent=0 // pred_check_branch
    %13 = sbr.rel (0) target = $region13
  $region12: #{unet_forward.30} parent=0 // pred_region
    _
  $region13: #{unet_forward.30} parent=0 // pred_fallthru
    _
  %v14 = vld [vmem:[%s0] sm:$0xf]
  %v15 = vld [vmem:[%s0 + $0x4] sm:$0xf]
  %v16 = vld [vmem:[%s0 + $0x8] sm:$0xf]
  %v17 = vld [vmem:[%s0 + $0xc] sm:$0xf]
  %v18 = vunpack.c.l.bf16 %v14
  %v19 = vunpack.c.l.bf16 %v15
  %v20 = vunpack.c.l.bf16 %v16
  %v21 = vunpack.c.l.bf16 %v17
  %v22 = vld [vmem:[%s1] sm:$0x1]
  %v24 = vlaneseq
  %v25 = vshrl.u32 %v24, 7
  %v26 = vsub.s32 0, %v25
  %v27 = vrot.slane %v22, %v26
  %v29 = vsub.f32 %v18, %v27
  %v30 = vsub.f32 %v19, %v27
  %v31 = vsub.f32 %v20, %v27
  %v32 = vsub.f32 %v21, %v27
  %v33 = vld [vmem:[%s2] sm:$0x1]
  %v35 = vlaneseq
  %v36 = vshrl.u32 %v35, 7
  %v37 = vsub.s32 0, %v36
  %v38 = vrot.slane %v33, %v37
  %v40 = vmul.f32 %v29, %v38
  %v41 = vmul.f32 %v30, %v38
  %v42 = vmul.f32 %v31, %v38
  %v43 = vmul.f32 %v32, %v38
  %v44 = vpack.c.bf16 %v41, %v40
  %v45 = vpack.c.bf16 %v43, %v42
  %v48 = vunpack.c.l.b16 %v44
  %v49 = vunpack.c.h.b16 %v44
  %v50 = vunpack.c.l.b16 %v45
  %v51 = vunpack.c.h.b16 %v45
  %v52 = vpack.c.b16 %v48, %v48
  %v53 = vpack.c.b16 %v49, %v49
  %v54 = vpack.c.b16 %v50, %v50
  %v55 = vpack.c.b16 %v51, %v51
  %vm60 = vcmask 519168
  %61 = vst.msk [vmem:[%s3] sm:$0xf] %vm60, %v52
  %62 = vst.msk [vmem:[%s3 + $0x4] sm:$0xf] %vm60, %v53
  %63 = vst.msk [vmem:[%s3 + $0x8] sm:$0xf] %vm60, %v54
  %64 = vst.msk [vmem:[%s3 + $0xc] sm:$0xf] %vm60, %v55
  // Predicated region
  $region14: #{unet_forward.30} parent=0 // pred_check
    _
  $region15: #{unet_forward.30} parent=0 // pred_check_branch
    %66 = sbr.rel (0) target = $region17
  $region16: #{unet_forward.30} parent=0 // pred_region
    _
  $region17: #{unet_forward.30} parent=0 // pred_fallthru
    _
  // Predicated region
  $region18: #{unet_forward.30} parent=0 // pred_check
    _
  $region19: #{unet_forward.30} parent=0 // pred_check_branch
    %68 = sbr.rel (0) target = $region21
  $region20: #{unet_forward.30} parent=0 // pred_region
    _
  $region21: #{unet_forward.30} parent=0 // pred_fallthru
    _

// kernel: unet_forward.29
$region0: #{unet_forward.29}
  #allocation0 [shape = 'u32[]', space=smem, size = 0x4, offset = 0x4, fixed_abs, tag = 'smem constant byte address 0x4 - core index']
  #allocation1 [shape = 'u32[144,128]{1,0:T(1,128)}', space=vmem, size = 0x12000, scoped, tag = 'internal scratch']
  #allocation2 [shape = 'f32[32,128]{1,0:T(8,128)}', space=vmem, size = 0x4000, scoped, tag = 'scratch operand']
  %s0 = inlined_call_operand.vmem [shape: bf16[32,576], index: 0, kind: input, shape index: {}]
  %s1 = inlined_call_operand.vmem [shape: bf16[576,128], index: 1, kind: input, shape index: {}]
  %s2 = inlined_call_operand.vmem [shape: f32[1,128], index: 2, kind: input, shape index: {}]
  %s3 = inlined_call_operand.vmem [shape: bf16[32,64], index: 3, kind: output, shape index: {0}]
  %s4 = inlined_call_operand.vmem [shape: f32[1,8,64], index: 4, kind: output, shape index: {1}]
  %s5 = inlined_call_operand.vmem [shape: f32[1,8,64], index: 5, kind: output, shape index: {2}]
  %6 = xla_tuple %s3, %s4, %s5
  %s7 = sld [smem:[#allocation0]]
  $region46: #{unet_forward.29} parent=0
    _
  %s9 = ssub.s32 1, %s7
  %s10 = scalar_select 0, %s9, %s7
  // Predicated region
  $region2: #{unet_forward.29} parent=0 // pred_check
    _
  $region3: #{unet_forward.29} parent=0 // pred_check_branch
    %12 = sbr.rel (0) target = $region5
  $region4: #{unet_forward.29} parent=0 // pred_region
    _
  $region5: #{unet_forward.29} parent=0 // pred_fallthru
    _
  // Predicated region
  $region6: #{unet_forward.29} parent=0 // pred_check
    _
  $region7: #{unet_forward.29} parent=0 // pred_check_branch
    %14 = sbr.rel (0) target = $region9
  $region8: #{unet_forward.29} parent=0 // pred_region
    _
  $region9: #{unet_forward.29} parent=0 // pred_fallthru
    _
  // Predicated region
  $region10: #{unet_forward.29} parent=0 // pred_check
    _
  $region11: #{unet_forward.29} parent=0 // pred_check_branch
    %16 = sbr.rel (0) target = $region13
  $region12: #{unet_forward.29} parent=0 // pred_region
    _
  $region13: #{unet_forward.29} parent=0 // pred_fallthru
    _
  %p18 = scmp.eq.s32.totalorder 0, 0
  // Predicated region
  $region14: #{unet_forward.29} parent=0 // pred_check
    %p19 = pneg %p18
  $region15: #{unet_forward.29} parent=0 // pred_check_branch
    %21 = sbr.rel (%p19) target = $region17
  $region16: #{unet_forward.29} parent=0 // pred_region
    %22 = vst [vmem:[#allocation2] sm:$0xff] 0.0
    %23 = vst [vmem:[#allocation2 + $0x8] sm:$0xff] 0.0
    %24 = vst [vmem:[#allocation2 + $0x10] sm:$0xff] 0.0
    %25 = vst [vmem:[#allocation2 + $0x18] sm:$0xff] 0.0
  $region17: #{unet_forward.29} parent=0 // pred_fallthru
    _
  %v26 = vld [vmem:[%s0] sm:$0xff]
  %v27 = vld [vmem:[%s0 + $0x8] sm:$0xff]
  %v28 = vld [vmem:[%s0 + $0x10] sm:$0xf]
  %v29 = vld [vmem:[%s0 + $0x14] sm:$0xff]
  %v30 = vld [vmem:[%s0 + $0x1c] sm:$0xff]
  %v31 = vld [vmem:[%s0 + $0x24] sm:$0xf]
  %v32 = vld [vmem:[%s0 + $0x28] sm:$0xff]
  %v33 = vld [vmem:[%s0 + $0x30] sm:$0xff]
  %v34 = vld [vmem:[%s0 + $0x38] sm:$0xf]
  %v35 = vld [vmem:[%s0 + $0x3c] sm:$0xff]
  %v36 = vld [vmem:[%s0 + $0x44] sm:$0xff]
  %v37 = vld [vmem:[%s0 + $0x4c] sm:$0xf]
  %v38 = vmax.bf16 %v26, 0
  %v39 = vmax.bf16 %v27, 0
  %v40 = vmax.bf16 %v28, 0
  %v41 = vmax.bf16 %v29, 0
  %v42 = vmax.bf16 %v30, 0
  %v43 = vmax.bf16 %v31, 0
  %v44 = vmax.bf16 %v32, 0
  %v45 = vmax.bf16 %v33, 0
  %v46 = vmax.bf16 %v34, 0
  %v47 = vmax.bf16 %v35, 0
  %v48 = vmax.bf16 %v36, 0
  %v49 = vmax.bf16 %v37, 0
  %v50 = vld [vmem:[%s1] sm:$0xf]
  %v51 = vld [vmem:[%s1 + $0x4] sm:$0xf]
  %v52 = vld [vmem:[%s1 + $0x8] sm:$0xf]
  %v53 = vld [vmem:[%s1 + $0xc] sm:$0xf]
  %v54 = vld [vmem:[%s1 + $0x10] sm:$0xf]
  %v55 = vld [vmem:[%s1 + $0x14] sm:$0xf]
  %v56 = vld [vmem:[%s1 + $0x18] sm:$0xf]
  %v57 = vld [vmem:[%s1 + $0x1c] sm:$0xf]
  %v58 = vld [vmem:[%s1 + $0x20] sm:$0xf]
  %v59 = vld [vmem:[%s1 + $0x24] sm:$0xf]
  %v60 = vld [vmem:[%s1 + $0x28] sm:$0xf]
  %v61 = vld [vmem:[%s1 + $0x2c] sm:$0xf]
  %v62 = vld [vmem:[%s1 + $0x30] sm:$0xf]
  %v63 = vld [vmem:[%s1 + $0x34] sm:$0xf]
  %v64 = vld [vmem:[%s1 + $0x38] sm:$0xf]
  %v65 = vld [vmem:[%s1 + $0x3c] sm:$0xf]
  %v66 = vld [vmem:[%s1 + $0x40] sm:$0xf]
  %v67 = vld [vmem:[%s1 + $0x44] sm:$0xf]
  %v68 = vld [vmem:[%s1 + $0x48] sm:$0xf]
  %v69 = vld [vmem:[%s1 + $0x4c] sm:$0xf]
  %v70 = vld [vmem:[%s1 + $0x50] sm:$0xf]
  %v71 = vld [vmem:[%s1 + $0x54] sm:$0xf]
  %v72 = vld [vmem:[%s1 + $0x58] sm:$0xf]
  %v73 = vld [vmem:[%s1 + $0x5c] sm:$0xf]
  %v74 = vld [vmem:[%s1 + $0x60] sm:$0xf]
  %v75 = vld [vmem:[%s1 + $0x64] sm:$0xf]
  %v76 = vld [vmem:[%s1 + $0x68] sm:$0xf]
  %v77 = vld [vmem:[%s1 + $0x6c] sm:$0xf]
  %v78 = vld [vmem:[%s1 + $0x70] sm:$0xf]
  %v79 = vld [vmem:[%s1 + $0x74] sm:$0xf]
  %v80 = vld [vmem:[%s1 + $0x78] sm:$0xf]
  %v81 = vld [vmem:[%s1 + $0x7c] sm:$0xf]
  %v82 = vld [vmem:[%s1 + $0x80] sm:$0xf]
  %v83 = vld [vmem:[%s1 + $0x84] sm:$0xf]
  %v84 = vld [vmem:[%s1 + $0x88] sm:$0xf]
  %v85 = vld [vmem:[%s1 + $0x8c] sm:$0xf]
  %v86 = vld [vmem:[%s1 + $0x90] sm:$0xf]
  %v87 = vld [vmem:[%s1 + $0x94] sm:$0xf]
  %v88 = vld [vmem:[%s1 + $0x98] sm:$0xf]
  %v89 = vld [vmem:[%s1 + $0x9c] sm:$0xf]
  %v90 = vld [vmem:[%s1 + $0xa0] sm:$0xf]
  %v91 = vld [vmem:[%s1 + $0xa4] sm:$0xf]
  %v92 = vld [vmem:[%s1 + $0xa8] sm:$0xf]
  %v93 = vld [vmem:[%s1 + $0xac] sm:$0xf]
  %v94 = vld [vmem:[%s1 + $0xb0] sm:$0xf]
  %v95 = vld [vmem:[%s1 + $0xb4] sm:$0xf]
  %v96 = vld [vmem:[%s1 + $0xb8] sm:$0xf]
  %v97 = vld [vmem:[%s1 + $0xbc] sm:$0xf]
  %v98 = vld [vmem:[%s1 + $0xc0] sm:$0xf]
  %v99 = vld [vmem:[%s1 + $0xc4] sm:$0xf]
  %v100 = vld [vmem:[%s1 + $0xc8] sm:$0xf]
  %v101 = vld [vmem:[%s1 + $0xcc] sm:$0xf]
  %v102 = vld [vmem:[%s1 + $0xd0] sm:$0xf]
  %v103 = vld [vmem:[%s1 + $0xd4] sm:$0xf]
  %v104 = vld [vmem:[%s1 + $0xd8] sm:$0xf]
  %v105 = vld [vmem:[%s1 + $0xdc] sm:$0xf]
  %v106 = vld [vmem:[%s1 + $0xe0] sm:$0xf]
  %v107 = vld [vmem:[%s1 + $0xe4] sm:$0xf]
  %v108 = vld [vmem:[%s1 + $0xe8] sm:$0xf]
  %v109 = vld [vmem:[%s1 + $0xec] sm:$0xf]
  %v110 = vld [vmem:[%s1 + $0xf0] sm:$0xf]
  %v111 = vld [vmem:[%s1 + $0xf4] sm:$0xf]
  %v112 = vld [vmem:[%s1 + $0xf8] sm:$0xf]
  %v113 = vld [vmem:[%s1 + $0xfc] sm:$0xf]
  %v114 = vld [vmem:[%s1 + $0x100] sm:$0xf]
  %v115 = vld [vmem:[%s1 + $0x104] sm:$0xf]
  %v116 = vld [vmem:[%s1 + $0x108] sm:$0xf]
  %v117 = vld [vmem:[%s1 + $0x10c] sm:$0xf]
  %v118 = vld [vmem:[%s1 + $0x110] sm:$0xf]
  %v119 = vld [vmem:[%s1 + $0x114] sm:$0xf]
  %v120 = vld [vmem:[%s1 + $0x118] sm:$0xf]
  %v121 = vld [vmem:[%s1 + $0x11c] sm:$0xf]
  %v122 = vld [vmem:[#allocation2] sm:$0xff]
  %v123 = vld [vmem:[#allocation2 + $0x8] sm:$0xff]
  %v124 = vld [vmem:[#allocation2 + $0x10] sm:$0xff]
  %v125 = vld [vmem:[#allocation2 + $0x18] sm:$0xff]
  %v138 = vunpack.c.l.b16 %v38
  %v139 = vunpack.c.h.b16 %v38
  %v140 = vunpack.c.l.b16 %v39
  %v141 = vunpack.c.h.b16 %v39
  %v142 = vunpack.c.l.b16 %v40
  %v143 = vunpack.c.l.b16 %v41
  %v144 = vunpack.c.h.b16 %v41
  %v145 = vunpack.c.l.b16 %v42
  %v146 = vunpack.c.h.b16 %v42
  %v147 = vunpack.c.l.b16 %v43
  %v148 = vunpack.c.l.b16 %v44
  %v149 = vunpack.c.h.b16 %v44
  %v150 = vunpack.c.l.b16 %v45
  %v151 = vunpack.c.h.b16 %v45
  %v152 = vunpack.c.l.b16 %v46
  %v153 = vunpack.c.l.b16 %v47
  %v154 = vunpack.c.h.b16 %v47
  %v155 = vunpack.c.l.b16 %v48
  %v156 = vunpack.c.h.b16 %v48
  %v157 = vunpack.c.l.b16 %v49
  %v158 = vpack.c.b16 %v143, %v138
  %v159 = vpack.c.b16 %v144, %v139
  %v160 = vpack.c.b16 %v145, %v140
  %v161 = vpack.c.b16 %v146, %v141
  %v162 = vpack.c.b16 %v147, %v142
  %v163 = vpack.c.b16 %v153, %v148
  %v164 = vpack.c.b16 %v154, %v149
  %v165 = vpack.c.b16 %v155, %v150
  %v166 = vpack.c.b16 %v156, %v151
  %v167 = vpack.c.b16 %v157, %v152
  %v248 = vunpack.c.l.b16 %v50
  %v249 = vunpack.c.l.b16 %v51
  %v250 = vunpack.c.l.b16 %v52
  %v251 = vunpack.c.l.b16 %v53
  %v252 = vunpack.c.l.b16 %v54
  %v253 = vunpack.c.l.b16 %v55
  %v254 = vunpack.c.l.b16 %v56
  %v255 = vunpack.c.l.b16 %v57
  %v256 = vunpack.c.l.b16 %v58
  %v257 = vunpack.c.l.b16 %v59
  %v258 = vunpack.c.l.b16 %v60
  %v259 = vunpack.c.l.b16 %v61
  %v260 = vunpack.c.l.b16 %v62
  %v261 = vunpack.c.l.b16 %v63
  %v262 = vunpack.c.l.b16 %v64
  %v263 = vunpack.c.l.b16 %v65
  %v264 = vunpack.c.l.b16 %v66
  %v265 = vunpack.c.l.b16 %v67
  %v266 = vunpack.c.l.b16 %v68
  %v267 = vunpack.c.l.b16 %v69
  %v268 = vunpack.c.l.b16 %v70
  %v269 = vunpack.c.l.b16 %v71
  %v270 = vunpack.c.l.b16 %v72
  %v271 = vunpack.c.l.b16 %v73
  %v272 = vunpack.c.l.b16 %v74
  %v273 = vunpack.c.l.b16 %v75
  %v274 = vunpack.c.l.b16 %v76
  %v275 = vunpack.c.l.b16 %v77
  %v276 = vunpack.c.l.b16 %v78
  %v277 = vunpack.c.l.b16 %v79
  %v278 = vunpack.c.l.b16 %v80
  %v279 = vunpack.c.l.b16 %v81
  %v280 = vunpack.c.l.b16 %v82
  %v281 = vunpack.c.l.b16 %v83
  %v282 = vunpack.c.l.b16 %v84
  %v283 = vunpack.c.l.b16 %v85
  %v284 = vunpack.c.l.b16 %v86
  %v285 = vunpack.c.l.b16 %v87
  %v286 = vunpack.c.l.b16 %v88
  %v287 = vunpack.c.l.b16 %v89
  %v288 = vunpack.c.l.b16 %v90
  %v289 = vunpack.c.l.b16 %v91
  %v290 = vunpack.c.l.b16 %v92
  %v291 = vunpack.c.l.b16 %v93
  %v292 = vunpack.c.l.b16 %v94
  %v293 = vunpack.c.l.b16 %v95
  %v294 = vunpack.c.l.b16 %v96
  %v295 = vunpack.c.l.b16 %v97
  %v296 = vunpack.c.l.b16 %v98
  %v297 = vunpack.c.l.b16 %v99
  %v298 = vunpack.c.l.b16 %v100
  %v299 = vunpack.c.l.b16 %v101
  %v300 = vunpack.c.l.b16 %v102
  %v301 = vunpack.c.l.b16 %v103
  %v302 = vunpack.c.l.b16 %v104
  %v303 = vunpack.c.l.b16 %v105
  %v304 = vunpack.c.l.b16 %v106
  %v305 = vunpack.c.l.b16 %v107
  %v306 = vunpack.c.l.b16 %v108
  %v307 = vunpack.c.l.b16 %v109
  %v308 = vunpack.c.l.b16 %v110
  %v309 = vunpack.c.l.b16 %v111
  %v310 = vunpack.c.l.b16 %v112
  %v311 = vunpack.c.l.b16 %v113
  %v312 = vunpack.c.l.b16 %v114
  %v313 = vunpack.c.l.b16 %v115
  %v314 = vunpack.c.l.b16 %v116
  %v315 = vunpack.c.l.b16 %v117
  %v316 = vunpack.c.l.b16 %v118
  %v317 = vunpack.c.l.b16 %v119
  %v318 = vunpack.c.l.b16 %v120
  %v319 = vunpack.c.l.b16 %v121
  %v320 = vpack.c.b16 %v249, %v248
  %v321 = vpack.c.b16 %v251, %v250
  %v322 = vpack.c.b16 %v253, %v252
  %v323 = vpack.c.b16 %v255, %v254
  %v324 = vpack.c.b16 %v257, %v256
  %v325 = vpack.c.b16 %v259, %v258
  %v326 = vpack.c.b16 %v261, %v260
  %v327 = vpack.c.b16 %v263, %v262
  %v328 = vpack.c.b16 %v265, %v264
  %v329 = vpack.c.b16 %v267, %v266
  %v330 = vpack.c.b16 %v269, %v268
  %v331 = vpack.c.b16 %v271, %v270
  %v332 = vpack.c.b16 %v273, %v272
  %v333 = vpack.c.b16 %v275, %v274
  %v334 = vpack.c.b16 %v277, %v276
  %v335 = vpack.c.b16 %v279, %v278
  %v336 = vpack.c.b16 %v281, %v280
  %v337 = vpack.c.b16 %v283, %v282
  %v338 = vpack.c.b16 %v285, %v284
  %v339 = vpack.c.b16 %v287, %v286
  %v340 = vpack.c.b16 %v289, %v288
  %v341 = vpack.c.b16 %v291, %v290
  %v342 = vpack.c.b16 %v293, %v292
  %v343 = vpack.c.b16 %v295, %v294
  %v344 = vpack.c.b16 %v297, %v296
  %v345 = vpack.c.b16 %v299, %v298
  %v346 = vpack.c.b16 %v301, %v300
  %v347 = vpack.c.b16 %v303, %v302
  %v348 = vpack.c.b16 %v305, %v304
  %v349 = vpack.c.b16 %v307, %v306
  %v350 = vpack.c.b16 %v309, %v308
  %v351 = vpack.c.b16 %v311, %v310
  %v352 = vpack.c.b16 %v313, %v312
  %v353 = vpack.c.b16 %v315, %v314
  %v354 = vpack.c.b16 %v317, %v316
  %v355 = vpack.c.b16 %v319, %v318
  %vm392 = vcmask 523264
  %v394 = vsel %vm392, %v162, 0
  %v397 = vsel %vm392, %v167, 0
  %399 = vmatprep.subr.bf16.mxu0 0
  %400 = vmatpush1.bf16.msra.mxu0 %v327
  %401 = vmatprep.subr.bf16.mxu0 0
  %402 = vmatpush1.bf16.msra.mxu0 %v326
  %403 = vmatprep.subr.bf16.mxu0 0
  %404 = vmatpush1.bf16.msra.mxu0 %v325
  %405 = vmatprep.subr.bf16.mxu0 0
  %406 = vmatpush1.bf16.msra.mxu0 %v324
  %407 = vmatprep.subr.bf16.mxu0 0
  %408 = vmatpush1.bf16.msra.mxu0 %v323
  %409 = vmatprep.subr.bf16.mxu0 0
  %410 = vmatpush1.bf16.msra.mxu0 %v322
  %411 = vmatprep.subr.bf16.mxu0 0
  %412 = vmatpush1.bf16.msra.mxu0 %v321
  %413 = vmatprep.subr.bf16.mxu0 0
  %414 = vmatpush1.bf16.msra.mxu0 %v320
  %415 = vmatprep.subr.bf16.mxu0 0
  %416 = vmatpush2.bf16.msra.mxu0 %v335
  %417 = vmatprep.subr.bf16.mxu0 0
  %418 = vmatpush2.bf16.msra.mxu0 %v334
  %419 = vmatprep.subr.bf16.mxu0 0
  %420 = vmatpush2.bf16.msra.mxu0 %v333
  %421 = vmatprep.subr.bf16.mxu0 0
  %422 = vmatpush2.bf16.msra.mxu0 %v332
  %423 = vmatprep.subr.bf16.mxu0 0
  %424 = vmatpush2.bf16.msra.mxu0 %v331
  %425 = vmatprep.subr.bf16.mxu0 0
  %426 = vmatpush2.bf16.msra.mxu0 %v330
  %427 = vmatprep.subr.bf16.mxu0 0
  %428 = vmatpush2.bf16.msra.mxu0 %v329
  %429 = vmatprep.subr.bf16.mxu0 0
  %430 = vmatpush2.bf16.msra.mxu0 %v328
  %431 = vmatprep.mubr.bf16.mxu0 %v159
  %432 = vmatmul.mubr.bf16.gmra.mxu0 %v158
  %v433 = vpop.f32.mrf.mxu0
  %v434 = vadd.f32 0.0, %v433
  %v435 = vpop.f32.mrf.mxu0
  %v436 = vpop.f32.mrf.mxu0
  %v437 = vadd.f32 0.0, %v436
  %v438 = vpop.f32.mrf.mxu0
  %439 = vmatprep.mubr.bf16.mxu0 %v164
  %440 = vmatmul.mubr.bf16.gmra.mxu0 %v163
  %v441 = vpop.f32.mrf.mxu0
  %v442 = vadd.f32 0.0, %v441
  %v443 = vpop.f32.mrf.mxu0
  %v444 = vpop.f32.mrf.mxu0
  %v445 = vadd.f32 0.0, %v444
  %v446 = vpop.f32.mrf.mxu0
  %447 = vdwg.mxu0
  %448 = vmatprep.subr.bf16.mxu0 0
  %449 = vmatpush1.bf16.msra.mxu0 %v343
  %450 = vmatprep.subr.bf16.mxu0 0
  %451 = vmatpush1.bf16.msra.mxu0 %v342
  %452 = vmatprep.subr.bf16.mxu0 0
  %453 = vmatpush1.bf16.msra.mxu0 %v341
  %454 = vmatprep.subr.bf16.mxu0 0
  %455 = vmatpush1.bf16.msra.mxu0 %v340
  %456 = vmatprep.subr.bf16.mxu0 0
  %457 = vmatpush1.bf16.msra.mxu0 %v339
  %458 = vmatprep.subr.bf16.mxu0 0
  %459 = vmatpush1.bf16.msra.mxu0 %v338
  %460 = vmatprep.subr.bf16.mxu0 0
  %461 = vmatpush1.bf16.msra.mxu0 %v337
  %462 = vmatprep.subr.bf16.mxu0 0
  %463 = vmatpush1.bf16.msra.mxu0 %v336
  %464 = vmatprep.subr.bf16.mxu0 0
  %465 = vmatpush2.bf16.msra.mxu0 %v351
  %466 = vmatprep.subr.bf16.mxu0 0
  %467 = vmatpush2.bf16.msra.mxu0 %v350
  %468 = vmatprep.subr.bf16.mxu0 0
  %469 = vmatpush2.bf16.msra.mxu0 %v349
  %470 = vmatprep.subr.bf16.mxu0 0
  %471 = vmatpush2.bf16.msra.mxu0 %v348
  %472 = vmatprep.subr.bf16.mxu0 0
  %473 = vmatpush2.bf16.msra.mxu0 %v347
  %474 = vmatprep.subr.bf16.mxu0 0
  %475 = vmatpush2.bf16.msra.mxu0 %v346
  %476 = vmatprep.subr.bf16.mxu0 0
  %477 = vmatpush2.bf16.msra.mxu0 %v345
  %478 = vmatprep.subr.bf16.mxu0 0
  %479 = vmatpush2.bf16.msra.mxu0 %v344
  %480 = vmatprep.mubr.bf16.mxu0 %v161
  %481 = vmatmul.mubr.bf16.gmra.mxu0 %v160
  %v482 = vpop.f32.mrf.mxu0
  %v483 = vadd.f32 %v434, %v482
  %v484 = vpop.f32.mrf.mxu0
  %v485 = vpop.f32.mrf.mxu0
  %v486 = vadd.f32 %v437, %v485
  %v487 = vpop.f32.mrf.mxu0
  %488 = vmatprep.mubr.bf16.mxu0 %v166
  %489 = vmatmul.mubr.bf16.gmra.mxu0 %v165
  %v490 = vpop.f32.mrf.mxu0
  %v491 = vadd.f32 %v442, %v490
  %v492 = vpop.f32.mrf.mxu0
  %v493 = vpop.f32.mrf.mxu0
  %v494 = vadd.f32 %v445, %v493
  %v495 = vpop.f32.mrf.mxu0
  %496 = vdwg.mxu0
  %497 = vmatprep.subr.bf16.mxu0 0
  %498 = vmatpush1.bf16.msra.mxu0 0
  %499 = vmatprep.subr.bf16.mxu0 0
  %500 = vmatpush1.bf16.msra.mxu0 0
  %501 = vmatprep.subr.bf16.mxu0 0
  %502 = vmatpush1.bf16.msra.mxu0 0
  %503 = vmatprep.subr.bf16.mxu0 0
  %504 = vmatpush1.bf16.msra.mxu0 0
  %505 = vmatprep.subr.bf16.mxu0 0
  %506 = vmatpush1.bf16.msra.mxu0 %v355
  %507 = vmatprep.subr.bf16.mxu0 0
  %508 = vmatpush1.bf16.msra.mxu0 %v354
  %509 = vmatprep.subr.bf16.mxu0 0
  %510 = vmatpush1.bf16.msra.mxu0 %v353
  %511 = vmatprep.subr.bf16.mxu0 0
  %512 = vmatpush1.bf16.msra.mxu0 %v352
  %513 = vmatprep.subr.bf16.mxu0 0
  %514 = vmatpush2.bf16.msra.mxu0 0
  %515 = vmatprep.subr.bf16.mxu0 0
  %516 = vmatpush2.bf16.msra.mxu0 0
  %517 = vmatprep.subr.bf16.mxu0 0
  %518 = vmatpush2.bf16.msra.mxu0 0
  %519 = vmatprep.subr.bf16.mxu0 0
  %520 = vmatpush2.bf16.msra.mxu0 0
  %521 = vmatprep.subr.bf16.mxu0 0
  %522 = vmatpush2.bf16.msra.mxu0 0
  %523 = vmatprep.subr.bf16.mxu0 0
  %524 = vmatpush2.bf16.msra.mxu0 0
  %525 = vmatprep.subr.bf16.mxu0 0
  %526 = vmatpush2.bf16.msra.mxu0 0
  %527 = vmatprep.subr.bf16.mxu0 0
  %528 = vmatpush2.bf16.msra.mxu0 0
  %529 = vmatprep.mubr.bf16.mxu0 0
  %530 = vmatmul.mubr.bf16.gmra.mxu0 %v394
  %v531 = vpop.f32.mrf.mxu0
  %v532 = vadd.f32 %v483, %v531
  %v533 = vpop.f32.mrf.mxu0
  %v534 = vpop.f32.mrf.mxu0
  %v535 = vadd.f32 %v486, %v534
  %v536 = vpop.f32.mrf.mxu0
  %537 = vmatprep.mubr.bf16.mxu0 0
  %538 = vmatmul.mubr.bf16.gmra.mxu0 %v397
  %v539 = vpop.f32.mrf.mxu0
  %v540 = vadd.f32 %v491, %v539
  %v541 = vpop.f32.mrf.mxu0
  %v542 = vpop.f32.mrf.mxu0
  %v543 = vadd.f32 %v494, %v542
  %v544 = vpop.f32.mrf.mxu0
  %545 = vdwg.mxu0
  %v546 = vadd.f32 %v122, %v532
  %v547 = vadd.f32 %v123, %v535
  %v548 = vadd.f32 %v124, %v540
  %v549 = vadd.f32 %v125, %v543
  %550 = vst [vmem:[#allocation2] sm:$0xff] %v546
  %551 = vst [vmem:[#allocation2 + $0x8] sm:$0xff] %v547
  %552 = vst [vmem:[#allocation2 + $0x10] sm:$0xff] %v548
  %553 = vst [vmem:[#allocation2 + $0x18] sm:$0xff] %v549
  // Predicated region
  $region18: #{unet_forward.29} parent=0 // pred_check
    %p554 = pneg %p18
  $region19: #{unet_forward.29} parent=0 // pred_check_branch
    %556 = sbr.rel (%p554) target = $region21
  $region20: #{unet_forward.29} parent=0 // pred_region
    %v557 = vld [vmem:[#allocation2] sm:$0xff]
    %v558 = vld [vmem:[#allocation2 + $0x8] sm:$0xff]
    %v559 = vld [vmem:[#allocation2 + $0x10] sm:$0xff]
    %v560 = vld [vmem:[#allocation2 + $0x18] sm:$0xff]
    %v561 = vld [vmem:[%s2] sm:$0x1]
    %v563 = vlaneseq
    %v564 = vshrl.u32 %v563, 7
    %v565 = vsub.s32 0, %v564
    %v566 = vrot.slane %v561, %v565
    %v568 = vadd.f32 %v557, %v566
    %v569 = vadd.f32 %v558, %v566
    %v570 = vadd.f32 %v559, %v566
    %v571 = vadd.f32 %v560, %v566
    %v572 = vsel %vm392, %v568, 0.0
    %v573 = vsel %vm392, %v569, 0.0
    %v574 = vadd.f32 %v572, %v573
    %v575 = vsel %vm392, %v570, 0.0
    %v576 = vadd.f32 %v574, %v575
    %v577 = vsel %vm392, %v571, 0.0
    %v578 = vadd.f32 %v576, %v577
    %v579 = vrot.slane %v578, 4
    %v580 = vadd.f32 %v578, %v579
    %v581 = vrot.slane %v580, 2
    %v582 = vadd.f32 %v580, %v581
    %v583 = vrot.slane %v582, 1
    %v584 = vadd.f32 %v582, %v583
    %v585 = vmul.f32 %v568, %v568
    %v586 = vmul.f32 %v569, %v569
    %v587 = vmul.f32 %v570, %v570
    %v588 = vmul.f32 %v571, %v571
    %v589 = vsel %vm392, %v585, 0.0
    %v590 = vsel %vm392, %v586, 0.0
    %v591 = vadd.f32 %v589, %v590
    %v592 = vsel %vm392, %v587, 0.0
    %v593 = vadd.f32 %v591, %v592
    %v594 = vsel %vm392, %v588, 0.0
    %v595 = vadd.f32 %v593, %v594
    %v596 = vrot.slane %v595, 4
    %v597 = vadd.f32 %v595, %v596
    %v598 = vrot.slane %v597, 2
    %v599 = vadd.f32 %v597, %v598
    %v600 = vrot.slane %v599, 1
    %v601 = vadd.f32 %v599, %v600
    %602 = vst.msk [vmem:[%s4] sm:$0xff] %vm392, %v584
    %603 = vst.msk [vmem:[%s5] sm:$0xff] %vm392, %v601
    %v604 = vpack.c.bf16 %v569, %v568
    %v605 = vpack.c.bf16 %v571, %v570
    %v608 = vunpack.c.l.b16 %v604
    %v609 = vunpack.c.h.b16 %v604
    %v610 = vunpack.c.l.b16 %v605
    %v611 = vunpack.c.h.b16 %v605
    %v612 = vpack.c.b16 %v608, %v608
    %v613 = vpack.c.b16 %v609, %v609
    %v614 = vpack.c.b16 %v610, %v610
    %v615 = vpack.c.b16 %v611, %v611
    %vm620 = vcmask 519168
    %621 = vst.msk [vmem:[%s3] sm:$0xf] %vm620, %v612
    %622 = vst.msk [vmem:[%s3 + $0x4] sm:$0xf] %vm620, %v613
    %623 = vst.msk [vmem:[%s3 + $0x8] sm:$0xf] %vm620, %v614
    %624 = vst.msk [vmem:[%s3 + $0xc] sm:$0xf] %vm620, %v615
  $region21: #{unet_forward.29} parent=0 // pred_fallthru
    _
  // Predicated region
  $region22: #{unet_forward.29} parent=0 // pred_check
    _
  $region23: #{unet_forward.29} parent=0 // pred_check_branch
    %626 = sbr.rel (0) target = $region25
  $region24: #{unet_forward.29} parent=0 // pred_region
    _
  $region25: #{unet_forward.29} parent=0 // pred_fallthru
    _
  // Predicated region
  $region26: #{unet_forward.29} parent=0 // pred_check
    _
  $region27: #{unet_forward.29} parent=0 // pred_check_branch
    %628 = sbr.rel (0) target = $region29
  $region28: #{unet_forward.29} parent=0 // pred_region
    _
  $region29: #{unet_forward.29} parent=0 // pred_fallthru
    _
  // Predicated region
  $region30: #{unet_forward.29} parent=0 // pred_check
    _
  $region31: #{unet_forward.29} parent=0 // pred_check_branch
    %630 = sbr.rel (0) target = $region33
  $region32: #{unet_forward.29} parent=0 // pred_region
    _
  $region33: #{unet_forward.29} parent=0 // pred_fallthru
    _
  // Predicated region
  $region34: #{unet_forward.29} parent=0 // pred_check
    _
  $region35: #{unet_forward.29} parent=0 // pred_check_branch
    %632 = sbr.rel (0) target = $region37
  $region36: #{unet_forward.29} parent=0 // pred_region
    _
  $region37: #{unet_forward.29} parent=0 // pred_fallthru
    _
  // Predicated region
  $region38: #{unet_forward.29} parent=0 // pred_check
    _
  $region39: #{unet_forward.29} parent=0 // pred_check_branch
    %634 = sbr.rel (0) target = $region41
  $region40: #{unet_forward.29} parent=0 // pred_region
    _
  $region41: #{unet_forward.29} parent=0 // pred_fallthru
    _
  // Predicated region
  $region42: #{unet_forward.29} parent=0 // pred_check
    _
  $region43: #{unet_forward.29} parent=0 // pred_check_branch
    %636 = sbr.rel (0) target = $region45
  $region44: #{unet_forward.29} parent=0 // pred_region
    _
  $region45: #{unet_forward.29} parent=0 // pred_fallthru
    _

// kernel: tile.77
$region0: #{tile.77}
  #allocation0 [shape = 's32[1]{0}', space=sflag, size = 0x4, scoped, tag = 'scoped memory for tile.77']
  %s0 = inlined_call_operand.vmem [shape: f32[8], index: 0, kind: input, shape index: {}]
  %s1 = inlined_call_operand.vmem [shape: f32[4,8], index: 1, kind: output, shape index: {}]
  // Predicated region
  $region2: #{tile.77} parent=0 // pred_check
    _
  $region3: #{tile.77} parent=0 // pred_check_branch
    %3 = sbr.rel (0) target = $region5
  $region4: #{tile.77} parent=0 // pred_region
    _
  $region5: #{tile.77} parent=0 // pred_fallthru
    _
  %v4 = vld [vmem:[%s0] ss:$0 sm:$0xff]
  %5 = vst [vmem:[%s1] sm:$0xf] %v4

// kernel: tile.79
$region0: #{tile.79}
  %s0 = inlined_call_operand.vmem [shape: f32[4,8], index: 0, kind: input, shape index: {}]
  %s1 = inlined_call_operand.vmem [shape: f32[1,32], index: 1, kind: output, shape index: {}]
  $region1: #{tile.79} parent=0
    #allocation0 [shape = 'u8[4096]{0}', space=vmem, size = 0x1000, scoped, tag = 'scoped mem for output reshape']
    #allocation1 [shape = 'u8[4096]{0}', space=vmem, size = 0x1000, scoped, tag = 'scoped mem for input reshape']
    %s3 = sshll.u32 1, 4
    %s4 = ssub.s32 %s3, 1
    %v5 = vld [vmem:[%s0] sm:%s4]
    %6 = vst [vmem:[#allocation1] sm:%s4] %v5
    %v7 = vld [vmem:[#allocation1] sm:$0x1]
    %vm8 = vcmask 64512
    %9 = vst.msk [vmem:[#allocation0] sm:$0x1] %vm8, %v7
    %s10 = scalar_lea.vmem [#allocation1], 3
    %v11 = vld [vmem:[%s10] sm:$0x1]
    %12 = vrot.lane.b32.xlu0 %v11, 24
    %v13 = vpop.permute.xlu0 %12
    %vm14 = vcmask 261312
    %15 = vst.msk [vmem:[#allocation0] sm:$0x1] %vm14, %v13
    %s16 = scalar_lea.vmem [#allocation1], 2
    %v17 = vld [vmem:[%s16] sm:$0x1]
    %18 = vrot.lane.b32.xlu0 %v17, 16
    %v19 = vpop.permute.xlu0 %18
    %vm20 = vcmask 195712
    %21 = vst.msk [vmem:[#allocation0] sm:$0x1] %vm20, %v19
    %s22 = scalar_lea.vmem [#allocation1], 1
    %v23 = vld [vmem:[%s22] sm:$0x1]
    %24 = vrot.lane.b32.xlu0 %v23, 8
    %v25 = vpop.permute.xlu0 %24
    %vm26 = vcmask 130112
    %27 = vst.msk [vmem:[#allocation0] sm:$0x1] %vm26, %v25
    %s29 = sshll.u32 1, 1
    %s30 = ssub.s32 %s29, 1
    %v32 = vld [vmem:[#allocation0] sm:%s30]
    %s33 = sshll.u32 1, 1
    %s34 = ssub.s32 %s33, 1
    %35 = vst [vmem:[%s1] sm:%s34] %v32

// kernel: unet_forward.31
$region0: #{unet_forward.31}
  #allocation0 [shape = 'u32[]', space=smem, size = 0x4, offset = 0x4, fixed_abs, tag = 'smem constant byte address 0x4 - core index']
  #allocation1 [shape = 'u32[144,128]{1,0:T(1,128)}', space=vmem, size = 0x12000, scoped, tag = 'internal scratch']
  #allocation2 [shape = 'f32[128,128]{1,0:T(8,128)}', space=vmem, size = 0x10000, scoped, tag = 'scratch operand']
  %s0 = inlined_call_operand.vmem [shape: bf16[128,288], index: 0, kind: input, shape index: {}]
  %s1 = inlined_call_operand.vmem [shape: bf16[288,128], index: 1, kind: input, shape index: {}]
  %s2 = inlined_call_operand.vmem [shape: f32[1,128], index: 2, kind: input, shape index: {}]
  %s3 = inlined_call_operand.vmem [shape: bf16[128,32], index: 3, kind: output, shape index: {0}]
  %s4 = inlined_call_operand.vmem [shape: f32[1,8,32], index: 4, kind: output, shape index: {1}]
  %s5 = inlined_call_operand.vmem [shape: f32[1,8,32], index: 5, kind: output, shape index: {2}]
  %6 = xla_tuple %s3, %s4, %s5
  %s7 = sld [smem:[#allocation0]]
  $region46: #{unet_forward.31} parent=0
    _
  %s9 = ssub.s32 1, %s7
  %s10 = scalar_select 0, %s9, %s7
  // Predicated region
  $region2: #{unet_forward.31} parent=0 // pred_check
    _
  $region3: #{unet_forward.31} parent=0 // pred_check_branch
    %12 = sbr.rel (0) target = $region5
  $region4: #{unet_forward.31} parent=0 // pred_region
    _
  $region5: #{unet_forward.31} parent=0 // pred_fallthru
    _
  // Predicated region
  $region6: #{unet_forward.31} parent=0 // pred_check
    _
  $region7: #{unet_forward.31} parent=0 // pred_check_branch
    %14 = sbr.rel (0) target = $region9
  $region8: #{unet_forward.31} parent=0 // pred_region
    _
  $region9: #{unet_forward.31} parent=0 // pred_fallthru
    _
  // Predicated region
  $region10: #{unet_forward.31} parent=0 // pred_check
    _
  $region11: #{unet_forward.31} parent=0 // pred_check_branch
    %16 = sbr.rel (0) target = $region13
  $region12: #{unet_forward.31} parent=0 // pred_region
    _
  $region13: #{unet_forward.31} parent=0 // pred_fallthru
    _
  %p18 = scmp.eq.s32.totalorder 0, 0
  // Predicated region
  $region14: #{unet_forward.31} parent=0 // pred_check
    %p19 = pneg %p18
  $region15: #{unet_forward.31} parent=0 // pred_check_branch
    %21 = sbr.rel (%p19) target = $region17
  $region16: #{unet_forward.31} parent=0 // pred_region
    %22 = vst [vmem:[#allocation2] sm:$0xff] 0.0
    %23 = vst [vmem:[#allocation2 + $0x8] sm:$0xff] 0.0
    %24 = vst [vmem:[#allocation2 + $0x10] sm:$0xff] 0.0
    %25 = vst [vmem:[#allocation2 + $0x18] sm:$0xff] 0.0
    %26 = vst [vmem:[#allocation2 + $0x20] sm:$0xff] 0.0
    %27 = vst [vmem:[#allocation2 + $0x28] sm:$0xff] 0.0
    %28 = vst [vmem:[#allocation2 + $0x30] sm:$0xff] 0.0
    %29 = vst [vmem:[#allocation2 + $0x38] sm:$0xff] 0.0
    %30 = vst [vmem:[#allocation2 + $0x40] sm:$0xff] 0.0
    %31 = vst [vmem:[#allocation2 + $0x48] sm:$0xff] 0.0
    %32 = vst [vmem:[#allocation2 + $0x50] sm:$0xff] 0.0
    %33 = vst [vmem:[#allocation2 + $0x58] sm:$0xff] 0.0
    %34 = vst [vmem:[#allocation2 + $0x60] sm:$0xff] 0.0
    %35 = vst [vmem:[#allocation2 + $0x68] sm:$0xff] 0.0
    %36 = vst [vmem:[#allocation2 + $0x70] sm:$0xff] 0.0
    %37 = vst [vmem:[#allocation2 + $0x78] sm:$0xff] 0.0
  $region17: #{unet_forward.31} parent=0 // pred_fallthru
    _
  %v38 = vld [vmem:[%s0] sm:$0xff]
  %v39 = vld [vmem:[%s0 + $0x8] sm:$0xf]
  %v40 = vld [vmem:[%s0 + $0xc] sm:$0xff]
  %v41 = vld [vmem:[%s0 + $0x14] sm:$0xf]
  %v42 = vld [vmem:[%s0 + $0x18] sm:$0xff]
  %v43 = vld [vmem:[%s0 + $0x20] sm:$0xf]
  %v44 = vld [vmem:[%s0 + $0x24] sm:$0xff]
  %v45 = vld [vmem:[%s0 + $0x2c] sm:$0xf]
  %v46 = vld [vmem:[%s0 + $0x30] sm:$0xff]
  %v47 = vld [vmem:[%s0 + $0x38] sm:$0xf]
  %v48 = vld [vmem:[%s0 + $0x3c] sm:$0xff]
  %v49 = vld [vmem:[%s0 + $0x44] sm:$0xf]
  %v50 = vld [vmem:[%s0 + $0x48] sm:$0xff]
  %v51 = vld [vmem:[%s0 + $0x50] sm:$0xf]
  %v52 = vld [vmem:[%s0 + $0x54] sm:$0xff]
  %v53 = vld [vmem:[%s0 + $0x5c] sm:$0xf]
  %v54 = vld [vmem:[%s0 + $0x60] sm:$0xff]
  %v55 = vld [vmem:[%s0 + $0x68] sm:$0xf]
  %v56 = vld [vmem:[%s0 + $0x6c] sm:$0xff]
  %v57 = vld [vmem:[%s0 + $0x74] sm:$0xf]
  %v58 = vld [vmem:[%s0 + $0x78] sm:$0xff]
  %v59 = vld [vmem:[%s0 + $0x80] sm:$0xf]
  %v60 = vld [vmem:[%s0 + $0x84] sm:$0xff]
  %v61 = vld [vmem:[%s0 + $0x8c] sm:$0xf]
  %v62 = vld [vmem:[%s0 + $0x90] sm:$0xff]
  %v63 = vld [vmem:[%s0 + $0x98] sm:$0xf]
  %v64 = vld [vmem:[%s0 + $0x9c] sm:$0xff]
  %v65 = vld [vmem:[%s0 + $0xa4] sm:$0xf]
  %v66 = vld [vmem:[%s0 + $0xa8] sm:$0xff]
  %v67 = vld [vmem:[%s0 + $0xb0] sm:$0xf]
  %v68 = vld [vmem:[%s0 + $0xb4] sm:$0xff]
  %v69 = vld [vmem:[%s0 + $0xbc] sm:$0xf]
  %v70 = vmax.bf16 %v38, 0
  %v71 = vmax.bf16 %v39, 0
  %v72 = vmax.bf16 %v40, 0
  %v73 = vmax.bf16 %v41, 0
  %v74 = vmax.bf16 %v42, 0
  %v75 = vmax.bf16 %v43, 0
  %v76 = vmax.bf16 %v44, 0
  %v77 = vmax.bf16 %v45, 0
  %v78 = vmax.bf16 %v46, 0
  %v79 = vmax.bf16 %v47, 0
  %v80 = vmax.bf16 %v48, 0
  %v81 = vmax.bf16 %v49, 0
  %v82 = vmax.bf16 %v50, 0
  %v83 = vmax.bf16 %v51, 0
  %v84 = vmax.bf16 %v52, 0
  %v85 = vmax.bf16 %v53, 0
  %v86 = vmax.bf16 %v54, 0
  %v87 = vmax.bf16 %v55, 0
  %v88 = vmax.bf16 %v56, 0
  %v89 = vmax.bf16 %v57, 0
  %v90 = vmax.bf16 %v58, 0
  %v91 = vmax.bf16 %v59, 0
  %v92 = vmax.bf16 %v60, 0
  %v93 = vmax.bf16 %v61, 0
  %v94 = vmax.bf16 %v62, 0
  %v95 = vmax.bf16 %v63, 0
  %v96 = vmax.bf16 %v64, 0
  %v97 = vmax.bf16 %v65, 0
  %v98 = vmax.bf16 %v66, 0
  %v99 = vmax.bf16 %v67, 0
  %v100 = vmax.bf16 %v68, 0
  %v101 = vmax.bf16 %v69, 0
  %v102 = vld [vmem:[%s1] sm:$0xf]
  %v103 = vld [vmem:[%s1 + $0x4] sm:$0xf]
  %v104 = vld [vmem:[%s1 + $0x8] sm:$0xf]
  %v105 = vld [vmem:[%s1 + $0xc] sm:$0xf]
  %v106 = vld [vmem:[%s1 + $0x10] sm:$0xf]
  %v107 = vld [vmem:[%s1 + $0x14] sm:$0xf]
  %v108 = vld [vmem:[%s1 + $0x18] sm:$0xf]
  %v109 = vld [vmem:[%s1 + $0x1c] sm:$0xf]
  %v110 = vld [vmem:[%s1 + $0x20] sm:$0xf]
  %v111 = vld [vmem:[%s1 + $0x24] sm:$0xf]
  %v112 = vld [vmem:[%s1 + $0x28] sm:$0xf]
  %v113 = vld [vmem:[%s1 + $0x2c] sm:$0xf]
  %v114 = vld [vmem:[%s1 + $0x30] sm:$0xf]
  %v115 = vld [vmem:[%s1 + $0x34] sm:$0xf]
  %v116 = vld [vmem:[%s1 + $0x38] sm:$0xf]
  %v117 = vld [vmem:[%s1 + $0x3c] sm:$0xf]
  %v118 = vld [vmem:[%s1 + $0x40] sm:$0xf]
  %v119 = vld [vmem:[%s1 + $0x44] sm:$0xf]
  %v120 = vld [vmem:[%s1 + $0x48] sm:$0xf]
  %v121 = vld [vmem:[%s1 + $0x4c] sm:$0xf]
  %v122 = vld [vmem:[%s1 + $0x50] sm:$0xf]
  %v123 = vld [vmem:[%s1 + $0x54] sm:$0xf]
  %v124 = vld [vmem:[%s1 + $0x58] sm:$0xf]
  %v125 = vld [vmem:[%s1 + $0x5c] sm:$0xf]
  %v126 = vld [vmem:[%s1 + $0x60] sm:$0xf]
  %v127 = vld [vmem:[%s1 + $0x64] sm:$0xf]
  %v128 = vld [vmem:[%s1 + $0x68] sm:$0xf]
  %v129 = vld [vmem:[%s1 + $0x6c] sm:$0xf]
  %v130 = vld [vmem:[%s1 + $0x70] sm:$0xf]
  %v131 = vld [vmem:[%s1 + $0x74] sm:$0xf]
  %v132 = vld [vmem:[%s1 + $0x78] sm:$0xf]
  %v133 = vld [vmem:[%s1 + $0x7c] sm:$0xf]
  %v134 = vld [vmem:[%s1 + $0x80] sm:$0xf]
  %v135 = vld [vmem:[%s1 + $0x84] sm:$0xf]
  %v136 = vld [vmem:[%s1 + $0x88] sm:$0xf]
  %v137 = vld [vmem:[%s1 + $0x8c] sm:$0xf]
  %v138 = vld [vmem:[#allocation2] sm:$0xff]
  %v139 = vld [vmem:[#allocation2 + $0x8] sm:$0xff]
  %v140 = vld [vmem:[#allocation2 + $0x10] sm:$0xff]
  %v141 = vld [vmem:[#allocation2 + $0x18] sm:$0xff]
  %v142 = vld [vmem:[#allocation2 + $0x20] sm:$0xff]
  %v143 = vld [vmem:[#allocation2 + $0x28] sm:$0xff]
  %v144 = vld [vmem:[#allocation2 + $0x30] sm:$0xff]
  %v145 = vld [vmem:[#allocation2 + $0x38] sm:$0xff]
  %v146 = vld [vmem:[#allocation2 + $0x40] sm:$0xff]
  %v147 = vld [vmem:[#allocation2 + $0x48] sm:$0xff]
  %v148 = vld [vmem:[#allocation2 + $0x50] sm:$0xff]
  %v149 = vld [vmem:[#allocation2 + $0x58] sm:$0xff]
  %v150 = vld [vmem:[#allocation2 + $0x60] sm:$0xff]
  %v151 = vld [vmem:[#allocation2 + $0x68] sm:$0xff]
  %v152 = vld [vmem:[#allocation2 + $0x70] sm:$0xff]
  %v153 = vld [vmem:[#allocation2 + $0x78] sm:$0xff]
  %v186 = vunpack.c.l.b16 %v70
  %v187 = vunpack.c.h.b16 %v70
  %v188 = vunpack.c.l.b16 %v71
  %v189 = vunpack.c.l.b16 %v72
  %v190 = vunpack.c.h.b16 %v72
  %v191 = vunpack.c.l.b16 %v73
  %v192 = vunpack.c.l.b16 %v74
  %v193 = vunpack.c.h.b16 %v74
  %v194 = vunpack.c.l.b16 %v75
  %v195 = vunpack.c.l.b16 %v76
  %v196 = vunpack.c.h.b16 %v76
  %v197 = vunpack.c.l.b16 %v77
  %v198 = vunpack.c.l.b16 %v78
  %v199 = vunpack.c.h.b16 %v78
  %v200 = vunpack.c.l.b16 %v79
  %v201 = vunpack.c.l.b16 %v80
  %v202 = vunpack.c.h.b16 %v80
  %v203 = vunpack.c.l.b16 %v81
  %v204 = vunpack.c.l.b16 %v82
  %v205 = vunpack.c.h.b16 %v82
  %v206 = vunpack.c.l.b16 %v83
  %v207 = vunpack.c.l.b16 %v84
  %v208 = vunpack.c.h.b16 %v84
  %v209 = vunpack.c.l.b16 %v85
  %v210 = vunpack.c.l.b16 %v86
  %v211 = vunpack.c.h.b16 %v86
  %v212 = vunpack.c.l.b16 %v87
  %v213 = vunpack.c.l.b16 %v88
  %v214 = vunpack.c.h.b16 %v88
  %v215 = vunpack.c.l.b16 %v89
  %v216 = vunpack.c.l.b16 %v90
  %v217 = vunpack.c.h.b16 %v90
  %v218 = vunpack.c.l.b16 %v91
  %v219 = vunpack.c.l.b16 %v92
  %v220 = vunpack.c.h.b16 %v92
  %v221 = vunpack.c.l.b16 %v93
  %v222 = vunpack.c.l.b16 %v94
  %v223 = vunpack.c.h.b16 %v94
  %v224 = vunpack.c.l.b16 %v95
  %v225 = vunpack.c.l.b16 %v96
  %v226 = vunpack.c.h.b16 %v96
  %v227 = vunpack.c.l.b16 %v97
  %v228 = vunpack.c.l.b16 %v98
  %v229 = vunpack.c.h.b16 %v98
  %v230 = vunpack.c.l.b16 %v99
  %v231 = vunpack.c.l.b16 %v100
  %v232 = vunpack.c.h.b16 %v100
  %v233 = vunpack.c.l.b16 %v101
  %v234 = vpack.c.b16 %v189, %v186
  %v235 = vpack.c.b16 %v190, %v187
  %v236 = vpack.c.b16 %v191, %v188
  %v237 = vpack.c.b16 %v195, %v192
  %v238 = vpack.c.b16 %v196, %v193
  %v239 = vpack.c.b16 %v197, %v194
  %v240 = vpack.c.b16 %v201, %v198
  %v241 = vpack.c.b16 %v202, %v199
  %v242 = vpack.c.b16 %v203, %v200
  %v243 = vpack.c.b16 %v207, %v204
  %v244 = vpack.c.b16 %v208, %v205
  %v245 = vpack.c.b16 %v209, %v206
  %v246 = vpack.c.b16 %v213, %v210
  %v247 = vpack.c.b16 %v214, %v211
  %v248 = vpack.c.b16 %v215, %v212
  %v249 = vpack.c.b16 %v219, %v216
  %v250 = vpack.c.b16 %v220, %v217
  %v251 = vpack.c.b16 %v221, %v218
  %v252 = vpack.c.b16 %v225, %v222
  %v253 = vpack.c.b16 %v226, %v223
  %v254 = vpack.c.b16 %v227, %v224
  %v255 = vpack.c.b16 %v231, %v228
  %v256 = vpack.c.b16 %v232, %v229
  %v257 = vpack.c.b16 %v233, %v230
  %v310 = vunpack.c.l.b16 %v102
  %v311 = vunpack.c.l.b16 %v103
  %v312 = vunpack.c.l.b16 %v104
  %v313 = vunpack.c.l.b16 %v105
  %v314 = vunpack.c.l.b16 %v106
  %v315 = vunpack.c.l.b16 %v107
  %v316 = vunpack.c.l.b16 %v108
  %v317 = vunpack.c.l.b16 %v109
  %v318 = vunpack.c.l.b16 %v110
  %v319 = vunpack.c.l.b16 %v111
  %v320 = vunpack.c.l.b16 %v112
  %v321 = vunpack.c.l.b16 %v113
  %v322 = vunpack.c.l.b16 %v114
  %v323 = vunpack.c.l.b16 %v115
  %v324 = vunpack.c.l.b16 %v116
  %v325 = vunpack.c.l.b16 %v117
  %v326 = vunpack.c.l.b16 %v118
  %v327 = vunpack.c.l.b16 %v119
  %v328 = vunpack.c.l.b16 %v120
  %v329 = vunpack.c.l.b16 %v121
  %v330 = vunpack.c.l.b16 %v122
  %v331 = vunpack.c.l.b16 %v123
  %v332 = vunpack.c.l.b16 %v124
  %v333 = vunpack.c.l.b16 %v125
  %v334 = vunpack.c.l.b16 %v126
  %v335 = vunpack.c.l.b16 %v127
  %v336 = vunpack.c.l.b16 %v128
  %v337 = vunpack.c.l.b16 %v129
  %v338 = vunpack.c.l.b16 %v130
  %v339 = vunpack.c.l.b16 %v131
  %v340 = vunpack.c.l.b16 %v132
  %v341 = vunpack.c.l.b16 %v133
  %v342 = vunpack.c.l.b16 %v134
  %v343 = vunpack.c.l.b16 %v135
  %v344 = vunpack.c.l.b16 %v136
  %v345 = vunpack.c.l.b16 %v137
  %v346 = vpack.c.b16 %v311, %v310
  %v347 = vpack.c.b16 %v313, %v312
  %v348 = vpack.c.b16 %v315, %v314
  %v349 = vpack.c.b16 %v317, %v316
  %v350 = vpack.c.b16 %v319, %v318
  %v351 = vpack.c.b16 %v321, %v320
  %v352 = vpack.c.b16 %v323, %v322
  %v353 = vpack.c.b16 %v325, %v324
  %v354 = vpack.c.b16 %v327, %v326
  %v355 = vpack.c.b16 %v329, %v328
  %v356 = vpack.c.b16 %v331, %v330
  %v357 = vpack.c.b16 %v333, %v332
  %v358 = vpack.c.b16 %v335, %v334
  %v359 = vpack.c.b16 %v337, %v336
  %v360 = vpack.c.b16 %v339, %v338
  %v361 = vpack.c.b16 %v341, %v340
  %v362 = vpack.c.b16 %v343, %v342
  %v363 = vpack.c.b16 %v345, %v344
  %vm382 = vcmask 261120
  %v384 = vsel %vm382, %v236, 0
  %v387 = vsel %vm382, %v239, 0
  %v390 = vsel %vm382, %v242, 0
  %v393 = vsel %vm382, %v245, 0
  %v396 = vsel %vm382, %v248, 0
  %v399 = vsel %vm382, %v251, 0
  %v402 = vsel %vm382, %v254, 0
  %v405 = vsel %vm382, %v257, 0
  %407 = vmatprep.subr.bf16.mxu0 0
  %408 = vmatpush1.bf16.msra.mxu0 %v353
  %409 = vmatprep.subr.bf16.mxu0 0
  %410 = vmatpush1.bf16.msra.mxu0 %v352
  %411 = vmatprep.subr.bf16.mxu0 0
  %412 = vmatpush1.bf16.msra.mxu0 %v351
  %413 = vmatprep.subr.bf16.mxu0 0
  %414 = vmatpush1.bf16.msra.mxu0 %v350
  %415 = vmatprep.subr.bf16.mxu0 0
  %416 = vmatpush1.bf16.msra.mxu0 %v349
  %417 = vmatprep.subr.bf16.mxu0 0
  %418 = vmatpush1.bf16.msra.mxu0 %v348
  %419 = vmatprep.subr.bf16.mxu0 0
  %420 = vmatpush1.bf16.msra.mxu0 %v347
  %421 = vmatprep.subr.bf16.mxu0 0
  %422 = vmatpush1.bf16.msra.mxu0 %v346
  %423 = vmatprep.subr.bf16.mxu0 0
  %424 = vmatpush2.bf16.msra.mxu0 %v361
  %425 = vmatprep.subr.bf16.mxu0 0
  %426 = vmatpush2.bf16.msra.mxu0 %v360
  %427 = vmatprep.subr.bf16.mxu0 0
  %428 = vmatpush2.bf16.msra.mxu0 %v359
  %429 = vmatprep.subr.bf16.mxu0 0
  %430 = vmatpush2.bf16.msra.mxu0 %v358
  %431 = vmatprep.subr.bf16.mxu0 0
  %432 = vmatpush2.bf16.msra.mxu0 %v357
  %433 = vmatprep.subr.bf16.mxu0 0
  %434 = vmatpush2.bf16.msra.mxu0 %v356
  %435 = vmatprep.subr.bf16.mxu0 0
  %436 = vmatpush2.bf16.msra.mxu0 %v355
  %437 = vmatprep.subr.bf16.mxu0 0
  %438 = vmatpush2.bf16.msra.mxu0 %v354
  %439 = vmatprep.mubr.bf16.mxu0 %v235
  %440 = vmatmul.mubr.bf16.gmra.mxu0 %v234
  %v441 = vpop.f32.mrf.mxu0
  %v442 = vadd.f32 0.0, %v441
  %v443 = vpop.f32.mrf.mxu0
  %v444 = vpop.f32.mrf.mxu0
  %v445 = vadd.f32 0.0, %v444
  %v446 = vpop.f32.mrf.mxu0
  %447 = vmatprep.mubr.bf16.mxu0 %v238
  %448 = vmatmul.mubr.bf16.gmra.mxu0 %v237
  %v449 = vpop.f32.mrf.mxu0
  %v450 = vadd.f32 0.0, %v449
  %v451 = vpop.f32.mrf.mxu0
  %v452 = vpop.f32.mrf.mxu0
  %v453 = vadd.f32 0.0, %v452
  %v454 = vpop.f32.mrf.mxu0
  %455 = vmatprep.mubr.bf16.mxu0 %v241
  %456 = vmatmul.mubr.bf16.gmra.mxu0 %v240
  %v457 = vpop.f32.mrf.mxu0
  %v458 = vadd.f32 0.0, %v457
  %v459 = vpop.f32.mrf.mxu0
  %v460 = vpop.f32.mrf.mxu0
  %v461 = vadd.f32 0.0, %v460
  %v462 = vpop.f32.mrf.mxu0
  %463 = vmatprep.mubr.bf16.mxu0 %v244
  %464 = vmatmul.mubr.bf16.gmra.mxu0 %v243
  %v465 = vpop.f32.mrf.mxu0
  %v466 = vadd.f32 0.0, %v465
  %v467 = vpop.f32.mrf.mxu0
  %v468 = vpop.f32.mrf.mxu0
  %v469 = vadd.f32 0.0, %v468
  %v470 = vpop.f32.mrf.mxu0
  %471 = vmatprep.mubr.bf16.mxu0 %v247
  %472 = vmatmul.mubr.bf16.gmra.mxu0 %v246
  %v473 = vpop.f32.mrf.mxu0
  %v474 = vadd.f32 0.0, %v473
  %v475 = vpop.f32.mrf.mxu0
  %v476 = vpop.f32.mrf.mxu0
  %v477 = vadd.f32 0.0, %v476
  %v478 = vpop.f32.mrf.mxu0
  %479 = vmatprep.mubr.bf16.mxu0 %v250
  %480 = vmatmul.mubr.bf16.gmra.mxu0 %v249
  %v481 = vpop.f32.mrf.mxu0
  %v482 = vadd.f32 0.0, %v481
  %v483 = vpop.f32.mrf.mxu0
  %v484 = vpop.f32.mrf.mxu0
  %v485 = vadd.f32 0.0, %v484
  %v486 = vpop.f32.mrf.mxu0
  %487 = vmatprep.mubr.bf16.mxu0 %v253
  %488 = vmatmul.mubr.bf16.gmra.mxu0 %v252
  %v489 = vpop.f32.mrf.mxu0
  %v490 = vadd.f32 0.0, %v489
  %v491 = vpop.f32.mrf.mxu0
  %v492 = vpop.f32.mrf.mxu0
  %v493 = vadd.f32 0.0, %v492
  %v494 = vpop.f32.mrf.mxu0
  %495 = vmatprep.mubr.bf16.mxu0 %v256
  %496 = vmatmul.mubr.bf16.gmra.mxu0 %v255
  %v497 = vpop.f32.mrf.mxu0
  %v498 = vadd.f32 0.0, %v497
  %v499 = vpop.f32.mrf.mxu0
  %v500 = vpop.f32.mrf.mxu0
  %v501 = vadd.f32 0.0, %v500
  %v502 = vpop.f32.mrf.mxu0
  %503 = vdwg.mxu0
  %504 = vmatprep.subr.bf16.mxu0 0
  %505 = vmatpush1.bf16.msra.mxu0 0
  %506 = vmatprep.subr.bf16.mxu0 0
  %507 = vmatpush1.bf16.msra.mxu0 0
  %508 = vmatprep.subr.bf16.mxu0 0
  %509 = vmatpush1.bf16.msra.mxu0 0
  %510 = vmatprep.subr.bf16.mxu0 0
  %511 = vmatpush1.bf16.msra.mxu0 0
  %512 = vmatprep.subr.bf16.mxu0 0
  %513 = vmatpush1.bf16.msra.mxu0 0
  %514 = vmatprep.subr.bf16.mxu0 0
  %515 = vmatpush1.bf16.msra.mxu0 0
  %516 = vmatprep.subr.bf16.mxu0 0
  %517 = vmatpush1.bf16.msra.mxu0 %v363
  %518 = vmatprep.subr.bf16.mxu0 0
  %519 = vmatpush1.bf16.msra.mxu0 %v362
  %520 = vmatprep.subr.bf16.mxu0 0
  %521 = vmatpush2.bf16.msra.mxu0 0
  %522 = vmatprep.subr.bf16.mxu0 0
  %523 = vmatpush2.bf16.msra.mxu0 0
  %524 = vmatprep.subr.bf16.mxu0 0
  %525 = vmatpush2.bf16.msra.mxu0 0
  %526 = vmatprep.subr.bf16.mxu0 0
  %527 = vmatpush2.bf16.msra.mxu0 0
  %528 = vmatprep.subr.bf16.mxu0 0
  %529 = vmatpush2.bf16.msra.mxu0 0
  %530 = vmatprep.subr.bf16.mxu0 0
  %531 = vmatpush2.bf16.msra.mxu0 0
  %532 = vmatprep.subr.bf16.mxu0 0
  %533 = vmatpush2.bf16.msra.mxu0 0
  %534 = vmatprep.subr.bf16.mxu0 0
  %535 = vmatpush2.bf16.msra.mxu0 0
  %536 = vmatprep.mubr.bf16.mxu0 0
  %537 = vmatmul.mubr.bf16.gmra.mxu0 %v384
  %v538 = vpop.f32.mrf.mxu0
  %v539 = vadd.f32 %v442, %v538
  %v540 = vpop.f32.mrf.mxu0
  %v541 = vpop.f32.mrf.mxu0
  %v542 = vadd.f32 %v445, %v541
  %v543 = vpop.f32.mrf.mxu0
  %544 = vmatprep.mubr.bf16.mxu0 0
  %545 = vmatmul.mubr.bf16.gmra.mxu0 %v387
  %v546 = vpop.f32.mrf.mxu0
  %v547 = vadd.f32 %v450, %v546
  %v548 = vpop.f32.mrf.mxu0
  %v549 = vpop.f32.mrf.mxu0
  %v550 = vadd.f32 %v453, %v549
  %v551 = vpop.f32.mrf.mxu0
  %552 = vmatprep.mubr.bf16.mxu0 0
  %553 = vmatmul.mubr.bf16.gmra.mxu0 %v390
  %v554 = vpop.f32.mrf.mxu0
  %v555 = vadd.f32 %v458, %v554
  %v556 = vpop.f32.mrf.mxu0
  %v557 = vpop.f32.mrf.mxu0
  %v558 = vadd.f32 %v461, %v557
  %v559 = vpop.f32.mrf.mxu0
  %560 = vmatprep.mubr.bf16.mxu0 0
  %561 = vmatmul.mubr.bf16.gmra.mxu0 %v393
  %v562 = vpop.f32.mrf.mxu0
  %v563 = vadd.f32 %v466, %v562
  %v564 = vpop.f32.mrf.mxu0
  %v565 = vpop.f32.mrf.mxu0
  %v566 = vadd.f32 %v469, %v565
  %v567 = vpop.f32.mrf.mxu0
  %568 = vmatprep.mubr.bf16.mxu0 0
  %569 = vmatmul.mubr.bf16.gmra.mxu0 %v396
  %v570 = vpop.f32.mrf.mxu0
  %v571 = vadd.f32 %v474, %v570
  %v572 = vpop.f32.mrf.mxu0
  %v573 = vpop.f32.mrf.mxu0
  %v574 = vadd.f32 %v477, %v573
  %v575 = vpop.f32.mrf.mxu0
  %576 = vmatprep.mubr.bf16.mxu0 0
  %577 = vmatmul.mubr.bf16.gmra.mxu0 %v399
  %v578 = vpop.f32.mrf.mxu0
  %v579 = vadd.f32 %v482, %v578
  %v580 = vpop.f32.mrf.mxu0
  %v581 = vpop.f32.mrf.mxu0
  %v582 = vadd.f32 %v485, %v581
  %v583 = vpop.f32.mrf.mxu0
  %584 = vmatprep.mubr.bf16.mxu0 0
  %585 = vmatmul.mubr.bf16.gmra.mxu0 %v402
  %v586 = vpop.f32.mrf.mxu0
  %v587 = vadd.f32 %v490, %v586
  %v588 = vpop.f32.mrf.mxu0
  %v589 = vpop.f32.mrf.mxu0
  %v590 = vadd.f32 %v493, %v589
  %v591 = vpop.f32.mrf.mxu0
  %592 = vmatprep.mubr.bf16.mxu0 0
  %593 = vmatmul.mubr.bf16.gmra.mxu0 %v405
  %v594 = vpop.f32.mrf.mxu0
  %v595 = vadd.f32 %v498, %v594
  %v596 = vpop.f32.mrf.mxu0
  %v597 = vpop.f32.mrf.mxu0
  %v598 = vadd.f32 %v501, %v597
  %v599 = vpop.f32.mrf.mxu0
  %600 = vdwg.mxu0
  %v601 = vadd.f32 %v138, %v539
  %v602 = vadd.f32 %v139, %v542
  %v603 = vadd.f32 %v140, %v547
  %v604 = vadd.f32 %v141, %v550
  %v605 = vadd.f32 %v142, %v555
  %v606 = vadd.f32 %v143, %v558
  %v607 = vadd.f32 %v144, %v563
  %v608 = vadd.f32 %v145, %v566
  %v609 = vadd.f32 %v146, %v571
  %v610 = vadd.f32 %v147, %v574
  %v611 = vadd.f32 %v148, %v579
  %v612 = vadd.f32 %v149, %v582
  %v613 = vadd.f32 %v150, %v587
  %v614 = vadd.f32 %v151, %v590
  %v615 = vadd.f32 %v152, %v595
  %v616 = vadd.f32 %v153, %v598
  %617 = vst [vmem:[#allocation2] sm:$0xff] %v601
  %618 = vst [vmem:[#allocation2 + $0x8] sm:$0xff] %v602
  %619 = vst [vmem:[#allocation2 + $0x10] sm:$0xff] %v603
  %620 = vst [vmem:[#allocation2 + $0x18] sm:$0xff] %v604
  %621 = vst [vmem:[#allocation2 + $0x20] sm:$0xff] %v605
  %622 = vst [vmem:[#allocation2 + $0x28] sm:$0xff] %v606
  %623 = vst [vmem:[#allocation2 + $0x30] sm:$0xff] %v607
  %624 = vst [vmem:[#allocation2 + $0x38] sm:$0xff] %v608
  %625 = vst [vmem:[#allocation2 + $0x40] sm:$0xff] %v609
  %626 = vst [vmem:[#allocation2 + $0x48] sm:$0xff] %v610
  %627 = vst [vmem:[#allocation2 + $0x50] sm:$0xff] %v611
  %628 = vst [vmem:[#allocation2 + $0x58] sm:$0xff] %v612
  %629 = vst [vmem:[#allocation2 + $0x60] sm:$0xff] %v613
  %630 = vst [vmem:[#allocation2 + $0x68] sm:$0xff] %v614
  %631 = vst [vmem:[#allocation2 + $0x70] sm:$0xff] %v615
  %632 = vst [vmem:[#allocation2 + $0x78] sm:$0xff] %v616
  // Predicated region
  $region18: #{unet_forward.31} parent=0 // pred_check
    %p633 = pneg %p18
  $region19: #{unet_forward.31} parent=0 // pred_check_branch
    %635 = sbr.rel (%p633) target = $region21
  $region20: #{unet_forward.31} parent=0 // pred_region
    %v636 = vld [vmem:[#allocation2] sm:$0xff]
    %v637 = vld [vmem:[#allocation2 + $0x8] sm:$0xff]
    %v638 = vld [vmem:[#allocation2 + $0x10] sm:$0xff]
    %v639 = vld [vmem:[#allocation2 + $0x18] sm:$0xff]
    %v640 = vld [vmem:[#allocation2 + $0x20] sm:$0xff]
    %v641 = vld [vmem:[#allocation2 + $0x28] sm:$0xff]
    %v642 = vld [vmem:[#allocation2 + $0x30] sm:$0xff]
    %v643 = vld [vmem:[#allocation2 + $0x38] sm:$0xff]
    %v644 = vld [vmem:[#allocation2 + $0x40] sm:$0xff]
    %v645 = vld [vmem:[#allocation2 + $0x48] sm:$0xff]
    %v646 = vld [vmem:[#allocation2 + $0x50] sm:$0xff]
    %v647 = vld [vmem:[#allocation2 + $0x58] sm:$0xff]
    %v648 = vld [vmem:[#allocation2 + $0x60] sm:$0xff]
    %v649 = vld [vmem:[#allocation2 + $0x68] sm:$0xff]
    %v650 = vld [vmem:[#allocation2 + $0x70] sm:$0xff]
    %v651 = vld [vmem:[#allocation2 + $0x78] sm:$0xff]
    %v652 = vld [vmem:[%s2] sm:$0x1]
    %v654 = vlaneseq
    %v655 = vshrl.u32 %v654, 7
    %v656 = vsub.s32 0, %v655
    %v657 = vrot.slane %v652, %v656
    %v659 = vadd.f32 %v636, %v657
    %v660 = vadd.f32 %v637, %v657
    %v661 = vadd.f32 %v638, %v657
    %v662 = vadd.f32 %v639, %v657
    %v663 = vadd.f32 %v640, %v657
    %v664 = vadd.f32 %v641, %v657
    %v665 = vadd.f32 %v642, %v657
    %v666 = vadd.f32 %v643, %v657
    %v667 = vadd.f32 %v644, %v657
    %v668 = vadd.f32 %v645, %v657
    %v669 = vadd.f32 %v646, %v657
    %v670 = vadd.f32 %v647, %v657
    %v671 = vadd.f32 %v648, %v657
    %v672 = vadd.f32 %v649, %v657
    %v673 = vadd.f32 %v650, %v657
    %v674 = vadd.f32 %v651, %v657
    %v675 = vsel %vm382, %v659, 0.0
    %v676 = vsel %vm382, %v660, 0.0
    %v677 = vadd.f32 %v675, %v676
    %v678 = vsel %vm382, %v661, 0.0
    %v679 = vadd.f32 %v677, %v678
    %v680 = vsel %vm382, %v662, 0.0
    %v681 = vadd.f32 %v679, %v680
    %v682 = vsel %vm382, %v663, 0.0
    %v683 = vadd.f32 %v681, %v682
    %v684 = vsel %vm382, %v664, 0.0
    %v685 = vadd.f32 %v683, %v684
    %v686 = vsel %vm382, %v665, 0.0
    %v687 = vadd.f32 %v685, %v686
    %v688 = vsel %vm382, %v666, 0.0
    %v689 = vadd.f32 %v687, %v688
    %v690 = vsel %vm382, %v667, 0.0
    %v691 = vadd.f32 %v689, %v690
    %v692 = vsel %vm382, %v668, 0.0
    %v693 = vadd.f32 %v691, %v692
    %v694 = vsel %vm382, %v669, 0.0
    %v695 = vadd.f32 %v693, %v694
    %v696 = vsel %vm382, %v670, 0.0
    %v697 = vadd.f32 %v695, %v696
    %v698 = vsel %vm382, %v671, 0.0
    %v699 = vadd.f32 %v697, %v698
    %v700 = vsel %vm382, %v672, 0.0
    %v701 = vadd.f32 %v699, %v700
    %v702 = vsel %vm382, %v673, 0.0
    %v703 = vadd.f32 %v701, %v702
    %v704 = vsel %vm382, %v674, 0.0
    %v705 = vadd.f32 %v703, %v704
    %v706 = vrot.slane %v705, 4
    %v707 = vadd.f32 %v705, %v706
    %v708 = vrot.slane %v707, 2
    %v709 = vadd.f32 %v707, %v708
    %v710 = vrot.slane %v709, 1
    %v711 = vadd.f32 %v709, %v710
    %v712 = vmul.f32 %v659, %v659
    %v713 = vmul.f32 %v660, %v660
    %v714 = vmul.f32 %v661, %v661
    %v715 = vmul.f32 %v662, %v662
    %v716 = vmul.f32 %v663, %v663
    %v717 = vmul.f32 %v664, %v664
    %v718 = vmul.f32 %v665, %v665
    %v719 = vmul.f32 %v666, %v666
    %v720 = vmul.f32 %v667, %v667
    %v721 = vmul.f32 %v668, %v668
    %v722 = vmul.f32 %v669, %v669
    %v723 = vmul.f32 %v670, %v670
    %v724 = vmul.f32 %v671, %v671
    %v725 = vmul.f32 %v672, %v672
    %v726 = vmul.f32 %v673, %v673
    %v727 = vmul.f32 %v674, %v674
    %v728 = vsel %vm382, %v712, 0.0
    %v729 = vsel %vm382, %v713, 0.0
    %v730 = vadd.f32 %v728, %v729
    %v731 = vsel %vm382, %v714, 0.0
    %v732 = vadd.f32 %v730, %v731
    %v733 = vsel %vm382, %v715, 0.0
    %v734 = vadd.f32 %v732, %v733
    %v735 = vsel %vm382, %v716, 0.0
    %v736 = vadd.f32 %v734, %v735
    %v737 = vsel %vm382, %v717, 0.0
    %v738 = vadd.f32 %v736, %v737
    %v739 = vsel %vm382, %v718, 0.0
    %v740 = vadd.f32 %v738, %v739
    %v741 = vsel %vm382, %v719, 0.0
    %v742 = vadd.f32 %v740, %v741
    %v743 = vsel %vm382, %v720, 0.0
    %v744 = vadd.f32 %v742, %v743
    %v745 = vsel %vm382, %v721, 0.0
    %v746 = vadd.f32 %v744, %v745
    %v747 = vsel %vm382, %v722, 0.0
    %v748 = vadd.f32 %v746, %v747
    %v749 = vsel %vm382, %v723, 0.0
    %v750 = vadd.f32 %v748, %v749
    %v751 = vsel %vm382, %v724, 0.0
    %v752 = vadd.f32 %v750, %v751
    %v753 = vsel %vm382, %v725, 0.0
    %v754 = vadd.f32 %v752, %v753
    %v755 = vsel %vm382, %v726, 0.0
    %v756 = vadd.f32 %v754, %v755
    %v757 = vsel %vm382, %v727, 0.0
    %v758 = vadd.f32 %v756, %v757
    %v759 = vrot.slane %v758, 4
    %v760 = vadd.f32 %v758, %v759
    %v761 = vrot.slane %v760, 2
    %v762 = vadd.f32 %v760, %v761
    %v763 = vrot.slane %v762, 1
    %v764 = vadd.f32 %v762, %v763
    %765 = vst.msk [vmem:[%s4] sm:$0xff] %vm382, %v711
    %766 = vst.msk [vmem:[%s5] sm:$0xff] %vm382, %v764
    %v767 = vpack.c.bf16 %v660, %v659
    %v768 = vpack.c.bf16 %v662, %v661
    %v769 = vpack.c.bf16 %v664, %v663
    %v770 = vpack.c.bf16 %v666, %v665
    %v771 = vpack.c.bf16 %v668, %v667
    %v772 = vpack.c.bf16 %v670, %v669
    %v773 = vpack.c.bf16 %v672, %v671
    %v774 = vpack.c.bf16 %v674, %v673
    %v783 = vunpack.c.l.b16 %v767
    %v784 = vunpack.c.h.b16 %v767
    %v785 = vunpack.c.l.b16 %v768
    %v786 = vunpack.c.h.b16 %v768
    %v787 = vunpack.c.l.b16 %v769
    %v788 = vunpack.c.h.b16 %v769
    %v789 = vunpack.c.l.b16 %v770
    %v790 = vunpack.c.h.b16 %v770
    %v791 = vunpack.c.l.b16 %v771
    %v792 = vunpack.c.h.b16 %v771
    %v793 = vunpack.c.l.b16 %v772
    %v794 = vunpack.c.h.b16 %v772
    %v795 = vunpack.c.l.b16 %v773
    %v796 = vunpack.c.h.b16 %v773
    %v797 = vunpack.c.l.b16 %v774
    %v798 = vunpack.c.h.b16 %v774
    %v799 = vpack.c.b16 %v783, %v783
    %v800 = vpack.c.b16 %v784, %v784
    %v801 = vpack.c.b16 %v785, %v785
    %v802 = vpack.c.b16 %v786, %v786
    %v803 = vpack.c.b16 %v787, %v787
    %v804 = vpack.c.b16 %v788, %v788
    %v805 = vpack.c.b16 %v789, %v789
    %v806 = vpack.c.b16 %v790, %v790
    %v807 = vpack.c.b16 %v791, %v791
    %v808 = vpack.c.b16 %v792, %v792
    %v809 = vpack.c.b16 %v793, %v793
    %v810 = vpack.c.b16 %v794, %v794
    %v811 = vpack.c.b16 %v795, %v795
    %v812 = vpack.c.b16 %v796, %v796
    %v813 = vpack.c.b16 %v797, %v797
    %v814 = vpack.c.b16 %v798, %v798
    %vm831 = vcmask 257024
    %832 = vst.msk [vmem:[%s3] sm:$0xf] %vm831, %v799
    %833 = vst.msk [vmem:[%s3 + $0x4] sm:$0xf] %vm831, %v800
    %834 = vst.msk [vmem:[%s3 + $0x8] sm:$0xf] %vm831, %v801
    %835 = vst.msk [vmem:[%s3 + $0xc] sm:$0xf] %vm831, %v802
    %836 = vst.msk [vmem:[%s3 + $0x10] sm:$0xf] %vm831, %v803
    %837 = vst.msk [vmem:[%s3 + $0x14] sm:$0xf] %vm831, %v804
    %838 = vst.msk [vmem:[%s3 + $0x18] sm:$0xf] %vm831, %v805
    %839 = vst.msk [vmem:[%s3 + $0x1c] sm:$0xf] %vm831, %v806
    %840 = vst.msk [vmem:[%s3 + $0x20] sm:$0xf] %vm831, %v807
    %841 = vst.msk [vmem:[%s3 + $0x24] sm:$0xf] %vm831, %v808
    %842 = vst.msk [vmem:[%s3 + $0x28] sm:$0xf] %vm831, %v809
    %843 = vst.msk [vmem:[%s3 + $0x2c] sm:$0xf] %vm831, %v810
    %844 = vst.msk [vmem:[%s3 + $0x30] sm:$0xf] %vm831, %v811
    %845 = vst.msk [vmem:[%s3 + $0x34] sm:$0xf] %vm831, %v812
    %846 = vst.msk [vmem:[%s3 + $0x38] sm:$0xf] %vm831, %v813
    %847 = vst.msk [vmem:[%s3 + $0x3c] sm:$0xf] %vm831, %v814
  $region21: #{unet_forward.31} parent=0 // pred_fallthru
    _
  // Predicated region
  $region22: #{unet_forward.31} parent=0 // pred_check
    _
  $region23: #{unet_forward.31} parent=0 // pred_check_branch
    %849 = sbr.rel (0) target = $region25
  $region24: #{unet_forward.31} parent=0 // pred_region
    _
  $region25: #{unet_forward.31} parent=0 // pred_fallthru
    _
  // Predicated region
  $region26: #{unet_forward.31} parent=0 // pred_check
    _
  $region27: #{unet_forward.31} parent=0 // pred_check_branch
    %851 = sbr.rel (0) target = $region29
  $region28: #{unet_forward.31} parent=0 // pred_region
    _
  $region29: #{unet_forward.31} parent=0 // pred_fallthru
    _
  // Predicated region
  $region30: #{unet_forward.31} parent=0 // pred_check
    _
  $region31: #{unet_forward.31} parent=0 // pred_check_branch
    %853 = sbr.rel (0) target = $region33
  $region32: #{unet_forward.31} parent=0 // pred_region
    _
  $region33: #{unet_forward.31} parent=0 // pred_fallthru
    _
  // Predicated region
  $region34: #{unet_forward.31} parent=0 // pred_check
    _
  $region35: #{unet_forward.31} parent=0 // pred_check_branch
    %855 = sbr.rel (0) target = $region37
  $region36: #{unet_forward.31} parent=0 // pred_region
    _
  $region37: #{unet_forward.31} parent=0 // pred_fallthru
    _
  // Predicated region
  $region38: #{unet_forward.31} parent=0 // pred_check
    _
  $region39: #{unet_forward.31} parent=0 // pred_check_branch
    %857 = sbr.rel (0) target = $region41
  $region40: #{unet_forward.31} parent=0 // pred_region
    _
  $region41: #{unet_forward.31} parent=0 // pred_fallthru
    _
  // Predicated region
  $region42: #{unet_forward.31} parent=0 // pred_check
    _
  $region43: #{unet_forward.31} parent=0 // pred_check_branch
    %859 = sbr.rel (0) target = $region45
  $region44: #{unet_forward.31} parent=0 // pred_region
    _
  $region45: #{unet_forward.31} parent=0 // pred_fallthru
    _

// kernel: unet_forward.32
$region0: #{unet_forward.32}
  #allocation0 [shape = 'u32[]', space=smem, size = 0x4, offset = 0x4, fixed_abs, tag = 'smem constant byte address 0x4 - core index']
  #allocation1 [shape = 'u32[144,128]{1,0:T(1,128)}', space=vmem, size = 0x12000, scoped, tag = 'internal scratch']
  %s0 = inlined_call_operand.vmem [shape: bf16[128,32], index: 0, kind: input, shape index: {}]
  %s1 = inlined_call_operand.vmem [shape: f32[1,32], index: 1, kind: input, shape index: {}]
  %s2 = inlined_call_operand.vmem [shape: f32[1,32], index: 2, kind: input, shape index: {}]
  %s3 = inlined_call_operand.vmem [shape: bf16[128,32], index: 3, kind: output, shape index: {}]
  %s4 = sld [smem:[#allocation0]]
  $region22: #{unet_forward.32} parent=0
    _
  %s6 = ssub.s32 1, %s4
  %s7 = scalar_select 0, %s6, %s4
  // Predicated region
  $region2: #{unet_forward.32} parent=0 // pred_check
    _
  $region3: #{unet_forward.32} parent=0 // pred_check_branch
    %9 = sbr.rel (0) target = $region5
  $region4: #{unet_forward.32} parent=0 // pred_region
    _
  $region5: #{unet_forward.32} parent=0 // pred_fallthru
    _
  // Predicated region
  $region6: #{unet_forward.32} parent=0 // pred_check
    _
  $region7: #{unet_forward.32} parent=0 // pred_check_branch
    %11 = sbr.rel (0) target = $region9
  $region8: #{unet_forward.32} parent=0 // pred_region
    _
  $region9: #{unet_forward.32} parent=0 // pred_fallthru
    _
  // Predicated region
  $region10: #{unet_forward.32} parent=0 // pred_check
    _
  $region11: #{unet_forward.32} parent=0 // pred_check_branch
    %13 = sbr.rel (0) target = $region13
  $region12: #{unet_forward.32} parent=0 // pred_region
    _
  $region13: #{unet_forward.32} parent=0 // pred_fallthru
    _
  %v14 = vld [vmem:[%s0] sm:$0xf]
  %v15 = vld [vmem:[%s0 + $0x4] sm:$0xf]
  %v16 = vld [vmem:[%s0 + $0x8] sm:$0xf]
  %v17 = vld [vmem:[%s0 + $0xc] sm:$0xf]
  %v18 = vld [vmem:[%s0 + $0x10] sm:$0xf]
  %v19 = vld [vmem:[%s0 + $0x14] sm:$0xf]
  %v20 = vld [vmem:[%s0 + $0x18] sm:$0xf]
  %v21 = vld [vmem:[%s0 + $0x1c] sm:$0xf]
  %v22 = vld [vmem:[%s0 + $0x20] sm:$0xf]
  %v23 = vld [vmem:[%s0 + $0x24] sm:$0xf]
  %v24 = vld [vmem:[%s0 + $0x28] sm:$0xf]
  %v25 = vld [vmem:[%s0 + $0x2c] sm:$0xf]
  %v26 = vld [vmem:[%s0 + $0x30] sm:$0xf]
  %v27 = vld [vmem:[%s0 + $0x34] sm:$0xf]
  %v28 = vld [vmem:[%s0 + $0x38] sm:$0xf]
  %v29 = vld [vmem:[%s0 + $0x3c] sm:$0xf]
  %v30 = vunpack.c.l.bf16 %v14
  %v31 = vunpack.c.l.bf16 %v15
  %v32 = vunpack.c.l.bf16 %v16
  %v33 = vunpack.c.l.bf16 %v17
  %v34 = vunpack.c.l.bf16 %v18
  %v35 = vunpack.c.l.bf16 %v19
  %v36 = vunpack.c.l.bf16 %v20
  %v37 = vunpack.c.l.bf16 %v21
  %v38 = vunpack.c.l.bf16 %v22
  %v39 = vunpack.c.l.bf16 %v23
  %v40 = vunpack.c.l.bf16 %v24
  %v41 = vunpack.c.l.bf16 %v25
  %v42 = vunpack.c.l.bf16 %v26
  %v43 = vunpack.c.l.bf16 %v27
  %v44 = vunpack.c.l.bf16 %v28
  %v45 = vunpack.c.l.bf16 %v29
  %v46 = vld [vmem:[%s1] sm:$0x1]
  %v48 = vlaneseq
  %v49 = vshrl.u32 %v48, 7
  %v50 = vsub.s32 0, %v49
  %v51 = vrot.slane %v46, %v50
  %v53 = vsub.f32 %v30, %v51
  %v54 = vsub.f32 %v31, %v51
  %v55 = vsub.f32 %v32, %v51
  %v56 = vsub.f32 %v33, %v51
  %v57 = vsub.f32 %v34, %v51
  %v58 = vsub.f32 %v35, %v51
  %v59 = vsub.f32 %v36, %v51
  %v60 = vsub.f32 %v37, %v51
  %v61 = vsub.f32 %v38, %v51
  %v62 = vsub.f32 %v39, %v51
  %v63 = vsub.f32 %v40, %v51
  %v64 = vsub.f32 %v41, %v51
  %v65 = vsub.f32 %v42, %v51
  %v66 = vsub.f32 %v43, %v51
  %v67 = vsub.f32 %v44, %v51
  %v68 = vsub.f32 %v45, %v51
  %v69 = vld [vmem:[%s2] sm:$0x1]
  %v71 = vlaneseq
  %v72 = vshrl.u32 %v71, 7
  %v73 = vsub.s32 0, %v72
  %v74 = vrot.slane %v69, %v73
  %v76 = vmul.f32 %v53, %v74
  %v77 = vmul.f32 %v54, %v74
  %v78 = vmul.f32 %v55, %v74
  %v79 = vmul.f32 %v56, %v74
  %v80 = vmul.f32 %v57, %v74
  %v81 = vmul.f32 %v58, %v74
  %v82 = vmul.f32 %v59, %v74
  %v83 = vmul.f32 %v60, %v74
  %v84 = vmul.f32 %v61, %v74
  %v85 = vmul.f32 %v62, %v74
  %v86 = vmul.f32 %v63, %v74
  %v87 = vmul.f32 %v64, %v74
  %v88 = vmul.f32 %v65, %v74
  %v89 = vmul.f32 %v66, %v74
  %v90 = vmul.f32 %v67, %v74
  %v91 = vmul.f32 %v68, %v74
  %v92 = vpack.c.bf16 %v77, %v76
  %v93 = vpack.c.bf16 %v79, %v78
  %v94 = vpack.c.bf16 %v81, %v80
  %v95 = vpack.c.bf16 %v83, %v82
  %v96 = vpack.c.bf16 %v85, %v84
  %v97 = vpack.c.bf16 %v87, %v86
  %v98 = vpack.c.bf16 %v89, %v88
  %v99 = vpack.c.bf16 %v91, %v90
  %v108 = vunpack.c.l.b16 %v92
  %v109 = vunpack.c.h.b16 %v92
  %v110 = vunpack.c.l.b16 %v93
  %v111 = vunpack.c.h.b16 %v93
  %v112 = vunpack.c.l.b16 %v94
  %v113 = vunpack.c.h.b16 %v94
  %v114 = vunpack.c.l.b16 %v95
  %v115 = vunpack.c.h.b16 %v95
  %v116 = vunpack.c.l.b16 %v96
  %v117 = vunpack.c.h.b16 %v96
  %v118 = vunpack.c.l.b16 %v97
  %v119 = vunpack.c.h.b16 %v97
  %v120 = vunpack.c.l.b16 %v98
  %v121 = vunpack.c.h.b16 %v98
  %v122 = vunpack.c.l.b16 %v99
  %v123 = vunpack.c.h.b16 %v99
  %v124 = vpack.c.b16 %v108, %v108
  %v125 = vpack.c.b16 %v109, %v109
  %v126 = vpack.c.b16 %v110, %v110
  %v127 = vpack.c.b16 %v111, %v111
  %v128 = vpack.c.b16 %v112, %v112
  %v129 = vpack.c.b16 %v113, %v113
  %v130 = vpack.c.b16 %v114, %v114
  %v131 = vpack.c.b16 %v115, %v115
  %v132 = vpack.c.b16 %v116, %v116
  %v133 = vpack.c.b16 %v117, %v117
  %v134 = vpack.c.b16 %v118, %v118
  %v135 = vpack.c.b16 %v119, %v119
  %v136 = vpack.c.b16 %v120, %v120
  %v137 = vpack.c.b16 %v121, %v121
  %v138 = vpack.c.b16 %v122, %v122
  %v139 = vpack.c.b16 %v123, %v123
  %vm156 = vcmask 257024
  %157 = vst.msk [vmem:[%s3] sm:$0xf] %vm156, %v124
  %158 = vst.msk [vmem:[%s3 + $0x4] sm:$0xf] %vm156, %v125
  %159 = vst.msk [vmem:[%s3 + $0x8] sm:$0xf] %vm156, %v126
  %160 = vst.msk [vmem:[%s3 + $0xc] sm:$0xf] %vm156, %v127
  %161 = vst.msk [vmem:[%s3 + $0x10] sm:$0xf] %vm156, %v128
  %162 = vst.msk [vmem:[%s3 + $0x14] sm:$0xf] %vm156, %v129
  %163 = vst.msk [vmem:[%s3 + $0x18] sm:$0xf] %vm156, %v130
  %164 = vst.msk [vmem:[%s3 + $0x1c] sm:$0xf] %vm156, %v131
  %165 = vst.msk [vmem:[%s3 + $0x20] sm:$0xf] %vm156, %v132
  %166 = vst.msk [vmem:[%s3 + $0x24] sm:$0xf] %vm156, %v133
  %167 = vst.msk [vmem:[%s3 + $0x28] sm:$0xf] %vm156, %v134
  %168 = vst.msk [vmem:[%s3 + $0x2c] sm:$0xf] %vm156, %v135
  %169 = vst.msk [vmem:[%s3 + $0x30] sm:$0xf] %vm156, %v136
  %170 = vst.msk [vmem:[%s3 + $0x34] sm:$0xf] %vm156, %v137
  %171 = vst.msk [vmem:[%s3 + $0x38] sm:$0xf] %vm156, %v138
  %172 = vst.msk [vmem:[%s3 + $0x3c] sm:$0xf] %vm156, %v139
  // Predicated region
  $region14: #{unet_forward.32} parent=0 // pred_check
    _
  $region15: #{unet_forward.32} parent=0 // pred_check_branch
    %174 = sbr.rel (0) target = $region17
  $region16: #{unet_forward.32} parent=0 // pred_region
    _
  $region17: #{unet_forward.32} parent=0 // pred_fallthru
    _
  // Predicated region
  $region18: #{unet_forward.32} parent=0 // pred_check
    _
  $region19: #{unet_forward.32} parent=0 // pred_check_branch
    %176 = sbr.rel (0) target = $region21
  $region20: #{unet_forward.32} parent=0 // pred_region
    _
  $region21: #{unet_forward.32} parent=0 // pred_fallthru
    _

// kernel: unet_forward.33
$region0: #{unet_forward.33}
  #allocation0 [shape = 'u32[]', space=smem, size = 0x4, offset = 0x4, fixed_abs, tag = 'smem constant byte address 0x4 - core index']
  #allocation1 [shape = 'u32[144,128]{1,0:T(1,128)}', space=vmem, size = 0x12000, scoped, tag = 'internal scratch']
  #allocation2 [shape = 'f32[512,128]{1,0:T(8,128)}', space=vmem, size = 0x40000, scoped, tag = 'scratch operand']
  %s0 = inlined_call_operand.vmem [shape: bf16[512,144], index: 0, kind: input, shape index: {}]
  %s1 = inlined_call_operand.vmem [shape: bf16[144,128], index: 1, kind: input, shape index: {}]
  %s2 = inlined_call_operand.vmem [shape: f32[1,128], index: 2, kind: input, shape index: {}]
  %s3 = inlined_call_operand.vmem [shape: f32[512,12], index: 3, kind: output, shape index: {}]
  %s4 = sld [smem:[#allocation0]]
  $region30: #{unet_forward.33} parent=0
    _
  %s6 = ssub.s32 1, %s4
  %s7 = scalar_select 0, %s6, %s4
  // Predicated region
  $region2: #{unet_forward.33} parent=0 // pred_check
    _
  $region3: #{unet_forward.33} parent=0 // pred_check_branch
    %9 = sbr.rel (0) target = $region5
  $region4: #{unet_forward.33} parent=0 // pred_region
    _
  $region5: #{unet_forward.33} parent=0 // pred_fallthru
    _
  // Predicated region
  $region6: #{unet_forward.33} parent=0 // pred_check
    _
  $region7: #{unet_forward.33} parent=0 // pred_check_branch
    %11 = sbr.rel (0) target = $region9
  $region8: #{unet_forward.33} parent=0 // pred_region
    _
  $region9: #{unet_forward.33} parent=0 // pred_fallthru
    _
  // Predicated region
  $region10: #{unet_forward.33} parent=0 // pred_check
    _
  $region11: #{unet_forward.33} parent=0 // pred_check_branch
    %13 = sbr.rel (0) target = $region13
  $region12: #{unet_forward.33} parent=0 // pred_region
    _
  $region13: #{unet_forward.33} parent=0 // pred_fallthru
    _
  %p15 = scmp.eq.s32.totalorder 0, 0
  // Predicated region
  $region14: #{unet_forward.33} parent=0 // pred_check
    %p16 = pneg %p15
  $region15: #{unet_forward.33} parent=0 // pred_check_branch
    %18 = sbr.rel (%p16) target = $region17
  $region16: #{unet_forward.33} parent=0 // pred_region
    %19 = vst [vmem:[#allocation2] sm:$0xff] 0.0
    %20 = vst [vmem:[#allocation2 + $0x8] sm:$0xff] 0.0
    %21 = vst [vmem:[#allocation2 + $0x10] sm:$0xff] 0.0
    %22 = vst [vmem:[#allocation2 + $0x18] sm:$0xff] 0.0
    %23 = vst [vmem:[#allocation2 + $0x20] sm:$0xff] 0.0
    %24 = vst [vmem:[#allocation2 + $0x28] sm:$0xff] 0.0
    %25 = vst [vmem:[#allocation2 + $0x30] sm:$0xff] 0.0
    %26 = vst [vmem:[#allocation2 + $0x38] sm:$0xff] 0.0
    %27 = vst [vmem:[#allocation2 + $0x40] sm:$0xff] 0.0
    %28 = vst [vmem:[#allocation2 + $0x48] sm:$0xff] 0.0
    %29 = vst [vmem:[#allocation2 + $0x50] sm:$0xff] 0.0
    %30 = vst [vmem:[#allocation2 + $0x58] sm:$0xff] 0.0
    %31 = vst [vmem:[#allocation2 + $0x60] sm:$0xff] 0.0
    %32 = vst [vmem:[#allocation2 + $0x68] sm:$0xff] 0.0
    %33 = vst [vmem:[#allocation2 + $0x70] sm:$0xff] 0.0
    %34 = vst [vmem:[#allocation2 + $0x78] sm:$0xff] 0.0
    %35 = vst [vmem:[#allocation2 + $0x80] sm:$0xff] 0.0
    %36 = vst [vmem:[#allocation2 + $0x88] sm:$0xff] 0.0
    %37 = vst [vmem:[#allocation2 + $0x90] sm:$0xff] 0.0
    %38 = vst [vmem:[#allocation2 + $0x98] sm:$0xff] 0.0
    %39 = vst [vmem:[#allocation2 + $0xa0] sm:$0xff] 0.0
    %40 = vst [vmem:[#allocation2 + $0xa8] sm:$0xff] 0.0
    %41 = vst [vmem:[#allocation2 + $0xb0] sm:$0xff] 0.0
    %42 = vst [vmem:[#allocation2 + $0xb8] sm:$0xff] 0.0
    %43 = vst [vmem:[#allocation2 + $0xc0] sm:$0xff] 0.0
    %44 = vst [vmem:[#allocation2 + $0xc8] sm:$0xff] 0.0
    %45 = vst [vmem:[#allocation2 + $0xd0] sm:$0xff] 0.0
    %46 = vst [vmem:[#allocation2 + $0xd8] sm:$0xff] 0.0
    %47 = vst [vmem:[#allocation2 + $0xe0] sm:$0xff] 0.0
    %48 = vst [vmem:[#allocation2 + $0xe8] sm:$0xff] 0.0
    %49 = vst [vmem:[#allocation2 + $0xf0] sm:$0xff] 0.0
    %50 = vst [vmem:[#allocation2 + $0xf8] sm:$0xff] 0.0
    %51 = vst [vmem:[#allocation2 + $0x100] sm:$0xff] 0.0
    %52 = vst [vmem:[#allocation2 + $0x108] sm:$0xff] 0.0
    %53 = vst [vmem:[#allocation2 + $0x110] sm:$0xff] 0.0
    %54 = vst [vmem:[#allocation2 + $0x118] sm:$0xff] 0.0
    %55 = vst [vmem:[#allocation2 + $0x120] sm:$0xff] 0.0
    %56 = vst [vmem:[#allocation2 + $0x128] sm:$0xff] 0.0
    %57 = vst [vmem:[#allocation2 + $0x130] sm:$0xff] 0.0
    %58 = vst [vmem:[#allocation2 + $0x138] sm:$0xff] 0.0
    %59 = vst [vmem:[#allocation2 + $0x140] sm:$0xff] 0.0
    %60 = vst [vmem:[#allocation2 + $0x148] sm:$0xff] 0.0
    %61 = vst [vmem:[#allocation2 + $0x150] sm:$0xff] 0.0
    %62 = vst [vmem:[#allocation2 + $0x158] sm:$0xff] 0.0
    %63 = vst [vmem:[#allocation2 + $0x160] sm:$0xff] 0.0
    %64 = vst [vmem:[#allocation2 + $0x168] sm:$0xff] 0.0
    %65 = vst [vmem:[#allocation2 + $0x170] sm:$0xff] 0.0
    %66 = vst [vmem:[#allocation2 + $0x178] sm:$0xff] 0.0
    %67 = vst [vmem:[#allocation2 + $0x180] sm:$0xff] 0.0
    %68 = vst [vmem:[#allocation2 + $0x188] sm:$0xff] 0.0
    %69 = vst [vmem:[#allocation2 + $0x190] sm:$0xff] 0.0
    %70 = vst [vmem:[#allocation2 + $0x198] sm:$0xff] 0.0
    %71 = vst [vmem:[#allocation2 + $0x1a0] sm:$0xff] 0.0
    %72 = vst [vmem:[#allocation2 + $0x1a8] sm:$0xff] 0.0
    %73 = vst [vmem:[#allocation2 + $0x1b0] sm:$0xff] 0.0
    %74 = vst [vmem:[#allocation2 + $0x1b8] sm:$0xff] 0.0
    %75 = vst [vmem:[#allocation2 + $0x1c0] sm:$0xff] 0.0
    %76 = vst [vmem:[#allocation2 + $0x1c8] sm:$0xff] 0.0
    %77 = vst [vmem:[#allocation2 + $0x1d0] sm:$0xff] 0.0
    %78 = vst [vmem:[#allocation2 + $0x1d8] sm:$0xff] 0.0
    %79 = vst [vmem:[#allocation2 + $0x1e0] sm:$0xff] 0.0
    %80 = vst [vmem:[#allocation2 + $0x1e8] sm:$0xff] 0.0
    %81 = vst [vmem:[#allocation2 + $0x1f0] sm:$0xff] 0.0
    %82 = vst [vmem:[#allocation2 + $0x1f8] sm:$0xff] 0.0
  $region17: #{unet_forward.33} parent=0 // pred_fallthru
    _
  %v83 = vld [vmem:[%s0] sm:$0xff]
  %v84 = vld [vmem:[%s0 + $0x8] sm:$0xff]
  %v85 = vld [vmem:[%s0 + $0x10] sm:$0xff]
  %v86 = vld [vmem:[%s0 + $0x18] sm:$0xff]
  %v87 = vld [vmem:[%s0 + $0x20] sm:$0xff]
  %v88 = vld [vmem:[%s0 + $0x28] sm:$0xff]
  %v89 = vld [vmem:[%s0 + $0x30] sm:$0xff]
  %v90 = vld [vmem:[%s0 + $0x38] sm:$0xff]
  %v91 = vld [vmem:[%s0 + $0x40] sm:$0xff]
  %v92 = vld [vmem:[%s0 + $0x48] sm:$0xff]
  %v93 = vld [vmem:[%s0 + $0x50] sm:$0xff]
  %v94 = vld [vmem:[%s0 + $0x58] sm:$0xff]
  %v95 = vld [vmem:[%s0 + $0x60] sm:$0xff]
  %v96 = vld [vmem:[%s0 + $0x68] sm:$0xff]
  %v97 = vld [vmem:[%s0 + $0x70] sm:$0xff]
  %v98 = vld [vmem:[%s0 + $0x78] sm:$0xff]
  %v99 = vld [vmem:[%s0 + $0x80] sm:$0xff]
  %v100 = vld [vmem:[%s0 + $0x88] sm:$0xff]
  %v101 = vld [vmem:[%s0 + $0x90] sm:$0xff]
  %v102 = vld [vmem:[%s0 + $0x98] sm:$0xff]
  %v103 = vld [vmem:[%s0 + $0xa0] sm:$0xff]
  %v104 = vld [vmem:[%s0 + $0xa8] sm:$0xff]
  %v105 = vld [vmem:[%s0 + $0xb0] sm:$0xff]
  %v106 = vld [vmem:[%s0 + $0xb8] sm:$0xff]
  %v107 = vld [vmem:[%s0 + $0xc0] sm:$0xff]
  %v108 = vld [vmem:[%s0 + $0xc8] sm:$0xff]
  %v109 = vld [vmem:[%s0 + $0xd0] sm:$0xff]
  %v110 = vld [vmem:[%s0 + $0xd8] sm:$0xff]
  %v111 = vld [vmem:[%s0 + $0xe0] sm:$0xff]
  %v112 = vld [vmem:[%s0 + $0xe8] sm:$0xff]
  %v113 = vld [vmem:[%s0 + $0xf0] sm:$0xff]
  %v114 = vld [vmem:[%s0 + $0xf8] sm:$0xff]
  %v115 = vld [vmem:[%s0 + $0x100] sm:$0xff]
  %v116 = vld [vmem:[%s0 + $0x108] sm:$0xff]
  %v117 = vld [vmem:[%s0 + $0x110] sm:$0xff]
  %v118 = vld [vmem:[%s0 + $0x118] sm:$0xff]
  %v119 = vld [vmem:[%s0 + $0x120] sm:$0xff]
  %v120 = vld [vmem:[%s0 + $0x128] sm:$0xff]
  %v121 = vld [vmem:[%s0 + $0x130] sm:$0xff]
  %v122 = vld [vmem:[%s0 + $0x138] sm:$0xff]
  %v123 = vld [vmem:[%s0 + $0x140] sm:$0xff]
  %v124 = vld [vmem:[%s0 + $0x148] sm:$0xff]
  %v125 = vld [vmem:[%s0 + $0x150] sm:$0xff]
  %v126 = vld [vmem:[%s0 + $0x158] sm:$0xff]
  %v127 = vld [vmem:[%s0 + $0x160] sm:$0xff]
  %v128 = vld [vmem:[%s0 + $0x168] sm:$0xff]
  %v129 = vld [vmem:[%s0 + $0x170] sm:$0xff]
  %v130 = vld [vmem:[%s0 + $0x178] sm:$0xff]
  %v131 = vld [vmem:[%s0 + $0x180] sm:$0xff]
  %v132 = vld [vmem:[%s0 + $0x188] sm:$0xff]
  %v133 = vld [vmem:[%s0 + $0x190] sm:$0xff]
  %v134 = vld [vmem:[%s0 + $0x198] sm:$0xff]
  %v135 = vld [vmem:[%s0 + $0x1a0] sm:$0xff]
  %v136 = vld [vmem:[%s0 + $0x1a8] sm:$0xff]
  %v137 = vld [vmem:[%s0 + $0x1b0] sm:$0xff]
  %v138 = vld [vmem:[%s0 + $0x1b8] sm:$0xff]
  %v139 = vld [vmem:[%s0 + $0x1c0] sm:$0xff]
  %v140 = vld [vmem:[%s0 + $0x1c8] sm:$0xff]
  %v141 = vld [vmem:[%s0 + $0x1d0] sm:$0xff]
  %v142 = vld [vmem:[%s0 + $0x1d8] sm:$0xff]
  %v143 = vld [vmem:[%s0 + $0x1e0] sm:$0xff]
  %v144 = vld [vmem:[%s0 + $0x1e8] sm:$0xff]
  %v145 = vld [vmem:[%s0 + $0x1f0] sm:$0xff]
  %v146 = vld [vmem:[%s0 + $0x1f8] sm:$0xff]
  %v147 = vmax.bf16 %v83, 0
  %v148 = vmax.bf16 %v84, 0
  %v149 = vmax.bf16 %v85, 0
  %v150 = vmax.bf16 %v86, 0
  %v151 = vmax.bf16 %v87, 0
  %v152 = vmax.bf16 %v88, 0
  %v153 = vmax.bf16 %v89, 0
  %v154 = vmax.bf16 %v90, 0
  %v155 = vmax.bf16 %v91, 0
  %v156 = vmax.bf16 %v92, 0
  %v157 = vmax.bf16 %v93, 0
  %v158 = vmax.bf16 %v94, 0
  %v159 = vmax.bf16 %v95, 0
  %v160 = vmax.bf16 %v96, 0
  %v161 = vmax.bf16 %v97, 0
  %v162 = vmax.bf16 %v98, 0
  %v163 = vmax.bf16 %v99, 0
  %v164 = vmax.bf16 %v100, 0
  %v165 = vmax.bf16 %v101, 0
  %v166 = vmax.bf16 %v102, 0
  %v167 = vmax.bf16 %v103, 0
  %v168 = vmax.bf16 %v104, 0
  %v169 = vmax.bf16 %v105, 0
  %v170 = vmax.bf16 %v106, 0
  %v171 = vmax.bf16 %v107, 0
  %v172 = vmax.bf16 %v108, 0
  %v173 = vmax.bf16 %v109, 0
  %v174 = vmax.bf16 %v110, 0
  %v175 = vmax.bf16 %v111, 0
  %v176 = vmax.bf16 %v112, 0
  %v177 = vmax.bf16 %v113, 0
  %v178 = vmax.bf16 %v114, 0
  %v179 = vmax.bf16 %v115, 0
  %v180 = vmax.bf16 %v116, 0
  %v181 = vmax.bf16 %v117, 0
  %v182 = vmax.bf16 %v118, 0
  %v183 = vmax.bf16 %v119, 0
  %v184 = vmax.bf16 %v120, 0
  %v185 = vmax.bf16 %v121, 0
  %v186 = vmax.bf16 %v122, 0
  %v187 = vmax.bf16 %v123, 0
  %v188 = vmax.bf16 %v124, 0
  %v189 = vmax.bf16 %v125, 0
  %v190 = vmax.bf16 %v126, 0
  %v191 = vmax.bf16 %v127, 0
  %v192 = vmax.bf16 %v128, 0
  %v193 = vmax.bf16 %v129, 0
  %v194 = vmax.bf16 %v130, 0
  %v195 = vmax.bf16 %v131, 0
  %v196 = vmax.bf16 %v132, 0
  %v197 = vmax.bf16 %v133, 0
  %v198 = vmax.bf16 %v134, 0
  %v199 = vmax.bf16 %v135, 0
  %v200 = vmax.bf16 %v136, 0
  %v201 = vmax.bf16 %v137, 0
  %v202 = vmax.bf16 %v138, 0
  %v203 = vmax.bf16 %v139, 0
  %v204 = vmax.bf16 %v140, 0
  %v205 = vmax.bf16 %v141, 0
  %v206 = vmax.bf16 %v142, 0
  %v207 = vmax.bf16 %v143, 0
  %v208 = vmax.bf16 %v144, 0
  %v209 = vmax.bf16 %v145, 0
  %v210 = vmax.bf16 %v146, 0
  %v211 = vld [vmem:[%s1] sm:$0xf]
  %v212 = vld [vmem:[%s1 + $0x4] sm:$0xf]
  %v213 = vld [vmem:[%s1 + $0x8] sm:$0xf]
  %v214 = vld [vmem:[%s1 + $0xc] sm:$0xf]
  %v215 = vld [vmem:[%s1 + $0x10] sm:$0xf]
  %v216 = vld [vmem:[%s1 + $0x14] sm:$0xf]
  %v217 = vld [vmem:[%s1 + $0x18] sm:$0xf]
  %v218 = vld [vmem:[%s1 + $0x1c] sm:$0xf]
  %v219 = vld [vmem:[%s1 + $0x20] sm:$0xf]
  %v220 = vld [vmem:[%s1 + $0x24] sm:$0xf]
  %v221 = vld [vmem:[%s1 + $0x28] sm:$0xf]
  %v222 = vld [vmem:[%s1 + $0x2c] sm:$0xf]
  %v223 = vld [vmem:[%s1 + $0x30] sm:$0xf]
  %v224 = vld [vmem:[%s1 + $0x34] sm:$0xf]
  %v225 = vld [vmem:[%s1 + $0x38] sm:$0xf]
  %v226 = vld [vmem:[%s1 + $0x3c] sm:$0xf]
  %v227 = vld [vmem:[%s1 + $0x40] sm:$0xf]
  %v228 = vld [vmem:[%s1 + $0x44] sm:$0xf]
  %v229 = vld [vmem:[#allocation2] sm:$0xff]
  %v230 = vld [vmem:[#allocation2 + $0x8] sm:$0xff]
  %v231 = vld [vmem:[#allocation2 + $0x10] sm:$0xff]
  %v232 = vld [vmem:[#allocation2 + $0x18] sm:$0xff]
  %v233 = vld [vmem:[#allocation2 + $0x20] sm:$0xff]
  %v234 = vld [vmem:[#allocation2 + $0x28] sm:$0xff]
  %v235 = vld [vmem:[#allocation2 + $0x30] sm:$0xff]
  %v236 = vld [vmem:[#allocation2 + $0x38] sm:$0xff]
  %v237 = vld [vmem:[#allocation2 + $0x40] sm:$0xff]
  %v238 = vld [vmem:[#allocation2 + $0x48] sm:$0xff]
  %v239 = vld [vmem:[#allocation2 + $0x50] sm:$0xff]
  %v240 = vld [vmem:[#allocation2 + $0x58] sm:$0xff]
  %v241 = vld [vmem:[#allocation2 + $0x60] sm:$0xff]
  %v242 = vld [vmem:[#allocation2 + $0x68] sm:$0xff]
  %v243 = vld [vmem:[#allocation2 + $0x70] sm:$0xff]
  %v244 = vld [vmem:[#allocation2 + $0x78] sm:$0xff]
  %v245 = vld [vmem:[#allocation2 + $0x80] sm:$0xff]
  %v246 = vld [vmem:[#allocation2 + $0x88] sm:$0xff]
  %v247 = vld [vmem:[#allocation2 + $0x90] sm:$0xff]
  %v248 = vld [vmem:[#allocation2 + $0x98] sm:$0xff]
  %v249 = vld [vmem:[#allocation2 + $0xa0] sm:$0xff]
  %v250 = vld [vmem:[#allocation2 + $0xa8] sm:$0xff]
  %v251 = vld [vmem:[#allocation2 + $0xb0] sm:$0xff]
  %v252 = vld [vmem:[#allocation2 + $0xb8] sm:$0xff]
  %v253 = vld [vmem:[#allocation2 + $0xc0] sm:$0xff]
  %v254 = vld [vmem:[#allocation2 + $0xc8] sm:$0xff]
  %v255 = vld [vmem:[#allocation2 + $0xd0] sm:$0xff]
  %v256 = vld [vmem:[#allocation2 + $0xd8] sm:$0xff]
  %v257 = vld [vmem:[#allocation2 + $0xe0] sm:$0xff]
  %v258 = vld [vmem:[#allocation2 + $0xe8] sm:$0xff]
  %v259 = vld [vmem:[#allocation2 + $0xf0] sm:$0xff]
  %v260 = vld [vmem:[#allocation2 + $0xf8] sm:$0xff]
  %v261 = vld [vmem:[#allocation2 + $0x100] sm:$0xff]
  %v262 = vld [vmem:[#allocation2 + $0x108] sm:$0xff]
  %v263 = vld [vmem:[#allocation2 + $0x110] sm:$0xff]
  %v264 = vld [vmem:[#allocation2 + $0x118] sm:$0xff]
  %v265 = vld [vmem:[#allocation2 + $0x120] sm:$0xff]
  %v266 = vld [vmem:[#allocation2 + $0x128] sm:$0xff]
  %v267 = vld [vmem:[#allocation2 + $0x130] sm:$0xff]
  %v268 = vld [vmem:[#allocation2 + $0x138] sm:$0xff]
  %v269 = vld [vmem:[#allocation2 + $0x140] sm:$0xff]
  %v270 = vld [vmem:[#allocation2 + $0x148] sm:$0xff]
  %v271 = vld [vmem:[#allocation2 + $0x150] sm:$0xff]
  %v272 = vld [vmem:[#allocation2 + $0x158] sm:$0xff]
  %v273 = vld [vmem:[#allocation2 + $0x160] sm:$0xff]
  %v274 = vld [vmem:[#allocation2 + $0x168] sm:$0xff]
  %v275 = vld [vmem:[#allocation2 + $0x170] sm:$0xff]
  %v276 = vld [vmem:[#allocation2 + $0x178] sm:$0xff]
  %v277 = vld [vmem:[#allocation2 + $0x180] sm:$0xff]
  %v278 = vld [vmem:[#allocation2 + $0x188] sm:$0xff]
  %v279 = vld [vmem:[#allocation2 + $0x190] sm:$0xff]
  %v280 = vld [vmem:[#allocation2 + $0x198] sm:$0xff]
  %v281 = vld [vmem:[#allocation2 + $0x1a0] sm:$0xff]
  %v282 = vld [vmem:[#allocation2 + $0x1a8] sm:$0xff]
  %v283 = vld [vmem:[#allocation2 + $0x1b0] sm:$0xff]
  %v284 = vld [vmem:[#allocation2 + $0x1b8] sm:$0xff]
  %v285 = vld [vmem:[#allocation2 + $0x1c0] sm:$0xff]
  %v286 = vld [vmem:[#allocation2 + $0x1c8] sm:$0xff]
  %v287 = vld [vmem:[#allocation2 + $0x1d0] sm:$0xff]
  %v288 = vld [vmem:[#allocation2 + $0x1d8] sm:$0xff]
  %v289 = vld [vmem:[#allocation2 + $0x1e0] sm:$0xff]
  %v290 = vld [vmem:[#allocation2 + $0x1e8] sm:$0xff]
  %v291 = vld [vmem:[#allocation2 + $0x1f0] sm:$0xff]
  %v292 = vld [vmem:[#allocation2 + $0x1f8] sm:$0xff]
  %v357 = vunpack.c.l.b16 %v147
  %v358 = vunpack.c.h.b16 %v147
  %v359 = vunpack.c.l.b16 %v148
  %v360 = vunpack.c.h.b16 %v148
  %v361 = vunpack.c.l.b16 %v149
  %v362 = vunpack.c.h.b16 %v149
  %v363 = vunpack.c.l.b16 %v150
  %v364 = vunpack.c.h.b16 %v150
  %v365 = vunpack.c.l.b16 %v151
  %v366 = vunpack.c.h.b16 %v151
  %v367 = vunpack.c.l.b16 %v152
  %v368 = vunpack.c.h.b16 %v152
  %v369 = vunpack.c.l.b16 %v153
  %v370 = vunpack.c.h.b16 %v153
  %v371 = vunpack.c.l.b16 %v154
  %v372 = vunpack.c.h.b16 %v154
  %v373 = vunpack.c.l.b16 %v155
  %v374 = vunpack.c.h.b16 %v155
  %v375 = vunpack.c.l.b16 %v156
  %v376 = vunpack.c.h.b16 %v156
  %v377 = vunpack.c.l.b16 %v157
  %v378 = vunpack.c.h.b16 %v157
  %v379 = vunpack.c.l.b16 %v158
  %v380 = vunpack.c.h.b16 %v158
  %v381 = vunpack.c.l.b16 %v159
  %v382 = vunpack.c.h.b16 %v159
  %v383 = vunpack.c.l.b16 %v160
  %v384 = vunpack.c.h.b16 %v160
  %v385 = vunpack.c.l.b16 %v161
  %v386 = vunpack.c.h.b16 %v161
  %v387 = vunpack.c.l.b16 %v162
  %v388 = vunpack.c.h.b16 %v162
  %v389 = vunpack.c.l.b16 %v163
  %v390 = vunpack.c.h.b16 %v163
  %v391 = vunpack.c.l.b16 %v164
  %v392 = vunpack.c.h.b16 %v164
  %v393 = vunpack.c.l.b16 %v165
  %v394 = vunpack.c.h.b16 %v165
  %v395 = vunpack.c.l.b16 %v166
  %v396 = vunpack.c.h.b16 %v166
  %v397 = vunpack.c.l.b16 %v167
  %v398 = vunpack.c.h.b16 %v167
  %v399 = vunpack.c.l.b16 %v168
  %v400 = vunpack.c.h.b16 %v168
  %v401 = vunpack.c.l.b16 %v169
  %v402 = vunpack.c.h.b16 %v169
  %v403 = vunpack.c.l.b16 %v170
  %v404 = vunpack.c.h.b16 %v170
  %v405 = vunpack.c.l.b16 %v171
  %v406 = vunpack.c.h.b16 %v171
  %v407 = vunpack.c.l.b16 %v172
  %v408 = vunpack.c.h.b16 %v172
  %v409 = vunpack.c.l.b16 %v173
  %v410 = vunpack.c.h.b16 %v173
  %v411 = vunpack.c.l.b16 %v174
  %v412 = vunpack.c.h.b16 %v174
  %v413 = vunpack.c.l.b16 %v175
  %v414 = vunpack.c.h.b16 %v175
  %v415 = vunpack.c.l.b16 %v176
  %v416 = vunpack.c.h.b16 %v176
  %v417 = vunpack.c.l.b16 %v177
  %v418 = vunpack.c.h.b16 %v177
  %v419 = vunpack.c.l.b16 %v178
  %v420 = vunpack.c.h.b16 %v178
  %v421 = vunpack.c.l.b16 %v179
  %v422 = vunpack.c.h.b16 %v179
  %v423 = vunpack.c.l.b16 %v180
  %v424 = vunpack.c.h.b16 %v180
  %v425 = vunpack.c.l.b16 %v181
  %v426 = vunpack.c.h.b16 %v181
  %v427 = vunpack.c.l.b16 %v182
  %v428 = vunpack.c.h.b16 %v182
  %v429 = vunpack.c.l.b16 %v183
  %v430 = vunpack.c.h.b16 %v183
  %v431 = vunpack.c.l.b16 %v184
  %v432 = vunpack.c.h.b16 %v184
  %v433 = vunpack.c.l.b16 %v185
  %v434 = vunpack.c.h.b16 %v185
  %v435 = vunpack.c.l.b16 %v186
  %v436 = vunpack.c.h.b16 %v186
  %v437 = vunpack.c.l.b16 %v187
  %v438 = vunpack.c.h.b16 %v187
  %v439 = vunpack.c.l.b16 %v188
  %v440 = vunpack.c.h.b16 %v188
  %v441 = vunpack.c.l.b16 %v189
  %v442 = vunpack.c.h.b16 %v189
  %v443 = vunpack.c.l.b16 %v190
  %v444 = vunpack.c.h.b16 %v190
  %v445 = vunpack.c.l.b16 %v191
  %v446 = vunpack.c.h.b16 %v191
  %v447 = vunpack.c.l.b16 %v192
  %v448 = vunpack.c.h.b16 %v192
  %v449 = vunpack.c.l.b16 %v193
  %v450 = vunpack.c.h.b16 %v193
  %v451 = vunpack.c.l.b16 %v194
  %v452 = vunpack.c.h.b16 %v194
  %v453 = vunpack.c.l.b16 %v195
  %v454 = vunpack.c.h.b16 %v195
  %v455 = vunpack.c.l.b16 %v196
  %v456 = vunpack.c.h.b16 %v196
  %v457 = vunpack.c.l.b16 %v197
  %v458 = vunpack.c.h.b16 %v197
  %v459 = vunpack.c.l.b16 %v198
  %v460 = vunpack.c.h.b16 %v198
  %v461 = vunpack.c.l.b16 %v199
  %v462 = vunpack.c.h.b16 %v199
  %v463 = vunpack.c.l.b16 %v200
  %v464 = vunpack.c.h.b16 %v200
  %v465 = vunpack.c.l.b16 %v201
  %v466 = vunpack.c.h.b16 %v201
  %v467 = vunpack.c.l.b16 %v202
  %v468 = vunpack.c.h.b16 %v202
  %v469 = vunpack.c.l.b16 %v203
  %v470 = vunpack.c.h.b16 %v203
  %v471 = vunpack.c.l.b16 %v204
  %v472 = vunpack.c.h.b16 %v204
  %v473 = vunpack.c.l.b16 %v205
  %v474 = vunpack.c.h.b16 %v205
  %v475 = vunpack.c.l.b16 %v206
  %v476 = vunpack.c.h.b16 %v206
  %v477 = vunpack.c.l.b16 %v207
  %v478 = vunpack.c.h.b16 %v207
  %v479 = vunpack.c.l.b16 %v208
  %v480 = vunpack.c.h.b16 %v208
  %v481 = vunpack.c.l.b16 %v209
  %v482 = vunpack.c.h.b16 %v209
  %v483 = vunpack.c.l.b16 %v210
  %v484 = vunpack.c.h.b16 %v210
  %v485 = vpack.c.b16 %v359, %v357
  %v486 = vpack.c.b16 %v360, %v358
  %v487 = vpack.c.b16 %v363, %v361
  %v488 = vpack.c.b16 %v364, %v362
  %v489 = vpack.c.b16 %v367, %v365
  %v490 = vpack.c.b16 %v368, %v366
  %v491 = vpack.c.b16 %v371, %v369
  %v492 = vpack.c.b16 %v372, %v370
  %v493 = vpack.c.b16 %v375, %v373
  %v494 = vpack.c.b16 %v376, %v374
  %v495 = vpack.c.b16 %v379, %v377
  %v496 = vpack.c.b16 %v380, %v378
  %v497 = vpack.c.b16 %v383, %v381
  %v498 = vpack.c.b16 %v384, %v382
  %v499 = vpack.c.b16 %v387, %v385
  %v500 = vpack.c.b16 %v388, %v386
  %v501 = vpack.c.b16 %v391, %v389
  %v502 = vpack.c.b16 %v392, %v390
  %v503 = vpack.c.b16 %v395, %v393
  %v504 = vpack.c.b16 %v396, %v394
  %v505 = vpack.c.b16 %v399, %v397
  %v506 = vpack.c.b16 %v400, %v398
  %v507 = vpack.c.b16 %v403, %v401
  %v508 = vpack.c.b16 %v404, %v402
  %v509 = vpack.c.b16 %v407, %v405
  %v510 = vpack.c.b16 %v408, %v406
  %v511 = vpack.c.b16 %v411, %v409
  %v512 = vpack.c.b16 %v412, %v410
  %v513 = vpack.c.b16 %v415, %v413
  %v514 = vpack.c.b16 %v416, %v414
  %v515 = vpack.c.b16 %v419, %v417
  %v516 = vpack.c.b16 %v420, %v418
  %v517 = vpack.c.b16 %v423, %v421
  %v518 = vpack.c.b16 %v424, %v422
  %v519 = vpack.c.b16 %v427, %v425
  %v520 = vpack.c.b16 %v428, %v426
  %v521 = vpack.c.b16 %v431, %v429
  %v522 = vpack.c.b16 %v432, %v430
  %v523 = vpack.c.b16 %v435, %v433
  %v524 = vpack.c.b16 %v436, %v434
  %v525 = vpack.c.b16 %v439, %v437
  %v526 = vpack.c.b16 %v440, %v438
  %v527 = vpack.c.b16 %v443, %v441
  %v528 = vpack.c.b16 %v444, %v442
  %v529 = vpack.c.b16 %v447, %v445
  %v530 = vpack.c.b16 %v448, %v446
  %v531 = vpack.c.b16 %v451, %v449
  %v532 = vpack.c.b16 %v452, %v450
  %v533 = vpack.c.b16 %v455, %v453
  %v534 = vpack.c.b16 %v456, %v454
  %v535 = vpack.c.b16 %v459, %v457
  %v536 = vpack.c.b16 %v460, %v458
  %v537 = vpack.c.b16 %v463, %v461
  %v538 = vpack.c.b16 %v464, %v462
  %v539 = vpack.c.b16 %v467, %v465
  %v540 = vpack.c.b16 %v468, %v466
  %v541 = vpack.c.b16 %v471, %v469
  %v542 = vpack.c.b16 %v472, %v470
  %v543 = vpack.c.b16 %v475, %v473
  %v544 = vpack.c.b16 %v476, %v474
  %v545 = vpack.c.b16 %v479, %v477
  %v546 = vpack.c.b16 %v480, %v478
  %v547 = vpack.c.b16 %v483, %v481
  %v548 = vpack.c.b16 %v484, %v482
  %v599 = vunpack.c.l.b16 %v211
  %v600 = vunpack.c.l.b16 %v212
  %v601 = vunpack.c.l.b16 %v213
  %v602 = vunpack.c.l.b16 %v214
  %v603 = vunpack.c.l.b16 %v215
  %v604 = vunpack.c.l.b16 %v216
  %v605 = vunpack.c.l.b16 %v217
  %v606 = vunpack.c.l.b16 %v218
  %v607 = vunpack.c.l.b16 %v219
  %v608 = vunpack.c.l.b16 %v220
  %v609 = vunpack.c.l.b16 %v221
  %v610 = vunpack.c.l.b16 %v222
  %v611 = vunpack.c.l.b16 %v223
  %v612 = vunpack.c.l.b16 %v224
  %v613 = vunpack.c.l.b16 %v225
  %v614 = vunpack.c.l.b16 %v226
  %v615 = vunpack.c.l.b16 %v227
  %v616 = vunpack.c.l.b16 %v228
  %v617 = vpack.c.b16 %v600, %v599
  %v618 = vpack.c.b16 %v602, %v601
  %v619 = vpack.c.b16 %v604, %v603
  %v620 = vpack.c.b16 %v606, %v605
  %v621 = vpack.c.b16 %v608, %v607
  %v622 = vpack.c.b16 %v610, %v609
  %v623 = vpack.c.b16 %v612, %v611
  %v624 = vpack.c.b16 %v614, %v613
  %v625 = vpack.c.b16 %v616, %v615
  %vm635 = vcmask 130048
  %v637 = vsel %vm635, %v486, 0
  %v640 = vsel %vm635, %v488, 0
  %v643 = vsel %vm635, %v490, 0
  %v646 = vsel %vm635, %v492, 0
  %v649 = vsel %vm635, %v494, 0
  %v652 = vsel %vm635, %v496, 0
  %v655 = vsel %vm635, %v498, 0
  %v658 = vsel %vm635, %v500, 0
  %v661 = vsel %vm635, %v502, 0
  %v664 = vsel %vm635, %v504, 0
  %v667 = vsel %vm635, %v506, 0
  %v670 = vsel %vm635, %v508, 0
  %v673 = vsel %vm635, %v510, 0
  %v676 = vsel %vm635, %v512, 0
  %v679 = vsel %vm635, %v514, 0
  %v682 = vsel %vm635, %v516, 0
  %v685 = vsel %vm635, %v518, 0
  %v688 = vsel %vm635, %v520, 0
  %v691 = vsel %vm635, %v522, 0
  %v694 = vsel %vm635, %v524, 0
  %v697 = vsel %vm635, %v526, 0
  %v700 = vsel %vm635, %v528, 0
  %v703 = vsel %vm635, %v530, 0
  %v706 = vsel %vm635, %v532, 0
  %v709 = vsel %vm635, %v534, 0
  %v712 = vsel %vm635, %v536, 0
  %v715 = vsel %vm635, %v538, 0
  %v718 = vsel %vm635, %v540, 0
  %v721 = vsel %vm635, %v542, 0
  %v724 = vsel %vm635, %v544, 0
  %v727 = vsel %vm635, %v546, 0
  %v730 = vsel %vm635, %v548, 0
  %732 = vmatprep.subr.bf16.mxu0 0
  %733 = vmatpush1.bf16.msra.mxu0 %v624
  %734 = vmatprep.subr.bf16.mxu0 0
  %735 = vmatpush1.bf16.msra.mxu0 %v623
  %736 = vmatprep.subr.bf16.mxu0 0
  %737 = vmatpush1.bf16.msra.mxu0 %v622
  %738 = vmatprep.subr.bf16.mxu0 0
  %739 = vmatpush1.bf16.msra.mxu0 %v621
  %740 = vmatprep.subr.bf16.mxu0 0
  %741 = vmatpush1.bf16.msra.mxu0 %v620
  %742 = vmatprep.subr.bf16.mxu0 0
  %743 = vmatpush1.bf16.msra.mxu0 %v619
  %744 = vmatprep.subr.bf16.mxu0 0
  %745 = vmatpush1.bf16.msra.mxu0 %v618
  %746 = vmatprep.subr.bf16.mxu0 0
  %747 = vmatpush1.bf16.msra.mxu0 %v617
  %748 = vmatprep.subr.bf16.mxu0 0
  %749 = vmatpush2.bf16.msra.mxu0 0
  %750 = vmatprep.subr.bf16.mxu0 0
  %751 = vmatpush2.bf16.msra.mxu0 0
  %752 = vmatprep.subr.bf16.mxu0 0
  %753 = vmatpush2.bf16.msra.mxu0 0
  %754 = vmatprep.subr.bf16.mxu0 0
  %755 = vmatpush2.bf16.msra.mxu0 0
  %756 = vmatprep.subr.bf16.mxu0 0
  %757 = vmatpush2.bf16.msra.mxu0 0
  %758 = vmatprep.subr.bf16.mxu0 0
  %759 = vmatpush2.bf16.msra.mxu0 0
  %760 = vmatprep.subr.bf16.mxu0 0
  %761 = vmatpush2.bf16.msra.mxu0 0
  %762 = vmatprep.subr.bf16.mxu0 0
  %763 = vmatpush2.bf16.msra.mxu0 %v625
  %764 = vmatprep.mubr.bf16.mxu0 %v637
  %765 = vmatmul.mubr.bf16.gmra.mxu0 %v485
  %v766 = vpop.f32.mrf.mxu0
  %v767 = vadd.f32 0.0, %v766
  %v768 = vpop.f32.mrf.mxu0
  %v769 = vpop.f32.mrf.mxu0
  %v770 = vadd.f32 0.0, %v769
  %v771 = vpop.f32.mrf.mxu0
  %772 = vmatprep.mubr.bf16.mxu0 %v640
  %773 = vmatmul.mubr.bf16.gmra.mxu0 %v487
  %v774 = vpop.f32.mrf.mxu0
  %v775 = vadd.f32 0.0, %v774
  %v776 = vpop.f32.mrf.mxu0
  %v777 = vpop.f32.mrf.mxu0
  %v778 = vadd.f32 0.0, %v777
  %v779 = vpop.f32.mrf.mxu0
  %780 = vmatprep.mubr.bf16.mxu0 %v643
  %781 = vmatmul.mubr.bf16.gmra.mxu0 %v489
  %v782 = vpop.f32.mrf.mxu0
  %v783 = vadd.f32 0.0, %v782
  %v784 = vpop.f32.mrf.mxu0
  %v785 = vpop.f32.mrf.mxu0
  %v786 = vadd.f32 0.0, %v785
  %v787 = vpop.f32.mrf.mxu0
  %788 = vmatprep.mubr.bf16.mxu0 %v646
  %789 = vmatmul.mubr.bf16.gmra.mxu0 %v491
  %v790 = vpop.f32.mrf.mxu0
  %v791 = vadd.f32 0.0, %v790
  %v792 = vpop.f32.mrf.mxu0
  %v793 = vpop.f32.mrf.mxu0
  %v794 = vadd.f32 0.0, %v793
  %v795 = vpop.f32.mrf.mxu0
  %796 = vmatprep.mubr.bf16.mxu0 %v649
  %797 = vmatmul.mubr.bf16.gmra.mxu0 %v493
  %v798 = vpop.f32.mrf.mxu0
  %v799 = vadd.f32 0.0, %v798
  %v800 = vpop.f32.mrf.mxu0
  %v801 = vpop.f32.mrf.mxu0
  %v802 = vadd.f32 0.0, %v801
  %v803 = vpop.f32.mrf.mxu0
  %804 = vmatprep.mubr.bf16.mxu0 %v652
  %805 = vmatmul.mubr.bf16.gmra.mxu0 %v495
  %v806 = vpop.f32.mrf.mxu0
  %v807 = vadd.f32 0.0, %v806
  %v808 = vpop.f32.mrf.mxu0
  %v809 = vpop.f32.mrf.mxu0
  %v810 = vadd.f32 0.0, %v809
  %v811 = vpop.f32.mrf.mxu0
  %812 = vmatprep.mubr.bf16.mxu0 %v655
  %813 = vmatmul.mubr.bf16.gmra.mxu0 %v497
  %v814 = vpop.f32.mrf.mxu0
  %v815 = vadd.f32 0.0, %v814
  %v816 = vpop.f32.mrf.mxu0
  %v817 = vpop.f32.mrf.mxu0
  %v818 = vadd.f32 0.0, %v817
  %v819 = vpop.f32.mrf.mxu0
  %820 = vmatprep.mubr.bf16.mxu0 %v658
  %821 = vmatmul.mubr.bf16.gmra.mxu0 %v499
  %v822 = vpop.f32.mrf.mxu0
  %v823 = vadd.f32 0.0, %v822
  %v824 = vpop.f32.mrf.mxu0
  %v825 = vpop.f32.mrf.mxu0
  %v826 = vadd.f32 0.0, %v825
  %v827 = vpop.f32.mrf.mxu0
  %828 = vmatprep.mubr.bf16.mxu0 %v661
  %829 = vmatmul.mubr.bf16.gmra.mxu0 %v501
  %v830 = vpop.f32.mrf.mxu0
  %v831 = vadd.f32 0.0, %v830
  %v832 = vpop.f32.mrf.mxu0
  %v833 = vpop.f32.mrf.mxu0
  %v834 = vadd.f32 0.0, %v833
  %v835 = vpop.f32.mrf.mxu0
  %836 = vmatprep.mubr.bf16.mxu0 %v664
  %837 = vmatmul.mubr.bf16.gmra.mxu0 %v503
  %v838 = vpop.f32.mrf.mxu0
  %v839 = vadd.f32 0.0, %v838
  %v840 = vpop.f32.mrf.mxu0
  %v841 = vpop.f32.mrf.mxu0
  %v842 = vadd.f32 0.0, %v841
  %v843 = vpop.f32.mrf.mxu0
  %844 = vmatprep.mubr.bf16.mxu0 %v667
  %845 = vmatmul.mubr.bf16.gmra.mxu0 %v505
  %v846 = vpop.f32.mrf.mxu0
  %v847 = vadd.f32 0.0, %v846
  %v848 = vpop.f32.mrf.mxu0
  %v849 = vpop.f32.mrf.mxu0
  %v850 = vadd.f32 0.0, %v849
  %v851 = vpop.f32.mrf.mxu0
  %852 = vmatprep.mubr.bf16.mxu0 %v670
  %853 = vmatmul.mubr.bf16.gmra.mxu0 %v507
  %v854 = vpop.f32.mrf.mxu0
  %v855 = vadd.f32 0.0, %v854
  %v856 = vpop.f32.mrf.mxu0
  %v857 = vpop.f32.mrf.mxu0
  %v858 = vadd.f32 0.0, %v857
  %v859 = vpop.f32.mrf.mxu0
  %860 = vmatprep.mubr.bf16.mxu0 %v673
  %861 = vmatmul.mubr.bf16.gmra.mxu0 %v509
  %v862 = vpop.f32.mrf.mxu0
  %v863 = vadd.f32 0.0, %v862
  %v864 = vpop.f32.mrf.mxu0
  %v865 = vpop.f32.mrf.mxu0
  %v866 = vadd.f32 0.0, %v865
  %v867 = vpop.f32.mrf.mxu0
  %868 = vmatprep.mubr.bf16.mxu0 %v676
  %869 = vmatmul.mubr.bf16.gmra.mxu0 %v511
  %v870 = vpop.f32.mrf.mxu0
  %v871 = vadd.f32 0.0, %v870
  %v872 = vpop.f32.mrf.mxu0
  %v873 = vpop.f32.mrf.mxu0
  %v874 = vadd.f32 0.0, %v873
  %v875 = vpop.f32.mrf.mxu0
  %876 = vmatprep.mubr.bf16.mxu0 %v679
  %877 = vmatmul.mubr.bf16.gmra.mxu0 %v513
  %v878 = vpop.f32.mrf.mxu0
  %v879 = vadd.f32 0.0, %v878
  %v880 = vpop.f32.mrf.mxu0
  %v881 = vpop.f32.mrf.mxu0
  %v882 = vadd.f32 0.0, %v881
  %v883 = vpop.f32.mrf.mxu0
  %884 = vmatprep.mubr.bf16.mxu0 %v682
  %885 = vmatmul.mubr.bf16.gmra.mxu0 %v515
  %v886 = vpop.f32.mrf.mxu0
  %v887 = vadd.f32 0.0, %v886
  %v888 = vpop.f32.mrf.mxu0
  %v889 = vpop.f32.mrf.mxu0
  %v890 = vadd.f32 0.0, %v889
  %v891 = vpop.f32.mrf.mxu0
  %892 = vmatprep.mubr.bf16.mxu0 %v685
  %893 = vmatmul.mubr.bf16.gmra.mxu0 %v517
  %v894 = vpop.f32.mrf.mxu0
  %v895 = vadd.f32 0.0, %v894
  %v896 = vpop.f32.mrf.mxu0
  %v897 = vpop.f32.mrf.mxu0
  %v898 = vadd.f32 0.0, %v897
  %v899 = vpop.f32.mrf.mxu0
  %900 = vmatprep.mubr.bf16.mxu0 %v688
  %901 = vmatmul.mubr.bf16.gmra.mxu0 %v519
  %v902 = vpop.f32.mrf.mxu0
  %v903 = vadd.f32 0.0, %v902
  %v904 = vpop.f32.mrf.mxu0
  %v905 = vpop.f32.mrf.mxu0
  %v906 = vadd.f32 0.0, %v905
  %v907 = vpop.f32.mrf.mxu0
  %908 = vmatprep.mubr.bf16.mxu0 %v691
  %909 = vmatmul.mubr.bf16.gmra.mxu0 %v521
  %v910 = vpop.f32.mrf.mxu0
  %v911 = vadd.f32 0.0, %v910
  %v912 = vpop.f32.mrf.mxu0
  %v913 = vpop.f32.mrf.mxu0
  %v914 = vadd.f32 0.0, %v913
  %v915 = vpop.f32.mrf.mxu0
  %916 = vmatprep.mubr.bf16.mxu0 %v694
  %917 = vmatmul.mubr.bf16.gmra.mxu0 %v523
  %v918 = vpop.f32.mrf.mxu0
  %v919 = vadd.f32 0.0, %v918
  %v920 = vpop.f32.mrf.mxu0
  %v921 = vpop.f32.mrf.mxu0
  %v922 = vadd.f32 0.0, %v921
  %v923 = vpop.f32.mrf.mxu0
  %924 = vmatprep.mubr.bf16.mxu0 %v697
  %925 = vmatmul.mubr.bf16.gmra.mxu0 %v525
  %v926 = vpop.f32.mrf.mxu0
  %v927 = vadd.f32 0.0, %v926
  %v928 = vpop.f32.mrf.mxu0
  %v929 = vpop.f32.mrf.mxu0
  %v930 = vadd.f32 0.0, %v929
  %v931 = vpop.f32.mrf.mxu0
  %932 = vmatprep.mubr.bf16.mxu0 %v700
  %933 = vmatmul.mubr.bf16.gmra.mxu0 %v527
  %v934 = vpop.f32.mrf.mxu0
  %v935 = vadd.f32 0.0, %v934
  %v936 = vpop.f32.mrf.mxu0
  %v937 = vpop.f32.mrf.mxu0
  %v938 = vadd.f32 0.0, %v937
  %v939 = vpop.f32.mrf.mxu0
  %940 = vmatprep.mubr.bf16.mxu0 %v703
  %941 = vmatmul.mubr.bf16.gmra.mxu0 %v529
  %v942 = vpop.f32.mrf.mxu0
  %v943 = vadd.f32 0.0, %v942
  %v944 = vpop.f32.mrf.mxu0
  %v945 = vpop.f32.mrf.mxu0
  %v946 = vadd.f32 0.0, %v945
  %v947 = vpop.f32.mrf.mxu0
  %948 = vmatprep.mubr.bf16.mxu0 %v706
  %949 = vmatmul.mubr.bf16.gmra.mxu0 %v531
  %v950 = vpop.f32.mrf.mxu0
  %v951 = vadd.f32 0.0, %v950
  %v952 = vpop.f32.mrf.mxu0
  %v953 = vpop.f32.mrf.mxu0
  %v954 = vadd.f32 0.0, %v953
  %v955 = vpop.f32.mrf.mxu0
  %956 = vmatprep.mubr.bf16.mxu0 %v709
  %957 = vmatmul.mubr.bf16.gmra.mxu0 %v533
  %v958 = vpop.f32.mrf.mxu0
  %v959 = vadd.f32 0.0, %v958
  %v960 = vpop.f32.mrf.mxu0
  %v961 = vpop.f32.mrf.mxu0
  %v962 = vadd.f32 0.0, %v961
  %v963 = vpop.f32.mrf.mxu0
  %964 = vmatprep.mubr.bf16.mxu0 %v712
  %965 = vmatmul.mubr.bf16.gmra.mxu0 %v535
  %v966 = vpop.f32.mrf.mxu0
  %v967 = vadd.f32 0.0, %v966
  %v968 = vpop.f32.mrf.mxu0
  %v969 = vpop.f32.mrf.mxu0
  %v970 = vadd.f32 0.0, %v969
  %v971 = vpop.f32.mrf.mxu0
  %972 = vmatprep.mubr.bf16.mxu0 %v715
  %973 = vmatmul.mubr.bf16.gmra.mxu0 %v537
  %v974 = vpop.f32.mrf.mxu0
  %v975 = vadd.f32 0.0, %v974
  %v976 = vpop.f32.mrf.mxu0
  %v977 = vpop.f32.mrf.mxu0
  %v978 = vadd.f32 0.0, %v977
  %v979 = vpop.f32.mrf.mxu0
  %980 = vmatprep.mubr.bf16.mxu0 %v718
  %981 = vmatmul.mubr.bf16.gmra.mxu0 %v539
  %v982 = vpop.f32.mrf.mxu0
  %v983 = vadd.f32 0.0, %v982
  %v984 = vpop.f32.mrf.mxu0
  %v985 = vpop.f32.mrf.mxu0
  %v986 = vadd.f32 0.0, %v985
  %v987 = vpop.f32.mrf.mxu0
  %988 = vmatprep.mubr.bf16.mxu0 %v721
  %989 = vmatmul.mubr.bf16.gmra.mxu0 %v541
  %v990 = vpop.f32.mrf.mxu0
  %v991 = vadd.f32 0.0, %v990
  %v992 = vpop.f32.mrf.mxu0
  %v993 = vpop.f32.mrf.mxu0
  %v994 = vadd.f32 0.0, %v993
  %v995 = vpop.f32.mrf.mxu0
  %996 = vmatprep.mubr.bf16.mxu0 %v724
  %997 = vmatmul.mubr.bf16.gmra.mxu0 %v543
  %v998 = vpop.f32.mrf.mxu0
  %v999 = vadd.f32 0.0, %v998
  %v1000 = vpop.f32.mrf.mxu0
  %v1001 = vpop.f32.mrf.mxu0
  %v1002 = vadd.f32 0.0, %v1001
  %v1003 = vpop.f32.mrf.mxu0
  %1004 = vmatprep.mubr.bf16.mxu0 %v727
  %1005 = vmatmul.mubr.bf16.gmra.mxu0 %v545
  %v1006 = vpop.f32.mrf.mxu0
  %v1007 = vadd.f32 0.0, %v1006
  %v1008 = vpop.f32.mrf.mxu0
  %v1009 = vpop.f32.mrf.mxu0
  %v1010 = vadd.f32 0.0, %v1009
  %v1011 = vpop.f32.mrf.mxu0
  %1012 = vmatprep.mubr.bf16.mxu0 %v730
  %1013 = vmatmul.mubr.bf16.gmra.mxu0 %v547
  %v1014 = vpop.f32.mrf.mxu0
  %v1015 = vadd.f32 0.0, %v1014
  %v1016 = vpop.f32.mrf.mxu0
  %v1017 = vpop.f32.mrf.mxu0
  %v1018 = vadd.f32 0.0, %v1017
  %v1019 = vpop.f32.mrf.mxu0
  %1020 = vdwg.mxu0
  %v1021 = vadd.f32 %v229, %v767
  %v1022 = vadd.f32 %v230, %v770
  %v1023 = vadd.f32 %v231, %v775
  %v1024 = vadd.f32 %v232, %v778
  %v1025 = vadd.f32 %v233, %v783
  %v1026 = vadd.f32 %v234, %v786
  %v1027 = vadd.f32 %v235, %v791
  %v1028 = vadd.f32 %v236, %v794
  %v1029 = vadd.f32 %v237, %v799
  %v1030 = vadd.f32 %v238, %v802
  %v1031 = vadd.f32 %v239, %v807
  %v1032 = vadd.f32 %v240, %v810
  %v1033 = vadd.f32 %v241, %v815
  %v1034 = vadd.f32 %v242, %v818
  %v1035 = vadd.f32 %v243, %v823
  %v1036 = vadd.f32 %v244, %v826
  %v1037 = vadd.f32 %v245, %v831
  %v1038 = vadd.f32 %v246, %v834
  %v1039 = vadd.f32 %v247, %v839
  %v1040 = vadd.f32 %v248, %v842
  %v1041 = vadd.f32 %v249, %v847
  %v1042 = vadd.f32 %v250, %v850
  %v1043 = vadd.f32 %v251, %v855
  %v1044 = vadd.f32 %v252, %v858
  %v1045 = vadd.f32 %v253, %v863
  %v1046 = vadd.f32 %v254, %v866
  %v1047 = vadd.f32 %v255, %v871
  %v1048 = vadd.f32 %v256, %v874
  %v1049 = vadd.f32 %v257, %v879
  %v1050 = vadd.f32 %v258, %v882
  %v1051 = vadd.f32 %v259, %v887
  %v1052 = vadd.f32 %v260, %v890
  %v1053 = vadd.f32 %v261, %v895
  %v1054 = vadd.f32 %v262, %v898
  %v1055 = vadd.f32 %v263, %v903
  %v1056 = vadd.f32 %v264, %v906
  %v1057 = vadd.f32 %v265, %v911
  %v1058 = vadd.f32 %v266, %v914
  %v1059 = vadd.f32 %v267, %v919
  %v1060 = vadd.f32 %v268, %v922
  %v1061 = vadd.f32 %v269, %v927
  %v1062 = vadd.f32 %v270, %v930
  %v1063 = vadd.f32 %v271, %v935
  %v1064 = vadd.f32 %v272, %v938
  %v1065 = vadd.f32 %v273, %v943
  %v1066 = vadd.f32 %v274, %v946
  %v1067 = vadd.f32 %v275, %v951
  %v1068 = vadd.f32 %v276, %v954
  %v1069 = vadd.f32 %v277, %v959
  %v1070 = vadd.f32 %v278, %v962
  %v1071 = vadd.f32 %v279, %v967
  %v1072 = vadd.f32 %v280, %v970
  %v1073 = vadd.f32 %v281, %v975
  %v1074 = vadd.f32 %v282, %v978
  %v1075 = vadd.f32 %v283, %v983
  %v1076 = vadd.f32 %v284, %v986
  %v1077 = vadd.f32 %v285, %v991
  %v1078 = vadd.f32 %v286, %v994
  %v1079 = vadd.f32 %v287, %v999
  %v1080 = vadd.f32 %v288, %v1002
  %v1081 = vadd.f32 %v289, %v1007
  %v1082 = vadd.f32 %v290, %v1010
  %v1083 = vadd.f32 %v291, %v1015
  %v1084 = vadd.f32 %v292, %v1018
  %1085 = vst [vmem:[#allocation2] sm:$0xff] %v1021
  %1086 = vst [vmem:[#allocation2 + $0x8] sm:$0xff] %v1022
  %1087 = vst [vmem:[#allocation2 + $0x10] sm:$0xff] %v1023
  %1088 = vst [vmem:[#allocation2 + $0x18] sm:$0xff] %v1024
  %1089 = vst [vmem:[#allocation2 + $0x20] sm:$0xff] %v1025
  %1090 = vst [vmem:[#allocation2 + $0x28] sm:$0xff] %v1026
  %1091 = vst [vmem:[#allocation2 + $0x30] sm:$0xff] %v1027
  %1092 = vst [vmem:[#allocation2 + $0x38] sm:$0xff] %v1028
  %1093 = vst [vmem:[#allocation2 + $0x40] sm:$0xff] %v1029
  %1094 = vst [vmem:[#allocation2 + $0x48] sm:$0xff] %v1030
  %1095 = vst [vmem:[#allocation2 + $0x50] sm:$0xff] %v1031
  %1096 = vst [vmem:[#allocation2 + $0x58] sm:$0xff] %v1032
  %1097 = vst [vmem:[#allocation2 + $0x60] sm:$0xff] %v1033
  %1098 = vst [vmem:[#allocation2 + $0x68] sm:$0xff] %v1034
  %1099 = vst [vmem:[#allocation2 + $0x70] sm:$0xff] %v1035
  %1100 = vst [vmem:[#allocation2 + $0x78] sm:$0xff] %v1036
  %1101 = vst [vmem:[#allocation2 + $0x80] sm:$0xff] %v1037
  %1102 = vst [vmem:[#allocation2 + $0x88] sm:$0xff] %v1038
  %1103 = vst [vmem:[#allocation2 + $0x90] sm:$0xff] %v1039
  %1104 = vst [vmem:[#allocation2 + $0x98] sm:$0xff] %v1040
  %1105 = vst [vmem:[#allocation2 + $0xa0] sm:$0xff] %v1041
  %1106 = vst [vmem:[#allocation2 + $0xa8] sm:$0xff] %v1042
  %1107 = vst [vmem:[#allocation2 + $0xb0] sm:$0xff] %v1043
  %1108 = vst [vmem:[#allocation2 + $0xb8] sm:$0xff] %v1044
  %1109 = vst [vmem:[#allocation2 + $0xc0] sm:$0xff] %v1045
  %1110 = vst [vmem:[#allocation2 + $0xc8] sm:$0xff] %v1046
  %1111 = vst [vmem:[#allocation2 + $0xd0] sm:$0xff] %v1047
  %1112 = vst [vmem:[#allocation2 + $0xd8] sm:$0xff] %v1048
  %1113 = vst [vmem:[#allocation2 + $0xe0] sm:$0xff] %v1049
  %1114 = vst [vmem:[#allocation2 + $0xe8] sm:$0xff] %v1050
  %1115 = vst [vmem:[#allocation2 + $0xf0] sm:$0xff] %v1051
  %1116 = vst [vmem:[#allocation2 + $0xf8] sm:$0xff] %v1052
  %1117 = vst [vmem:[#allocation2 + $0x100] sm:$0xff] %v1053
  %1118 = vst [vmem:[#allocation2 + $0x108] sm:$0xff] %v1054
  %1119 = vst [vmem:[#allocation2 + $0x110] sm:$0xff] %v1055
  %1120 = vst [vmem:[#allocation2 + $0x118] sm:$0xff] %v1056
  %1121 = vst [vmem:[#allocation2 + $0x120] sm:$0xff] %v1057
  %1122 = vst [vmem:[#allocation2 + $0x128] sm:$0xff] %v1058
  %1123 = vst [vmem:[#allocation2 + $0x130] sm:$0xff] %v1059
  %1124 = vst [vmem:[#allocation2 + $0x138] sm:$0xff] %v1060
  %1125 = vst [vmem:[#allocation2 + $0x140] sm:$0xff] %v1061
  %1126 = vst [vmem:[#allocation2 + $0x148] sm:$0xff] %v1062
  %1127 = vst [vmem:[#allocation2 + $0x150] sm:$0xff] %v1063
  %1128 = vst [vmem:[#allocation2 + $0x158] sm:$0xff] %v1064
  %1129 = vst [vmem:[#allocation2 + $0x160] sm:$0xff] %v1065
  %1130 = vst [vmem:[#allocation2 + $0x168] sm:$0xff] %v1066
  %1131 = vst [vmem:[#allocation2 + $0x170] sm:$0xff] %v1067
  %1132 = vst [vmem:[#allocation2 + $0x178] sm:$0xff] %v1068
  %1133 = vst [vmem:[#allocation2 + $0x180] sm:$0xff] %v1069
  %1134 = vst [vmem:[#allocation2 + $0x188] sm:$0xff] %v1070
  %1135 = vst [vmem:[#allocation2 + $0x190] sm:$0xff] %v1071
  %1136 = vst [vmem:[#allocation2 + $0x198] sm:$0xff] %v1072
  %1137 = vst [vmem:[#allocation2 + $0x1a0] sm:$0xff] %v1073
  %1138 = vst [vmem:[#allocation2 + $0x1a8] sm:$0xff] %v1074
  %1139 = vst [vmem:[#allocation2 + $0x1b0] sm:$0xff] %v1075
  %1140 = vst [vmem:[#allocation2 + $0x1b8] sm:$0xff] %v1076
  %1141 = vst [vmem:[#allocation2 + $0x1c0] sm:$0xff] %v1077
  %1142 = vst [vmem:[#allocation2 + $0x1c8] sm:$0xff] %v1078
  %1143 = vst [vmem:[#allocation2 + $0x1d0] sm:$0xff] %v1079
  %1144 = vst [vmem:[#allocation2 + $0x1d8] sm:$0xff] %v1080
  %1145 = vst [vmem:[#allocation2 + $0x1e0] sm:$0xff] %v1081
  %1146 = vst [vmem:[#allocation2 + $0x1e8] sm:$0xff] %v1082
  %1147 = vst [vmem:[#allocation2 + $0x1f0] sm:$0xff] %v1083
  %1148 = vst [vmem:[#allocation2 + $0x1f8] sm:$0xff] %v1084
  // Predicated region
  $region18: #{unet_forward.33} parent=0 // pred_check
    %p1149 = pneg %p15
  $region19: #{unet_forward.33} parent=0 // pred_check_branch
    %1151 = sbr.rel (%p1149) target = $region21
  $region20: #{unet_forward.33} parent=0 // pred_region
    %v1152 = vld [vmem:[#allocation2] sm:$0xff]
    %v1153 = vld [vmem:[#allocation2 + $0x8] sm:$0xff]
    %v1154 = vld [vmem:[#allocation2 + $0x10] sm:$0xff]
    %v1155 = vld [vmem:[#allocation2 + $0x18] sm:$0xff]
    %v1156 = vld [vmem:[#allocation2 + $0x20] sm:$0xff]
    %v1157 = vld [vmem:[#allocation2 + $0x28] sm:$0xff]
    %v1158 = vld [vmem:[#allocation2 + $0x30] sm:$0xff]
    %v1159 = vld [vmem:[#allocation2 + $0x38] sm:$0xff]
    %v1160 = vld [vmem:[#allocation2 + $0x40] sm:$0xff]
    %v1161 = vld [vmem:[#allocation2 + $0x48] sm:$0xff]
    %v1162 = vld [vmem:[#allocation2 + $0x50] sm:$0xff]
    %v1163 = vld [vmem:[#allocation2 + $0x58] sm:$0xff]
    %v1164 = vld [vmem:[#allocation2 + $0x60] sm:$0xff]
    %v1165 = vld [vmem:[#allocation2 + $0x68] sm:$0xff]
    %v1166 = vld [vmem:[#allocation2 + $0x70] sm:$0xff]
    %v1167 = vld [vmem:[#allocation2 + $0x78] sm:$0xff]
    %v1168 = vld [vmem:[#allocation2 + $0x80] sm:$0xff]
    %v1169 = vld [vmem:[#allocation2 + $0x88] sm:$0xff]
    %v1170 = vld [vmem:[#allocation2 + $0x90] sm:$0xff]
    %v1171 = vld [vmem:[#allocation2 + $0x98] sm:$0xff]
    %v1172 = vld [vmem:[#allocation2 + $0xa0] sm:$0xff]
    %v1173 = vld [vmem:[#allocation2 + $0xa8] sm:$0xff]
    %v1174 = vld [vmem:[#allocation2 + $0xb0] sm:$0xff]
    %v1175 = vld [vmem:[#allocation2 + $0xb8] sm:$0xff]
    %v1176 = vld [vmem:[#allocation2 + $0xc0] sm:$0xff]
    %v1177 = vld [vmem:[#allocation2 + $0xc8] sm:$0xff]
    %v1178 = vld [vmem:[#allocation2 + $0xd0] sm:$0xff]
    %v1179 = vld [vmem:[#allocation2 + $0xd8] sm:$0xff]
    %v1180 = vld [vmem:[#allocation2 + $0xe0] sm:$0xff]
    %v1181 = vld [vmem:[#allocation2 + $0xe8] sm:$0xff]
    %v1182 = vld [vmem:[#allocation2 + $0xf0] sm:$0xff]
    %v1183 = vld [vmem:[#allocation2 + $0xf8] sm:$0xff]
    %v1184 = vld [vmem:[#allocation2 + $0x100] sm:$0xff]
    %v1185 = vld [vmem:[#allocation2 + $0x108] sm:$0xff]
    %v1186 = vld [vmem:[#allocation2 + $0x110] sm:$0xff]
    %v1187 = vld [vmem:[#allocation2 + $0x118] sm:$0xff]
    %v1188 = vld [vmem:[#allocation2 + $0x120] sm:$0xff]
    %v1189 = vld [vmem:[#allocation2 + $0x128] sm:$0xff]
    %v1190 = vld [vmem:[#allocation2 + $0x130] sm:$0xff]
    %v1191 = vld [vmem:[#allocation2 + $0x138] sm:$0xff]
    %v1192 = vld [vmem:[#allocation2 + $0x140] sm:$0xff]
    %v1193 = vld [vmem:[#allocation2 + $0x148] sm:$0xff]
    %v1194 = vld [vmem:[#allocation2 + $0x150] sm:$0xff]
    %v1195 = vld [vmem:[#allocation2 + $0x158] sm:$0xff]
    %v1196 = vld [vmem:[#allocation2 + $0x160] sm:$0xff]
    %v1197 = vld [vmem:[#allocation2 + $0x168] sm:$0xff]
    %v1198 = vld [vmem:[#allocation2 + $0x170] sm:$0xff]
    %v1199 = vld [vmem:[#allocation2 + $0x178] sm:$0xff]
    %v1200 = vld [vmem:[#allocation2 + $0x180] sm:$0xff]
    %v1201 = vld [vmem:[#allocation2 + $0x188] sm:$0xff]
    %v1202 = vld [vmem:[#allocation2 + $0x190] sm:$0xff]
    %v1203 = vld [vmem:[#allocation2 + $0x198] sm:$0xff]
    %v1204 = vld [vmem:[#allocation2 + $0x1a0] sm:$0xff]
    %v1205 = vld [vmem:[#allocation2 + $0x1a8] sm:$0xff]
    %v1206 = vld [vmem:[#allocation2 + $0x1b0] sm:$0xff]
    %v1207 = vld [vmem:[#allocation2 + $0x1b8] sm:$0xff]
    %v1208 = vld [vmem:[#allocation2 + $0x1c0] sm:$0xff]
    %v1209 = vld [vmem:[#allocation2 + $0x1c8] sm:$0xff]
    %v1210 = vld [vmem:[#allocation2 + $0x1d0] sm:$0xff]
    %v1211 = vld [vmem:[#allocation2 + $0x1d8] sm:$0xff]
    %v1212 = vld [vmem:[#allocation2 + $0x1e0] sm:$0xff]
    %v1213 = vld [vmem:[#allocation2 + $0x1e8] sm:$0xff]
    %v1214 = vld [vmem:[#allocation2 + $0x1f0] sm:$0xff]
    %v1215 = vld [vmem:[#allocation2 + $0x1f8] sm:$0xff]
    %v1216 = vld [vmem:[%s2] sm:$0x1]
    %v1218 = vlaneseq
    %v1219 = vshrl.u32 %v1218, 7
    %v1220 = vsub.s32 0, %v1219
    %v1221 = vrot.slane %v1216, %v1220
    %v1223 = vadd.f32 %v1152, %v1221
    %v1224 = vadd.f32 %v1153, %v1221
    %v1225 = vadd.f32 %v1154, %v1221
    %v1226 = vadd.f32 %v1155, %v1221
    %v1227 = vadd.f32 %v1156, %v1221
    %v1228 = vadd.f32 %v1157, %v1221
    %v1229 = vadd.f32 %v1158, %v1221
    %v1230 = vadd.f32 %v1159, %v1221
    %v1231 = vadd.f32 %v1160, %v1221
    %v1232 = vadd.f32 %v1161, %v1221
    %v1233 = vadd.f32 %v1162, %v1221
    %v1234 = vadd.f32 %v1163, %v1221
    %v1235 = vadd.f32 %v1164, %v1221
    %v1236 = vadd.f32 %v1165, %v1221
    %v1237 = vadd.f32 %v1166, %v1221
    %v1238 = vadd.f32 %v1167, %v1221
    %v1239 = vadd.f32 %v1168, %v1221
    %v1240 = vadd.f32 %v1169, %v1221
    %v1241 = vadd.f32 %v1170, %v1221
    %v1242 = vadd.f32 %v1171, %v1221
    %v1243 = vadd.f32 %v1172, %v1221
    %v1244 = vadd.f32 %v1173, %v1221
    %v1245 = vadd.f32 %v1174, %v1221
    %v1246 = vadd.f32 %v1175, %v1221
    %v1247 = vadd.f32 %v1176, %v1221
    %v1248 = vadd.f32 %v1177, %v1221
    %v1249 = vadd.f32 %v1178, %v1221
    %v1250 = vadd.f32 %v1179, %v1221
    %v1251 = vadd.f32 %v1180, %v1221
    %v1252 = vadd.f32 %v1181, %v1221
    %v1253 = vadd.f32 %v1182, %v1221
    %v1254 = vadd.f32 %v1183, %v1221
    %v1255 = vadd.f32 %v1184, %v1221
    %v1256 = vadd.f32 %v1185, %v1221
    %v1257 = vadd.f32 %v1186, %v1221
    %v1258 = vadd.f32 %v1187, %v1221
    %v1259 = vadd.f32 %v1188, %v1221
    %v1260 = vadd.f32 %v1189, %v1221
    %v1261 = vadd.f32 %v1190, %v1221
    %v1262 = vadd.f32 %v1191, %v1221
    %v1263 = vadd.f32 %v1192, %v1221
    %v1264 = vadd.f32 %v1193, %v1221
    %v1265 = vadd.f32 %v1194, %v1221
    %v1266 = vadd.f32 %v1195, %v1221
    %v1267 = vadd.f32 %v1196, %v1221
    %v1268 = vadd.f32 %v1197, %v1221
    %v1269 = vadd.f32 %v1198, %v1221
    %v1270 = vadd.f32 %v1199, %v1221
    %v1271 = vadd.f32 %v1200, %v1221
    %v1272 = vadd.f32 %v1201, %v1221
    %v1273 = vadd.f32 %v1202, %v1221
    %v1274 = vadd.f32 %v1203, %v1221
    %v1275 = vadd.f32 %v1204, %v1221
    %v1276 = vadd.f32 %v1205, %v1221
    %v1277 = vadd.f32 %v1206, %v1221
    %v1278 = vadd.f32 %v1207, %v1221
    %v1279 = vadd.f32 %v1208, %v1221
    %v1280 = vadd.f32 %v1209, %v1221
    %v1281 = vadd.f32 %v1210, %v1221
    %v1282 = vadd.f32 %v1211, %v1221
    %v1283 = vadd.f32 %v1212, %v1221
    %v1284 = vadd.f32 %v1213, %v1221
    %v1285 = vadd.f32 %v1214, %v1221
    %v1286 = vadd.f32 %v1215, %v1221
    %v1287 = vtanh.pop %v1223
    %v1288 = vtanh.pop %v1224
    %v1289 = vtanh.pop %v1225
    %v1290 = vtanh.pop %v1226
    %v1291 = vtanh.pop %v1227
    %v1292 = vtanh.pop %v1228
    %v1293 = vtanh.pop %v1229
    %v1294 = vtanh.pop %v1230
    %v1295 = vtanh.pop %v1231
    %v1296 = vtanh.pop %v1232
    %v1297 = vtanh.pop %v1233
    %v1298 = vtanh.pop %v1234
    %v1299 = vtanh.pop %v1235
    %v1300 = vtanh.pop %v1236
    %v1301 = vtanh.pop %v1237
    %v1302 = vtanh.pop %v1238
    %v1303 = vtanh.pop %v1239
    %v1304 = vtanh.pop %v1240
    %v1305 = vtanh.pop %v1241
    %v1306 = vtanh.pop %v1242
    %v1307 = vtanh.pop %v1243
    %v1308 = vtanh.pop %v1244
    %v1309 = vtanh.pop %v1245
    %v1310 = vtanh.pop %v1246
    %v1311 = vtanh.pop %v1247
    %v1312 = vtanh.pop %v1248
    %v1313 = vtanh.pop %v1249
    %v1314 = vtanh.pop %v1250
    %v1315 = vtanh.pop %v1251
    %v1316 = vtanh.pop %v1252
    %v1317 = vtanh.pop %v1253
    %v1318 = vtanh.pop %v1254
    %v1319 = vtanh.pop %v1255
    %v1320 = vtanh.pop %v1256
    %v1321 = vtanh.pop %v1257
    %v1322 = vtanh.pop %v1258
    %v1323 = vtanh.pop %v1259
    %v1324 = vtanh.pop %v1260
    %v1325 = vtanh.pop %v1261
    %v1326 = vtanh.pop %v1262
    %v1327 = vtanh.pop %v1263
    %v1328 = vtanh.pop %v1264
    %v1329 = vtanh.pop %v1265
    %v1330 = vtanh.pop %v1266
    %v1331 = vtanh.pop %v1267
    %v1332 = vtanh.pop %v1268
    %v1333 = vtanh.pop %v1269
    %v1334 = vtanh.pop %v1270
    %v1335 = vtanh.pop %v1271
    %v1336 = vtanh.pop %v1272
    %v1337 = vtanh.pop %v1273
    %v1338 = vtanh.pop %v1274
    %v1339 = vtanh.pop %v1275
    %v1340 = vtanh.pop %v1276
    %v1341 = vtanh.pop %v1277
    %v1342 = vtanh.pop %v1278
    %v1343 = vtanh.pop %v1279
    %v1344 = vtanh.pop %v1280
    %v1345 = vtanh.pop %v1281
    %v1346 = vtanh.pop %v1282
    %v1347 = vtanh.pop %v1283
    %v1348 = vtanh.pop %v1284
    %v1349 = vtanh.pop %v1285
    %v1350 = vtanh.pop %v1286
    %vm1351 = vcmask 97280
    %1352 = vst.msk [vmem:[%s3] sm:$0xff] %vm1351, %v1287
    %1353 = vst.msk [vmem:[%s3 + $0x8] sm:$0xff] %vm1351, %v1288
    %1354 = vst.msk [vmem:[%s3 + $0x10] sm:$0xff] %vm1351, %v1289
    %1355 = vst.msk [vmem:[%s3 + $0x18] sm:$0xff] %vm1351, %v1290
    %1356 = vst.msk [vmem:[%s3 + $0x20] sm:$0xff] %vm1351, %v1291
    %1357 = vst.msk [vmem:[%s3 + $0x28] sm:$0xff] %vm1351, %v1292
    %1358 = vst.msk [vmem:[%s3 + $0x30] sm:$0xff] %vm1351, %v1293
    %1359 = vst.msk [vmem:[%s3 + $0x38] sm:$0xff] %vm1351, %v1294
    %1360 = vst.msk [vmem:[%s3 + $0x40] sm:$0xff] %vm1351, %v1295
    %1361 = vst.msk [vmem:[%s3 + $0x48] sm:$0xff] %vm1351, %v1296
    %1362 = vst.msk [vmem:[%s3 + $0x50] sm:$0xff] %vm1351, %v1297
    %1363 = vst.msk [vmem:[%s3 + $0x58] sm:$0xff] %vm1351, %v1298
    %1364 = vst.msk [vmem:[%s3 + $0x60] sm:$0xff] %vm1351, %v1299
    %1365 = vst.msk [vmem:[%s3 + $0x68] sm:$0xff] %vm1351, %v1300
    %1366 = vst.msk [vmem:[%s3 + $0x70] sm:$0xff] %vm1351, %v1301
    %1367 = vst.msk [vmem:[%s3 + $0x78] sm:$0xff] %vm1351, %v1302
    %1368 = vst.msk [vmem:[%s3 + $0x80] sm:$0xff] %vm1351, %v1303
    %1369 = vst.msk [vmem:[%s3 + $0x88] sm:$0xff] %vm1351, %v1304
    %1370 = vst.msk [vmem:[%s3 + $0x90] sm:$0xff] %vm1351, %v1305
    %1371 = vst.msk [vmem:[%s3 + $0x98] sm:$0xff] %vm1351, %v1306
    %1372 = vst.msk [vmem:[%s3 + $0xa0] sm:$0xff] %vm1351, %v1307
    %1373 = vst.msk [vmem:[%s3 + $0xa8] sm:$0xff] %vm1351, %v1308
    %1374 = vst.msk [vmem:[%s3 + $0xb0] sm:$0xff] %vm1351, %v1309
    %1375 = vst.msk [vmem:[%s3 + $0xb8] sm:$0xff] %vm1351, %v1310
    %1376 = vst.msk [vmem:[%s3 + $0xc0] sm:$0xff] %vm1351, %v1311
    %1377 = vst.msk [vmem:[%s3 + $0xc8] sm:$0xff] %vm1351, %v1312
    %1378 = vst.msk [vmem:[%s3 + $0xd0] sm:$0xff] %vm1351, %v1313
    %1379 = vst.msk [vmem:[%s3 + $0xd8] sm:$0xff] %vm1351, %v1314
    %1380 = vst.msk [vmem:[%s3 + $0xe0] sm:$0xff] %vm1351, %v1315
    %1381 = vst.msk [vmem:[%s3 + $0xe8] sm:$0xff] %vm1351, %v1316
    %1382 = vst.msk [vmem:[%s3 + $0xf0] sm:$0xff] %vm1351, %v1317
    %1383 = vst.msk [vmem:[%s3 + $0xf8] sm:$0xff] %vm1351, %v1318
    %1384 = vst.msk [vmem:[%s3 + $0x100] sm:$0xff] %vm1351, %v1319
    %1385 = vst.msk [vmem:[%s3 + $0x108] sm:$0xff] %vm1351, %v1320
    %1386 = vst.msk [vmem:[%s3 + $0x110] sm:$0xff] %vm1351, %v1321
    %1387 = vst.msk [vmem:[%s3 + $0x118] sm:$0xff] %vm1351, %v1322
    %1388 = vst.msk [vmem:[%s3 + $0x120] sm:$0xff] %vm1351, %v1323
    %1389 = vst.msk [vmem:[%s3 + $0x128] sm:$0xff] %vm1351, %v1324
    %1390 = vst.msk [vmem:[%s3 + $0x130] sm:$0xff] %vm1351, %v1325
    %1391 = vst.msk [vmem:[%s3 + $0x138] sm:$0xff] %vm1351, %v1326
    %1392 = vst.msk [vmem:[%s3 + $0x140] sm:$0xff] %vm1351, %v1327
    %1393 = vst.msk [vmem:[%s3 + $0x148] sm:$0xff] %vm1351, %v1328
    %1394 = vst.msk [vmem:[%s3 + $0x150] sm:$0xff] %vm1351, %v1329
    %1395 = vst.msk [vmem:[%s3 + $0x158] sm:$0xff] %vm1351, %v1330
    %1396 = vst.msk [vmem:[%s3 + $0x160] sm:$0xff] %vm1351, %v1331
    %1397 = vst.msk [vmem:[%s3 + $0x168] sm:$0xff] %vm1351, %v1332
    %1398 = vst.msk [vmem:[%s3 + $0x170] sm:$0xff] %vm1351, %v1333
    %1399 = vst.msk [vmem:[%s3 + $0x178] sm:$0xff] %vm1351, %v1334
    %1400 = vst.msk [vmem:[%s3 + $0x180] sm:$0xff] %vm1351, %v1335
    %1401 = vst.msk [vmem:[%s3 + $0x188] sm:$0xff] %vm1351, %v1336
    %1402 = vst.msk [vmem:[%s3 + $0x190] sm:$0xff] %vm1351, %v1337
    %1403 = vst.msk [vmem:[%s3 + $0x198] sm:$0xff] %vm1351, %v1338
    %1404 = vst.msk [vmem:[%s3 + $0x1a0] sm:$0xff] %vm1351, %v1339
    %1405 = vst.msk [vmem:[%s3 + $0x1a8] sm:$0xff] %vm1351, %v1340
    %1406 = vst.msk [vmem:[%s3 + $0x1b0] sm:$0xff] %vm1351, %v1341
    %1407 = vst.msk [vmem:[%s3 + $0x1b8] sm:$0xff] %vm1351, %v1342
    %1408 = vst.msk [vmem:[%s3 + $0x1c0] sm:$0xff] %vm1351, %v1343
    %1409 = vst.msk [vmem:[%s3 + $0x1c8] sm:$0xff] %vm1351, %v1344
    %1410 = vst.msk [vmem:[%s3 + $0x1d0] sm:$0xff] %vm1351, %v1345
    %1411 = vst.msk [vmem:[%s3 + $0x1d8] sm:$0xff] %vm1351, %v1346
    %1412 = vst.msk [vmem:[%s3 + $0x1e0] sm:$0xff] %vm1351, %v1347
    %1413 = vst.msk [vmem:[%s3 + $0x1e8] sm:$0xff] %vm1351, %v1348
    %1414 = vst.msk [vmem:[%s3 + $0x1f0] sm:$0xff] %vm1351, %v1349
    %1415 = vst.msk [vmem:[%s3 + $0x1f8] sm:$0xff] %vm1351, %v1350
  $region21: #{unet_forward.33} parent=0 // pred_fallthru
    _
  // Predicated region
  $region22: #{unet_forward.33} parent=0 // pred_check
    _
  $region23: #{unet_forward.33} parent=0 // pred_check_branch
    %1417 = sbr.rel (0) target = $region25
  $region24: #{unet_forward.33} parent=0 // pred_region
    _
  $region25: #{unet_forward.33} parent=0 // pred_fallthru
    _
  // Predicated region
  $region26: #{unet_forward.33} parent=0 // pred_check
    _
  $region27: #{unet_forward.33} parent=0 // pred_check_branch
    %1419 = sbr.rel (0) target = $region29
  $region28: #{unet_forward.33} parent=0 // pred_region
    _
  $region29: #{unet_forward.33} parent=0 // pred_fallthru
    _

</llo_original>
